<compile_context>
chip_gen: v7x
topology: tpu7x:2x2x1
jax: 0.10.0
libtpu: 0.0.40
codegen_flags: <defaults>
</compile_context>

<pallas_src>
import functools

import jax
import jax.numpy as jnp
import numpy as np
from jax import lax
from jax.experimental import pallas as pl
from jax.experimental.pallas import tpu as pltpu

# Left zero-pad (in W) of the layer-1 activation scratch. Chosen = 8 (instead of the
# natural P=2) so the interior store lands on an 8-aligned sublane offset.
_W_LPAD = 8


def _feature_kernel(x1_ref, w1_ref, s1_ref, t1_ref, w2_ref, s2_ref, t2_ref,
                    o_ref, pad_ref, *, NB, H, W, K, C1, C2):
    """Fused Feature.forward for a block of NB images.

    x1_ref : (NB*H*W, K*K*Cin) bf16   layer-1 im2col rows, (n, h, w)-major
    w1_ref : (K*K*Cin, C1)     bf16   layer-1 weights, rows = (dy*K+dx)*Cin + cin
    s1_ref : (1, C1)           f32    folded BN1 scale  = gamma / sqrt(var + eps)
    t1_ref : (1, C1)           f32    folded BN1 shift  = beta + (bias - mean) * scale
    w2_ref : (K*K, C1, C2)     bf16   layer-2 weights, tap-major
    s2_ref : (1, C2)           f32    folded BN2 scale
    t2_ref : (1, C2)           f32    folded BN2 shift (conv bias folded in)
    o_ref  : (NB, H//4, W//4, C2) f32
    pad_ref: (NB, H//2 + K-1, _W_LPAD + W//2 + (K-1)//2, C1) f32 scratch
    """
    Ho, Wo = H // 2, W // 2
    Ho2, Wo2 = Ho // 2, Wo // 2
    P = (K - 1) // 2
    M2 = NB * Ho * Wo

    # ---------------- layer 1 ----------------
    # Conv2d(Cin, C1, k=5, p=2) as ONE deep matmul on the MXU (im2col done in wrapper).
    h1 = jnp.dot(x1_ref[...], w1_ref[...], preferred_element_type=jnp.float32)
    # (NB*H*W, C1), rows ordered (n, h, w)

    # MaxPool2d(2, 2)
    t = h1.reshape(NB * H, Wo, 2, C1)
    t = jnp.max(t, axis=2)                          # pool over w -> (NB*H, Wo, C1)
    t = t.reshape(NB * Ho, 2, Wo, C1)
    p1 = jnp.max(t, axis=1)                         # pool over h -> (NB*Ho, Wo, C1)

    # BatchNorm2d(C1) inference affine (conv bias folded into shift) + ReLU.
    # Dropout2d(0.5): identity at inference.
    a1 = jnp.maximum(p1 * s1_ref[...] + t1_ref[...], 0.0)

    # Keep the zero-padded activation resident in VMEM (halo for the 5x5 conv of layer 2).
    pad_ref[...] = jnp.zeros_like(pad_ref)
    pad_ref[:, P:P + Ho, _W_LPAD:_W_LPAD + Wo, :] = a1.reshape(NB, Ho, Wo, C1)

    # ---------------- layer 2 ----------------
    # Conv2d(C1, C2, k=5, p=2): 25 tap matmuls, each with contraction depth C1 = 64,
    # accumulated in f32. Small (M2, C2) accumulator -> no vreg spill pressure.
    acc = jnp.zeros((M2, C2), jnp.float32)
    c_base = _W_LPAD - P
    for dy in range(K):
        for dx in range(K):
            patch = (pad_ref[:, dy:dy + Ho, c_base + dx:c_base + dx + Wo, :]
                     .reshape(M2, C1).astype(jnp.bfloat16))
            acc = acc + jnp.dot(patch, w2_ref[dy * K + dx],
                                preferred_element_type=jnp.float32)

    # MaxPool2d(2, 2)
    t = acc.reshape(NB * Ho, Wo2, 2, C2)
    t = jnp.max(t, axis=2)                          # pool over w
    t = t.reshape(NB * Ho2, 2, Wo2, C2)
    p2 = jnp.max(t, axis=1)                         # pool over h -> (NB*Ho2, Wo2, C2)

    # BatchNorm2d(C2) inference affine + ReLU; Dropout2d identity at inference.
    a2 = jnp.maximum(p2 * s2_ref[...] + t2_ref[...], 0.0)
    o_ref[...] = a2.reshape(NB, Ho2, Wo2, C2)       # lane-dense: last dim = C2 = 128


def _im2col_nhwc(x, K, P):
    """(N,H,W,C) -> (N,H,W,K*K*C), tap-major ordering (dy*K+dx)*C + c."""
    N, H, W, C = x.shape
    xp = jnp.pad(x, ((0, 0), (P, P), (P, P), (0, 0)))
    cols = [xp[:, dy:dy + H, dx:dx + W, :] for dy in range(K) for dx in range(K)]
    return jnp.concatenate(cols, axis=-1)


def feature_forward(img_nchw, p, eps=1e-5):
    """Full Feature.forward. Input NCHW (PyTorch convention), output NCHW."""
    x = jnp.transpose(img_nchw, (0, 2, 3, 1)).astype(jnp.float32)   # NCHW -> NHWC
    N, H, W, Cin = x.shape
    C1, _, K, _ = p["w1"].shape        # (64, 3, 5, 5)
    C2 = p["w2"].shape[0]              # 128
    P = (K - 1) // 2
    assert H % 4 == 0 and W % 4 == 0, (H, W)
    Ho, Wo, Ho2, Wo2 = H // 2, W // 2, H // 4, W // 4

    # Layer-1 im2col in the wrapper: turns the conv into one depth-(K*K*Cin) contraction
    # and keeps Cin=3 off the kernel's lane dimension. bf16 operands for the MXU.
    x1 = _im2col_nhwc(x, K, P).reshape(N * H * W, K * K * Cin).astype(jnp.bfloat16)

    # Tap-major weight matrices (rows = (dy*K+dx)*Cin_layer + cin), bf16 operands.
    w1 = jnp.transpose(p["w1"], (2, 3, 1, 0)).reshape(K * K * Cin, C1).astype(jnp.bfloat16)
    w2 = jnp.transpose(p["w2"], (2, 3, 1, 0)).reshape(K * K, C1, C2).astype(jnp.bfloat16)

    # Inference BN folded to per-channel scale/shift; conv bias folded into the shift
    # (valid because maxpool commutes with a per-channel additive constant).
    s1 = (p["g1"] / jnp.sqrt(p["v1"] + eps)).astype(jnp.float32)
    t1 = (p["be1"] + (p["b1"] - p["m1"]) * s1).astype(jnp.float32)
    s2 = (p["g2"] / jnp.sqrt(p["v2"] + eps)).astype(jnp.float32)
    t2 = (p["be2"] + (p["b2"] - p["m2"]) * s2).astype(jnp.float32)

    # Split the batch over at most two grid steps (so v7x's two TensorCores both get work);
    # everything else is batched into a single block to amortize per-step overhead.
    G = 2 if (N % 2 == 0 and N >= 2) else 1
    NB = N // G

    kernel = functools.partial(_feature_kernel, NB=NB, H=H, W=W, K=K, C1=C1, C2=C2)
    out = pl.pallas_call(
        kernel,
        out_shape=jax.ShapeDtypeStruct((N, Ho2, Wo2, C2), jnp.float32),
        grid=(G,),
        in_specs=[
            pl.BlockSpec((NB * H * W, K * K * Cin), lambda g: (g, 0)),
            pl.BlockSpec((K * K * Cin, C1), lambda g: (0, 0)),
            pl.BlockSpec((1, C1), lambda g: (0, 0)),
            pl.BlockSpec((1, C1), lambda g: (0, 0)),
            pl.BlockSpec((K * K, C1, C2), lambda g: (0, 0, 0)),
            pl.BlockSpec((1, C2), lambda g: (0, 0)),
            pl.BlockSpec((1, C2), lambda g: (0, 0)),
        ],
        out_specs=pl.BlockSpec((NB, Ho2, Wo2, C2), lambda g: (g, 0, 0, 0)),
        scratch_shapes=[
            pltpu.VMEM((NB, Ho + 2 * P, _W_LPAD + Wo + P, C1), jnp.float32),
        ],
        compiler_params=pltpu.CompilerParams(dimension_semantics=("parallel",)),
    )(x1, w1, s1.reshape(1, C1), t1.reshape(1, C1),
      w2, s2.reshape(1, C2), t2.reshape(1, C2))

    return jnp.transpose(out, (0, 3, 1, 2))                          # NHWC -> NCHW


# ---------- pure-JAX reference (same bf16-operand / f32-accumulate precision) ----------
def _ref_block(x, w_oihw, b, gamma, beta, mean, var, eps=1e-5):
    w_hwio = jnp.transpose(w_oihw, (2, 3, 1, 0)).astype(jnp.bfloat16)
    y = lax.conv_general_dilated(
        x.astype(jnp.bfloat16), w_hwio, (1, 1), ((2, 2), (2, 2)),
        dimension_numbers=("NHWC", "HWIO", "NHWC"),
        preferred_element_type=jnp.float32)
    y = y + b
    y = lax.reduce_window(y, -jnp.inf, lax.max, (1, 2, 2, 1), (1, 2, 2, 1), "VALID")
    scale = gamma / jnp.sqrt(var + eps)
    return jnp.maximum(y * scale + (beta - mean * scale), 0.0)


def _ref_forward(img_nchw, p):
    x = jnp.transpose(img_nchw, (0, 2, 3, 1)).astype(jnp.float32)
    x = _ref_block(x, p["w1"], p["b1"], p["g1"], p["be1"], p["m1"], p["v1"])
    x = _ref_block(x, p["w2"], p["b2"], p["g2"], p["be2"], p["m2"], p["v2"])
    return jnp.transpose(x, (0, 3, 1, 2))


if __name__ == "__main__":
    key = jax.random.PRNGKey(0)
    ks = jax.random.split(key, 16)

    N, Cin, H, W = 2, 3, 16, 16
    img = jax.random.normal(ks[0], (N, Cin, H, W), jnp.float32)

    params = {
        # layer 1: Conv2d(3, 64, 5) + BatchNorm2d(64)
        "w1": 0.1 * jax.random.normal(ks[1], (64, 3, 5, 5), jnp.float32),
        "b1": 0.1 * jax.random.normal(ks[2], (64,), jnp.float32),
        "g1": 1.0 + 0.1 * jax.random.normal(ks[3], (64,), jnp.float32),
        "be1": 0.1 * jax.random.normal(ks[4], (64,), jnp.float32),
        "m1": 0.1 * jax.random.normal(ks[5], (64,), jnp.float32),
        "v1": jax.random.uniform(ks[6], (64,), jnp.float32, 0.5, 1.5),
        # layer 2: Conv2d(64, 128, 5) + BatchNorm2d(128)
        "w2": 0.05 * jax.random.normal(ks[7], (128, 64, 5, 5), jnp.float32),
        "b2": 0.1 * jax.random.normal(ks[8], (128,), jnp.float32),
        "g2": 1.0 + 0.1 * jax.random.normal(ks[9], (128,), jnp.float32),
        "be2": 0.1 * jax.random.normal(ks[10], (128,), jnp.float32),
        "m2": 0.1 * jax.random.normal(ks[11], (128,), jnp.float32),
        "v2": jax.random.uniform(ks[12], (128,), jnp.float32, 0.5, 1.5),
    }

    out = jax.block_until_ready(jax.jit(feature_forward)(img, params))
    assert out.shape == (N, 128, H // 4, W // 4), out.shape

    ref = jax.block_until_ready(_ref_forward(img, params))
    max_err = float(np.max(np.abs(np.asarray(out) - np.asarray(ref))))
    assert np.allclose(np.asarray(out), np.asarray(ref), rtol=1e-2, atol=1e-2), max_err

    print("KERNEL_OK")
</pallas_src>

<mosaic_0001>
module attributes {stable_mosaic.version = 11 : i64} {
  func.func @_feature_kernel(%arg0: i32, %arg1: memref<256x75xbf16, #tpu.memory_space<vmem>>, %arg2: memref<75x64xbf16, #tpu.memory_space<vmem>>, %arg3: memref<1x64xf32, #tpu.memory_space<vmem>>, %arg4: memref<1x64xf32, #tpu.memory_space<vmem>>, %arg5: memref<25x64x128xbf16, #tpu.memory_space<vmem>>, %arg6: memref<1x128xf32, #tpu.memory_space<vmem>>, %arg7: memref<1x128xf32, #tpu.memory_space<vmem>>, %arg8: memref<1x4x4x128xf32, #tpu.memory_space<vmem>>, %arg9: memref<1x12x18x64xf32, #tpu.memory_space<vmem>>) attributes {dimension_semantics = [#tpu.dimension_semantics<parallel>], iteration_bounds = array<i64: 2>, scalar_prefetch = 0 : i64, scratch_operands = 1 : i64, tpu.core_type = #tpu.core_type<tc>, window_params = [{transform_indices = @transform_0, window_bounds = array<i64: 256, 75>}, {pipeline_mode = #tpu.pipeline_mode<synchronous>, transform_indices = @transform_1, window_bounds = array<i64: 75, 64>}, {pipeline_mode = #tpu.pipeline_mode<synchronous>, transform_indices = @transform_2, window_bounds = array<i64: 1, 64>}, {pipeline_mode = #tpu.pipeline_mode<synchronous>, transform_indices = @transform_3, window_bounds = array<i64: 1, 64>}, {pipeline_mode = #tpu.pipeline_mode<synchronous>, transform_indices = @transform_4, window_bounds = array<i64: 25, 64, 128>}, {pipeline_mode = #tpu.pipeline_mode<synchronous>, transform_indices = @transform_5, window_bounds = array<i64: 1, 128>}, {pipeline_mode = #tpu.pipeline_mode<synchronous>, transform_indices = @transform_6, window_bounds = array<i64: 1, 128>}, {transform_indices = @transform_7, window_bounds = array<i64: 1, 4, 4, 128>}]} {
    %c0 = arith.constant 0 : index
    %c0_0 = arith.constant 0 : index
    %0 = vector.load %arg1[%c0, %c0_0] : memref<256x75xbf16, #tpu.memory_space<vmem>>, vector<256x75xbf16>
    %c0_1 = arith.constant 0 : index
    %c0_2 = arith.constant 0 : index
    %1 = vector.load %arg2[%c0_1, %c0_2] : memref<75x64xbf16, #tpu.memory_space<vmem>>, vector<75x64xbf16>
    %cst = arith.constant dense<0.000000e+00> : vector<256x64xf32>
    %2 = tpu.matmul %0, %1, %cst {dimension_numbers = #tpu.dot_dimension_numbers<[1], [0], [0], [1], [0, 0, 1, 1], [], []>} : vector<256x75xbf16>, vector<75x64xbf16>, vector<256x64xf32> -> vector<256x64xf32>
    %3 = vector.shape_cast %2 : vector<256x64xf32> to vector<16x8x2x64xf32>
    %cst_3 = arith.constant dense<0xFF800000> : vector<16x8x64xf32>
    %4 = vector.multi_reduction <maximumf>, %3, %cst_3 [2] : vector<16x8x2x64xf32> to vector<16x8x64xf32>
    %5 = vector.shape_cast %4 : vector<16x8x64xf32> to vector<8x2x8x64xf32>
    %cst_4 = arith.constant dense<0xFF800000> : vector<8x8x64xf32>
    %6 = vector.multi_reduction <maximumf>, %5, %cst_4 [1] : vector<8x2x8x64xf32> to vector<8x8x64xf32>
    %c0_5 = arith.constant 0 : index
    %c0_6 = arith.constant 0 : index
    %7 = vector.load %arg3[%c0_5, %c0_6] : memref<1x64xf32, #tpu.memory_space<vmem>>, vector<1x64xf32>
    %8 = vector.shape_cast %7 : vector<1x64xf32> to vector<1x1x64xf32>
    %9 = vector.broadcast %8 : vector<1x1x64xf32> to vector<8x8x64xf32>
    %10 = arith.mulf %6, %9 : vector<8x8x64xf32>
    %c0_7 = arith.constant 0 : index
    %c0_8 = arith.constant 0 : index
    %11 = vector.load %arg4[%c0_7, %c0_8] : memref<1x64xf32, #tpu.memory_space<vmem>>, vector<1x64xf32>
    %12 = vector.shape_cast %11 : vector<1x64xf32> to vector<1x1x64xf32>
    %13 = vector.broadcast %12 : vector<1x1x64xf32> to vector<8x8x64xf32>
    %14 = arith.addf %10, %13 : vector<8x8x64xf32>
    %cst_9 = arith.constant 0.000000e+00 : f32
    %15 = vector.broadcast %cst_9 : f32 to vector<8x8x64xf32>
    %16 = arith.maximumf %14, %15 : vector<8x8x64xf32>
    %cst_10 = arith.constant 0.000000e+00 : f32
    %17 = vector.broadcast %cst_10 : f32 to vector<1x12x18x64xf32>
    %c0_11 = arith.constant 0 : index
    %c0_12 = arith.constant 0 : index
    %c0_13 = arith.constant 0 : index
    %c0_14 = arith.constant 0 : index
    %18 = vector.load %arg9[%c0_11, %c0_12, %c0_13, %c0_14] : memref<1x12x18x64xf32, #tpu.memory_space<vmem>>, vector<1x12x18x64xf32>
    tpu.vector_store %arg9[%c0_11, %c0_12, %c0_13, %c0_14], %17 {strides = array<i32>} : memref<1x12x18x64xf32, #tpu.memory_space<vmem>>, vector<1x12x18x64xf32>,
    %19 = vector.shape_cast %16 : vector<8x8x64xf32> to vector<1x8x8x64xf32>
    %c0_15 = arith.constant 0 : index
    %c2 = arith.constant 2 : index
    %c8 = arith.constant 8 : index
    %c0_16 = arith.constant 0 : index
    %20 = vector.load %arg9[%c0_15, %c2, %c8, %c0_16] : memref<1x12x18x64xf32, #tpu.memory_space<vmem>>, vector<1x8x8x64xf32>
    tpu.vector_store %arg9[%c0_15, %c2, %c8, %c0_16], %19 {strides = array<i32>} : memref<1x12x18x64xf32, #tpu.memory_space<vmem>>, vector<1x8x8x64xf32>,
    %cst_17 = arith.constant 0.000000e+00 : f32
    %21 = vector.broadcast %cst_17 : f32 to vector<64x128xf32>
    %c0_18 = arith.constant 0 : index
    %c0_19 = arith.constant 0 : index
    %c6 = arith.constant 6 : index
    %c0_20 = arith.constant 0 : index
    %22 = vector.load %arg9[%c0_18, %c0_19, %c6, %c0_20] : memref<1x12x18x64xf32, #tpu.memory_space<vmem>>, vector<1x8x8x64xf32>
    %23 = vector.shape_cast %22 : vector<1x8x8x64xf32> to vector<64x64xf32>
    %24 = arith.truncf %23 : vector<64x64xf32> to vector<64x64xbf16>
    %c0_21 = arith.constant 0 : index
    %c0_22 = arith.constant 0 : index
    %c0_23 = arith.constant 0 : index
    %25 = vector.load %arg5[%c0_21, %c0_22, %c0_23] : memref<25x64x128xbf16, #tpu.memory_space<vmem>>, vector<1x64x128xbf16>
    %26 = vector.shape_cast %25 : vector<1x64x128xbf16> to vector<64x128xbf16>
    %cst_24 = arith.constant dense<0.000000e+00> : vector<64x128xf32>
    %27 = tpu.matmul %24, %26, %cst_24 {dimension_numbers = #tpu.dot_dimension_numbers<[1], [0], [0], [1], [0, 0, 1, 1], [], []>} : vector<64x64xbf16>, vector<64x128xbf16>, vector<64x128xf32> -> vector<64x128xf32>
    %28 = arith.addf %21, %27 : vector<64x128xf32>
    %c0_25 = arith.constant 0 : index
    %c0_26 = arith.constant 0 : index
    %c7 = arith.constant 7 : index
    %c0_27 = arith.constant 0 : index
    %29 = vector.load %arg9[%c0_25, %c0_26, %c7, %c0_27] : memref<1x12x18x64xf32, #tpu.memory_space<vmem>>, vector<1x8x8x64xf32>
    %30 = vector.shape_cast %29 : vector<1x8x8x64xf32> to vector<64x64xf32>
    %31 = arith.truncf %30 : vector<64x64xf32> to vector<64x64xbf16>
    %c1 = arith.constant 1 : index
    %c0_28 = arith.constant 0 : index
    %c0_29 = arith.constant 0 : index
    %32 = vector.load %arg5[%c1, %c0_28, %c0_29] : memref<25x64x128xbf16, #tpu.memory_space<vmem>>, vector<1x64x128xbf16>
    %33 = vector.shape_cast %32 : vector<1x64x128xbf16> to vector<64x128xbf16>
    %cst_30 = arith.constant dense<0.000000e+00> : vector<64x128xf32>
    %34 = tpu.matmul %31, %33, %cst_30 {dimension_numbers = #tpu.dot_dimension_numbers<[1], [0], [0], [1], [0, 0, 1, 1], [], []>} : vector<64x64xbf16>, vector<64x128xbf16>, vector<64x128xf32> -> vector<64x128xf32>
    %35 = arith.addf %28, %34 : vector<64x128xf32>
    %c0_31 = arith.constant 0 : index
    %c0_32 = arith.constant 0 : index
    %c8_33 = arith.constant 8 : index
    %c0_34 = arith.constant 0 : index
    %36 = vector.load %arg9[%c0_31, %c0_32, %c8_33, %c0_34] : memref<1x12x18x64xf32, #tpu.memory_space<vmem>>, vector<1x8x8x64xf32>
    %37 = vector.shape_cast %36 : vector<1x8x8x64xf32> to vector<64x64xf32>
    %38 = arith.truncf %37 : vector<64x64xf32> to vector<64x64xbf16>
    %c2_35 = arith.constant 2 : index
    %c0_36 = arith.constant 0 : index
    %c0_37 = arith.constant 0 : index
    %39 = vector.load %arg5[%c2_35, %c0_36, %c0_37] : memref<25x64x128xbf16, #tpu.memory_space<vmem>>, vector<1x64x128xbf16>
    %40 = vector.shape_cast %39 : vector<1x64x128xbf16> to vector<64x128xbf16>
    %cst_38 = arith.constant dense<0.000000e+00> : vector<64x128xf32>
    %41 = tpu.matmul %38, %40, %cst_38 {dimension_numbers = #tpu.dot_dimension_numbers<[1], [0], [0], [1], [0, 0, 1, 1], [], []>} : vector<64x64xbf16>, vector<64x128xbf16>, vector<64x128xf32> -> vector<64x128xf32>
    %42 = arith.addf %35, %41 : vector<64x128xf32>
    %c0_39 = arith.constant 0 : index
    %c0_40 = arith.constant 0 : index
    %c9 = arith.constant 9 : index
    %c0_41 = arith.constant 0 : index
    %43 = vector.load %arg9[%c0_39, %c0_40, %c9, %c0_41] : memref<1x12x18x64xf32, #tpu.memory_space<vmem>>, vector<1x8x8x64xf32>
    %44 = vector.shape_cast %43 : vector<1x8x8x64xf32> to vector<64x64xf32>
    %45 = arith.truncf %44 : vector<64x64xf32> to vector<64x64xbf16>
    %c3 = arith.constant 3 : index
    %c0_42 = arith.constant 0 : index
    %c0_43 = arith.constant 0 : index
    %46 = vector.load %arg5[%c3, %c0_42, %c0_43] : memref<25x64x128xbf16, #tpu.memory_space<vmem>>, vector<1x64x128xbf16>
    %47 = vector.shape_cast %46 : vector<1x64x128xbf16> to vector<64x128xbf16>
    %cst_44 = arith.constant dense<0.000000e+00> : vector<64x128xf32>
    %48 = tpu.matmul %45, %47, %cst_44 {dimension_numbers = #tpu.dot_dimension_numbers<[1], [0], [0], [1], [0, 0, 1, 1], [], []>} : vector<64x64xbf16>, vector<64x128xbf16>, vector<64x128xf32> -> vector<64x128xf32>
    %49 = arith.addf %42, %48 : vector<64x128xf32>
    %c0_45 = arith.constant 0 : index
    %c0_46 = arith.constant 0 : index
    %c10 = arith.constant 10 : index
    %c0_47 = arith.constant 0 : index
    %50 = vector.load %arg9[%c0_45, %c0_46, %c10, %c0_47] : memref<1x12x18x64xf32, #tpu.memory_space<vmem>>, vector<1x8x8x64xf32>
    %51 = vector.shape_cast %50 : vector<1x8x8x64xf32> to vector<64x64xf32>
    %52 = arith.truncf %51 : vector<64x64xf32> to vector<64x64xbf16>
    %c4 = arith.constant 4 : index
    %c0_48 = arith.constant 0 : index
    %c0_49 = arith.constant 0 : index
    %53 = vector.load %arg5[%c4, %c0_48, %c0_49] : memref<25x64x128xbf16, #tpu.memory_space<vmem>>, vector<1x64x128xbf16>
    %54 = vector.shape_cast %53 : vector<1x64x128xbf16> to vector<64x128xbf16>
    %cst_50 = arith.constant dense<0.000000e+00> : vector<64x128xf32>
    %55 = tpu.matmul %52, %54, %cst_50 {dimension_numbers = #tpu.dot_dimension_numbers<[1], [0], [0], [1], [0, 0, 1, 1], [], []>} : vector<64x64xbf16>, vector<64x128xbf16>, vector<64x128xf32> -> vector<64x128xf32>
    %56 = arith.addf %49, %55 : vector<64x128xf32>
    %c0_51 = arith.constant 0 : index
    %c1_52 = arith.constant 1 : index
    %c6_53 = arith.constant 6 : index
    %c0_54 = arith.constant 0 : index
    %57 = vector.load %arg9[%c0_51, %c1_52, %c6_53, %c0_54] : memref<1x12x18x64xf32, #tpu.memory_space<vmem>>, vector<1x8x8x64xf32>
    %58 = vector.shape_cast %57 : vector<1x8x8x64xf32> to vector<64x64xf32>
    %59 = arith.truncf %58 : vector<64x64xf32> to vector<64x64xbf16>
    %c5 = arith.constant 5 : index
    %c0_55 = arith.constant 0 : index
    %c0_56 = arith.constant 0 : index
    %60 = vector.load %arg5[%c5, %c0_55, %c0_56] : memref<25x64x128xbf16, #tpu.memory_space<vmem>>, vector<1x64x128xbf16>
    %61 = vector.shape_cast %60 : vector<1x64x128xbf16> to vector<64x128xbf16>
    %cst_57 = arith.constant dense<0.000000e+00> : vector<64x128xf32>
    %62 = tpu.matmul %59, %61, %cst_57 {dimension_numbers = #tpu.dot_dimension_numbers<[1], [0], [0], [1], [0, 0, 1, 1], [], []>} : vector<64x64xbf16>, vector<64x128xbf16>, vector<64x128xf32> -> vector<64x128xf32>
    %63 = arith.addf %56, %62 : vector<64x128xf32>
    %c0_58 = arith.constant 0 : index
    %c1_59 = arith.constant 1 : index
    %c7_60 = arith.constant 7 : index
    %c0_61 = arith.constant 0 : index
    %64 = vector.load %arg9[%c0_58, %c1_59, %c7_60, %c0_61] : memref<1x12x18x64xf32, #tpu.memory_space<vmem>>, vector<1x8x8x64xf32>
    %65 = vector.shape_cast %64 : vector<1x8x8x64xf32> to vector<64x64xf32>
    %66 = arith.truncf %65 : vector<64x64xf32> to vector<64x64xbf16>
    %c6_62 = arith.constant 6 : index
    %c0_63 = arith.constant 0 : index
    %c0_64 = arith.constant 0 : index
    %67 = vector.load %arg5[%c6_62, %c0_63, %c0_64] : memref<25x64x128xbf16, #tpu.memory_space<vmem>>, vector<1x64x128xbf16>
    %68 = vector.shape_cast %67 : vector<1x64x128xbf16> to vector<64x128xbf16>
    %cst_65 = arith.constant dense<0.000000e+00> : vector<64x128xf32>
    %69 = tpu.matmul %66, %68, %cst_65 {dimension_numbers = #tpu.dot_dimension_numbers<[1], [0], [0], [1], [0, 0, 1, 1], [], []>} : vector<64x64xbf16>, vector<64x128xbf16>, vector<64x128xf32> -> vector<64x128xf32>
    %70 = arith.addf %63, %69 : vector<64x128xf32>
    %c0_66 = arith.constant 0 : index
    %c1_67 = arith.constant 1 : index
    %c8_68 = arith.constant 8 : index
    %c0_69 = arith.constant 0 : index
    %71 = vector.load %arg9[%c0_66, %c1_67, %c8_68, %c0_69] : memref<1x12x18x64xf32, #tpu.memory_space<vmem>>, vector<1x8x8x64xf32>
    %72 = vector.shape_cast %71 : vector<1x8x8x64xf32> to vector<64x64xf32>
    %73 = arith.truncf %72 : vector<64x64xf32> to vector<64x64xbf16>
    %c7_70 = arith.constant 7 : index
    %c0_71 = arith.constant 0 : index
    %c0_72 = arith.constant 0 : index
    %74 = vector.load %arg5[%c7_70, %c0_71, %c0_72] : memref<25x64x128xbf16, #tpu.memory_space<vmem>>, vector<1x64x128xbf16>
    %75 = vector.shape_cast %74 : vector<1x64x128xbf16> to vector<64x128xbf16>
    %cst_73 = arith.constant dense<0.000000e+00> : vector<64x128xf32>
    %76 = tpu.matmul %73, %75, %cst_73 {dimension_numbers = #tpu.dot_dimension_numbers<[1], [0], [0], [1], [0, 0, 1, 1], [], []>} : vector<64x64xbf16>, vector<64x128xbf16>, vector<64x128xf32> -> vector<64x128xf32>
    %77 = arith.addf %70, %76 : vector<64x128xf32>
    %c0_74 = arith.constant 0 : index
    %c1_75 = arith.constant 1 : index
    %c9_76 = arith.constant 9 : index
    %c0_77 = arith.constant 0 : index
    %78 = vector.load %arg9[%c0_74, %c1_75, %c9_76, %c0_77] : memref<1x12x18x64xf32, #tpu.memory_space<vmem>>, vector<1x8x8x64xf32>
    %79 = vector.shape_cast %78 : vector<1x8x8x64xf32> to vector<64x64xf32>
    %80 = arith.truncf %79 : vector<64x64xf32> to vector<64x64xbf16>
    %c8_78 = arith.constant 8 : index
    %c0_79 = arith.constant 0 : index
    %c0_80 = arith.constant 0 : index
    %81 = vector.load %arg5[%c8_78, %c0_79, %c0_80] : memref<25x64x128xbf16, #tpu.memory_space<vmem>>, vector<1x64x128xbf16>
    %82 = vector.shape_cast %81 : vector<1x64x128xbf16> to vector<64x128xbf16>
    %cst_81 = arith.constant dense<0.000000e+00> : vector<64x128xf32>
    %83 = tpu.matmul %80, %82, %cst_81 {dimension_numbers = #tpu.dot_dimension_numbers<[1], [0], [0], [1], [0, 0, 1, 1], [], []>} : vector<64x64xbf16>, vector<64x128xbf16>, vector<64x128xf32> -> vector<64x128xf32>
    %84 = arith.addf %77, %83 : vector<64x128xf32>
    %c0_82 = arith.constant 0 : index
    %c1_83 = arith.constant 1 : index
    %c10_84 = arith.constant 10 : index
    %c0_85 = arith.constant 0 : index
    %85 = vector.load %arg9[%c0_82, %c1_83, %c10_84, %c0_85] : memref<1x12x18x64xf32, #tpu.memory_space<vmem>>, vector<1x8x8x64xf32>
    %86 = vector.shape_cast %85 : vector<1x8x8x64xf32> to vector<64x64xf32>
    %87 = arith.truncf %86 : vector<64x64xf32> to vector<64x64xbf16>
    %c9_86 = arith.constant 9 : index
    %c0_87 = arith.constant 0 : index
    %c0_88 = arith.constant 0 : index
    %88 = vector.load %arg5[%c9_86, %c0_87, %c0_88] : memref<25x64x128xbf16, #tpu.memory_space<vmem>>, vector<1x64x128xbf16>
    %89 = vector.shape_cast %88 : vector<1x64x128xbf16> to vector<64x128xbf16>
    %cst_89 = arith.constant dense<0.000000e+00> : vector<64x128xf32>
    %90 = tpu.matmul %87, %89, %cst_89 {dimension_numbers = #tpu.dot_dimension_numbers<[1], [0], [0], [1], [0, 0, 1, 1], [], []>} : vector<64x64xbf16>, vector<64x128xbf16>, vector<64x128xf32> -> vector<64x128xf32>
    %91 = arith.addf %84, %90 : vector<64x128xf32>
    %c0_90 = arith.constant 0 : index
    %c2_91 = arith.constant 2 : index
    %c6_92 = arith.constant 6 : index
    %c0_93 = arith.constant 0 : index
    %92 = vector.load %arg9[%c0_90, %c2_91, %c6_92, %c0_93] : memref<1x12x18x64xf32, #tpu.memory_space<vmem>>, vector<1x8x8x64xf32>
    %93 = vector.shape_cast %92 : vector<1x8x8x64xf32> to vector<64x64xf32>
    %94 = arith.truncf %93 : vector<64x64xf32> to vector<64x64xbf16>
    %c10_94 = arith.constant 10 : index
    %c0_95 = arith.constant 0 : index
    %c0_96 = arith.constant 0 : index
    %95 = vector.load %arg5[%c10_94, %c0_95, %c0_96] : memref<25x64x128xbf16, #tpu.memory_space<vmem>>, vector<1x64x128xbf16>
    %96 = vector.shape_cast %95 : vector<1x64x128xbf16> to vector<64x128xbf16>
    %cst_97 = arith.constant dense<0.000000e+00> : vector<64x128xf32>
    %97 = tpu.matmul %94, %96, %cst_97 {dimension_numbers = #tpu.dot_dimension_numbers<[1], [0], [0], [1], [0, 0, 1, 1], [], []>} : vector<64x64xbf16>, vector<64x128xbf16>, vector<64x128xf32> -> vector<64x128xf32>
    %98 = arith.addf %91, %97 : vector<64x128xf32>
    %c0_98 = arith.constant 0 : index
    %c2_99 = arith.constant 2 : index
    %c7_100 = arith.constant 7 : index
    %c0_101 = arith.constant 0 : index
    %99 = vector.load %arg9[%c0_98, %c2_99, %c7_100, %c0_101] : memref<1x12x18x64xf32, #tpu.memory_space<vmem>>, vector<1x8x8x64xf32>
    %100 = vector.shape_cast %99 : vector<1x8x8x64xf32> to vector<64x64xf32>
    %101 = arith.truncf %100 : vector<64x64xf32> to vector<64x64xbf16>
    %c11 = arith.constant 11 : index
    %c0_102 = arith.constant 0 : index
    %c0_103 = arith.constant 0 : index
    %102 = vector.load %arg5[%c11, %c0_102, %c0_103] : memref<25x64x128xbf16, #tpu.memory_space<vmem>>, vector<1x64x128xbf16>
    %103 = vector.shape_cast %102 : vector<1x64x128xbf16> to vector<64x128xbf16>
    %cst_104 = arith.constant dense<0.000000e+00> : vector<64x128xf32>
    %104 = tpu.matmul %101, %103, %cst_104 {dimension_numbers = #tpu.dot_dimension_numbers<[1], [0], [0], [1], [0, 0, 1, 1], [], []>} : vector<64x64xbf16>, vector<64x128xbf16>, vector<64x128xf32> -> vector<64x128xf32>
    %105 = arith.addf %98, %104 : vector<64x128xf32>
    %c0_105 = arith.constant 0 : index
    %c2_106 = arith.constant 2 : index
    %c8_107 = arith.constant 8 : index
    %c0_108 = arith.constant 0 : index
    %106 = vector.load %arg9[%c0_105, %c2_106, %c8_107, %c0_108] : memref<1x12x18x64xf32, #tpu.memory_space<vmem>>, vector<1x8x8x64xf32>
    %107 = vector.shape_cast %106 : vector<1x8x8x64xf32> to vector<64x64xf32>
    %108 = arith.truncf %107 : vector<64x64xf32> to vector<64x64xbf16>
    %c12 = arith.constant 12 : index
    %c0_109 = arith.constant 0 : index
    %c0_110 = arith.constant 0 : index
    %109 = vector.load %arg5[%c12, %c0_109, %c0_110] : memref<25x64x128xbf16, #tpu.memory_space<vmem>>, vector<1x64x128xbf16>
    %110 = vector.shape_cast %109 : vector<1x64x128xbf16> to vector<64x128xbf16>
    %cst_111 = arith.constant dense<0.000000e+00> : vector<64x128xf32>
    %111 = tpu.matmul %108, %110, %cst_111 {dimension_numbers = #tpu.dot_dimension_numbers<[1], [0], [0], [1], [0, 0, 1, 1], [], []>} : vector<64x64xbf16>, vector<64x128xbf16>, vector<64x128xf32> -> vector<64x128xf32>
    %112 = arith.addf %105, %111 : vector<64x128xf32>
    %c0_112 = arith.constant 0 : index
    %c2_113 = arith.constant 2 : index
    %c9_114 = arith.constant 9 : index
    %c0_115 = arith.constant 0 : index
    %113 = vector.load %arg9[%c0_112, %c2_113, %c9_114, %c0_115] : memref<1x12x18x64xf32, #tpu.memory_space<vmem>>, vector<1x8x8x64xf32>
    %114 = vector.shape_cast %113 : vector<1x8x8x64xf32> to vector<64x64xf32>
    %115 = arith.truncf %114 : vector<64x64xf32> to vector<64x64xbf16>
    %c13 = arith.constant 13 : index
    %c0_116 = arith.constant 0 : index
    %c0_117 = arith.constant 0 : index
    %116 = vector.load %arg5[%c13, %c0_116, %c0_117] : memref<25x64x128xbf16, #tpu.memory_space<vmem>>, vector<1x64x128xbf16>
    %117 = vector.shape_cast %116 : vector<1x64x128xbf16> to vector<64x128xbf16>
    %cst_118 = arith.constant dense<0.000000e+00> : vector<64x128xf32>
    %118 = tpu.matmul %115, %117, %cst_118 {dimension_numbers = #tpu.dot_dimension_numbers<[1], [0], [0], [1], [0, 0, 1, 1], [], []>} : vector<64x64xbf16>, vector<64x128xbf16>, vector<64x128xf32> -> vector<64x128xf32>
    %119 = arith.addf %112, %118 : vector<64x128xf32>
    %c0_119 = arith.constant 0 : index
    %c2_120 = arith.constant 2 : index
    %c10_121 = arith.constant 10 : index
    %c0_122 = arith.constant 0 : index
    %120 = vector.load %arg9[%c0_119, %c2_120, %c10_121, %c0_122] : memref<1x12x18x64xf32, #tpu.memory_space<vmem>>, vector<1x8x8x64xf32>
    %121 = vector.shape_cast %120 : vector<1x8x8x64xf32> to vector<64x64xf32>
    %122 = arith.truncf %121 : vector<64x64xf32> to vector<64x64xbf16>
    %c14 = arith.constant 14 : index
    %c0_123 = arith.constant 0 : index
    %c0_124 = arith.constant 0 : index
    %123 = vector.load %arg5[%c14, %c0_123, %c0_124] : memref<25x64x128xbf16, #tpu.memory_space<vmem>>, vector<1x64x128xbf16>
    %124 = vector.shape_cast %123 : vector<1x64x128xbf16> to vector<64x128xbf16>
    %cst_125 = arith.constant dense<0.000000e+00> : vector<64x128xf32>
    %125 = tpu.matmul %122, %124, %cst_125 {dimension_numbers = #tpu.dot_dimension_numbers<[1], [0], [0], [1], [0, 0, 1, 1], [], []>} : vector<64x64xbf16>, vector<64x128xbf16>, vector<64x128xf32> -> vector<64x128xf32>
    %126 = arith.addf %119, %125 : vector<64x128xf32>
    %c0_126 = arith.constant 0 : index
    %c3_127 = arith.constant 3 : index
    %c6_128 = arith.constant 6 : index
    %c0_129 = arith.constant 0 : index
    %127 = vector.load %arg9[%c0_126, %c3_127, %c6_128, %c0_129] : memref<1x12x18x64xf32, #tpu.memory_space<vmem>>, vector<1x8x8x64xf32>
    %128 = vector.shape_cast %127 : vector<1x8x8x64xf32> to vector<64x64xf32>
    %129 = arith.truncf %128 : vector<64x64xf32> to vector<64x64xbf16>
    %c15 = arith.constant 15 : index
    %c0_130 = arith.constant 0 : index
    %c0_131 = arith.constant 0 : index
    %130 = vector.load %arg5[%c15, %c0_130, %c0_131] : memref<25x64x128xbf16, #tpu.memory_space<vmem>>, vector<1x64x128xbf16>
    %131 = vector.shape_cast %130 : vector<1x64x128xbf16> to vector<64x128xbf16>
    %cst_132 = arith.constant dense<0.000000e+00> : vector<64x128xf32>
    %132 = tpu.matmul %129, %131, %cst_132 {dimension_numbers = #tpu.dot_dimension_numbers<[1], [0], [0], [1], [0, 0, 1, 1], [], []>} : vector<64x64xbf16>, vector<64x128xbf16>, vector<64x128xf32> -> vector<64x128xf32>
    %133 = arith.addf %126, %132 : vector<64x128xf32>
    %c0_133 = arith.constant 0 : index
    %c3_134 = arith.constant 3 : index
    %c7_135 = arith.constant 7 : index
    %c0_136 = arith.constant 0 : index
    %134 = vector.load %arg9[%c0_133, %c3_134, %c7_135, %c0_136] : memref<1x12x18x64xf32, #tpu.memory_space<vmem>>, vector<1x8x8x64xf32>
    %135 = vector.shape_cast %134 : vector<1x8x8x64xf32> to vector<64x64xf32>
    %136 = arith.truncf %135 : vector<64x64xf32> to vector<64x64xbf16>
    %c16 = arith.constant 16 : index
    %c0_137 = arith.constant 0 : index
    %c0_138 = arith.constant 0 : index
    %137 = vector.load %arg5[%c16, %c0_137, %c0_138] : memref<25x64x128xbf16, #tpu.memory_space<vmem>>, vector<1x64x128xbf16>
    %138 = vector.shape_cast %137 : vector<1x64x128xbf16> to vector<64x128xbf16>
    %cst_139 = arith.constant dense<0.000000e+00> : vector<64x128xf32>
    %139 = tpu.matmul %136, %138, %cst_139 {dimension_numbers = #tpu.dot_dimension_numbers<[1], [0], [0], [1], [0, 0, 1, 1], [], []>} : vector<64x64xbf16>, vector<64x128xbf16>, vector<64x128xf32> -> vector<64x128xf32>
    %140 = arith.addf %133, %139 : vector<64x128xf32>
    %c0_140 = arith.constant 0 : index
    %c3_141 = arith.constant 3 : index
    %c8_142 = arith.constant 8 : index
    %c0_143 = arith.constant 0 : index
    %141 = vector.load %arg9[%c0_140, %c3_141, %c8_142, %c0_143] : memref<1x12x18x64xf32, #tpu.memory_space<vmem>>, vector<1x8x8x64xf32>
    %142 = vector.shape_cast %141 : vector<1x8x8x64xf32> to vector<64x64xf32>
    %143 = arith.truncf %142 : vector<64x64xf32> to vector<64x64xbf16>
    %c17 = arith.constant 17 : index
    %c0_144 = arith.constant 0 : index
    %c0_145 = arith.constant 0 : index
    %144 = vector.load %arg5[%c17, %c0_144, %c0_145] : memref<25x64x128xbf16, #tpu.memory_space<vmem>>, vector<1x64x128xbf16>
    %145 = vector.shape_cast %144 : vector<1x64x128xbf16> to vector<64x128xbf16>
    %cst_146 = arith.constant dense<0.000000e+00> : vector<64x128xf32>
    %146 = tpu.matmul %143, %145, %cst_146 {dimension_numbers = #tpu.dot_dimension_numbers<[1], [0], [0], [1], [0, 0, 1, 1], [], []>} : vector<64x64xbf16>, vector<64x128xbf16>, vector<64x128xf32> -> vector<64x128xf32>
    %147 = arith.addf %140, %146 : vector<64x128xf32>
    %c0_147 = arith.constant 0 : index
    %c3_148 = arith.constant 3 : index
    %c9_149 = arith.constant 9 : index
    %c0_150 = arith.constant 0 : index
    %148 = vector.load %arg9[%c0_147, %c3_148, %c9_149, %c0_150] : memref<1x12x18x64xf32, #tpu.memory_space<vmem>>, vector<1x8x8x64xf32>
    %149 = vector.shape_cast %148 : vector<1x8x8x64xf32> to vector<64x64xf32>
    %150 = arith.truncf %149 : vector<64x64xf32> to vector<64x64xbf16>
    %c18 = arith.constant 18 : index
    %c0_151 = arith.constant 0 : index
    %c0_152 = arith.constant 0 : index
    %151 = vector.load %arg5[%c18, %c0_151, %c0_152] : memref<25x64x128xbf16, #tpu.memory_space<vmem>>, vector<1x64x128xbf16>
    %152 = vector.shape_cast %151 : vector<1x64x128xbf16> to vector<64x128xbf16>
    %cst_153 = arith.constant dense<0.000000e+00> : vector<64x128xf32>
    %153 = tpu.matmul %150, %152, %cst_153 {dimension_numbers = #tpu.dot_dimension_numbers<[1], [0], [0], [1], [0, 0, 1, 1], [], []>} : vector<64x64xbf16>, vector<64x128xbf16>, vector<64x128xf32> -> vector<64x128xf32>
    %154 = arith.addf %147, %153 : vector<64x128xf32>
    %c0_154 = arith.constant 0 : index
    %c3_155 = arith.constant 3 : index
    %c10_156 = arith.constant 10 : index
    %c0_157 = arith.constant 0 : index
    %155 = vector.load %arg9[%c0_154, %c3_155, %c10_156, %c0_157] : memref<1x12x18x64xf32, #tpu.memory_space<vmem>>, vector<1x8x8x64xf32>
    %156 = vector.shape_cast %155 : vector<1x8x8x64xf32> to vector<64x64xf32>
    %157 = arith.truncf %156 : vector<64x64xf32> to vector<64x64xbf16>
    %c19 = arith.constant 19 : index
    %c0_158 = arith.constant 0 : index
    %c0_159 = arith.constant 0 : index
    %158 = vector.load %arg5[%c19, %c0_158, %c0_159] : memref<25x64x128xbf16, #tpu.memory_space<vmem>>, vector<1x64x128xbf16>
    %159 = vector.shape_cast %158 : vector<1x64x128xbf16> to vector<64x128xbf16>
    %cst_160 = arith.constant dense<0.000000e+00> : vector<64x128xf32>
    %160 = tpu.matmul %157, %159, %cst_160 {dimension_numbers = #tpu.dot_dimension_numbers<[1], [0], [0], [1], [0, 0, 1, 1], [], []>} : vector<64x64xbf16>, vector<64x128xbf16>, vector<64x128xf32> -> vector<64x128xf32>
    %161 = arith.addf %154, %160 : vector<64x128xf32>
    %c0_161 = arith.constant 0 : index
    %c4_162 = arith.constant 4 : index
    %c6_163 = arith.constant 6 : index
    %c0_164 = arith.constant 0 : index
    %162 = vector.load %arg9[%c0_161, %c4_162, %c6_163, %c0_164] : memref<1x12x18x64xf32, #tpu.memory_space<vmem>>, vector<1x8x8x64xf32>
    %163 = vector.shape_cast %162 : vector<1x8x8x64xf32> to vector<64x64xf32>
    %164 = arith.truncf %163 : vector<64x64xf32> to vector<64x64xbf16>
    %c20 = arith.constant 20 : index
    %c0_165 = arith.constant 0 : index
    %c0_166 = arith.constant 0 : index
    %165 = vector.load %arg5[%c20, %c0_165, %c0_166] : memref<25x64x128xbf16, #tpu.memory_space<vmem>>, vector<1x64x128xbf16>
    %166 = vector.shape_cast %165 : vector<1x64x128xbf16> to vector<64x128xbf16>
    %cst_167 = arith.constant dense<0.000000e+00> : vector<64x128xf32>
    %167 = tpu.matmul %164, %166, %cst_167 {dimension_numbers = #tpu.dot_dimension_numbers<[1], [0], [0], [1], [0, 0, 1, 1], [], []>} : vector<64x64xbf16>, vector<64x128xbf16>, vector<64x128xf32> -> vector<64x128xf32>
    %168 = arith.addf %161, %167 : vector<64x128xf32>
    %c0_168 = arith.constant 0 : index
    %c4_169 = arith.constant 4 : index
    %c7_170 = arith.constant 7 : index
    %c0_171 = arith.constant 0 : index
    %169 = vector.load %arg9[%c0_168, %c4_169, %c7_170, %c0_171] : memref<1x12x18x64xf32, #tpu.memory_space<vmem>>, vector<1x8x8x64xf32>
    %170 = vector.shape_cast %169 : vector<1x8x8x64xf32> to vector<64x64xf32>
    %171 = arith.truncf %170 : vector<64x64xf32> to vector<64x64xbf16>
    %c21 = arith.constant 21 : index
    %c0_172 = arith.constant 0 : index
    %c0_173 = arith.constant 0 : index
    %172 = vector.load %arg5[%c21, %c0_172, %c0_173] : memref<25x64x128xbf16, #tpu.memory_space<vmem>>, vector<1x64x128xbf16>
    %173 = vector.shape_cast %172 : vector<1x64x128xbf16> to vector<64x128xbf16>
    %cst_174 = arith.constant dense<0.000000e+00> : vector<64x128xf32>
    %174 = tpu.matmul %171, %173, %cst_174 {dimension_numbers = #tpu.dot_dimension_numbers<[1], [0], [0], [1], [0, 0, 1, 1], [], []>} : vector<64x64xbf16>, vector<64x128xbf16>, vector<64x128xf32> -> vector<64x128xf32>
    %175 = arith.addf %168, %174 : vector<64x128xf32>
    %c0_175 = arith.constant 0 : index
    %c4_176 = arith.constant 4 : index
    %c8_177 = arith.constant 8 : index
    %c0_178 = arith.constant 0 : index
    %176 = vector.load %arg9[%c0_175, %c4_176, %c8_177, %c0_178] : memref<1x12x18x64xf32, #tpu.memory_space<vmem>>, vector<1x8x8x64xf32>
    %177 = vector.shape_cast %176 : vector<1x8x8x64xf32> to vector<64x64xf32>
    %178 = arith.truncf %177 : vector<64x64xf32> to vector<64x64xbf16>
    %c22 = arith.constant 22 : index
    %c0_179 = arith.constant 0 : index
    %c0_180 = arith.constant 0 : index
    %179 = vector.load %arg5[%c22, %c0_179, %c0_180] : memref<25x64x128xbf16, #tpu.memory_space<vmem>>, vector<1x64x128xbf16>
    %180 = vector.shape_cast %179 : vector<1x64x128xbf16> to vector<64x128xbf16>
    %cst_181 = arith.constant dense<0.000000e+00> : vector<64x128xf32>
    %181 = tpu.matmul %178, %180, %cst_181 {dimension_numbers = #tpu.dot_dimension_numbers<[1], [0], [0], [1], [0, 0, 1, 1], [], []>} : vector<64x64xbf16>, vector<64x128xbf16>, vector<64x128xf32> -> vector<64x128xf32>
    %182 = arith.addf %175, %181 : vector<64x128xf32>
    %c0_182 = arith.constant 0 : index
    %c4_183 = arith.constant 4 : index
    %c9_184 = arith.constant 9 : index
    %c0_185 = arith.constant 0 : index
    %183 = vector.load %arg9[%c0_182, %c4_183, %c9_184, %c0_185] : memref<1x12x18x64xf32, #tpu.memory_space<vmem>>, vector<1x8x8x64xf32>
    %184 = vector.shape_cast %183 : vector<1x8x8x64xf32> to vector<64x64xf32>
    %185 = arith.truncf %184 : vector<64x64xf32> to vector<64x64xbf16>
    %c23 = arith.constant 23 : index
    %c0_186 = arith.constant 0 : index
    %c0_187 = arith.constant 0 : index
    %186 = vector.load %arg5[%c23, %c0_186, %c0_187] : memref<25x64x128xbf16, #tpu.memory_space<vmem>>, vector<1x64x128xbf16>
    %187 = vector.shape_cast %186 : vector<1x64x128xbf16> to vector<64x128xbf16>
    %cst_188 = arith.constant dense<0.000000e+00> : vector<64x128xf32>
    %188 = tpu.matmul %185, %187, %cst_188 {dimension_numbers = #tpu.dot_dimension_numbers<[1], [0], [0], [1], [0, 0, 1, 1], [], []>} : vector<64x64xbf16>, vector<64x128xbf16>, vector<64x128xf32> -> vector<64x128xf32>
    %189 = arith.addf %182, %188 : vector<64x128xf32>
    %c0_189 = arith.constant 0 : index
    %c4_190 = arith.constant 4 : index
    %c10_191 = arith.constant 10 : index
    %c0_192 = arith.constant 0 : index
    %190 = vector.load %arg9[%c0_189, %c4_190, %c10_191, %c0_192] : memref<1x12x18x64xf32, #tpu.memory_space<vmem>>, vector<1x8x8x64xf32>
    %191 = vector.shape_cast %190 : vector<1x8x8x64xf32> to vector<64x64xf32>
    %192 = arith.truncf %191 : vector<64x64xf32> to vector<64x64xbf16>
    %c24 = arith.constant 24 : index
    %c0_193 = arith.constant 0 : index
    %c0_194 = arith.constant 0 : index
    %193 = vector.load %arg5[%c24, %c0_193, %c0_194] : memref<25x64x128xbf16, #tpu.memory_space<vmem>>, vector<1x64x128xbf16>
    %194 = vector.shape_cast %193 : vector<1x64x128xbf16> to vector<64x128xbf16>
    %cst_195 = arith.constant dense<0.000000e+00> : vector<64x128xf32>
    %195 = tpu.matmul %192, %194, %cst_195 {dimension_numbers = #tpu.dot_dimension_numbers<[1], [0], [0], [1], [0, 0, 1, 1], [], []>} : vector<64x64xbf16>, vector<64x128xbf16>, vector<64x128xf32> -> vector<64x128xf32>
    %196 = arith.addf %189, %195 : vector<64x128xf32>
    %197 = vector.shape_cast %196 : vector<64x128xf32> to vector<8x4x2x128xf32>
    %cst_196 = arith.constant dense<0xFF800000> : vector<8x4x128xf32>
    %198 = vector.multi_reduction <maximumf>, %197, %cst_196 [2] : vector<8x4x2x128xf32> to vector<8x4x128xf32>
    %199 = vector.shape_cast %198 : vector<8x4x128xf32> to vector<4x2x4x128xf32>
    %cst_197 = arith.constant dense<0xFF800000> : vector<4x4x128xf32>
    %200 = vector.multi_reduction <maximumf>, %199, %cst_197 [1] : vector<4x2x4x128xf32> to vector<4x4x128xf32>
    %c0_198 = arith.constant 0 : index
    %c0_199 = arith.constant 0 : index
    %201 = vector.load %arg6[%c0_198, %c0_199] : memref<1x128xf32, #tpu.memory_space<vmem>>, vector<1x128xf32>
    %202 = vector.shape_cast %201 : vector<1x128xf32> to vector<1x1x128xf32>
    %203 = vector.broadcast %202 : vector<1x1x128xf32> to vector<4x4x128xf32>
    %204 = arith.mulf %200, %203 : vector<4x4x128xf32>
    %c0_200 = arith.constant 0 : index
    %c0_201 = arith.constant 0 : index
    %205 = vector.load %arg7[%c0_200, %c0_201] : memref<1x128xf32, #tpu.memory_space<vmem>>, vector<1x128xf32>
    %206 = vector.shape_cast %205 : vector<1x128xf32> to vector<1x1x128xf32>
    %207 = vector.broadcast %206 : vector<1x1x128xf32> to vector<4x4x128xf32>
    %208 = arith.addf %204, %207 : vector<4x4x128xf32>
    %cst_202 = arith.constant 0.000000e+00 : f32
    %209 = vector.broadcast %cst_202 : f32 to vector<4x4x128xf32>
    %210 = arith.maximumf %208, %209 : vector<4x4x128xf32>
    %211 = vector.shape_cast %210 : vector<4x4x128xf32> to vector<1x4x4x128xf32>
    %c0_203 = arith.constant 0 : index
    %c0_204 = arith.constant 0 : index
    %c0_205 = arith.constant 0 : index
    %c0_206 = arith.constant 0 : index
    %212 = vector.load %arg8[%c0_203, %c0_204, %c0_205, %c0_206] : memref<1x4x4x128xf32, #tpu.memory_space<vmem>>, vector<1x4x4x128xf32>
    tpu.vector_store %arg8[%c0_203, %c0_204, %c0_205, %c0_206], %211 {strides = array<i32>} : memref<1x4x4x128xf32, #tpu.memory_space<vmem>>, vector<1x4x4x128xf32>,
    return
  }
  func.func @transform_0(%arg0: i32) -> (i32, i32) {
    %c0_i32 = arith.constant 0 : i32
    %c0_i32_0 = arith.constant 0 : i32
    return %arg0, %c0_i32 : i32, i32
  }
  func.func @transform_1(%arg0: i32) -> (i32, i32) {
    %c0_i32 = arith.constant 0 : i32
    %c0_i32_0 = arith.constant 0 : i32
    %c0_i32_1 = arith.constant 0 : i32
    return %c0_i32, %c0_i32_0 : i32, i32
  }
  func.func @transform_2(%arg0: i32) -> (i32, i32) {
    %c0_i32 = arith.constant 0 : i32
    %c0_i32_0 = arith.constant 0 : i32
    %c0_i32_1 = arith.constant 0 : i32
    return %c0_i32, %c0_i32_0 : i32, i32
  }
  func.func @transform_3(%arg0: i32) -> (i32, i32) {
    %c0_i32 = arith.constant 0 : i32
    %c0_i32_0 = arith.constant 0 : i32
    %c0_i32_1 = arith.constant 0 : i32
    return %c0_i32, %c0_i32_0 : i32, i32
  }
  func.func @transform_4(%arg0: i32) -> (i32, i32, i32) {
    %c0_i32 = arith.constant 0 : i32
    %c0_i32_0 = arith.constant 0 : i32
    %c0_i32_1 = arith.constant 0 : i32
    %c0_i32_2 = arith.constant 0 : i32
    return %c0_i32, %c0_i32_0, %c0_i32_1 : i32, i32, i32
  }
  func.func @transform_5(%arg0: i32) -> (i32, i32) {
    %c0_i32 = arith.constant 0 : i32
    %c0_i32_0 = arith.constant 0 : i32
    %c0_i32_1 = arith.constant 0 : i32
    return %c0_i32, %c0_i32_0 : i32, i32
  }
  func.func @transform_6(%arg0: i32) -> (i32, i32) {
    %c0_i32 = arith.constant 0 : i32
    %c0_i32_0 = arith.constant 0 : i32
    %c0_i32_1 = arith.constant 0 : i32
    return %c0_i32, %c0_i32_0 : i32, i32
  }
  func.func @transform_7(%arg0: i32) -> (i32, i32, i32, i32) {
    %c0_i32 = arith.constant 0 : i32
    %c0_i32_0 = arith.constant 0 : i32
    %c0_i32_1 = arith.constant 0 : i32
    %c0_i32_2 = arith.constant 0 : i32
    return %arg0, %c0_i32, %c0_i32_0, %c0_i32_1 : i32, i32, i32, i32
  }
}

</mosaic_0001>

<llo_original>
// kernel: feature_forward.1
$region0: #{feature_forward.1}
  #allocation0 [shape = 'u32[]', space=smem, size = 0x4, offset = 0x4, fixed_abs, tag = 'smem constant byte address 0x4 - core index']
  #allocation1 [shape = 'u32[144,128]{1,0:T(1,128)}', space=vmem, size = 0x12000, scoped, tag = 'internal scratch']
  #allocation2 [shape = 'f32[1,12,18,64]{3,2,1,0:T(8,128)}', space=vmem, size = 0x24000, scoped, tag = 'scratch operand']
  %s0 = inlined_call_operand.vmem [shape: bf16[512,75], index: 0, kind: input, shape index: {}]
  %s1 = inlined_call_operand.vmem [shape: bf16[75,64], index: 1, kind: input, shape index: {}]
  %s2 = inlined_call_operand.vmem [shape: f32[1,64], index: 2, kind: input, shape index: {}]
  %s3 = inlined_call_operand.vmem [shape: f32[1,64], index: 3, kind: input, shape index: {}]
  %s4 = inlined_call_operand.vmem [shape: bf16[25,64,128], index: 4, kind: input, shape index: {}]
  %s5 = inlined_call_operand.vmem [shape: f32[1,128], index: 5, kind: input, shape index: {}]
  %s6 = inlined_call_operand.vmem [shape: f32[1,128], index: 6, kind: input, shape index: {}]
  %s7 = inlined_call_operand.hbm [shape: f32[2,4,4,128], index: 7, kind: output, shape index: {}]
  %s8 = sld [smem:[#allocation0]]
  $region61: #{feature_forward.1} parent=0
    _
  %s10 = ssub.s32 1, %s8
  %s11 = scalar_select 0, %s10, %s8
  $region1: #{feature_forward.1} parent=0
    #allocation3 [shape = 'u8[16384]{0}', space=vmem, size = 0x4000, scoped, tag = 'output window, operand 0']
    #allocation4 [shape = 's32[2]{0}', space=sflag, size = 0x8, scoped, tag = 'scoped memory for feature_forward.1']
    %12 = vsyncpa [#allocation4], 0
    %s13 = scalar_lea.sflag [#allocation4], 1
    %14 = vsyncpa %s13, 0
    loop: start=0, step=1, limit=4
    $region2: #{feature_forward.1} parent=1 // loop_pre_header
      _
    $region3: #{feature_forward.1} parent=1 // loop_header
      %s16 = sphi 0, %s20
      %p17 = scmp.ge.s32.totalorder %s16, 4
      %s26 = sphi 0, %s28
      %s29 = sphi 0, %s26
      %s30 = sphi 0, %s29
      %s46 = sphi 0, %s30
      %s50 = sphi 0, %s50
      %s52 = sphi 0, %s50
      %s53 = sphi 0, %s52
      %s67 = sphi 0, %s53
      %s71 = sphi 0, %s71
      %s73 = sphi 0, %s71
      %s74 = sphi 0, %s73
      %s88 = sphi 0, %s74
      %s92 = sphi 0, %s92
      %s94 = sphi 0, %s92
      %s95 = sphi 0, %s94
      %s109 = sphi 0, %s95
      %s113 = sphi 0, %s113
      %s115 = sphi 0, %s113
      %s116 = sphi 0, %s115
      %s130 = sphi 0, %s116
      %s134 = sphi 0, %s134
      %s136 = sphi 0, %s134
      %s137 = sphi 0, %s136
      %s151 = sphi 0, %s137
      %s155 = sphi 0, %s155
      %s157 = sphi 0, %s155
      %s158 = sphi 0, %s157
      %s172 = sphi 0, %s158
      %s178 = sphi 0, %s180
      %s181 = sphi 0, %s178
      %s182 = sphi 0, %s181
      %s198 = sphi 0, %s182
    $region4: #{feature_forward.1} parent=1 // loop_header_branch
      %19 = sbr.rel (%p17) target = $region8
    $region5: #{feature_forward.1} parent=1 // loop_body
      %s21 = ssub.s32 %s16, 1
      %s22 = ssub.s32 %s16, 2
      %s23 = sadd.s32 %s16, 1
      %s24 = ssub.s32 %s16, %s23
      %p25 = scmp.eq.s32.totalorder %s24, 0
      %s27 = sadd.s32 %s26, 1
      %s28 = scalar_select %p25, %s26, %s27
      %p31 = pneg %p25
      %p32 = scmp.eq.s32.totalorder %s16, 1
      %p33 = por %p31, %p32
      %p34 = scmp.ne.s32.totalorder %s26, %s29
      %p35 = scmp.eq.s32.totalorder %s16, 0
      %p36 = por %p34, %p35
      %p37 = scmp.ne.s32.totalorder %s26, %s29
      %p38 = scmp.eq.s32.totalorder %s21, 1
      %p39 = por %p37, %p38
      %p40 = scmp.ne.s32.totalorder %s29, %s30
      %p41 = scmp.eq.s32.totalorder %s21, 0
      %p42 = por %p40, %p41
      %p43 = scmp.ne.s32.totalorder %s29, %s30
      %p44 = scmp.eq.s32.totalorder %s22, 1
      %p45 = por %p43, %p44
      %p47 = scmp.ne.s32.totalorder %s30, %s46
      %p48 = scmp.eq.s32.totalorder %s22, 0
      %p49 = por %p47, %p48
      %s51 = sadd.s32 %s50, 1
      %p54 = scmp.eq.s32.totalorder %s16, 1
      %p55 = scmp.ne.s32.totalorder %s50, %s52
      %p56 = scmp.eq.s32.totalorder %s16, 0
      %p57 = por %p55, %p56
      %p58 = scmp.ne.s32.totalorder %s50, %s52
      %p59 = scmp.eq.s32.totalorder %s21, 1
      %p60 = por %p58, %p59
      %p61 = scmp.ne.s32.totalorder %s52, %s53
      %p62 = scmp.eq.s32.totalorder %s21, 0
      %p63 = por %p61, %p62
      %p64 = scmp.ne.s32.totalorder %s52, %s53
      %p65 = scmp.eq.s32.totalorder %s22, 1
      %p66 = por %p64, %p65
      %p68 = scmp.ne.s32.totalorder %s53, %s67
      %p69 = scmp.eq.s32.totalorder %s22, 0
      %p70 = por %p68, %p69
      %s72 = sadd.s32 %s71, 1
      %p75 = scmp.eq.s32.totalorder %s16, 1
      %p76 = scmp.ne.s32.totalorder %s71, %s73
      %p77 = scmp.eq.s32.totalorder %s16, 0
      %p78 = por %p76, %p77
      %p79 = scmp.ne.s32.totalorder %s71, %s73
      %p80 = scmp.eq.s32.totalorder %s21, 1
      %p81 = por %p79, %p80
      %p82 = scmp.ne.s32.totalorder %s73, %s74
      %p83 = scmp.eq.s32.totalorder %s21, 0
      %p84 = por %p82, %p83
      %p85 = scmp.ne.s32.totalorder %s73, %s74
      %p86 = scmp.eq.s32.totalorder %s22, 1
      %p87 = por %p85, %p86
      %p89 = scmp.ne.s32.totalorder %s74, %s88
      %p90 = scmp.eq.s32.totalorder %s22, 0
      %p91 = por %p89, %p90
      %s93 = sadd.s32 %s92, 1
      %p96 = scmp.eq.s32.totalorder %s16, 1
      %p97 = scmp.ne.s32.totalorder %s92, %s94
      %p98 = scmp.eq.s32.totalorder %s16, 0
      %p99 = por %p97, %p98
      %p100 = scmp.ne.s32.totalorder %s92, %s94
      %p101 = scmp.eq.s32.totalorder %s21, 1
      %p102 = por %p100, %p101
      %p103 = scmp.ne.s32.totalorder %s94, %s95
      %p104 = scmp.eq.s32.totalorder %s21, 0
      %p105 = por %p103, %p104
      %p106 = scmp.ne.s32.totalorder %s94, %s95
      %p107 = scmp.eq.s32.totalorder %s22, 1
      %p108 = por %p106, %p107
      %p110 = scmp.ne.s32.totalorder %s95, %s109
      %p111 = scmp.eq.s32.totalorder %s22, 0
      %p112 = por %p110, %p111
      %s114 = sadd.s32 %s113, 1
      %p117 = scmp.eq.s32.totalorder %s16, 1
      %p118 = scmp.ne.s32.totalorder %s113, %s115
      %p119 = scmp.eq.s32.totalorder %s16, 0
      %p120 = por %p118, %p119
      %p121 = scmp.ne.s32.totalorder %s113, %s115
      %p122 = scmp.eq.s32.totalorder %s21, 1
      %p123 = por %p121, %p122
      %p124 = scmp.ne.s32.totalorder %s115, %s116
      %p125 = scmp.eq.s32.totalorder %s21, 0
      %p126 = por %p124, %p125
      %p127 = scmp.ne.s32.totalorder %s115, %s116
      %p128 = scmp.eq.s32.totalorder %s22, 1
      %p129 = por %p127, %p128
      %p131 = scmp.ne.s32.totalorder %s116, %s130
      %p132 = scmp.eq.s32.totalorder %s22, 0
      %p133 = por %p131, %p132
      %s135 = sadd.s32 %s134, 1
      %p138 = scmp.eq.s32.totalorder %s16, 1
      %p139 = scmp.ne.s32.totalorder %s134, %s136
      %p140 = scmp.eq.s32.totalorder %s16, 0
      %p141 = por %p139, %p140
      %p142 = scmp.ne.s32.totalorder %s134, %s136
      %p143 = scmp.eq.s32.totalorder %s21, 1
      %p144 = por %p142, %p143
      %p145 = scmp.ne.s32.totalorder %s136, %s137
      %p146 = scmp.eq.s32.totalorder %s21, 0
      %p147 = por %p145, %p146
      %p148 = scmp.ne.s32.totalorder %s136, %s137
      %p149 = scmp.eq.s32.totalorder %s22, 1
      %p150 = por %p148, %p149
      %p152 = scmp.ne.s32.totalorder %s137, %s151
      %p153 = scmp.eq.s32.totalorder %s22, 0
      %p154 = por %p152, %p153
      %s156 = sadd.s32 %s155, 1
      %p159 = scmp.eq.s32.totalorder %s16, 1
      %p160 = scmp.ne.s32.totalorder %s155, %s157
      %p161 = scmp.eq.s32.totalorder %s16, 0
      %p162 = por %p160, %p161
      %p163 = scmp.ne.s32.totalorder %s155, %s157
      %p164 = scmp.eq.s32.totalorder %s21, 1
      %p165 = por %p163, %p164
      %p166 = scmp.ne.s32.totalorder %s157, %s158
      %p167 = scmp.eq.s32.totalorder %s21, 0
      %p168 = por %p166, %p167
      %p169 = scmp.ne.s32.totalorder %s157, %s158
      %p170 = scmp.eq.s32.totalorder %s22, 1
      %p171 = por %p169, %p170
      %p173 = scmp.ne.s32.totalorder %s158, %s172
      %p174 = scmp.eq.s32.totalorder %s22, 0
      %p175 = por %p173, %p174
      %s176 = ssub.s32 %s16, %s23
      %p177 = scmp.eq.s32.totalorder %s176, 0
      %s179 = sadd.s32 %s178, 1
      %s180 = scalar_select %p177, %s178, %s179
      %p183 = pneg %p177
      %p184 = scmp.eq.s32.totalorder %s16, 1
      %p185 = por %p183, %p184
      %p186 = scmp.ne.s32.totalorder %s178, %s181
      %p187 = scmp.eq.s32.totalorder %s16, 0
      %p188 = por %p186, %p187
      %p189 = scmp.ne.s32.totalorder %s178, %s181
      %p190 = scmp.eq.s32.totalorder %s21, 1
      %p191 = por %p189, %p190
      %p192 = scmp.ne.s32.totalorder %s181, %s182
      %p193 = scmp.eq.s32.totalorder %s21, 0
      %p194 = por %p192, %p193
      %p195 = scmp.ne.s32.totalorder %s181, %s182
      %p196 = scmp.eq.s32.totalorder %s22, 1
      %p197 = por %p195, %p196
      %p199 = scmp.ne.s32.totalorder %s182, %s198
      %p200 = scmp.eq.s32.totalorder %s22, 0
      %p201 = por %p199, %p200
      %p202 = scmp.le.s32.totalorder 1, %s16
      %p203 = scmp.lt.s32.totalorder %s16, 3
      %p204 = pnand %p202, %p203
      %p205 = pneg %p204
      // Predicated region
      $region9: #{feature_forward.1} parent=5 // pred_check
        _
      $region10: #{feature_forward.1} parent=5 // pred_check_branch
        %207 = sbr.rel (%p204) target = $region12
      $region11: #{feature_forward.1} parent=5 // pred_region
        %s208 = ssub.s32 %s16, 1
        // Predicated region
        $region13: #{feature_forward.1} parent=11 // pred_check
          %p209 = pneg %p63
        $region14: #{feature_forward.1} parent=11 // pred_check_branch
          %211 = sbr.rel (%p209) target = $region16
        $region15: #{feature_forward.1} parent=11 // pred_region
          _
        $region16: #{feature_forward.1} parent=11 // pred_fallthru
          _
        // Predicated region
        $region17: #{feature_forward.1} parent=11 // pred_check
          %p212 = pneg %p84
        $region18: #{feature_forward.1} parent=11 // pred_check_branch
          %214 = sbr.rel (%p212) target = $region20
        $region19: #{feature_forward.1} parent=11 // pred_region
          _
        $region20: #{feature_forward.1} parent=11 // pred_fallthru
          _
        // Predicated region
        $region21: #{feature_forward.1} parent=11 // pred_check
          %p215 = pneg %p105
        $region22: #{feature_forward.1} parent=11 // pred_check_branch
          %217 = sbr.rel (%p215) target = $region24
        $region23: #{feature_forward.1} parent=11 // pred_region
          _
        $region24: #{feature_forward.1} parent=11 // pred_fallthru
          _
        // Predicated region
        $region25: #{feature_forward.1} parent=11 // pred_check
          %p218 = pneg %p126
        $region26: #{feature_forward.1} parent=11 // pred_check_branch
          %220 = sbr.rel (%p218) target = $region28
        $region27: #{feature_forward.1} parent=11 // pred_region
          _
        $region28: #{feature_forward.1} parent=11 // pred_fallthru
          _
        // Predicated region
        $region29: #{feature_forward.1} parent=11 // pred_check
          %p221 = pneg %p147
        $region30: #{feature_forward.1} parent=11 // pred_check_branch
          %223 = sbr.rel (%p221) target = $region32
        $region31: #{feature_forward.1} parent=11 // pred_region
          _
        $region32: #{feature_forward.1} parent=11 // pred_fallthru
          _
        // Predicated region
        $region33: #{feature_forward.1} parent=11 // pred_check
          %p224 = pneg %p168
        $region34: #{feature_forward.1} parent=11 // pred_check_branch
          %226 = sbr.rel (%p224) target = $region36
        $region35: #{feature_forward.1} parent=11 // pred_region
          _
        $region36: #{feature_forward.1} parent=11 // pred_fallthru
          _
      $region12: #{feature_forward.1} parent=5 // pred_fallthru
        _
      %p227 = scmp.lt.s32.totalorder %s16, 2
      // Predicated region
      $region37: #{feature_forward.1} parent=5 // pred_check
        %p228 = pneg %p227
      $region38: #{feature_forward.1} parent=5 // pred_check_branch
        %230 = sbr.rel (%p228) target = $region40
      $region39: #{feature_forward.1} parent=5 // pred_region
        // Predicated region
        $region41: #{feature_forward.1} parent=39 // pred_check
          %p231 = pneg %p36
        $region42: #{feature_forward.1} parent=39 // pred_check_branch
          %233 = sbr.rel (%p231) target = $region44
        $region43: #{feature_forward.1} parent=39 // pred_region
          %s234 = smul.u32 32, %s16
          %p235 = scmp.lt.s32.totalorder %s234, 63
          %s236 = scalar_select %p235, %s234, 63
          %s237 = smul.addr %s236, 4
          %s238 = scalar_lea.vmem %s0, %s237
          %s239 = smul.u32 32, %s16
        $region44: #{feature_forward.1} parent=39 // pred_fallthru
          _
      $region40: #{feature_forward.1} parent=5 // pred_fallthru
        _
      %p240 = scmp.le.s32.totalorder 1, %s16
      %p241 = scmp.lt.s32.totalorder %s16, 3
      %p242 = pnand %p240, %p241
      %p243 = pneg %p242
      // Predicated region
      $region45: #{feature_forward.1} parent=5 // pred_check
        _
      $region46: #{feature_forward.1} parent=5 // pred_check_branch
        %245 = sbr.rel (%p242) target = $region48
      $region47: #{feature_forward.1} parent=5 // pred_region
        %s246 = ssub.s32 %s16, 1
        %s247 = smul.u32 32, %s21
        %p248 = scmp.lt.s32.totalorder %s247, 63
        %s249 = scalar_select %p248, %s247, 63
        %s250 = smul.addr %s249, 4
        %s251 = scalar_lea.vmem %s0, %s250
        %p252 = pneg %p42
        %p253 = pneg %p39
        %p254 = pneg %p63
        %p255 = pneg %p60
        %p256 = pneg %p84
        %p257 = pneg %p81
        %p258 = pneg %p105
        %p259 = pneg %p102
        %p260 = pneg %p126
        %p261 = pneg %p123
        %p262 = pneg %p147
        %p263 = pneg %p144
        %p264 = pneg %p168
        %p265 = pneg %p165
        %p266 = pneg %p194
        %p267 = pneg %p191
        %s268 = sand.u32 %s181, 1
        %s269 = scalar_lea.sflag [#allocation4], %s268
        %s270 = sand.u32 %s181, 1
        %s271 = smul.addr %s270, 16
        %s272 = scalar_lea.vmem [#allocation3], %s271
        %s273 = smul.u32 32, %s21
        %p274 = scmp.lt.s32.totalorder %s273, 63
        %s275 = scalar_select %p274, %s273, 63
        %s276 = smul.addr %s275, 4
        %s277 = scalar_lea.vmem %s0, %s276
        %s278 = smul.u32 32, %s21
        %v280 = vld [vmem:[%s277] sm:$0xf]
        %v281 = vld [vmem:[%s277 + $0x4] sm:$0xf]
        %v282 = vld [vmem:[%s277 + $0x8] sm:$0xf]
        %v283 = vld [vmem:[%s277 + $0xc] sm:$0xf]
        %v284 = vld [vmem:[%s277 + $0x10] sm:$0xf]
        %v285 = vld [vmem:[%s277 + $0x14] sm:$0xf]
        %v286 = vld [vmem:[%s277 + $0x18] sm:$0xf]
        %v287 = vld [vmem:[%s277 + $0x1c] sm:$0xf]
        %v288 = vld [vmem:[%s277 + $0x20] sm:$0xf]
        %v289 = vld [vmem:[%s277 + $0x24] sm:$0xf]
        %v290 = vld [vmem:[%s277 + $0x28] sm:$0xf]
        %v291 = vld [vmem:[%s277 + $0x2c] sm:$0xf]
        %v292 = vld [vmem:[%s277 + $0x30] sm:$0xf]
        %v293 = vld [vmem:[%s277 + $0x34] sm:$0xf]
        %v294 = vld [vmem:[%s277 + $0x38] sm:$0xf]
        %v295 = vld [vmem:[%s277 + $0x3c] sm:$0xf]
        %v296 = vld [vmem:[%s277 + $0x40] sm:$0xf]
        %v297 = vld [vmem:[%s277 + $0x44] sm:$0xf]
        %v298 = vld [vmem:[%s277 + $0x48] sm:$0xf]
        %v299 = vld [vmem:[%s277 + $0x4c] sm:$0xf]
        %v300 = vld [vmem:[%s277 + $0x50] sm:$0xf]
        %v301 = vld [vmem:[%s277 + $0x54] sm:$0xf]
        %v302 = vld [vmem:[%s277 + $0x58] sm:$0xf]
        %v303 = vld [vmem:[%s277 + $0x5c] sm:$0xf]
        %v304 = vld [vmem:[%s277 + $0x60] sm:$0xf]
        %v305 = vld [vmem:[%s277 + $0x64] sm:$0xf]
        %v306 = vld [vmem:[%s277 + $0x68] sm:$0xf]
        %v307 = vld [vmem:[%s277 + $0x6c] sm:$0xf]
        %v308 = vld [vmem:[%s277 + $0x70] sm:$0xf]
        %v309 = vld [vmem:[%s277 + $0x74] sm:$0xf]
        %v310 = vld [vmem:[%s277 + $0x78] sm:$0xf]
        %v311 = vld [vmem:[%s277 + $0x7c] sm:$0xf]
        %v312 = vld [vmem:[%s1] sm:$0xf]
        %v313 = vld [vmem:[%s1 + $0x4] sm:$0xf]
        %v314 = vld [vmem:[%s1 + $0x8] sm:$0xf]
        %v315 = vld [vmem:[%s1 + $0xc] sm:$0xf]
        %v316 = vld [vmem:[%s1 + $0x10] sm:$0xf]
        %v317 = vld [vmem:[%s1 + $0x14] sm:$0xf]
        %v318 = vld [vmem:[%s1 + $0x18] sm:$0xf]
        %v319 = vld [vmem:[%s1 + $0x1c] sm:$0xf]
        %v320 = vld [vmem:[%s1 + $0x20] sm:$0xf]
        %v321 = vld [vmem:[%s1 + $0x24] sm:$0x3]
        %v354 = vunpack.c.l.b16 %v280
        %v355 = vunpack.c.l.b16 %v281
        %v356 = vunpack.c.l.b16 %v282
        %v357 = vunpack.c.l.b16 %v283
        %v358 = vunpack.c.l.b16 %v284
        %v359 = vunpack.c.l.b16 %v285
        %v360 = vunpack.c.l.b16 %v286
        %v361 = vunpack.c.l.b16 %v287
        %v362 = vunpack.c.l.b16 %v288
        %v363 = vunpack.c.l.b16 %v289
        %v364 = vunpack.c.l.b16 %v290
        %v365 = vunpack.c.l.b16 %v291
        %v366 = vunpack.c.l.b16 %v292
        %v367 = vunpack.c.l.b16 %v293
        %v368 = vunpack.c.l.b16 %v294
        %v369 = vunpack.c.l.b16 %v295
        %v370 = vunpack.c.l.b16 %v296
        %v371 = vunpack.c.l.b16 %v297
        %v372 = vunpack.c.l.b16 %v298
        %v373 = vunpack.c.l.b16 %v299
        %v374 = vunpack.c.l.b16 %v300
        %v375 = vunpack.c.l.b16 %v301
        %v376 = vunpack.c.l.b16 %v302
        %v377 = vunpack.c.l.b16 %v303
        %v378 = vunpack.c.l.b16 %v304
        %v379 = vunpack.c.l.b16 %v305
        %v380 = vunpack.c.l.b16 %v306
        %v381 = vunpack.c.l.b16 %v307
        %v382 = vunpack.c.l.b16 %v308
        %v383 = vunpack.c.l.b16 %v309
        %v384 = vunpack.c.l.b16 %v310
        %v385 = vunpack.c.l.b16 %v311
        %v386 = vpack.c.b16 %v355, %v354
        %v387 = vpack.c.b16 %v357, %v356
        %v388 = vpack.c.b16 %v359, %v358
        %v389 = vpack.c.b16 %v361, %v360
        %v390 = vpack.c.b16 %v363, %v362
        %v391 = vpack.c.b16 %v365, %v364
        %v392 = vpack.c.b16 %v367, %v366
        %v393 = vpack.c.b16 %v369, %v368
        %v394 = vpack.c.b16 %v371, %v370
        %v395 = vpack.c.b16 %v373, %v372
        %v396 = vpack.c.b16 %v375, %v374
        %v397 = vpack.c.b16 %v377, %v376
        %v398 = vpack.c.b16 %v379, %v378
        %v399 = vpack.c.b16 %v381, %v380
        %v400 = vpack.c.b16 %v383, %v382
        %v401 = vpack.c.b16 %v385, %v384
        %v412 = vunpack.c.l.b16 %v312
        %v413 = vunpack.c.l.b16 %v313
        %v414 = vunpack.c.l.b16 %v314
        %v415 = vunpack.c.l.b16 %v315
        %v416 = vunpack.c.l.b16 %v316
        %v417 = vunpack.c.l.b16 %v317
        %v418 = vunpack.c.l.b16 %v318
        %v419 = vunpack.c.l.b16 %v319
        %v420 = vunpack.c.l.b16 %v320
        %v421 = vunpack.c.l.b16 %v321
        %v422 = vpack.c.b16 %v413, %v412
        %v423 = vpack.c.b16 %v415, %v414
        %v424 = vpack.c.b16 %v417, %v416
        %v425 = vpack.c.b16 %v419, %v418
        %v426 = vpack.c.b16 %v421, %v420
        %vm431 = vcmask 613376
        %v433 = vsel %vm431, %v386, 0
        %v436 = vsel %vm431, %v387, 0
        %v439 = vsel %vm431, %v388, 0
        %v442 = vsel %vm431, %v389, 0
        %v445 = vsel %vm431, %v390, 0
        %v448 = vsel %vm431, %v391, 0
        %v451 = vsel %vm431, %v392, 0
        %v454 = vsel %vm431, %v393, 0
        %v457 = vsel %vm431, %v394, 0
        %v460 = vsel %vm431, %v395, 0
        %v463 = vsel %vm431, %v396, 0
        %v466 = vsel %vm431, %v397, 0
        %v469 = vsel %vm431, %v398, 0
        %v472 = vsel %vm431, %v399, 0
        %v475 = vsel %vm431, %v400, 0
        %v478 = vsel %vm431, %v401, 0
        %vm480 = vcmask 1044480
        %vm481 = vcmask 1045504
        %v482 = vsel %vm480, 4294967295, 65535
        %v483 = vsel %vm481, %v482, 0
        %v485 = vand.u32 %v426, %v483
        %487 = vmatprep.subr.bf16.mxu0 0
        %488 = vmatpush1.bf16.msra.mxu0 %v422
        %489 = vmatprep.subr.bf16.mxu0 0
        %490 = vmatpush1.bf16.msra.mxu0 %v423
        %491 = vmatprep.subr.bf16.mxu0 0
        %492 = vmatpush1.bf16.msra.mxu0 %v424
        %493 = vmatprep.subr.bf16.mxu0 0
        %494 = vmatpush1.bf16.msra.mxu0 %v425
        %495 = vmatprep.subr.bf16.mxu0 0
        %496 = vmatpush1.bf16.msra.mxu0 %v485
        %497 = vmatprep.subr.bf16.mxu0 0
        %498 = vmatpush1.bf16.msra.mxu0 0
        %499 = vmatprep.subr.bf16.mxu0 0
        %500 = vmatpush1.bf16.msra.mxu0 0
        %501 = vmatprep.subr.bf16.mxu0 0
        %502 = vmatpush1.bf16.msra.mxu0 0
        %503 = vmatprep.subr.bf16.mxu0 0
        %504 = vmatpush1.bf16.msra.mxu0 0
        %505 = vmatprep.subr.bf16.mxu0 0
        %506 = vmatpush1.bf16.msra.mxu0 0
        %507 = vmatprep.subr.bf16.mxu0 0
        %508 = vmatpush1.bf16.msra.mxu0 0
        %509 = vmatprep.subr.bf16.mxu0 0
        %510 = vmatpush1.bf16.msra.mxu0 0
        %511 = vmatprep.subr.bf16.mxu0 0
        %512 = vmatpush1.bf16.msra.mxu0 0
        %513 = vmatprep.subr.bf16.mxu0 0
        %514 = vmatpush1.bf16.msra.mxu0 0
        %515 = vmatprep.subr.bf16.mxu0 0
        %516 = vmatpush1.bf16.msra.mxu0 0
        %517 = vmatprep.subr.bf16.mxu0 0
        %518 = vmatpush1.bf16.msra.mxu0 0
        %519 = vmatprep.mubr.bf16.mxu0 0
        %520 = vmatmul.mubr.bf16.gmra.mrb[0].mxu0 %v433
        %v521 = vpop.f32.mrb[0].mxu0
        %v522 = vadd.f32 0.0, %v521
        %v523 = vpop.f32.mrb[0].mxu0
        %v524 = vpop.f32.mrb[0].mxu0
        %v525 = vadd.f32 0.0, %v524
        %v526 = vpop.f32.mrb[0].mxu0
        %527 = vmatprep.mubr.bf16.mxu0 0
        %528 = vmatmul.mubr.bf16.gmra.mrb[0].mxu0 %v436
        %v529 = vpop.f32.mrb[0].mxu0
        %v530 = vadd.f32 0.0, %v529
        %v531 = vpop.f32.mrb[0].mxu0
        %v532 = vpop.f32.mrb[0].mxu0
        %v533 = vadd.f32 0.0, %v532
        %v534 = vpop.f32.mrb[0].mxu0
        %535 = vmatprep.mubr.bf16.mxu0 0
        %536 = vmatmul.mubr.bf16.gmra.mrb[0].mxu0 %v439
        %v537 = vpop.f32.mrb[0].mxu0
        %v538 = vadd.f32 0.0, %v537
        %v539 = vpop.f32.mrb[0].mxu0
        %v540 = vpop.f32.mrb[0].mxu0
        %v541 = vadd.f32 0.0, %v540
        %v542 = vpop.f32.mrb[0].mxu0
        %543 = vmatprep.mubr.bf16.mxu0 0
        %544 = vmatmul.mubr.bf16.gmra.mrb[0].mxu0 %v442
        %v545 = vpop.f32.mrb[0].mxu0
        %v546 = vadd.f32 0.0, %v545
        %v547 = vpop.f32.mrb[0].mxu0
        %v548 = vpop.f32.mrb[0].mxu0
        %v549 = vadd.f32 0.0, %v548
        %v550 = vpop.f32.mrb[0].mxu0
        %551 = vmatprep.mubr.bf16.mxu0 0
        %552 = vmatmul.mubr.bf16.gmra.mrb[0].mxu0 %v445
        %v553 = vpop.f32.mrb[0].mxu0
        %v554 = vadd.f32 0.0, %v553
        %v555 = vpop.f32.mrb[0].mxu0
        %v556 = vpop.f32.mrb[0].mxu0
        %v557 = vadd.f32 0.0, %v556
        %v558 = vpop.f32.mrb[0].mxu0
        %559 = vmatprep.mubr.bf16.mxu0 0
        %560 = vmatmul.mubr.bf16.gmra.mrb[0].mxu0 %v448
        %v561 = vpop.f32.mrb[0].mxu0
        %v562 = vadd.f32 0.0, %v561
        %v563 = vpop.f32.mrb[0].mxu0
        %v564 = vpop.f32.mrb[0].mxu0
        %v565 = vadd.f32 0.0, %v564
        %v566 = vpop.f32.mrb[0].mxu0
        %567 = vmatprep.mubr.bf16.mxu0 0
        %568 = vmatmul.mubr.bf16.gmra.mrb[0].mxu0 %v451
        %v569 = vpop.f32.mrb[0].mxu0
        %v570 = vadd.f32 0.0, %v569
        %v571 = vpop.f32.mrb[0].mxu0
        %v572 = vpop.f32.mrb[0].mxu0
        %v573 = vadd.f32 0.0, %v572
        %v574 = vpop.f32.mrb[0].mxu0
        %575 = vmatprep.mubr.bf16.mxu0 0
        %576 = vmatmul.mubr.bf16.gmra.mrb[0].mxu0 %v454
        %v577 = vpop.f32.mrb[0].mxu0
        %v578 = vadd.f32 0.0, %v577
        %v579 = vpop.f32.mrb[0].mxu0
        %v580 = vpop.f32.mrb[0].mxu0
        %v581 = vadd.f32 0.0, %v580
        %v582 = vpop.f32.mrb[0].mxu0
        %583 = vmatprep.mubr.bf16.mxu0 0
        %584 = vmatmul.mubr.bf16.gmra.mrb[0].mxu0 %v457
        %v585 = vpop.f32.mrb[0].mxu0
        %v586 = vadd.f32 0.0, %v585
        %v587 = vpop.f32.mrb[0].mxu0
        %v588 = vpop.f32.mrb[0].mxu0
        %v589 = vadd.f32 0.0, %v588
        %v590 = vpop.f32.mrb[0].mxu0
        %591 = vmatprep.mubr.bf16.mxu0 0
        %592 = vmatmul.mubr.bf16.gmra.mrb[0].mxu0 %v460
        %v593 = vpop.f32.mrb[0].mxu0
        %v594 = vadd.f32 0.0, %v593
        %v595 = vpop.f32.mrb[0].mxu0
        %v596 = vpop.f32.mrb[0].mxu0
        %v597 = vadd.f32 0.0, %v596
        %v598 = vpop.f32.mrb[0].mxu0
        %599 = vmatprep.mubr.bf16.mxu0 0
        %600 = vmatmul.mubr.bf16.gmra.mrb[0].mxu0 %v463
        %v601 = vpop.f32.mrb[0].mxu0
        %v602 = vadd.f32 0.0, %v601
        %v603 = vpop.f32.mrb[0].mxu0
        %v604 = vpop.f32.mrb[0].mxu0
        %v605 = vadd.f32 0.0, %v604
        %v606 = vpop.f32.mrb[0].mxu0
        %607 = vmatprep.mubr.bf16.mxu0 0
        %608 = vmatmul.mubr.bf16.gmra.mrb[0].mxu0 %v466
        %v609 = vpop.f32.mrb[0].mxu0
        %v610 = vadd.f32 0.0, %v609
        %v611 = vpop.f32.mrb[0].mxu0
        %v612 = vpop.f32.mrb[0].mxu0
        %v613 = vadd.f32 0.0, %v612
        %v614 = vpop.f32.mrb[0].mxu0
        %615 = vmatprep.mubr.bf16.mxu0 0
        %616 = vmatmul.mubr.bf16.gmra.mrb[0].mxu0 %v469
        %v617 = vpop.f32.mrb[0].mxu0
        %v618 = vadd.f32 0.0, %v617
        %v619 = vpop.f32.mrb[0].mxu0
        %v620 = vpop.f32.mrb[0].mxu0
        %v621 = vadd.f32 0.0, %v620
        %v622 = vpop.f32.mrb[0].mxu0
        %623 = vmatprep.mubr.bf16.mxu0 0
        %624 = vmatmul.mubr.bf16.gmra.mrb[0].mxu0 %v472
        %v625 = vpop.f32.mrb[0].mxu0
        %v626 = vadd.f32 0.0, %v625
        %v627 = vpop.f32.mrb[0].mxu0
        %v628 = vpop.f32.mrb[0].mxu0
        %v629 = vadd.f32 0.0, %v628
        %v630 = vpop.f32.mrb[0].mxu0
        %631 = vmatprep.mubr.bf16.mxu0 0
        %632 = vmatmul.mubr.bf16.gmra.mrb[0].mxu0 %v475
        %v633 = vpop.f32.mrb[0].mxu0
        %v634 = vadd.f32 0.0, %v633
        %v635 = vpop.f32.mrb[0].mxu0
        %v636 = vpop.f32.mrb[0].mxu0
        %v637 = vadd.f32 0.0, %v636
        %v638 = vpop.f32.mrb[0].mxu0
        %639 = vmatprep.mubr.bf16.mxu0 0
        %640 = vmatmul.mubr.bf16.gmra.mrb[0].mxu0 %v478
        %v641 = vpop.f32.mrb[0].mxu0
        %v642 = vadd.f32 0.0, %v641
        %v643 = vpop.f32.mrb[0].mxu0
        %v644 = vpop.f32.mrb[0].mxu0
        %v645 = vadd.f32 0.0, %v644
        %v646 = vpop.f32.mrb[0].mxu0
        %647 = vdwg.mxu0
        %v680 = vcombine.high %v522, %v522
        %v682 = vunpack.c.l.s4 1983009808
        %v683 = vunpack.c.0.s8 %v682
        %v684 = vlaneseq
        %v685 = vshrl.u32 %v684, 7
        %v686 = vsub.s32 %v683, %v685
        %v687 = vrot.slane %v522, %v686
        %v689 = vunpack.c.l.s4 1983009808
        %v690 = vunpack.c.0.s8 %v689
        %v691 = vlaneseq
        %v692 = vshrl.u32 %v691, 7
        %v693 = vsub.s32 %v690, %v692
        %v694 = vrot.slane %v680, %v693
        %v695 = vcombine.high %v687, %v687
        %v696 = vcombine.high %v694, %v694
        %v697 = vcombine.high %v525, %v525
        %v699 = vunpack.c.l.s4 1983009808
        %v700 = vunpack.c.0.s8 %v699
        %v701 = vlaneseq
        %v702 = vshrl.u32 %v701, 7
        %v703 = vsub.s32 %v700, %v702
        %v704 = vrot.slane %v525, %v703
        %v706 = vunpack.c.l.s4 1983009808
        %v707 = vunpack.c.0.s8 %v706
        %v708 = vlaneseq
        %v709 = vshrl.u32 %v708, 7
        %v710 = vsub.s32 %v707, %v709
        %v711 = vrot.slane %v697, %v710
        %v712 = vcombine.high %v704, %v704
        %v713 = vcombine.high %v711, %v711
        %v714 = vcombine.high %v530, %v530
        %v716 = vunpack.c.l.s4 1983009808
        %v717 = vunpack.c.0.s8 %v716
        %v718 = vlaneseq
        %v719 = vshrl.u32 %v718, 7
        %v720 = vsub.s32 %v717, %v719
        %v721 = vrot.slane %v530, %v720
        %v723 = vunpack.c.l.s4 1983009808
        %v724 = vunpack.c.0.s8 %v723
        %v725 = vlaneseq
        %v726 = vshrl.u32 %v725, 7
        %v727 = vsub.s32 %v724, %v726
        %v728 = vrot.slane %v714, %v727
        %v729 = vcombine.high %v721, %v721
        %v730 = vcombine.high %v728, %v728
        %v731 = vcombine.high %v533, %v533
        %v733 = vunpack.c.l.s4 1983009808
        %v734 = vunpack.c.0.s8 %v733
        %v735 = vlaneseq
        %v736 = vshrl.u32 %v735, 7
        %v737 = vsub.s32 %v734, %v736
        %v738 = vrot.slane %v533, %v737
        %v740 = vunpack.c.l.s4 1983009808
        %v741 = vunpack.c.0.s8 %v740
        %v742 = vlaneseq
        %v743 = vshrl.u32 %v742, 7
        %v744 = vsub.s32 %v741, %v743
        %v745 = vrot.slane %v731, %v744
        %v746 = vcombine.high %v738, %v738
        %v747 = vcombine.high %v745, %v745
        %v748 = vcombine.high %v538, %v538
        %v750 = vunpack.c.l.s4 1983009808
        %v751 = vunpack.c.0.s8 %v750
        %v752 = vlaneseq
        %v753 = vshrl.u32 %v752, 7
        %v754 = vsub.s32 %v751, %v753
        %v755 = vrot.slane %v538, %v754
        %v757 = vunpack.c.l.s4 1983009808
        %v758 = vunpack.c.0.s8 %v757
        %v759 = vlaneseq
        %v760 = vshrl.u32 %v759, 7
        %v761 = vsub.s32 %v758, %v760
        %v762 = vrot.slane %v748, %v761
        %v763 = vcombine.high %v755, %v755
        %v764 = vcombine.high %v762, %v762
        %v765 = vcombine.high %v541, %v541
        %v767 = vunpack.c.l.s4 1983009808
        %v768 = vunpack.c.0.s8 %v767
        %v769 = vlaneseq
        %v770 = vshrl.u32 %v769, 7
        %v771 = vsub.s32 %v768, %v770
        %v772 = vrot.slane %v541, %v771
        %v774 = vunpack.c.l.s4 1983009808
        %v775 = vunpack.c.0.s8 %v774
        %v776 = vlaneseq
        %v777 = vshrl.u32 %v776, 7
        %v778 = vsub.s32 %v775, %v777
        %v779 = vrot.slane %v765, %v778
        %v780 = vcombine.high %v772, %v772
        %v781 = vcombine.high %v779, %v779
        %v782 = vcombine.high %v546, %v546
        %v784 = vunpack.c.l.s4 1983009808
        %v785 = vunpack.c.0.s8 %v784
        %v786 = vlaneseq
        %v787 = vshrl.u32 %v786, 7
        %v788 = vsub.s32 %v785, %v787
        %v789 = vrot.slane %v546, %v788
        %v791 = vunpack.c.l.s4 1983009808
        %v792 = vunpack.c.0.s8 %v791
        %v793 = vlaneseq
        %v794 = vshrl.u32 %v793, 7
        %v795 = vsub.s32 %v792, %v794
        %v796 = vrot.slane %v782, %v795
        %v797 = vcombine.high %v789, %v789
        %v798 = vcombine.high %v796, %v796
        %v799 = vcombine.high %v549, %v549
        %v801 = vunpack.c.l.s4 1983009808
        %v802 = vunpack.c.0.s8 %v801
        %v803 = vlaneseq
        %v804 = vshrl.u32 %v803, 7
        %v805 = vsub.s32 %v802, %v804
        %v806 = vrot.slane %v549, %v805
        %v808 = vunpack.c.l.s4 1983009808
        %v809 = vunpack.c.0.s8 %v808
        %v810 = vlaneseq
        %v811 = vshrl.u32 %v810, 7
        %v812 = vsub.s32 %v809, %v811
        %v813 = vrot.slane %v799, %v812
        %v814 = vcombine.high %v806, %v806
        %v815 = vcombine.high %v813, %v813
        %v816 = vcombine.high %v554, %v554
        %v818 = vunpack.c.l.s4 1983009808
        %v819 = vunpack.c.0.s8 %v818
        %v820 = vlaneseq
        %v821 = vshrl.u32 %v820, 7
        %v822 = vsub.s32 %v819, %v821
        %v823 = vrot.slane %v554, %v822
        %v825 = vunpack.c.l.s4 1983009808
        %v826 = vunpack.c.0.s8 %v825
        %v827 = vlaneseq
        %v828 = vshrl.u32 %v827, 7
        %v829 = vsub.s32 %v826, %v828
        %v830 = vrot.slane %v816, %v829
        %v831 = vcombine.high %v823, %v823
        %v832 = vcombine.high %v830, %v830
        %v833 = vcombine.high %v557, %v557
        %v835 = vunpack.c.l.s4 1983009808
        %v836 = vunpack.c.0.s8 %v835
        %v837 = vlaneseq
        %v838 = vshrl.u32 %v837, 7
        %v839 = vsub.s32 %v836, %v838
        %v840 = vrot.slane %v557, %v839
        %v842 = vunpack.c.l.s4 1983009808
        %v843 = vunpack.c.0.s8 %v842
        %v844 = vlaneseq
        %v845 = vshrl.u32 %v844, 7
        %v846 = vsub.s32 %v843, %v845
        %v847 = vrot.slane %v833, %v846
        %v848 = vcombine.high %v840, %v840
        %v849 = vcombine.high %v847, %v847
        %v850 = vcombine.high %v562, %v562
        %v852 = vunpack.c.l.s4 1983009808
        %v853 = vunpack.c.0.s8 %v852
        %v854 = vlaneseq
        %v855 = vshrl.u32 %v854, 7
        %v856 = vsub.s32 %v853, %v855
        %v857 = vrot.slane %v562, %v856
        %v859 = vunpack.c.l.s4 1983009808
        %v860 = vunpack.c.0.s8 %v859
        %v861 = vlaneseq
        %v862 = vshrl.u32 %v861, 7
        %v863 = vsub.s32 %v860, %v862
        %v864 = vrot.slane %v850, %v863
        %v865 = vcombine.high %v857, %v857
        %v866 = vcombine.high %v864, %v864
        %v867 = vcombine.high %v565, %v565
        %v869 = vunpack.c.l.s4 1983009808
        %v870 = vunpack.c.0.s8 %v869
        %v871 = vlaneseq
        %v872 = vshrl.u32 %v871, 7
        %v873 = vsub.s32 %v870, %v872
        %v874 = vrot.slane %v565, %v873
        %v876 = vunpack.c.l.s4 1983009808
        %v877 = vunpack.c.0.s8 %v876
        %v878 = vlaneseq
        %v879 = vshrl.u32 %v878, 7
        %v880 = vsub.s32 %v877, %v879
        %v881 = vrot.slane %v867, %v880
        %v882 = vcombine.high %v874, %v874
        %v883 = vcombine.high %v881, %v881
        %v884 = vcombine.high %v570, %v570
        %v886 = vunpack.c.l.s4 1983009808
        %v887 = vunpack.c.0.s8 %v886
        %v888 = vlaneseq
        %v889 = vshrl.u32 %v888, 7
        %v890 = vsub.s32 %v887, %v889
        %v891 = vrot.slane %v570, %v890
        %v893 = vunpack.c.l.s4 1983009808
        %v894 = vunpack.c.0.s8 %v893
        %v895 = vlaneseq
        %v896 = vshrl.u32 %v895, 7
        %v897 = vsub.s32 %v894, %v896
        %v898 = vrot.slane %v884, %v897
        %v899 = vcombine.high %v891, %v891
        %v900 = vcombine.high %v898, %v898
        %v901 = vcombine.high %v573, %v573
        %v903 = vunpack.c.l.s4 1983009808
        %v904 = vunpack.c.0.s8 %v903
        %v905 = vlaneseq
        %v906 = vshrl.u32 %v905, 7
        %v907 = vsub.s32 %v904, %v906
        %v908 = vrot.slane %v573, %v907
        %v910 = vunpack.c.l.s4 1983009808
        %v911 = vunpack.c.0.s8 %v910
        %v912 = vlaneseq
        %v913 = vshrl.u32 %v912, 7
        %v914 = vsub.s32 %v911, %v913
        %v915 = vrot.slane %v901, %v914
        %v916 = vcombine.high %v908, %v908
        %v917 = vcombine.high %v915, %v915
        %v918 = vcombine.high %v578, %v578
        %v920 = vunpack.c.l.s4 1983009808
        %v921 = vunpack.c.0.s8 %v920
        %v922 = vlaneseq
        %v923 = vshrl.u32 %v922, 7
        %v924 = vsub.s32 %v921, %v923
        %v925 = vrot.slane %v578, %v924
        %v927 = vunpack.c.l.s4 1983009808
        %v928 = vunpack.c.0.s8 %v927
        %v929 = vlaneseq
        %v930 = vshrl.u32 %v929, 7
        %v931 = vsub.s32 %v928, %v930
        %v932 = vrot.slane %v918, %v931
        %v933 = vcombine.high %v925, %v925
        %v934 = vcombine.high %v932, %v932
        %v935 = vcombine.high %v581, %v581
        %v937 = vunpack.c.l.s4 1983009808
        %v938 = vunpack.c.0.s8 %v937
        %v939 = vlaneseq
        %v940 = vshrl.u32 %v939, 7
        %v941 = vsub.s32 %v938, %v940
        %v942 = vrot.slane %v581, %v941
        %v944 = vunpack.c.l.s4 1983009808
        %v945 = vunpack.c.0.s8 %v944
        %v946 = vlaneseq
        %v947 = vshrl.u32 %v946, 7
        %v948 = vsub.s32 %v945, %v947
        %v949 = vrot.slane %v935, %v948
        %v950 = vcombine.high %v942, %v942
        %v951 = vcombine.high %v949, %v949
        %v952 = vcombine.high %v586, %v586
        %v954 = vunpack.c.l.s4 1983009808
        %v955 = vunpack.c.0.s8 %v954
        %v956 = vlaneseq
        %v957 = vshrl.u32 %v956, 7
        %v958 = vsub.s32 %v955, %v957
        %v959 = vrot.slane %v586, %v958
        %v961 = vunpack.c.l.s4 1983009808
        %v962 = vunpack.c.0.s8 %v961
        %v963 = vlaneseq
        %v964 = vshrl.u32 %v963, 7
        %v965 = vsub.s32 %v962, %v964
        %v966 = vrot.slane %v952, %v965
        %v967 = vcombine.high %v959, %v959
        %v968 = vcombine.high %v966, %v966
        %v969 = vcombine.high %v589, %v589
        %v971 = vunpack.c.l.s4 1983009808
        %v972 = vunpack.c.0.s8 %v971
        %v973 = vlaneseq
        %v974 = vshrl.u32 %v973, 7
        %v975 = vsub.s32 %v972, %v974
        %v976 = vrot.slane %v589, %v975
        %v978 = vunpack.c.l.s4 1983009808
        %v979 = vunpack.c.0.s8 %v978
        %v980 = vlaneseq
        %v981 = vshrl.u32 %v980, 7
        %v982 = vsub.s32 %v979, %v981
        %v983 = vrot.slane %v969, %v982
        %v984 = vcombine.high %v976, %v976
        %v985 = vcombine.high %v983, %v983
        %v986 = vcombine.high %v594, %v594
        %v988 = vunpack.c.l.s4 1983009808
        %v989 = vunpack.c.0.s8 %v988
        %v990 = vlaneseq
        %v991 = vshrl.u32 %v990, 7
        %v992 = vsub.s32 %v989, %v991
        %v993 = vrot.slane %v594, %v992
        %v995 = vunpack.c.l.s4 1983009808
        %v996 = vunpack.c.0.s8 %v995
        %v997 = vlaneseq
        %v998 = vshrl.u32 %v997, 7
        %v999 = vsub.s32 %v996, %v998
        %v1000 = vrot.slane %v986, %v999
        %v1001 = vcombine.high %v993, %v993
        %v1002 = vcombine.high %v1000, %v1000
        %v1003 = vcombine.high %v597, %v597
        %v1005 = vunpack.c.l.s4 1983009808
        %v1006 = vunpack.c.0.s8 %v1005
        %v1007 = vlaneseq
        %v1008 = vshrl.u32 %v1007, 7
        %v1009 = vsub.s32 %v1006, %v1008
        %v1010 = vrot.slane %v597, %v1009
        %v1012 = vunpack.c.l.s4 1983009808
        %v1013 = vunpack.c.0.s8 %v1012
        %v1014 = vlaneseq
        %v1015 = vshrl.u32 %v1014, 7
        %v1016 = vsub.s32 %v1013, %v1015
        %v1017 = vrot.slane %v1003, %v1016
        %v1018 = vcombine.high %v1010, %v1010
        %v1019 = vcombine.high %v1017, %v1017
        %v1020 = vcombine.high %v602, %v602
        %v1022 = vunpack.c.l.s4 1983009808
        %v1023 = vunpack.c.0.s8 %v1022
        %v1024 = vlaneseq
        %v1025 = vshrl.u32 %v1024, 7
        %v1026 = vsub.s32 %v1023, %v1025
        %v1027 = vrot.slane %v602, %v1026
        %v1029 = vunpack.c.l.s4 1983009808
        %v1030 = vunpack.c.0.s8 %v1029
        %v1031 = vlaneseq
        %v1032 = vshrl.u32 %v1031, 7
        %v1033 = vsub.s32 %v1030, %v1032
        %v1034 = vrot.slane %v1020, %v1033
        %v1035 = vcombine.high %v1027, %v1027
        %v1036 = vcombine.high %v1034, %v1034
        %v1037 = vcombine.high %v605, %v605
        %v1039 = vunpack.c.l.s4 1983009808
        %v1040 = vunpack.c.0.s8 %v1039
        %v1041 = vlaneseq
        %v1042 = vshrl.u32 %v1041, 7
        %v1043 = vsub.s32 %v1040, %v1042
        %v1044 = vrot.slane %v605, %v1043
        %v1046 = vunpack.c.l.s4 1983009808
        %v1047 = vunpack.c.0.s8 %v1046
        %v1048 = vlaneseq
        %v1049 = vshrl.u32 %v1048, 7
        %v1050 = vsub.s32 %v1047, %v1049
        %v1051 = vrot.slane %v1037, %v1050
        %v1052 = vcombine.high %v1044, %v1044
        %v1053 = vcombine.high %v1051, %v1051
        %v1054 = vcombine.high %v610, %v610
        %v1056 = vunpack.c.l.s4 1983009808
        %v1057 = vunpack.c.0.s8 %v1056
        %v1058 = vlaneseq
        %v1059 = vshrl.u32 %v1058, 7
        %v1060 = vsub.s32 %v1057, %v1059
        %v1061 = vrot.slane %v610, %v1060
        %v1063 = vunpack.c.l.s4 1983009808
        %v1064 = vunpack.c.0.s8 %v1063
        %v1065 = vlaneseq
        %v1066 = vshrl.u32 %v1065, 7
        %v1067 = vsub.s32 %v1064, %v1066
        %v1068 = vrot.slane %v1054, %v1067
        %v1069 = vcombine.high %v1061, %v1061
        %v1070 = vcombine.high %v1068, %v1068
        %v1071 = vcombine.high %v613, %v613
        %v1073 = vunpack.c.l.s4 1983009808
        %v1074 = vunpack.c.0.s8 %v1073
        %v1075 = vlaneseq
        %v1076 = vshrl.u32 %v1075, 7
        %v1077 = vsub.s32 %v1074, %v1076
        %v1078 = vrot.slane %v613, %v1077
        %v1080 = vunpack.c.l.s4 1983009808
        %v1081 = vunpack.c.0.s8 %v1080
        %v1082 = vlaneseq
        %v1083 = vshrl.u32 %v1082, 7
        %v1084 = vsub.s32 %v1081, %v1083
        %v1085 = vrot.slane %v1071, %v1084
        %v1086 = vcombine.high %v1078, %v1078
        %v1087 = vcombine.high %v1085, %v1085
        %v1088 = vcombine.high %v618, %v618
        %v1090 = vunpack.c.l.s4 1983009808
        %v1091 = vunpack.c.0.s8 %v1090
        %v1092 = vlaneseq
        %v1093 = vshrl.u32 %v1092, 7
        %v1094 = vsub.s32 %v1091, %v1093
        %v1095 = vrot.slane %v618, %v1094
        %v1097 = vunpack.c.l.s4 1983009808
        %v1098 = vunpack.c.0.s8 %v1097
        %v1099 = vlaneseq
        %v1100 = vshrl.u32 %v1099, 7
        %v1101 = vsub.s32 %v1098, %v1100
        %v1102 = vrot.slane %v1088, %v1101
        %v1103 = vcombine.high %v1095, %v1095
        %v1104 = vcombine.high %v1102, %v1102
        %v1105 = vcombine.high %v621, %v621
        %v1107 = vunpack.c.l.s4 1983009808
        %v1108 = vunpack.c.0.s8 %v1107
        %v1109 = vlaneseq
        %v1110 = vshrl.u32 %v1109, 7
        %v1111 = vsub.s32 %v1108, %v1110
        %v1112 = vrot.slane %v621, %v1111
        %v1114 = vunpack.c.l.s4 1983009808
        %v1115 = vunpack.c.0.s8 %v1114
        %v1116 = vlaneseq
        %v1117 = vshrl.u32 %v1116, 7
        %v1118 = vsub.s32 %v1115, %v1117
        %v1119 = vrot.slane %v1105, %v1118
        %v1120 = vcombine.high %v1112, %v1112
        %v1121 = vcombine.high %v1119, %v1119
        %v1122 = vcombine.high %v626, %v626
        %v1124 = vunpack.c.l.s4 1983009808
        %v1125 = vunpack.c.0.s8 %v1124
        %v1126 = vlaneseq
        %v1127 = vshrl.u32 %v1126, 7
        %v1128 = vsub.s32 %v1125, %v1127
        %v1129 = vrot.slane %v626, %v1128
        %v1131 = vunpack.c.l.s4 1983009808
        %v1132 = vunpack.c.0.s8 %v1131
        %v1133 = vlaneseq
        %v1134 = vshrl.u32 %v1133, 7
        %v1135 = vsub.s32 %v1132, %v1134
        %v1136 = vrot.slane %v1122, %v1135
        %v1137 = vcombine.high %v1129, %v1129
        %v1138 = vcombine.high %v1136, %v1136
        %v1139 = vcombine.high %v629, %v629
        %v1141 = vunpack.c.l.s4 1983009808
        %v1142 = vunpack.c.0.s8 %v1141
        %v1143 = vlaneseq
        %v1144 = vshrl.u32 %v1143, 7
        %v1145 = vsub.s32 %v1142, %v1144
        %v1146 = vrot.slane %v629, %v1145
        %v1148 = vunpack.c.l.s4 1983009808
        %v1149 = vunpack.c.0.s8 %v1148
        %v1150 = vlaneseq
        %v1151 = vshrl.u32 %v1150, 7
        %v1152 = vsub.s32 %v1149, %v1151
        %v1153 = vrot.slane %v1139, %v1152
        %v1154 = vcombine.high %v1146, %v1146
        %v1155 = vcombine.high %v1153, %v1153
        %v1156 = vcombine.high %v634, %v634
        %v1158 = vunpack.c.l.s4 1983009808
        %v1159 = vunpack.c.0.s8 %v1158
        %v1160 = vlaneseq
        %v1161 = vshrl.u32 %v1160, 7
        %v1162 = vsub.s32 %v1159, %v1161
        %v1163 = vrot.slane %v634, %v1162
        %v1165 = vunpack.c.l.s4 1983009808
        %v1166 = vunpack.c.0.s8 %v1165
        %v1167 = vlaneseq
        %v1168 = vshrl.u32 %v1167, 7
        %v1169 = vsub.s32 %v1166, %v1168
        %v1170 = vrot.slane %v1156, %v1169
        %v1171 = vcombine.high %v1163, %v1163
        %v1172 = vcombine.high %v1170, %v1170
        %v1173 = vcombine.high %v637, %v637
        %v1175 = vunpack.c.l.s4 1983009808
        %v1176 = vunpack.c.0.s8 %v1175
        %v1177 = vlaneseq
        %v1178 = vshrl.u32 %v1177, 7
        %v1179 = vsub.s32 %v1176, %v1178
        %v1180 = vrot.slane %v637, %v1179
        %v1182 = vunpack.c.l.s4 1983009808
        %v1183 = vunpack.c.0.s8 %v1182
        %v1184 = vlaneseq
        %v1185 = vshrl.u32 %v1184, 7
        %v1186 = vsub.s32 %v1183, %v1185
        %v1187 = vrot.slane %v1173, %v1186
        %v1188 = vcombine.high %v1180, %v1180
        %v1189 = vcombine.high %v1187, %v1187
        %v1190 = vcombine.high %v642, %v642
        %v1192 = vunpack.c.l.s4 1983009808
        %v1193 = vunpack.c.0.s8 %v1192
        %v1194 = vlaneseq
        %v1195 = vshrl.u32 %v1194, 7
        %v1196 = vsub.s32 %v1193, %v1195
        %v1197 = vrot.slane %v642, %v1196
        %v1199 = vunpack.c.l.s4 1983009808
        %v1200 = vunpack.c.0.s8 %v1199
        %v1201 = vlaneseq
        %v1202 = vshrl.u32 %v1201, 7
        %v1203 = vsub.s32 %v1200, %v1202
        %v1204 = vrot.slane %v1190, %v1203
        %v1205 = vcombine.high %v1197, %v1197
        %v1206 = vcombine.high %v1204, %v1204
        %v1207 = vcombine.high %v645, %v645
        %v1209 = vunpack.c.l.s4 1983009808
        %v1210 = vunpack.c.0.s8 %v1209
        %v1211 = vlaneseq
        %v1212 = vshrl.u32 %v1211, 7
        %v1213 = vsub.s32 %v1210, %v1212
        %v1214 = vrot.slane %v645, %v1213
        %v1216 = vunpack.c.l.s4 1983009808
        %v1217 = vunpack.c.0.s8 %v1216
        %v1218 = vlaneseq
        %v1219 = vshrl.u32 %v1218, 7
        %v1220 = vsub.s32 %v1217, %v1219
        %v1221 = vrot.slane %v1207, %v1220
        %v1222 = vcombine.high %v1214, %v1214
        %v1223 = vcombine.high %v1221, %v1221
        %vm1352 = vcmask 517120
        %v1353 = vsel %vm1352, %v687, -inf
        %v1354 = vrot.slane %v1353, 4
        %v1355 = vmax.f32 %v1353, %v1354
        %v1356 = vrot.slane %v1355, 2
        %v1357 = vmax.f32 %v1355, %v1356
        %v1358 = vrot.slane %v1357, 1
        %v1359 = vmax.f32 %v1357, %v1358
        %v1360 = vsel %vm1352, %v695, -inf
        %v1361 = vrot.slane %v1360, 4
        %v1362 = vmax.f32 %v1360, %v1361
        %v1363 = vrot.slane %v1362, 2
        %v1364 = vmax.f32 %v1362, %v1363
        %v1365 = vrot.slane %v1364, 1
        %v1366 = vmax.f32 %v1364, %v1365
        %v1367 = vsel %vm1352, %v694, -inf
        %v1368 = vrot.slane %v1367, 4
        %v1369 = vmax.f32 %v1367, %v1368
        %v1370 = vrot.slane %v1369, 2
        %v1371 = vmax.f32 %v1369, %v1370
        %v1372 = vrot.slane %v1371, 1
        %v1373 = vmax.f32 %v1371, %v1372
        %v1374 = vsel %vm1352, %v696, -inf
        %v1375 = vrot.slane %v1374, 4
        %v1376 = vmax.f32 %v1374, %v1375
        %v1377 = vrot.slane %v1376, 2
        %v1378 = vmax.f32 %v1376, %v1377
        %v1379 = vrot.slane %v1378, 1
        %v1380 = vmax.f32 %v1378, %v1379
        %v1381 = vsel %vm1352, %v704, -inf
        %v1382 = vrot.slane %v1381, 4
        %v1383 = vmax.f32 %v1381, %v1382
        %v1384 = vrot.slane %v1383, 2
        %v1385 = vmax.f32 %v1383, %v1384
        %v1386 = vrot.slane %v1385, 1
        %v1387 = vmax.f32 %v1385, %v1386
        %v1388 = vsel %vm1352, %v712, -inf
        %v1389 = vrot.slane %v1388, 4
        %v1390 = vmax.f32 %v1388, %v1389
        %v1391 = vrot.slane %v1390, 2
        %v1392 = vmax.f32 %v1390, %v1391
        %v1393 = vrot.slane %v1392, 1
        %v1394 = vmax.f32 %v1392, %v1393
        %v1395 = vsel %vm1352, %v711, -inf
        %v1396 = vrot.slane %v1395, 4
        %v1397 = vmax.f32 %v1395, %v1396
        %v1398 = vrot.slane %v1397, 2
        %v1399 = vmax.f32 %v1397, %v1398
        %v1400 = vrot.slane %v1399, 1
        %v1401 = vmax.f32 %v1399, %v1400
        %v1402 = vsel %vm1352, %v713, -inf
        %v1403 = vrot.slane %v1402, 4
        %v1404 = vmax.f32 %v1402, %v1403
        %v1405 = vrot.slane %v1404, 2
        %v1406 = vmax.f32 %v1404, %v1405
        %v1407 = vrot.slane %v1406, 1
        %v1408 = vmax.f32 %v1406, %v1407
        %v1409 = vsel %vm1352, %v721, -inf
        %v1410 = vrot.slane %v1409, 4
        %v1411 = vmax.f32 %v1409, %v1410
        %v1412 = vrot.slane %v1411, 2
        %v1413 = vmax.f32 %v1411, %v1412
        %v1414 = vrot.slane %v1413, 1
        %v1415 = vmax.f32 %v1413, %v1414
        %v1416 = vsel %vm1352, %v729, -inf
        %v1417 = vrot.slane %v1416, 4
        %v1418 = vmax.f32 %v1416, %v1417
        %v1419 = vrot.slane %v1418, 2
        %v1420 = vmax.f32 %v1418, %v1419
        %v1421 = vrot.slane %v1420, 1
        %v1422 = vmax.f32 %v1420, %v1421
        %v1423 = vsel %vm1352, %v728, -inf
        %v1424 = vrot.slane %v1423, 4
        %v1425 = vmax.f32 %v1423, %v1424
        %v1426 = vrot.slane %v1425, 2
        %v1427 = vmax.f32 %v1425, %v1426
        %v1428 = vrot.slane %v1427, 1
        %v1429 = vmax.f32 %v1427, %v1428
        %v1430 = vsel %vm1352, %v730, -inf
        %v1431 = vrot.slane %v1430, 4
        %v1432 = vmax.f32 %v1430, %v1431
        %v1433 = vrot.slane %v1432, 2
        %v1434 = vmax.f32 %v1432, %v1433
        %v1435 = vrot.slane %v1434, 1
        %v1436 = vmax.f32 %v1434, %v1435
        %v1437 = vsel %vm1352, %v738, -inf
        %v1438 = vrot.slane %v1437, 4
        %v1439 = vmax.f32 %v1437, %v1438
        %v1440 = vrot.slane %v1439, 2
        %v1441 = vmax.f32 %v1439, %v1440
        %v1442 = vrot.slane %v1441, 1
        %v1443 = vmax.f32 %v1441, %v1442
        %v1444 = vsel %vm1352, %v746, -inf
        %v1445 = vrot.slane %v1444, 4
        %v1446 = vmax.f32 %v1444, %v1445
        %v1447 = vrot.slane %v1446, 2
        %v1448 = vmax.f32 %v1446, %v1447
        %v1449 = vrot.slane %v1448, 1
        %v1450 = vmax.f32 %v1448, %v1449
        %v1451 = vsel %vm1352, %v745, -inf
        %v1452 = vrot.slane %v1451, 4
        %v1453 = vmax.f32 %v1451, %v1452
        %v1454 = vrot.slane %v1453, 2
        %v1455 = vmax.f32 %v1453, %v1454
        %v1456 = vrot.slane %v1455, 1
        %v1457 = vmax.f32 %v1455, %v1456
        %v1458 = vsel %vm1352, %v747, -inf
        %v1459 = vrot.slane %v1458, 4
        %v1460 = vmax.f32 %v1458, %v1459
        %v1461 = vrot.slane %v1460, 2
        %v1462 = vmax.f32 %v1460, %v1461
        %v1463 = vrot.slane %v1462, 1
        %v1464 = vmax.f32 %v1462, %v1463
        %v1465 = vsel %vm1352, %v755, -inf
        %v1466 = vrot.slane %v1465, 4
        %v1467 = vmax.f32 %v1465, %v1466
        %v1468 = vrot.slane %v1467, 2
        %v1469 = vmax.f32 %v1467, %v1468
        %v1470 = vrot.slane %v1469, 1
        %v1471 = vmax.f32 %v1469, %v1470
        %v1472 = vsel %vm1352, %v763, -inf
        %v1473 = vrot.slane %v1472, 4
        %v1474 = vmax.f32 %v1472, %v1473
        %v1475 = vrot.slane %v1474, 2
        %v1476 = vmax.f32 %v1474, %v1475
        %v1477 = vrot.slane %v1476, 1
        %v1478 = vmax.f32 %v1476, %v1477
        %v1479 = vsel %vm1352, %v762, -inf
        %v1480 = vrot.slane %v1479, 4
        %v1481 = vmax.f32 %v1479, %v1480
        %v1482 = vrot.slane %v1481, 2
        %v1483 = vmax.f32 %v1481, %v1482
        %v1484 = vrot.slane %v1483, 1
        %v1485 = vmax.f32 %v1483, %v1484
        %v1486 = vsel %vm1352, %v764, -inf
        %v1487 = vrot.slane %v1486, 4
        %v1488 = vmax.f32 %v1486, %v1487
        %v1489 = vrot.slane %v1488, 2
        %v1490 = vmax.f32 %v1488, %v1489
        %v1491 = vrot.slane %v1490, 1
        %v1492 = vmax.f32 %v1490, %v1491
        %v1493 = vsel %vm1352, %v772, -inf
        %v1494 = vrot.slane %v1493, 4
        %v1495 = vmax.f32 %v1493, %v1494
        %v1496 = vrot.slane %v1495, 2
        %v1497 = vmax.f32 %v1495, %v1496
        %v1498 = vrot.slane %v1497, 1
        %v1499 = vmax.f32 %v1497, %v1498
        %v1500 = vsel %vm1352, %v780, -inf
        %v1501 = vrot.slane %v1500, 4
        %v1502 = vmax.f32 %v1500, %v1501
        %v1503 = vrot.slane %v1502, 2
        %v1504 = vmax.f32 %v1502, %v1503
        %v1505 = vrot.slane %v1504, 1
        %v1506 = vmax.f32 %v1504, %v1505
        %v1507 = vsel %vm1352, %v779, -inf
        %v1508 = vrot.slane %v1507, 4
        %v1509 = vmax.f32 %v1507, %v1508
        %v1510 = vrot.slane %v1509, 2
        %v1511 = vmax.f32 %v1509, %v1510
        %v1512 = vrot.slane %v1511, 1
        %v1513 = vmax.f32 %v1511, %v1512
        %v1514 = vsel %vm1352, %v781, -inf
        %v1515 = vrot.slane %v1514, 4
        %v1516 = vmax.f32 %v1514, %v1515
        %v1517 = vrot.slane %v1516, 2
        %v1518 = vmax.f32 %v1516, %v1517
        %v1519 = vrot.slane %v1518, 1
        %v1520 = vmax.f32 %v1518, %v1519
        %v1521 = vsel %vm1352, %v789, -inf
        %v1522 = vrot.slane %v1521, 4
        %v1523 = vmax.f32 %v1521, %v1522
        %v1524 = vrot.slane %v1523, 2
        %v1525 = vmax.f32 %v1523, %v1524
        %v1526 = vrot.slane %v1525, 1
        %v1527 = vmax.f32 %v1525, %v1526
        %v1528 = vsel %vm1352, %v797, -inf
        %v1529 = vrot.slane %v1528, 4
        %v1530 = vmax.f32 %v1528, %v1529
        %v1531 = vrot.slane %v1530, 2
        %v1532 = vmax.f32 %v1530, %v1531
        %v1533 = vrot.slane %v1532, 1
        %v1534 = vmax.f32 %v1532, %v1533
        %v1535 = vsel %vm1352, %v796, -inf
        %v1536 = vrot.slane %v1535, 4
        %v1537 = vmax.f32 %v1535, %v1536
        %v1538 = vrot.slane %v1537, 2
        %v1539 = vmax.f32 %v1537, %v1538
        %v1540 = vrot.slane %v1539, 1
        %v1541 = vmax.f32 %v1539, %v1540
        %v1542 = vsel %vm1352, %v798, -inf
        %v1543 = vrot.slane %v1542, 4
        %v1544 = vmax.f32 %v1542, %v1543
        %v1545 = vrot.slane %v1544, 2
        %v1546 = vmax.f32 %v1544, %v1545
        %v1547 = vrot.slane %v1546, 1
        %v1548 = vmax.f32 %v1546, %v1547
        %v1549 = vsel %vm1352, %v806, -inf
        %v1550 = vrot.slane %v1549, 4
        %v1551 = vmax.f32 %v1549, %v1550
        %v1552 = vrot.slane %v1551, 2
        %v1553 = vmax.f32 %v1551, %v1552
        %v1554 = vrot.slane %v1553, 1
        %v1555 = vmax.f32 %v1553, %v1554
        %v1556 = vsel %vm1352, %v814, -inf
        %v1557 = vrot.slane %v1556, 4
        %v1558 = vmax.f32 %v1556, %v1557
        %v1559 = vrot.slane %v1558, 2
        %v1560 = vmax.f32 %v1558, %v1559
        %v1561 = vrot.slane %v1560, 1
        %v1562 = vmax.f32 %v1560, %v1561
        %v1563 = vsel %vm1352, %v813, -inf
        %v1564 = vrot.slane %v1563, 4
        %v1565 = vmax.f32 %v1563, %v1564
        %v1566 = vrot.slane %v1565, 2
        %v1567 = vmax.f32 %v1565, %v1566
        %v1568 = vrot.slane %v1567, 1
        %v1569 = vmax.f32 %v1567, %v1568
        %v1570 = vsel %vm1352, %v815, -inf
        %v1571 = vrot.slane %v1570, 4
        %v1572 = vmax.f32 %v1570, %v1571
        %v1573 = vrot.slane %v1572, 2
        %v1574 = vmax.f32 %v1572, %v1573
        %v1575 = vrot.slane %v1574, 1
        %v1576 = vmax.f32 %v1574, %v1575
        %v1577 = vsel %vm1352, %v823, -inf
        %v1578 = vrot.slane %v1577, 4
        %v1579 = vmax.f32 %v1577, %v1578
        %v1580 = vrot.slane %v1579, 2
        %v1581 = vmax.f32 %v1579, %v1580
        %v1582 = vrot.slane %v1581, 1
        %v1583 = vmax.f32 %v1581, %v1582
        %v1584 = vsel %vm1352, %v831, -inf
        %v1585 = vrot.slane %v1584, 4
        %v1586 = vmax.f32 %v1584, %v1585
        %v1587 = vrot.slane %v1586, 2
        %v1588 = vmax.f32 %v1586, %v1587
        %v1589 = vrot.slane %v1588, 1
        %v1590 = vmax.f32 %v1588, %v1589
        %v1591 = vsel %vm1352, %v830, -inf
        %v1592 = vrot.slane %v1591, 4
        %v1593 = vmax.f32 %v1591, %v1592
        %v1594 = vrot.slane %v1593, 2
        %v1595 = vmax.f32 %v1593, %v1594
        %v1596 = vrot.slane %v1595, 1
        %v1597 = vmax.f32 %v1595, %v1596
        %v1598 = vsel %vm1352, %v832, -inf
        %v1599 = vrot.slane %v1598, 4
        %v1600 = vmax.f32 %v1598, %v1599
        %v1601 = vrot.slane %v1600, 2
        %v1602 = vmax.f32 %v1600, %v1601
        %v1603 = vrot.slane %v1602, 1
        %v1604 = vmax.f32 %v1602, %v1603
        %v1605 = vsel %vm1352, %v840, -inf
        %v1606 = vrot.slane %v1605, 4
        %v1607 = vmax.f32 %v1605, %v1606
        %v1608 = vrot.slane %v1607, 2
        %v1609 = vmax.f32 %v1607, %v1608
        %v1610 = vrot.slane %v1609, 1
        %v1611 = vmax.f32 %v1609, %v1610
        %v1612 = vsel %vm1352, %v848, -inf
        %v1613 = vrot.slane %v1612, 4
        %v1614 = vmax.f32 %v1612, %v1613
        %v1615 = vrot.slane %v1614, 2
        %v1616 = vmax.f32 %v1614, %v1615
        %v1617 = vrot.slane %v1616, 1
        %v1618 = vmax.f32 %v1616, %v1617
        %v1619 = vsel %vm1352, %v847, -inf
        %v1620 = vrot.slane %v1619, 4
        %v1621 = vmax.f32 %v1619, %v1620
        %v1622 = vrot.slane %v1621, 2
        %v1623 = vmax.f32 %v1621, %v1622
        %v1624 = vrot.slane %v1623, 1
        %v1625 = vmax.f32 %v1623, %v1624
        %v1626 = vsel %vm1352, %v849, -inf
        %v1627 = vrot.slane %v1626, 4
        %v1628 = vmax.f32 %v1626, %v1627
        %v1629 = vrot.slane %v1628, 2
        %v1630 = vmax.f32 %v1628, %v1629
        %v1631 = vrot.slane %v1630, 1
        %v1632 = vmax.f32 %v1630, %v1631
        %v1633 = vsel %vm1352, %v857, -inf
        %v1634 = vrot.slane %v1633, 4
        %v1635 = vmax.f32 %v1633, %v1634
        %v1636 = vrot.slane %v1635, 2
        %v1637 = vmax.f32 %v1635, %v1636
        %v1638 = vrot.slane %v1637, 1
        %v1639 = vmax.f32 %v1637, %v1638
        %v1640 = vsel %vm1352, %v865, -inf
        %v1641 = vrot.slane %v1640, 4
        %v1642 = vmax.f32 %v1640, %v1641
        %v1643 = vrot.slane %v1642, 2
        %v1644 = vmax.f32 %v1642, %v1643
        %v1645 = vrot.slane %v1644, 1
        %v1646 = vmax.f32 %v1644, %v1645
        %v1647 = vsel %vm1352, %v864, -inf
        %v1648 = vrot.slane %v1647, 4
        %v1649 = vmax.f32 %v1647, %v1648
        %v1650 = vrot.slane %v1649, 2
        %v1651 = vmax.f32 %v1649, %v1650
        %v1652 = vrot.slane %v1651, 1
        %v1653 = vmax.f32 %v1651, %v1652
        %v1654 = vsel %vm1352, %v866, -inf
        %v1655 = vrot.slane %v1654, 4
        %v1656 = vmax.f32 %v1654, %v1655
        %v1657 = vrot.slane %v1656, 2
        %v1658 = vmax.f32 %v1656, %v1657
        %v1659 = vrot.slane %v1658, 1
        %v1660 = vmax.f32 %v1658, %v1659
        %v1661 = vsel %vm1352, %v874, -inf
        %v1662 = vrot.slane %v1661, 4
        %v1663 = vmax.f32 %v1661, %v1662
        %v1664 = vrot.slane %v1663, 2
        %v1665 = vmax.f32 %v1663, %v1664
        %v1666 = vrot.slane %v1665, 1
        %v1667 = vmax.f32 %v1665, %v1666
        %v1668 = vsel %vm1352, %v882, -inf
        %v1669 = vrot.slane %v1668, 4
        %v1670 = vmax.f32 %v1668, %v1669
        %v1671 = vrot.slane %v1670, 2
        %v1672 = vmax.f32 %v1670, %v1671
        %v1673 = vrot.slane %v1672, 1
        %v1674 = vmax.f32 %v1672, %v1673
        %v1675 = vsel %vm1352, %v881, -inf
        %v1676 = vrot.slane %v1675, 4
        %v1677 = vmax.f32 %v1675, %v1676
        %v1678 = vrot.slane %v1677, 2
        %v1679 = vmax.f32 %v1677, %v1678
        %v1680 = vrot.slane %v1679, 1
        %v1681 = vmax.f32 %v1679, %v1680
        %v1682 = vsel %vm1352, %v883, -inf
        %v1683 = vrot.slane %v1682, 4
        %v1684 = vmax.f32 %v1682, %v1683
        %v1685 = vrot.slane %v1684, 2
        %v1686 = vmax.f32 %v1684, %v1685
        %v1687 = vrot.slane %v1686, 1
        %v1688 = vmax.f32 %v1686, %v1687
        %v1689 = vsel %vm1352, %v891, -inf
        %v1690 = vrot.slane %v1689, 4
        %v1691 = vmax.f32 %v1689, %v1690
        %v1692 = vrot.slane %v1691, 2
        %v1693 = vmax.f32 %v1691, %v1692
        %v1694 = vrot.slane %v1693, 1
        %v1695 = vmax.f32 %v1693, %v1694
        %v1696 = vsel %vm1352, %v899, -inf
        %v1697 = vrot.slane %v1696, 4
        %v1698 = vmax.f32 %v1696, %v1697
        %v1699 = vrot.slane %v1698, 2
        %v1700 = vmax.f32 %v1698, %v1699
        %v1701 = vrot.slane %v1700, 1
        %v1702 = vmax.f32 %v1700, %v1701
        %v1703 = vsel %vm1352, %v898, -inf
        %v1704 = vrot.slane %v1703, 4
        %v1705 = vmax.f32 %v1703, %v1704
        %v1706 = vrot.slane %v1705, 2
        %v1707 = vmax.f32 %v1705, %v1706
        %v1708 = vrot.slane %v1707, 1
        %v1709 = vmax.f32 %v1707, %v1708
        %v1710 = vsel %vm1352, %v900, -inf
        %v1711 = vrot.slane %v1710, 4
        %v1712 = vmax.f32 %v1710, %v1711
        %v1713 = vrot.slane %v1712, 2
        %v1714 = vmax.f32 %v1712, %v1713
        %v1715 = vrot.slane %v1714, 1
        %v1716 = vmax.f32 %v1714, %v1715
        %v1717 = vsel %vm1352, %v908, -inf
        %v1718 = vrot.slane %v1717, 4
        %v1719 = vmax.f32 %v1717, %v1718
        %v1720 = vrot.slane %v1719, 2
        %v1721 = vmax.f32 %v1719, %v1720
        %v1722 = vrot.slane %v1721, 1
        %v1723 = vmax.f32 %v1721, %v1722
        %v1724 = vsel %vm1352, %v916, -inf
        %v1725 = vrot.slane %v1724, 4
        %v1726 = vmax.f32 %v1724, %v1725
        %v1727 = vrot.slane %v1726, 2
        %v1728 = vmax.f32 %v1726, %v1727
        %v1729 = vrot.slane %v1728, 1
        %v1730 = vmax.f32 %v1728, %v1729
        %v1731 = vsel %vm1352, %v915, -inf
        %v1732 = vrot.slane %v1731, 4
        %v1733 = vmax.f32 %v1731, %v1732
        %v1734 = vrot.slane %v1733, 2
        %v1735 = vmax.f32 %v1733, %v1734
        %v1736 = vrot.slane %v1735, 1
        %v1737 = vmax.f32 %v1735, %v1736
        %v1738 = vsel %vm1352, %v917, -inf
        %v1739 = vrot.slane %v1738, 4
        %v1740 = vmax.f32 %v1738, %v1739
        %v1741 = vrot.slane %v1740, 2
        %v1742 = vmax.f32 %v1740, %v1741
        %v1743 = vrot.slane %v1742, 1
        %v1744 = vmax.f32 %v1742, %v1743
        %v1745 = vsel %vm1352, %v925, -inf
        %v1746 = vrot.slane %v1745, 4
        %v1747 = vmax.f32 %v1745, %v1746
        %v1748 = vrot.slane %v1747, 2
        %v1749 = vmax.f32 %v1747, %v1748
        %v1750 = vrot.slane %v1749, 1
        %v1751 = vmax.f32 %v1749, %v1750
        %v1752 = vsel %vm1352, %v933, -inf
        %v1753 = vrot.slane %v1752, 4
        %v1754 = vmax.f32 %v1752, %v1753
        %v1755 = vrot.slane %v1754, 2
        %v1756 = vmax.f32 %v1754, %v1755
        %v1757 = vrot.slane %v1756, 1
        %v1758 = vmax.f32 %v1756, %v1757
        %v1759 = vsel %vm1352, %v932, -inf
        %v1760 = vrot.slane %v1759, 4
        %v1761 = vmax.f32 %v1759, %v1760
        %v1762 = vrot.slane %v1761, 2
        %v1763 = vmax.f32 %v1761, %v1762
        %v1764 = vrot.slane %v1763, 1
        %v1765 = vmax.f32 %v1763, %v1764
        %v1766 = vsel %vm1352, %v934, -inf
        %v1767 = vrot.slane %v1766, 4
        %v1768 = vmax.f32 %v1766, %v1767
        %v1769 = vrot.slane %v1768, 2
        %v1770 = vmax.f32 %v1768, %v1769
        %v1771 = vrot.slane %v1770, 1
        %v1772 = vmax.f32 %v1770, %v1771
        %v1773 = vsel %vm1352, %v942, -inf
        %v1774 = vrot.slane %v1773, 4
        %v1775 = vmax.f32 %v1773, %v1774
        %v1776 = vrot.slane %v1775, 2
        %v1777 = vmax.f32 %v1775, %v1776
        %v1778 = vrot.slane %v1777, 1
        %v1779 = vmax.f32 %v1777, %v1778
        %v1780 = vsel %vm1352, %v950, -inf
        %v1781 = vrot.slane %v1780, 4
        %v1782 = vmax.f32 %v1780, %v1781
        %v1783 = vrot.slane %v1782, 2
        %v1784 = vmax.f32 %v1782, %v1783
        %v1785 = vrot.slane %v1784, 1
        %v1786 = vmax.f32 %v1784, %v1785
        %v1787 = vsel %vm1352, %v949, -inf
        %v1788 = vrot.slane %v1787, 4
        %v1789 = vmax.f32 %v1787, %v1788
        %v1790 = vrot.slane %v1789, 2
        %v1791 = vmax.f32 %v1789, %v1790
        %v1792 = vrot.slane %v1791, 1
        %v1793 = vmax.f32 %v1791, %v1792
        %v1794 = vsel %vm1352, %v951, -inf
        %v1795 = vrot.slane %v1794, 4
        %v1796 = vmax.f32 %v1794, %v1795
        %v1797 = vrot.slane %v1796, 2
        %v1798 = vmax.f32 %v1796, %v1797
        %v1799 = vrot.slane %v1798, 1
        %v1800 = vmax.f32 %v1798, %v1799
        %v1801 = vsel %vm1352, %v959, -inf
        %v1802 = vrot.slane %v1801, 4
        %v1803 = vmax.f32 %v1801, %v1802
        %v1804 = vrot.slane %v1803, 2
        %v1805 = vmax.f32 %v1803, %v1804
        %v1806 = vrot.slane %v1805, 1
        %v1807 = vmax.f32 %v1805, %v1806
        %v1808 = vsel %vm1352, %v967, -inf
        %v1809 = vrot.slane %v1808, 4
        %v1810 = vmax.f32 %v1808, %v1809
        %v1811 = vrot.slane %v1810, 2
        %v1812 = vmax.f32 %v1810, %v1811
        %v1813 = vrot.slane %v1812, 1
        %v1814 = vmax.f32 %v1812, %v1813
        %v1815 = vsel %vm1352, %v966, -inf
        %v1816 = vrot.slane %v1815, 4
        %v1817 = vmax.f32 %v1815, %v1816
        %v1818 = vrot.slane %v1817, 2
        %v1819 = vmax.f32 %v1817, %v1818
        %v1820 = vrot.slane %v1819, 1
        %v1821 = vmax.f32 %v1819, %v1820
        %v1822 = vsel %vm1352, %v968, -inf
        %v1823 = vrot.slane %v1822, 4
        %v1824 = vmax.f32 %v1822, %v1823
        %v1825 = vrot.slane %v1824, 2
        %v1826 = vmax.f32 %v1824, %v1825
        %v1827 = vrot.slane %v1826, 1
        %v1828 = vmax.f32 %v1826, %v1827
        %v1829 = vsel %vm1352, %v976, -inf
        %v1830 = vrot.slane %v1829, 4
        %v1831 = vmax.f32 %v1829, %v1830
        %v1832 = vrot.slane %v1831, 2
        %v1833 = vmax.f32 %v1831, %v1832
        %v1834 = vrot.slane %v1833, 1
        %v1835 = vmax.f32 %v1833, %v1834
        %v1836 = vsel %vm1352, %v984, -inf
        %v1837 = vrot.slane %v1836, 4
        %v1838 = vmax.f32 %v1836, %v1837
        %v1839 = vrot.slane %v1838, 2
        %v1840 = vmax.f32 %v1838, %v1839
        %v1841 = vrot.slane %v1840, 1
        %v1842 = vmax.f32 %v1840, %v1841
        %v1843 = vsel %vm1352, %v983, -inf
        %v1844 = vrot.slane %v1843, 4
        %v1845 = vmax.f32 %v1843, %v1844
        %v1846 = vrot.slane %v1845, 2
        %v1847 = vmax.f32 %v1845, %v1846
        %v1848 = vrot.slane %v1847, 1
        %v1849 = vmax.f32 %v1847, %v1848
        %v1850 = vsel %vm1352, %v985, -inf
        %v1851 = vrot.slane %v1850, 4
        %v1852 = vmax.f32 %v1850, %v1851
        %v1853 = vrot.slane %v1852, 2
        %v1854 = vmax.f32 %v1852, %v1853
        %v1855 = vrot.slane %v1854, 1
        %v1856 = vmax.f32 %v1854, %v1855
        %v1857 = vsel %vm1352, %v993, -inf
        %v1858 = vrot.slane %v1857, 4
        %v1859 = vmax.f32 %v1857, %v1858
        %v1860 = vrot.slane %v1859, 2
        %v1861 = vmax.f32 %v1859, %v1860
        %v1862 = vrot.slane %v1861, 1
        %v1863 = vmax.f32 %v1861, %v1862
        %v1864 = vsel %vm1352, %v1001, -inf
        %v1865 = vrot.slane %v1864, 4
        %v1866 = vmax.f32 %v1864, %v1865
        %v1867 = vrot.slane %v1866, 2
        %v1868 = vmax.f32 %v1866, %v1867
        %v1869 = vrot.slane %v1868, 1
        %v1870 = vmax.f32 %v1868, %v1869
        %v1871 = vsel %vm1352, %v1000, -inf
        %v1872 = vrot.slane %v1871, 4
        %v1873 = vmax.f32 %v1871, %v1872
        %v1874 = vrot.slane %v1873, 2
        %v1875 = vmax.f32 %v1873, %v1874
        %v1876 = vrot.slane %v1875, 1
        %v1877 = vmax.f32 %v1875, %v1876
        %v1878 = vsel %vm1352, %v1002, -inf
        %v1879 = vrot.slane %v1878, 4
        %v1880 = vmax.f32 %v1878, %v1879
        %v1881 = vrot.slane %v1880, 2
        %v1882 = vmax.f32 %v1880, %v1881
        %v1883 = vrot.slane %v1882, 1
        %v1884 = vmax.f32 %v1882, %v1883
        %v1885 = vsel %vm1352, %v1010, -inf
        %v1886 = vrot.slane %v1885, 4
        %v1887 = vmax.f32 %v1885, %v1886
        %v1888 = vrot.slane %v1887, 2
        %v1889 = vmax.f32 %v1887, %v1888
        %v1890 = vrot.slane %v1889, 1
        %v1891 = vmax.f32 %v1889, %v1890
        %v1892 = vsel %vm1352, %v1018, -inf
        %v1893 = vrot.slane %v1892, 4
        %v1894 = vmax.f32 %v1892, %v1893
        %v1895 = vrot.slane %v1894, 2
        %v1896 = vmax.f32 %v1894, %v1895
        %v1897 = vrot.slane %v1896, 1
        %v1898 = vmax.f32 %v1896, %v1897
        %v1899 = vsel %vm1352, %v1017, -inf
        %v1900 = vrot.slane %v1899, 4
        %v1901 = vmax.f32 %v1899, %v1900
        %v1902 = vrot.slane %v1901, 2
        %v1903 = vmax.f32 %v1901, %v1902
        %v1904 = vrot.slane %v1903, 1
        %v1905 = vmax.f32 %v1903, %v1904
        %v1906 = vsel %vm1352, %v1019, -inf
        %v1907 = vrot.slane %v1906, 4
        %v1908 = vmax.f32 %v1906, %v1907
        %v1909 = vrot.slane %v1908, 2
        %v1910 = vmax.f32 %v1908, %v1909
        %v1911 = vrot.slane %v1910, 1
        %v1912 = vmax.f32 %v1910, %v1911
        %v1913 = vsel %vm1352, %v1027, -inf
        %v1914 = vrot.slane %v1913, 4
        %v1915 = vmax.f32 %v1913, %v1914
        %v1916 = vrot.slane %v1915, 2
        %v1917 = vmax.f32 %v1915, %v1916
        %v1918 = vrot.slane %v1917, 1
        %v1919 = vmax.f32 %v1917, %v1918
        %v1920 = vsel %vm1352, %v1035, -inf
        %v1921 = vrot.slane %v1920, 4
        %v1922 = vmax.f32 %v1920, %v1921
        %v1923 = vrot.slane %v1922, 2
        %v1924 = vmax.f32 %v1922, %v1923
        %v1925 = vrot.slane %v1924, 1
        %v1926 = vmax.f32 %v1924, %v1925
        %v1927 = vsel %vm1352, %v1034, -inf
        %v1928 = vrot.slane %v1927, 4
        %v1929 = vmax.f32 %v1927, %v1928
        %v1930 = vrot.slane %v1929, 2
        %v1931 = vmax.f32 %v1929, %v1930
        %v1932 = vrot.slane %v1931, 1
        %v1933 = vmax.f32 %v1931, %v1932
        %v1934 = vsel %vm1352, %v1036, -inf
        %v1935 = vrot.slane %v1934, 4
        %v1936 = vmax.f32 %v1934, %v1935
        %v1937 = vrot.slane %v1936, 2
        %v1938 = vmax.f32 %v1936, %v1937
        %v1939 = vrot.slane %v1938, 1
        %v1940 = vmax.f32 %v1938, %v1939
        %v1941 = vsel %vm1352, %v1044, -inf
        %v1942 = vrot.slane %v1941, 4
        %v1943 = vmax.f32 %v1941, %v1942
        %v1944 = vrot.slane %v1943, 2
        %v1945 = vmax.f32 %v1943, %v1944
        %v1946 = vrot.slane %v1945, 1
        %v1947 = vmax.f32 %v1945, %v1946
        %v1948 = vsel %vm1352, %v1052, -inf
        %v1949 = vrot.slane %v1948, 4
        %v1950 = vmax.f32 %v1948, %v1949
        %v1951 = vrot.slane %v1950, 2
        %v1952 = vmax.f32 %v1950, %v1951
        %v1953 = vrot.slane %v1952, 1
        %v1954 = vmax.f32 %v1952, %v1953
        %v1955 = vsel %vm1352, %v1051, -inf
        %v1956 = vrot.slane %v1955, 4
        %v1957 = vmax.f32 %v1955, %v1956
        %v1958 = vrot.slane %v1957, 2
        %v1959 = vmax.f32 %v1957, %v1958
        %v1960 = vrot.slane %v1959, 1
        %v1961 = vmax.f32 %v1959, %v1960
        %v1962 = vsel %vm1352, %v1053, -inf
        %v1963 = vrot.slane %v1962, 4
        %v1964 = vmax.f32 %v1962, %v1963
        %v1965 = vrot.slane %v1964, 2
        %v1966 = vmax.f32 %v1964, %v1965
        %v1967 = vrot.slane %v1966, 1
        %v1968 = vmax.f32 %v1966, %v1967
        %v1969 = vsel %vm1352, %v1061, -inf
        %v1970 = vrot.slane %v1969, 4
        %v1971 = vmax.f32 %v1969, %v1970
        %v1972 = vrot.slane %v1971, 2
        %v1973 = vmax.f32 %v1971, %v1972
        %v1974 = vrot.slane %v1973, 1
        %v1975 = vmax.f32 %v1973, %v1974
        %v1976 = vsel %vm1352, %v1069, -inf
        %v1977 = vrot.slane %v1976, 4
        %v1978 = vmax.f32 %v1976, %v1977
        %v1979 = vrot.slane %v1978, 2
        %v1980 = vmax.f32 %v1978, %v1979
        %v1981 = vrot.slane %v1980, 1
        %v1982 = vmax.f32 %v1980, %v1981
        %v1983 = vsel %vm1352, %v1068, -inf
        %v1984 = vrot.slane %v1983, 4
        %v1985 = vmax.f32 %v1983, %v1984
        %v1986 = vrot.slane %v1985, 2
        %v1987 = vmax.f32 %v1985, %v1986
        %v1988 = vrot.slane %v1987, 1
        %v1989 = vmax.f32 %v1987, %v1988
        %v1990 = vsel %vm1352, %v1070, -inf
        %v1991 = vrot.slane %v1990, 4
        %v1992 = vmax.f32 %v1990, %v1991
        %v1993 = vrot.slane %v1992, 2
        %v1994 = vmax.f32 %v1992, %v1993
        %v1995 = vrot.slane %v1994, 1
        %v1996 = vmax.f32 %v1994, %v1995
        %v1997 = vsel %vm1352, %v1078, -inf
        %v1998 = vrot.slane %v1997, 4
        %v1999 = vmax.f32 %v1997, %v1998
        %v2000 = vrot.slane %v1999, 2
        %v2001 = vmax.f32 %v1999, %v2000
        %v2002 = vrot.slane %v2001, 1
        %v2003 = vmax.f32 %v2001, %v2002
        %v2004 = vsel %vm1352, %v1086, -inf
        %v2005 = vrot.slane %v2004, 4
        %v2006 = vmax.f32 %v2004, %v2005
        %v2007 = vrot.slane %v2006, 2
        %v2008 = vmax.f32 %v2006, %v2007
        %v2009 = vrot.slane %v2008, 1
        %v2010 = vmax.f32 %v2008, %v2009
        %v2011 = vsel %vm1352, %v1085, -inf
        %v2012 = vrot.slane %v2011, 4
        %v2013 = vmax.f32 %v2011, %v2012
        %v2014 = vrot.slane %v2013, 2
        %v2015 = vmax.f32 %v2013, %v2014
        %v2016 = vrot.slane %v2015, 1
        %v2017 = vmax.f32 %v2015, %v2016
        %v2018 = vsel %vm1352, %v1087, -inf
        %v2019 = vrot.slane %v2018, 4
        %v2020 = vmax.f32 %v2018, %v2019
        %v2021 = vrot.slane %v2020, 2
        %v2022 = vmax.f32 %v2020, %v2021
        %v2023 = vrot.slane %v2022, 1
        %v2024 = vmax.f32 %v2022, %v2023
        %v2025 = vsel %vm1352, %v1095, -inf
        %v2026 = vrot.slane %v2025, 4
        %v2027 = vmax.f32 %v2025, %v2026
        %v2028 = vrot.slane %v2027, 2
        %v2029 = vmax.f32 %v2027, %v2028
        %v2030 = vrot.slane %v2029, 1
        %v2031 = vmax.f32 %v2029, %v2030
        %v2032 = vsel %vm1352, %v1103, -inf
        %v2033 = vrot.slane %v2032, 4
        %v2034 = vmax.f32 %v2032, %v2033
        %v2035 = vrot.slane %v2034, 2
        %v2036 = vmax.f32 %v2034, %v2035
        %v2037 = vrot.slane %v2036, 1
        %v2038 = vmax.f32 %v2036, %v2037
        %v2039 = vsel %vm1352, %v1102, -inf
        %v2040 = vrot.slane %v2039, 4
        %v2041 = vmax.f32 %v2039, %v2040
        %v2042 = vrot.slane %v2041, 2
        %v2043 = vmax.f32 %v2041, %v2042
        %v2044 = vrot.slane %v2043, 1
        %v2045 = vmax.f32 %v2043, %v2044
        %v2046 = vsel %vm1352, %v1104, -inf
        %v2047 = vrot.slane %v2046, 4
        %v2048 = vmax.f32 %v2046, %v2047
        %v2049 = vrot.slane %v2048, 2
        %v2050 = vmax.f32 %v2048, %v2049
        %v2051 = vrot.slane %v2050, 1
        %v2052 = vmax.f32 %v2050, %v2051
        %v2053 = vsel %vm1352, %v1112, -inf
        %v2054 = vrot.slane %v2053, 4
        %v2055 = vmax.f32 %v2053, %v2054
        %v2056 = vrot.slane %v2055, 2
        %v2057 = vmax.f32 %v2055, %v2056
        %v2058 = vrot.slane %v2057, 1
        %v2059 = vmax.f32 %v2057, %v2058
        %v2060 = vsel %vm1352, %v1120, -inf
        %v2061 = vrot.slane %v2060, 4
        %v2062 = vmax.f32 %v2060, %v2061
        %v2063 = vrot.slane %v2062, 2
        %v2064 = vmax.f32 %v2062, %v2063
        %v2065 = vrot.slane %v2064, 1
        %v2066 = vmax.f32 %v2064, %v2065
        %v2067 = vsel %vm1352, %v1119, -inf
        %v2068 = vrot.slane %v2067, 4
        %v2069 = vmax.f32 %v2067, %v2068
        %v2070 = vrot.slane %v2069, 2
        %v2071 = vmax.f32 %v2069, %v2070
        %v2072 = vrot.slane %v2071, 1
        %v2073 = vmax.f32 %v2071, %v2072
        %v2074 = vsel %vm1352, %v1121, -inf
        %v2075 = vrot.slane %v2074, 4
        %v2076 = vmax.f32 %v2074, %v2075
        %v2077 = vrot.slane %v2076, 2
        %v2078 = vmax.f32 %v2076, %v2077
        %v2079 = vrot.slane %v2078, 1
        %v2080 = vmax.f32 %v2078, %v2079
        %v2081 = vsel %vm1352, %v1129, -inf
        %v2082 = vrot.slane %v2081, 4
        %v2083 = vmax.f32 %v2081, %v2082
        %v2084 = vrot.slane %v2083, 2
        %v2085 = vmax.f32 %v2083, %v2084
        %v2086 = vrot.slane %v2085, 1
        %v2087 = vmax.f32 %v2085, %v2086
        %v2088 = vsel %vm1352, %v1137, -inf
        %v2089 = vrot.slane %v2088, 4
        %v2090 = vmax.f32 %v2088, %v2089
        %v2091 = vrot.slane %v2090, 2
        %v2092 = vmax.f32 %v2090, %v2091
        %v2093 = vrot.slane %v2092, 1
        %v2094 = vmax.f32 %v2092, %v2093
        %v2095 = vsel %vm1352, %v1136, -inf
        %v2096 = vrot.slane %v2095, 4
        %v2097 = vmax.f32 %v2095, %v2096
        %v2098 = vrot.slane %v2097, 2
        %v2099 = vmax.f32 %v2097, %v2098
        %v2100 = vrot.slane %v2099, 1
        %v2101 = vmax.f32 %v2099, %v2100
        %v2102 = vsel %vm1352, %v1138, -inf
        %v2103 = vrot.slane %v2102, 4
        %v2104 = vmax.f32 %v2102, %v2103
        %v2105 = vrot.slane %v2104, 2
        %v2106 = vmax.f32 %v2104, %v2105
        %v2107 = vrot.slane %v2106, 1
        %v2108 = vmax.f32 %v2106, %v2107
        %v2109 = vsel %vm1352, %v1146, -inf
        %v2110 = vrot.slane %v2109, 4
        %v2111 = vmax.f32 %v2109, %v2110
        %v2112 = vrot.slane %v2111, 2
        %v2113 = vmax.f32 %v2111, %v2112
        %v2114 = vrot.slane %v2113, 1
        %v2115 = vmax.f32 %v2113, %v2114
        %v2116 = vsel %vm1352, %v1154, -inf
        %v2117 = vrot.slane %v2116, 4
        %v2118 = vmax.f32 %v2116, %v2117
        %v2119 = vrot.slane %v2118, 2
        %v2120 = vmax.f32 %v2118, %v2119
        %v2121 = vrot.slane %v2120, 1
        %v2122 = vmax.f32 %v2120, %v2121
        %v2123 = vsel %vm1352, %v1153, -inf
        %v2124 = vrot.slane %v2123, 4
        %v2125 = vmax.f32 %v2123, %v2124
        %v2126 = vrot.slane %v2125, 2
        %v2127 = vmax.f32 %v2125, %v2126
        %v2128 = vrot.slane %v2127, 1
        %v2129 = vmax.f32 %v2127, %v2128
        %v2130 = vsel %vm1352, %v1155, -inf
        %v2131 = vrot.slane %v2130, 4
        %v2132 = vmax.f32 %v2130, %v2131
        %v2133 = vrot.slane %v2132, 2
        %v2134 = vmax.f32 %v2132, %v2133
        %v2135 = vrot.slane %v2134, 1
        %v2136 = vmax.f32 %v2134, %v2135
        %v2137 = vsel %vm1352, %v1163, -inf
        %v2138 = vrot.slane %v2137, 4
        %v2139 = vmax.f32 %v2137, %v2138
        %v2140 = vrot.slane %v2139, 2
        %v2141 = vmax.f32 %v2139, %v2140
        %v2142 = vrot.slane %v2141, 1
        %v2143 = vmax.f32 %v2141, %v2142
        %v2144 = vsel %vm1352, %v1171, -inf
        %v2145 = vrot.slane %v2144, 4
        %v2146 = vmax.f32 %v2144, %v2145
        %v2147 = vrot.slane %v2146, 2
        %v2148 = vmax.f32 %v2146, %v2147
        %v2149 = vrot.slane %v2148, 1
        %v2150 = vmax.f32 %v2148, %v2149
        %v2151 = vsel %vm1352, %v1170, -inf
        %v2152 = vrot.slane %v2151, 4
        %v2153 = vmax.f32 %v2151, %v2152
        %v2154 = vrot.slane %v2153, 2
        %v2155 = vmax.f32 %v2153, %v2154
        %v2156 = vrot.slane %v2155, 1
        %v2157 = vmax.f32 %v2155, %v2156
        %v2158 = vsel %vm1352, %v1172, -inf
        %v2159 = vrot.slane %v2158, 4
        %v2160 = vmax.f32 %v2158, %v2159
        %v2161 = vrot.slane %v2160, 2
        %v2162 = vmax.f32 %v2160, %v2161
        %v2163 = vrot.slane %v2162, 1
        %v2164 = vmax.f32 %v2162, %v2163
        %v2165 = vsel %vm1352, %v1180, -inf
        %v2166 = vrot.slane %v2165, 4
        %v2167 = vmax.f32 %v2165, %v2166
        %v2168 = vrot.slane %v2167, 2
        %v2169 = vmax.f32 %v2167, %v2168
        %v2170 = vrot.slane %v2169, 1
        %v2171 = vmax.f32 %v2169, %v2170
        %v2172 = vsel %vm1352, %v1188, -inf
        %v2173 = vrot.slane %v2172, 4
        %v2174 = vmax.f32 %v2172, %v2173
        %v2175 = vrot.slane %v2174, 2
        %v2176 = vmax.f32 %v2174, %v2175
        %v2177 = vrot.slane %v2176, 1
        %v2178 = vmax.f32 %v2176, %v2177
        %v2179 = vsel %vm1352, %v1187, -inf
        %v2180 = vrot.slane %v2179, 4
        %v2181 = vmax.f32 %v2179, %v2180
        %v2182 = vrot.slane %v2181, 2
        %v2183 = vmax.f32 %v2181, %v2182
        %v2184 = vrot.slane %v2183, 1
        %v2185 = vmax.f32 %v2183, %v2184
        %v2186 = vsel %vm1352, %v1189, -inf
        %v2187 = vrot.slane %v2186, 4
        %v2188 = vmax.f32 %v2186, %v2187
        %v2189 = vrot.slane %v2188, 2
        %v2190 = vmax.f32 %v2188, %v2189
        %v2191 = vrot.slane %v2190, 1
        %v2192 = vmax.f32 %v2190, %v2191
        %v2193 = vsel %vm1352, %v1197, -inf
        %v2194 = vrot.slane %v2193, 4
        %v2195 = vmax.f32 %v2193, %v2194
        %v2196 = vrot.slane %v2195, 2
        %v2197 = vmax.f32 %v2195, %v2196
        %v2198 = vrot.slane %v2197, 1
        %v2199 = vmax.f32 %v2197, %v2198
        %v2200 = vsel %vm1352, %v1205, -inf
        %v2201 = vrot.slane %v2200, 4
        %v2202 = vmax.f32 %v2200, %v2201
        %v2203 = vrot.slane %v2202, 2
        %v2204 = vmax.f32 %v2202, %v2203
        %v2205 = vrot.slane %v2204, 1
        %v2206 = vmax.f32 %v2204, %v2205
        %v2207 = vsel %vm1352, %v1204, -inf
        %v2208 = vrot.slane %v2207, 4
        %v2209 = vmax.f32 %v2207, %v2208
        %v2210 = vrot.slane %v2209, 2
        %v2211 = vmax.f32 %v2209, %v2210
        %v2212 = vrot.slane %v2211, 1
        %v2213 = vmax.f32 %v2211, %v2212
        %v2214 = vsel %vm1352, %v1206, -inf
        %v2215 = vrot.slane %v2214, 4
        %v2216 = vmax.f32 %v2214, %v2215
        %v2217 = vrot.slane %v2216, 2
        %v2218 = vmax.f32 %v2216, %v2217
        %v2219 = vrot.slane %v2218, 1
        %v2220 = vmax.f32 %v2218, %v2219
        %v2221 = vsel %vm1352, %v1214, -inf
        %v2222 = vrot.slane %v2221, 4
        %v2223 = vmax.f32 %v2221, %v2222
        %v2224 = vrot.slane %v2223, 2
        %v2225 = vmax.f32 %v2223, %v2224
        %v2226 = vrot.slane %v2225, 1
        %v2227 = vmax.f32 %v2225, %v2226
        %v2228 = vsel %vm1352, %v1222, -inf
        %v2229 = vrot.slane %v2228, 4
        %v2230 = vmax.f32 %v2228, %v2229
        %v2231 = vrot.slane %v2230, 2
        %v2232 = vmax.f32 %v2230, %v2231
        %v2233 = vrot.slane %v2232, 1
        %v2234 = vmax.f32 %v2232, %v2233
        %v2235 = vsel %vm1352, %v1221, -inf
        %v2236 = vrot.slane %v2235, 4
        %v2237 = vmax.f32 %v2235, %v2236
        %v2238 = vrot.slane %v2237, 2
        %v2239 = vmax.f32 %v2237, %v2238
        %v2240 = vrot.slane %v2239, 1
        %v2241 = vmax.f32 %v2239, %v2240
        %v2242 = vsel %vm1352, %v1223, -inf
        %v2243 = vrot.slane %v2242, 4
        %v2244 = vmax.f32 %v2242, %v2243
        %v2245 = vrot.slane %v2244, 2
        %v2246 = vmax.f32 %v2244, %v2245
        %v2247 = vrot.slane %v2246, 1
        %v2248 = vmax.f32 %v2246, %v2247
        %vm2249 = vcmask 523264
        %v2250 = vsel %vm2249, %v1359, -inf
        %v2251 = vsel %vm2249, %v1415, -inf
        %v2252 = vmax.f32 %v2250, %v2251
        %v2253 = vsel %vm2249, %v1366, -inf
        %v2254 = vsel %vm2249, %v1422, -inf
        %v2255 = vmax.f32 %v2253, %v2254
        %v2256 = vsel %vm2249, %v1373, -inf
        %v2257 = vsel %vm2249, %v1429, -inf
        %v2258 = vmax.f32 %v2256, %v2257
        %v2259 = vsel %vm2249, %v1380, -inf
        %v2260 = vsel %vm2249, %v1436, -inf
        %v2261 = vmax.f32 %v2259, %v2260
        %v2262 = vsel %vm2249, %v1387, -inf
        %v2263 = vsel %vm2249, %v1443, -inf
        %v2264 = vmax.f32 %v2262, %v2263
        %v2265 = vsel %vm2249, %v1394, -inf
        %v2266 = vsel %vm2249, %v1450, -inf
        %v2267 = vmax.f32 %v2265, %v2266
        %v2268 = vsel %vm2249, %v1401, -inf
        %v2269 = vsel %vm2249, %v1457, -inf
        %v2270 = vmax.f32 %v2268, %v2269
        %v2271 = vsel %vm2249, %v1408, -inf
        %v2272 = vsel %vm2249, %v1464, -inf
        %v2273 = vmax.f32 %v2271, %v2272
        %v2274 = vsel %vm2249, %v1471, -inf
        %v2275 = vsel %vm2249, %v1527, -inf
        %v2276 = vmax.f32 %v2274, %v2275
        %v2277 = vsel %vm2249, %v1478, -inf
        %v2278 = vsel %vm2249, %v1534, -inf
        %v2279 = vmax.f32 %v2277, %v2278
        %v2280 = vsel %vm2249, %v1485, -inf
        %v2281 = vsel %vm2249, %v1541, -inf
        %v2282 = vmax.f32 %v2280, %v2281
        %v2283 = vsel %vm2249, %v1492, -inf
        %v2284 = vsel %vm2249, %v1548, -inf
        %v2285 = vmax.f32 %v2283, %v2284
        %v2286 = vsel %vm2249, %v1499, -inf
        %v2287 = vsel %vm2249, %v1555, -inf
        %v2288 = vmax.f32 %v2286, %v2287
        %v2289 = vsel %vm2249, %v1506, -inf
        %v2290 = vsel %vm2249, %v1562, -inf
        %v2291 = vmax.f32 %v2289, %v2290
        %v2292 = vsel %vm2249, %v1513, -inf
        %v2293 = vsel %vm2249, %v1569, -inf
        %v2294 = vmax.f32 %v2292, %v2293
        %v2295 = vsel %vm2249, %v1520, -inf
        %v2296 = vsel %vm2249, %v1576, -inf
        %v2297 = vmax.f32 %v2295, %v2296
        %v2298 = vsel %vm2249, %v1583, -inf
        %v2299 = vsel %vm2249, %v1639, -inf
        %v2300 = vmax.f32 %v2298, %v2299
        %v2301 = vsel %vm2249, %v1590, -inf
        %v2302 = vsel %vm2249, %v1646, -inf
        %v2303 = vmax.f32 %v2301, %v2302
        %v2304 = vsel %vm2249, %v1597, -inf
        %v2305 = vsel %vm2249, %v1653, -inf
        %v2306 = vmax.f32 %v2304, %v2305
        %v2307 = vsel %vm2249, %v1604, -inf
        %v2308 = vsel %vm2249, %v1660, -inf
        %v2309 = vmax.f32 %v2307, %v2308
        %v2310 = vsel %vm2249, %v1611, -inf
        %v2311 = vsel %vm2249, %v1667, -inf
        %v2312 = vmax.f32 %v2310, %v2311
        %v2313 = vsel %vm2249, %v1618, -inf
        %v2314 = vsel %vm2249, %v1674, -inf
        %v2315 = vmax.f32 %v2313, %v2314
        %v2316 = vsel %vm2249, %v1625, -inf
        %v2317 = vsel %vm2249, %v1681, -inf
        %v2318 = vmax.f32 %v2316, %v2317
        %v2319 = vsel %vm2249, %v1632, -inf
        %v2320 = vsel %vm2249, %v1688, -inf
        %v2321 = vmax.f32 %v2319, %v2320
        %v2322 = vsel %vm2249, %v1695, -inf
        %v2323 = vsel %vm2249, %v1751, -inf
        %v2324 = vmax.f32 %v2322, %v2323
        %v2325 = vsel %vm2249, %v1702, -inf
        %v2326 = vsel %vm2249, %v1758, -inf
        %v2327 = vmax.f32 %v2325, %v2326
        %v2328 = vsel %vm2249, %v1709, -inf
        %v2329 = vsel %vm2249, %v1765, -inf
        %v2330 = vmax.f32 %v2328, %v2329
        %v2331 = vsel %vm2249, %v1716, -inf
        %v2332 = vsel %vm2249, %v1772, -inf
        %v2333 = vmax.f32 %v2331, %v2332
        %v2334 = vsel %vm2249, %v1723, -inf
        %v2335 = vsel %vm2249, %v1779, -inf
        %v2336 = vmax.f32 %v2334, %v2335
        %v2337 = vsel %vm2249, %v1730, -inf
        %v2338 = vsel %vm2249, %v1786, -inf
        %v2339 = vmax.f32 %v2337, %v2338
        %v2340 = vsel %vm2249, %v1737, -inf
        %v2341 = vsel %vm2249, %v1793, -inf
        %v2342 = vmax.f32 %v2340, %v2341
        %v2343 = vsel %vm2249, %v1744, -inf
        %v2344 = vsel %vm2249, %v1800, -inf
        %v2345 = vmax.f32 %v2343, %v2344
        %v2346 = vsel %vm2249, %v1807, -inf
        %v2347 = vsel %vm2249, %v1863, -inf
        %v2348 = vmax.f32 %v2346, %v2347
        %v2349 = vsel %vm2249, %v1814, -inf
        %v2350 = vsel %vm2249, %v1870, -inf
        %v2351 = vmax.f32 %v2349, %v2350
        %v2352 = vsel %vm2249, %v1821, -inf
        %v2353 = vsel %vm2249, %v1877, -inf
        %v2354 = vmax.f32 %v2352, %v2353
        %v2355 = vsel %vm2249, %v1828, -inf
        %v2356 = vsel %vm2249, %v1884, -inf
        %v2357 = vmax.f32 %v2355, %v2356
        %v2358 = vsel %vm2249, %v1835, -inf
        %v2359 = vsel %vm2249, %v1891, -inf
        %v2360 = vmax.f32 %v2358, %v2359
        %v2361 = vsel %vm2249, %v1842, -inf
        %v2362 = vsel %vm2249, %v1898, -inf
        %v2363 = vmax.f32 %v2361, %v2362
        %v2364 = vsel %vm2249, %v1849, -inf
        %v2365 = vsel %vm2249, %v1905, -inf
        %v2366 = vmax.f32 %v2364, %v2365
        %v2367 = vsel %vm2249, %v1856, -inf
        %v2368 = vsel %vm2249, %v1912, -inf
        %v2369 = vmax.f32 %v2367, %v2368
        %v2370 = vsel %vm2249, %v1919, -inf
        %v2371 = vsel %vm2249, %v1975, -inf
        %v2372 = vmax.f32 %v2370, %v2371
        %v2373 = vsel %vm2249, %v1926, -inf
        %v2374 = vsel %vm2249, %v1982, -inf
        %v2375 = vmax.f32 %v2373, %v2374
        %v2376 = vsel %vm2249, %v1933, -inf
        %v2377 = vsel %vm2249, %v1989, -inf
        %v2378 = vmax.f32 %v2376, %v2377
        %v2379 = vsel %vm2249, %v1940, -inf
        %v2380 = vsel %vm2249, %v1996, -inf
        %v2381 = vmax.f32 %v2379, %v2380
        %v2382 = vsel %vm2249, %v1947, -inf
        %v2383 = vsel %vm2249, %v2003, -inf
        %v2384 = vmax.f32 %v2382, %v2383
        %v2385 = vsel %vm2249, %v1954, -inf
        %v2386 = vsel %vm2249, %v2010, -inf
        %v2387 = vmax.f32 %v2385, %v2386
        %v2388 = vsel %vm2249, %v1961, -inf
        %v2389 = vsel %vm2249, %v2017, -inf
        %v2390 = vmax.f32 %v2388, %v2389
        %v2391 = vsel %vm2249, %v1968, -inf
        %v2392 = vsel %vm2249, %v2024, -inf
        %v2393 = vmax.f32 %v2391, %v2392
        %v2394 = vsel %vm2249, %v2031, -inf
        %v2395 = vsel %vm2249, %v2087, -inf
        %v2396 = vmax.f32 %v2394, %v2395
        %v2397 = vsel %vm2249, %v2038, -inf
        %v2398 = vsel %vm2249, %v2094, -inf
        %v2399 = vmax.f32 %v2397, %v2398
        %v2400 = vsel %vm2249, %v2045, -inf
        %v2401 = vsel %vm2249, %v2101, -inf
        %v2402 = vmax.f32 %v2400, %v2401
        %v2403 = vsel %vm2249, %v2052, -inf
        %v2404 = vsel %vm2249, %v2108, -inf
        %v2405 = vmax.f32 %v2403, %v2404
        %v2406 = vsel %vm2249, %v2059, -inf
        %v2407 = vsel %vm2249, %v2115, -inf
        %v2408 = vmax.f32 %v2406, %v2407
        %v2409 = vsel %vm2249, %v2066, -inf
        %v2410 = vsel %vm2249, %v2122, -inf
        %v2411 = vmax.f32 %v2409, %v2410
        %v2412 = vsel %vm2249, %v2073, -inf
        %v2413 = vsel %vm2249, %v2129, -inf
        %v2414 = vmax.f32 %v2412, %v2413
        %v2415 = vsel %vm2249, %v2080, -inf
        %v2416 = vsel %vm2249, %v2136, -inf
        %v2417 = vmax.f32 %v2415, %v2416
        %v2418 = vsel %vm2249, %v2143, -inf
        %v2419 = vsel %vm2249, %v2199, -inf
        %v2420 = vmax.f32 %v2418, %v2419
        %v2421 = vsel %vm2249, %v2150, -inf
        %v2422 = vsel %vm2249, %v2206, -inf
        %v2423 = vmax.f32 %v2421, %v2422
        %v2424 = vsel %vm2249, %v2157, -inf
        %v2425 = vsel %vm2249, %v2213, -inf
        %v2426 = vmax.f32 %v2424, %v2425
        %v2427 = vsel %vm2249, %v2164, -inf
        %v2428 = vsel %vm2249, %v2220, -inf
        %v2429 = vmax.f32 %v2427, %v2428
        %v2430 = vsel %vm2249, %v2171, -inf
        %v2431 = vsel %vm2249, %v2227, -inf
        %v2432 = vmax.f32 %v2430, %v2431
        %v2433 = vsel %vm2249, %v2178, -inf
        %v2434 = vsel %vm2249, %v2234, -inf
        %v2435 = vmax.f32 %v2433, %v2434
        %v2436 = vsel %vm2249, %v2185, -inf
        %v2437 = vsel %vm2249, %v2241, -inf
        %v2438 = vmax.f32 %v2436, %v2437
        %v2439 = vsel %vm2249, %v2192, -inf
        %v2440 = vsel %vm2249, %v2248, -inf
        %v2441 = vmax.f32 %v2439, %v2440
        %v2442 = vld [vmem:[%s2] sm:$0x1]
        %v2444 = vlaneseq
        %v2445 = vshrl.u32 %v2444, 7
        %v2446 = vsub.s32 0, %v2445
        %v2447 = vrot.slane %v2442, %v2446
        %v2449 = vmul.f32 %v2252, %v2447
        %v2450 = vmul.f32 %v2255, %v2447
        %v2451 = vmul.f32 %v2258, %v2447
        %v2452 = vmul.f32 %v2261, %v2447
        %v2453 = vmul.f32 %v2264, %v2447
        %v2454 = vmul.f32 %v2267, %v2447
        %v2455 = vmul.f32 %v2270, %v2447
        %v2456 = vmul.f32 %v2273, %v2447
        %v2457 = vmul.f32 %v2276, %v2447
        %v2458 = vmul.f32 %v2279, %v2447
        %v2459 = vmul.f32 %v2282, %v2447
        %v2460 = vmul.f32 %v2285, %v2447
        %v2461 = vmul.f32 %v2288, %v2447
        %v2462 = vmul.f32 %v2291, %v2447
        %v2463 = vmul.f32 %v2294, %v2447
        %v2464 = vmul.f32 %v2297, %v2447
        %v2465 = vmul.f32 %v2300, %v2447
        %v2466 = vmul.f32 %v2303, %v2447
        %v2467 = vmul.f32 %v2306, %v2447
        %v2468 = vmul.f32 %v2309, %v2447
        %v2469 = vmul.f32 %v2312, %v2447
        %v2470 = vmul.f32 %v2315, %v2447
        %v2471 = vmul.f32 %v2318, %v2447
        %v2472 = vmul.f32 %v2321, %v2447
        %v2473 = vmul.f32 %v2324, %v2447
        %v2474 = vmul.f32 %v2327, %v2447
        %v2475 = vmul.f32 %v2330, %v2447
        %v2476 = vmul.f32 %v2333, %v2447
        %v2477 = vmul.f32 %v2336, %v2447
        %v2478 = vmul.f32 %v2339, %v2447
        %v2479 = vmul.f32 %v2342, %v2447
        %v2480 = vmul.f32 %v2345, %v2447
        %v2481 = vmul.f32 %v2348, %v2447
        %v2482 = vmul.f32 %v2351, %v2447
        %v2483 = vmul.f32 %v2354, %v2447
        %v2484 = vmul.f32 %v2357, %v2447
        %v2485 = vmul.f32 %v2360, %v2447
        %v2486 = vmul.f32 %v2363, %v2447
        %v2487 = vmul.f32 %v2366, %v2447
        %v2488 = vmul.f32 %v2369, %v2447
        %v2489 = vmul.f32 %v2372, %v2447
        %v2490 = vmul.f32 %v2375, %v2447
        %v2491 = vmul.f32 %v2378, %v2447
        %v2492 = vmul.f32 %v2381, %v2447
        %v2493 = vmul.f32 %v2384, %v2447
        %v2494 = vmul.f32 %v2387, %v2447
        %v2495 = vmul.f32 %v2390, %v2447
        %v2496 = vmul.f32 %v2393, %v2447
        %v2497 = vmul.f32 %v2396, %v2447
        %v2498 = vmul.f32 %v2399, %v2447
        %v2499 = vmul.f32 %v2402, %v2447
        %v2500 = vmul.f32 %v2405, %v2447
        %v2501 = vmul.f32 %v2408, %v2447
        %v2502 = vmul.f32 %v2411, %v2447
        %v2503 = vmul.f32 %v2414, %v2447
        %v2504 = vmul.f32 %v2417, %v2447
        %v2505 = vmul.f32 %v2420, %v2447
        %v2506 = vmul.f32 %v2423, %v2447
        %v2507 = vmul.f32 %v2426, %v2447
        %v2508 = vmul.f32 %v2429, %v2447
        %v2509 = vmul.f32 %v2432, %v2447
        %v2510 = vmul.f32 %v2435, %v2447
        %v2511 = vmul.f32 %v2438, %v2447
        %v2512 = vmul.f32 %v2441, %v2447
        %v2513 = vld [vmem:[%s3] sm:$0x1]
        %v2515 = vlaneseq
        %v2516 = vshrl.u32 %v2515, 7
        %v2517 = vsub.s32 0, %v2516
        %v2518 = vrot.slane %v2513, %v2517
        %v2520 = vadd.f32 %v2449, %v2518
        %v2521 = vadd.f32 %v2450, %v2518
        %v2522 = vadd.f32 %v2451, %v2518
        %v2523 = vadd.f32 %v2452, %v2518
        %v2524 = vadd.f32 %v2453, %v2518
        %v2525 = vadd.f32 %v2454, %v2518
        %v2526 = vadd.f32 %v2455, %v2518
        %v2527 = vadd.f32 %v2456, %v2518
        %v2528 = vadd.f32 %v2457, %v2518
        %v2529 = vadd.f32 %v2458, %v2518
        %v2530 = vadd.f32 %v2459, %v2518
        %v2531 = vadd.f32 %v2460, %v2518
        %v2532 = vadd.f32 %v2461, %v2518
        %v2533 = vadd.f32 %v2462, %v2518
        %v2534 = vadd.f32 %v2463, %v2518
        %v2535 = vadd.f32 %v2464, %v2518
        %v2536 = vadd.f32 %v2465, %v2518
        %v2537 = vadd.f32 %v2466, %v2518
        %v2538 = vadd.f32 %v2467, %v2518
        %v2539 = vadd.f32 %v2468, %v2518
        %v2540 = vadd.f32 %v2469, %v2518
        %v2541 = vadd.f32 %v2470, %v2518
        %v2542 = vadd.f32 %v2471, %v2518
        %v2543 = vadd.f32 %v2472, %v2518
        %v2544 = vadd.f32 %v2473, %v2518
        %v2545 = vadd.f32 %v2474, %v2518
        %v2546 = vadd.f32 %v2475, %v2518
        %v2547 = vadd.f32 %v2476, %v2518
        %v2548 = vadd.f32 %v2477, %v2518
        %v2549 = vadd.f32 %v2478, %v2518
        %v2550 = vadd.f32 %v2479, %v2518
        %v2551 = vadd.f32 %v2480, %v2518
        %v2552 = vadd.f32 %v2481, %v2518
        %v2553 = vadd.f32 %v2482, %v2518
        %v2554 = vadd.f32 %v2483, %v2518
        %v2555 = vadd.f32 %v2484, %v2518
        %v2556 = vadd.f32 %v2485, %v2518
        %v2557 = vadd.f32 %v2486, %v2518
        %v2558 = vadd.f32 %v2487, %v2518
        %v2559 = vadd.f32 %v2488, %v2518
        %v2560 = vadd.f32 %v2489, %v2518
        %v2561 = vadd.f32 %v2490, %v2518
        %v2562 = vadd.f32 %v2491, %v2518
        %v2563 = vadd.f32 %v2492, %v2518
        %v2564 = vadd.f32 %v2493, %v2518
        %v2565 = vadd.f32 %v2494, %v2518
        %v2566 = vadd.f32 %v2495, %v2518
        %v2567 = vadd.f32 %v2496, %v2518
        %v2568 = vadd.f32 %v2497, %v2518
        %v2569 = vadd.f32 %v2498, %v2518
        %v2570 = vadd.f32 %v2499, %v2518
        %v2571 = vadd.f32 %v2500, %v2518
        %v2572 = vadd.f32 %v2501, %v2518
        %v2573 = vadd.f32 %v2502, %v2518
        %v2574 = vadd.f32 %v2503, %v2518
        %v2575 = vadd.f32 %v2504, %v2518
        %v2576 = vadd.f32 %v2505, %v2518
        %v2577 = vadd.f32 %v2506, %v2518
        %v2578 = vadd.f32 %v2507, %v2518
        %v2579 = vadd.f32 %v2508, %v2518
        %v2580 = vadd.f32 %v2509, %v2518
        %v2581 = vadd.f32 %v2510, %v2518
        %v2582 = vadd.f32 %v2511, %v2518
        %v2583 = vadd.f32 %v2512, %v2518
        %v2584 = vmax.f32 %v2520, 0.0
        %v2585 = vmax.f32 %v2521, 0.0
        %v2586 = vmax.f32 %v2522, 0.0
        %v2587 = vmax.f32 %v2523, 0.0
        %v2588 = vmax.f32 %v2524, 0.0
        %v2589 = vmax.f32 %v2525, 0.0
        %v2590 = vmax.f32 %v2526, 0.0
        %v2591 = vmax.f32 %v2527, 0.0
        %v2592 = vmax.f32 %v2528, 0.0
        %v2593 = vmax.f32 %v2529, 0.0
        %v2594 = vmax.f32 %v2530, 0.0
        %v2595 = vmax.f32 %v2531, 0.0
        %v2596 = vmax.f32 %v2532, 0.0
        %v2597 = vmax.f32 %v2533, 0.0
        %v2598 = vmax.f32 %v2534, 0.0
        %v2599 = vmax.f32 %v2535, 0.0
        %v2600 = vmax.f32 %v2536, 0.0
        %v2601 = vmax.f32 %v2537, 0.0
        %v2602 = vmax.f32 %v2538, 0.0
        %v2603 = vmax.f32 %v2539, 0.0
        %v2604 = vmax.f32 %v2540, 0.0
        %v2605 = vmax.f32 %v2541, 0.0
        %v2606 = vmax.f32 %v2542, 0.0
        %v2607 = vmax.f32 %v2543, 0.0
        %v2608 = vmax.f32 %v2544, 0.0
        %v2609 = vmax.f32 %v2545, 0.0
        %v2610 = vmax.f32 %v2546, 0.0
        %v2611 = vmax.f32 %v2547, 0.0
        %v2612 = vmax.f32 %v2548, 0.0
        %v2613 = vmax.f32 %v2549, 0.0
        %v2614 = vmax.f32 %v2550, 0.0
        %v2615 = vmax.f32 %v2551, 0.0
        %v2616 = vmax.f32 %v2552, 0.0
        %v2617 = vmax.f32 %v2553, 0.0
        %v2618 = vmax.f32 %v2554, 0.0
        %v2619 = vmax.f32 %v2555, 0.0
        %v2620 = vmax.f32 %v2556, 0.0
        %v2621 = vmax.f32 %v2557, 0.0
        %v2622 = vmax.f32 %v2558, 0.0
        %v2623 = vmax.f32 %v2559, 0.0
        %v2624 = vmax.f32 %v2560, 0.0
        %v2625 = vmax.f32 %v2561, 0.0
        %v2626 = vmax.f32 %v2562, 0.0
        %v2627 = vmax.f32 %v2563, 0.0
        %v2628 = vmax.f32 %v2564, 0.0
        %v2629 = vmax.f32 %v2565, 0.0
        %v2630 = vmax.f32 %v2566, 0.0
        %v2631 = vmax.f32 %v2567, 0.0
        %v2632 = vmax.f32 %v2568, 0.0
        %v2633 = vmax.f32 %v2569, 0.0
        %v2634 = vmax.f32 %v2570, 0.0
        %v2635 = vmax.f32 %v2571, 0.0
        %v2636 = vmax.f32 %v2572, 0.0
        %v2637 = vmax.f32 %v2573, 0.0
        %v2638 = vmax.f32 %v2574, 0.0
        %v2639 = vmax.f32 %v2575, 0.0
        %v2640 = vmax.f32 %v2576, 0.0
        %v2641 = vmax.f32 %v2577, 0.0
        %v2642 = vmax.f32 %v2578, 0.0
        %v2643 = vmax.f32 %v2579, 0.0
        %v2644 = vmax.f32 %v2580, 0.0
        %v2645 = vmax.f32 %v2581, 0.0
        %v2646 = vmax.f32 %v2582, 0.0
        %v2647 = vmax.f32 %v2583, 0.0
        %2648 = vst.msk [vmem:[#allocation2] sm:$0xff] %vm2249, 0.0
        %2649 = vst.msk [vmem:[#allocation2 + $0x8] sm:$0xff] %vm2249, 0.0
        %2650 = vst.msk [vmem:[#allocation2 + $0x10] sm:$0x3] %vm1352, 0.0
        %2651 = vst.msk [vmem:[#allocation2 + $0x18] sm:$0xff] %vm2249, 0.0
        %2652 = vst.msk [vmem:[#allocation2 + $0x20] sm:$0xff] %vm2249, 0.0
        %2653 = vst.msk [vmem:[#allocation2 + $0x28] sm:$0x3] %vm1352, 0.0
        %2654 = vst.msk [vmem:[#allocation2 + $0x30] sm:$0xff] %vm2249, 0.0
        %2655 = vst.msk [vmem:[#allocation2 + $0x38] sm:$0xff] %vm2249, 0.0
        %2656 = vst.msk [vmem:[#allocation2 + $0x40] sm:$0x3] %vm1352, 0.0
        %2657 = vst.msk [vmem:[#allocation2 + $0x48] sm:$0xff] %vm2249, 0.0
        %2658 = vst.msk [vmem:[#allocation2 + $0x50] sm:$0xff] %vm2249, 0.0
        %2659 = vst.msk [vmem:[#allocation2 + $0x58] sm:$0x3] %vm1352, 0.0
        %2660 = vst.msk [vmem:[#allocation2 + $0x60] sm:$0xff] %vm2249, 0.0
        %2661 = vst.msk [vmem:[#allocation2 + $0x68] sm:$0xff] %vm2249, 0.0
        %2662 = vst.msk [vmem:[#allocation2 + $0x70] sm:$0x3] %vm1352, 0.0
        %2663 = vst.msk [vmem:[#allocation2 + $0x78] sm:$0xff] %vm2249, 0.0
        %2664 = vst.msk [vmem:[#allocation2 + $0x80] sm:$0xff] %vm2249, 0.0
        %2665 = vst.msk [vmem:[#allocation2 + $0x88] sm:$0x3] %vm1352, 0.0
        %2666 = vst.msk [vmem:[#allocation2 + $0x90] sm:$0xff] %vm2249, 0.0
        %2667 = vst.msk [vmem:[#allocation2 + $0x98] sm:$0xff] %vm2249, 0.0
        %2668 = vst.msk [vmem:[#allocation2 + $0xa0] sm:$0x3] %vm1352, 0.0
        %2669 = vst.msk [vmem:[#allocation2 + $0xa8] sm:$0xff] %vm2249, 0.0
        %2670 = vst.msk [vmem:[#allocation2 + $0xb0] sm:$0xff] %vm2249, 0.0
        %2671 = vst.msk [vmem:[#allocation2 + $0xb8] sm:$0x3] %vm1352, 0.0
        %2672 = vst.msk [vmem:[#allocation2 + $0xc0] sm:$0xff] %vm2249, 0.0
        %2673 = vst.msk [vmem:[#allocation2 + $0xc8] sm:$0xff] %vm2249, 0.0
        %2674 = vst.msk [vmem:[#allocation2 + $0xd0] sm:$0x3] %vm1352, 0.0
        %2675 = vst.msk [vmem:[#allocation2 + $0xd8] sm:$0xff] %vm2249, 0.0
        %2676 = vst.msk [vmem:[#allocation2 + $0xe0] sm:$0xff] %vm2249, 0.0
        %2677 = vst.msk [vmem:[#allocation2 + $0xe8] sm:$0x3] %vm1352, 0.0
        %2678 = vst.msk [vmem:[#allocation2 + $0xf0] sm:$0xff] %vm2249, 0.0
        %2679 = vst.msk [vmem:[#allocation2 + $0xf8] sm:$0xff] %vm2249, 0.0
        %2680 = vst.msk [vmem:[#allocation2 + $0x100] sm:$0x3] %vm1352, 0.0
        %2681 = vst.msk [vmem:[#allocation2 + $0x108] sm:$0xff] %vm2249, 0.0
        %2682 = vst.msk [vmem:[#allocation2 + $0x110] sm:$0xff] %vm2249, 0.0
        %2683 = vst.msk [vmem:[#allocation2 + $0x118] sm:$0x3] %vm1352, 0.0
        %v2748 = vrot.slane %v2585, 7
        %vm2749 = vcmask 1041409
        %v2750 = vsel %vm2749, %v2748, %v2584
        %v2751 = vrot.slane %v2586, 6
        %vm2752 = vcmask 1042434
        %v2753 = vsel %vm2752, %v2751, %v2750
        %v2754 = vrot.slane %v2587, 5
        %vm2755 = vcmask 1043459
        %v2756 = vsel %vm2755, %v2754, %v2753
        %v2757 = vrot.slane %v2588, 4
        %vm2758 = vcmask 1044484
        %v2759 = vsel %vm2758, %v2757, %v2756
        %v2760 = vrot.slane %v2589, 3
        %vm2761 = vcmask 1045509
        %v2762 = vsel %vm2761, %v2760, %v2759
        %v2763 = vrot.slane %v2590, 2
        %vm2764 = vcmask 1046534
        %v2765 = vsel %vm2764, %v2763, %v2762
        %v2766 = vrot.slane %v2591, 1
        %vm2767 = vcmask 1047559
        %v2768 = vsel %vm2767, %v2766, %v2765
        %v2769 = vrot.slane %v2593, 7
        %v2770 = vsel %vm2749, %v2769, %v2592
        %v2771 = vrot.slane %v2594, 6
        %v2772 = vsel %vm2752, %v2771, %v2770
        %v2773 = vrot.slane %v2595, 5
        %v2774 = vsel %vm2755, %v2773, %v2772
        %v2775 = vrot.slane %v2596, 4
        %v2776 = vsel %vm2758, %v2775, %v2774
        %v2777 = vrot.slane %v2597, 3
        %v2778 = vsel %vm2761, %v2777, %v2776
        %v2779 = vrot.slane %v2598, 2
        %v2780 = vsel %vm2764, %v2779, %v2778
        %v2781 = vrot.slane %v2599, 1
        %v2782 = vsel %vm2767, %v2781, %v2780
        %v2783 = vrot.slane %v2601, 7
        %v2784 = vsel %vm2749, %v2783, %v2600
        %v2785 = vrot.slane %v2602, 6
        %v2786 = vsel %vm2752, %v2785, %v2784
        %v2787 = vrot.slane %v2603, 5
        %v2788 = vsel %vm2755, %v2787, %v2786
        %v2789 = vrot.slane %v2604, 4
        %v2790 = vsel %vm2758, %v2789, %v2788
        %v2791 = vrot.slane %v2605, 3
        %v2792 = vsel %vm2761, %v2791, %v2790
        %v2793 = vrot.slane %v2606, 2
        %v2794 = vsel %vm2764, %v2793, %v2792
        %v2795 = vrot.slane %v2607, 1
        %v2796 = vsel %vm2767, %v2795, %v2794
        %v2797 = vrot.slane %v2609, 7
        %v2798 = vsel %vm2749, %v2797, %v2608
        %v2799 = vrot.slane %v2610, 6
        %v2800 = vsel %vm2752, %v2799, %v2798
        %v2801 = vrot.slane %v2611, 5
        %v2802 = vsel %vm2755, %v2801, %v2800
        %v2803 = vrot.slane %v2612, 4
        %v2804 = vsel %vm2758, %v2803, %v2802
        %v2805 = vrot.slane %v2613, 3
        %v2806 = vsel %vm2761, %v2805, %v2804
        %v2807 = vrot.slane %v2614, 2
        %v2808 = vsel %vm2764, %v2807, %v2806
        %v2809 = vrot.slane %v2615, 1
        %v2810 = vsel %vm2767, %v2809, %v2808
        %v2811 = vrot.slane %v2617, 7
        %v2812 = vsel %vm2749, %v2811, %v2616
        %v2813 = vrot.slane %v2618, 6
        %v2814 = vsel %vm2752, %v2813, %v2812
        %v2815 = vrot.slane %v2619, 5
        %v2816 = vsel %vm2755, %v2815, %v2814
        %v2817 = vrot.slane %v2620, 4
        %v2818 = vsel %vm2758, %v2817, %v2816
        %v2819 = vrot.slane %v2621, 3
        %v2820 = vsel %vm2761, %v2819, %v2818
        %v2821 = vrot.slane %v2622, 2
        %v2822 = vsel %vm2764, %v2821, %v2820
        %v2823 = vrot.slane %v2623, 1
        %v2824 = vsel %vm2767, %v2823, %v2822
        %v2825 = vrot.slane %v2625, 7
        %v2826 = vsel %vm2749, %v2825, %v2624
        %v2827 = vrot.slane %v2626, 6
        %v2828 = vsel %vm2752, %v2827, %v2826
        %v2829 = vrot.slane %v2627, 5
        %v2830 = vsel %vm2755, %v2829, %v2828
        %v2831 = vrot.slane %v2628, 4
        %v2832 = vsel %vm2758, %v2831, %v2830
        %v2833 = vrot.slane %v2629, 3
        %v2834 = vsel %vm2761, %v2833, %v2832
        %v2835 = vrot.slane %v2630, 2
        %v2836 = vsel %vm2764, %v2835, %v2834
        %v2837 = vrot.slane %v2631, 1
        %v2838 = vsel %vm2767, %v2837, %v2836
        %v2839 = vrot.slane %v2633, 7
        %v2840 = vsel %vm2749, %v2839, %v2632
        %v2841 = vrot.slane %v2634, 6
        %v2842 = vsel %vm2752, %v2841, %v2840
        %v2843 = vrot.slane %v2635, 5
        %v2844 = vsel %vm2755, %v2843, %v2842
        %v2845 = vrot.slane %v2636, 4
        %v2846 = vsel %vm2758, %v2845, %v2844
        %v2847 = vrot.slane %v2637, 3
        %v2848 = vsel %vm2761, %v2847, %v2846
        %v2849 = vrot.slane %v2638, 2
        %v2850 = vsel %vm2764, %v2849, %v2848
        %v2851 = vrot.slane %v2639, 1
        %v2852 = vsel %vm2767, %v2851, %v2850
        %v2853 = vrot.slane %v2641, 7
        %v2854 = vsel %vm2749, %v2853, %v2640
        %v2855 = vrot.slane %v2642, 6
        %v2856 = vsel %vm2752, %v2855, %v2854
        %v2857 = vrot.slane %v2643, 5
        %v2858 = vsel %vm2755, %v2857, %v2856
        %v2859 = vrot.slane %v2644, 4
        %v2860 = vsel %vm2758, %v2859, %v2858
        %v2861 = vrot.slane %v2645, 3
        %v2862 = vsel %vm2761, %v2861, %v2860
        %v2863 = vrot.slane %v2646, 2
        %v2864 = vsel %vm2764, %v2863, %v2862
        %v2865 = vrot.slane %v2647, 1
        %v2866 = vsel %vm2767, %v2865, %v2864
        %s2875 = scalar_lea.vmem [#allocation2], 48
        %2876 = vst.msk [vmem:[%s2875 + $0x8] sm:$0xff] %vm2249, %v2768
        %2877 = vst.msk [vmem:[%s2875 + $0x20] sm:$0xff] %vm2249, %v2782
        %2878 = vst.msk [vmem:[%s2875 + $0x38] sm:$0xff] %vm2249, %v2796
        %2879 = vst.msk [vmem:[%s2875 + $0x50] sm:$0xff] %vm2249, %v2810
        %2880 = vst.msk [vmem:[%s2875 + $0x68] sm:$0xff] %vm2249, %v2824
        %2881 = vst.msk [vmem:[%s2875 + $0x80] sm:$0xff] %vm2249, %v2838
        %2882 = vst.msk [vmem:[%s2875 + $0x98] sm:$0xff] %vm2249, %v2852
        %2883 = vst.msk [vmem:[%s2875 + $0xb0] sm:$0xff] %vm2249, %v2866
        %v2884 = vld [vmem:[#allocation2 + $0x6] sm:$0xff]
        %v2885 = vld [vmem:[#allocation2 + $0x1e] sm:$0xff]
        %v2886 = vld [vmem:[#allocation2 + $0x36] sm:$0xff]
        %v2887 = vld [vmem:[#allocation2 + $0x4e] sm:$0xff]
        %v2888 = vld [vmem:[#allocation2 + $0x66] sm:$0xff]
        %v2889 = vld [vmem:[#allocation2 + $0x7e] sm:$0xff]
        %v2890 = vld [vmem:[#allocation2 + $0x96] sm:$0xff]
        %v2891 = vld [vmem:[#allocation2 + $0xae] sm:$0xff]
        %v2892 = vpack.c.bf16 %v2885, %v2884
        %v2893 = vpack.c.bf16 %v2887, %v2886
        %v2894 = vpack.c.bf16 %v2889, %v2888
        %v2895 = vpack.c.bf16 %v2891, %v2890
        %v2896 = vld [vmem:[%s4] sm:$0xf]
        %v2897 = vld [vmem:[%s4 + $0x4] sm:$0xf]
        %v2898 = vld [vmem:[%s4 + $0x8] sm:$0xf]
        %v2899 = vld [vmem:[%s4 + $0xc] sm:$0xf]
        %v2900 = vld [vmem:[%s4 + $0x10] sm:$0xf]
        %v2901 = vld [vmem:[%s4 + $0x14] sm:$0xf]
        %v2902 = vld [vmem:[%s4 + $0x18] sm:$0xf]
        %v2903 = vld [vmem:[%s4 + $0x1c] sm:$0xf]
        %v2904 = vld [vmem:[#allocation2 + $0x7] sm:$0xff]
        %v2905 = vld [vmem:[#allocation2 + $0x1f] sm:$0xff]
        %v2906 = vld [vmem:[#allocation2 + $0x37] sm:$0xff]
        %v2907 = vld [vmem:[#allocation2 + $0x4f] sm:$0xff]
        %v2908 = vld [vmem:[#allocation2 + $0x67] sm:$0xff]
        %v2909 = vld [vmem:[#allocation2 + $0x7f] sm:$0xff]
        %v2910 = vld [vmem:[#allocation2 + $0x97] sm:$0xff]
        %v2911 = vld [vmem:[#allocation2 + $0xaf] sm:$0xff]
        %v2912 = vpack.c.bf16 %v2905, %v2904
        %v2913 = vpack.c.bf16 %v2907, %v2906
        %v2914 = vpack.c.bf16 %v2909, %v2908
        %v2915 = vpack.c.bf16 %v2911, %v2910
        %s2916 = scalar_lea.vmem %s4, 32
        %v2917 = vld [vmem:[%s2916] sm:$0xf]
        %v2918 = vld [vmem:[%s2916 + $0x4] sm:$0xf]
        %v2919 = vld [vmem:[%s2916 + $0x8] sm:$0xf]
        %v2920 = vld [vmem:[%s2916 + $0xc] sm:$0xf]
        %v2921 = vld [vmem:[%s2916 + $0x10] sm:$0xf]
        %v2922 = vld [vmem:[%s2916 + $0x14] sm:$0xf]
        %v2923 = vld [vmem:[%s2916 + $0x18] sm:$0xf]
        %v2924 = vld [vmem:[%s2916 + $0x1c] sm:$0xf]
        %v2933 = vunpack.c.l.b16 %v2917
        %v2934 = vunpack.c.l.b16 %v2918
        %v2935 = vunpack.c.l.b16 %v2919
        %v2936 = vunpack.c.l.b16 %v2920
        %v2937 = vunpack.c.l.b16 %v2921
        %v2938 = vunpack.c.l.b16 %v2922
        %v2939 = vunpack.c.l.b16 %v2923
        %v2940 = vunpack.c.l.b16 %v2924
        %v2941 = vpack.c.b16 %v2934, %v2933
        %v2942 = vpack.c.b16 %v2936, %v2935
        %v2943 = vpack.c.b16 %v2938, %v2937
        %v2944 = vpack.c.b16 %v2940, %v2939
        %v2950 = vsel %vm2249, %v2912, 0
        %v2953 = vsel %vm2249, %v2913, 0
        %v2956 = vsel %vm2249, %v2914, 0
        %v2959 = vsel %vm2249, %v2915, 0
        %2961 = vmatprep.subr.bf16.mxu0 0
        %2962 = vmatpush1.bf16.msra.mxu0 %v2941
        %2963 = vmatprep.subr.bf16.mxu0 0
        %2964 = vmatpush1.bf16.msra.mxu0 %v2942
        %2965 = vmatprep.subr.bf16.mxu0 0
        %2966 = vmatpush1.bf16.msra.mxu0 %v2943
        %2967 = vmatprep.subr.bf16.mxu0 0
        %2968 = vmatpush1.bf16.msra.mxu0 %v2944
        %2969 = vmatprep.subr.bf16.mxu0 0
        %2970 = vmatpush1.bf16.msra.mxu0 0
        %2971 = vmatprep.subr.bf16.mxu0 0
        %2972 = vmatpush1.bf16.msra.mxu0 0
        %2973 = vmatprep.subr.bf16.mxu0 0
        %2974 = vmatpush1.bf16.msra.mxu0 0
        %2975 = vmatprep.subr.bf16.mxu0 0
        %2976 = vmatpush1.bf16.msra.mxu0 0
        %2977 = vmatprep.subr.bf16.mxu0 0
        %2978 = vmatpush1.bf16.msra.mxu0 0
        %2979 = vmatprep.subr.bf16.mxu0 0
        %2980 = vmatpush1.bf16.msra.mxu0 0
        %2981 = vmatprep.subr.bf16.mxu0 0
        %2982 = vmatpush1.bf16.msra.mxu0 0
        %2983 = vmatprep.subr.bf16.mxu0 0
        %2984 = vmatpush1.bf16.msra.mxu0 0
        %2985 = vmatprep.subr.bf16.mxu0 0
        %2986 = vmatpush1.bf16.msra.mxu0 0
        %2987 = vmatprep.subr.bf16.mxu0 0
        %2988 = vmatpush1.bf16.msra.mxu0 0
        %2989 = vmatprep.subr.bf16.mxu0 0
        %2990 = vmatpush1.bf16.msra.mxu0 0
        %2991 = vmatprep.subr.bf16.mxu0 0
        %2992 = vmatpush1.bf16.msra.mxu0 0
        %2993 = vmatprep.mubr.bf16.mxu0 0
        %2994 = vmatmul.mubr.bf16.gmra.mrb[0].mxu0 %v2950
        %v2995 = vpop.f32.mrb[0].mxu0
        %v2996 = vadd.f32 0.0, %v2995
        %v2997 = vpop.f32.mrb[0].mxu0
        %v2998 = vpop.f32.mrb[0].mxu0
        %v2999 = vadd.f32 0.0, %v2998
        %v3000 = vpop.f32.mrb[0].mxu0
        %3001 = vmatprep.mubr.bf16.mxu0 0
        %3002 = vmatmul.mubr.bf16.gmra.mrb[0].mxu0 %v2953
        %v3003 = vpop.f32.mrb[0].mxu0
        %v3004 = vadd.f32 0.0, %v3003
        %v3005 = vpop.f32.mrb[0].mxu0
        %v3006 = vpop.f32.mrb[0].mxu0
        %v3007 = vadd.f32 0.0, %v3006
        %v3008 = vpop.f32.mrb[0].mxu0
        %3009 = vmatprep.mubr.bf16.mxu0 0
        %3010 = vmatmul.mubr.bf16.gmra.mrb[0].mxu0 %v2956
        %v3011 = vpop.f32.mrb[0].mxu0
        %v3012 = vadd.f32 0.0, %v3011
        %v3013 = vpop.f32.mrb[0].mxu0
        %v3014 = vpop.f32.mrb[0].mxu0
        %v3015 = vadd.f32 0.0, %v3014
        %v3016 = vpop.f32.mrb[0].mxu0
        %3017 = vmatprep.mubr.bf16.mxu0 0
        %3018 = vmatmul.mubr.bf16.gmra.mrb[0].mxu0 %v2959
        %v3019 = vpop.f32.mrb[0].mxu0
        %v3020 = vadd.f32 0.0, %v3019
        %v3021 = vpop.f32.mrb[0].mxu0
        %v3022 = vpop.f32.mrb[0].mxu0
        %v3023 = vadd.f32 0.0, %v3022
        %v3024 = vpop.f32.mrb[0].mxu0
        %3025 = vdwg.mxu0
        %v3034 = vunpack.c.l.b16 %v2896
        %v3035 = vunpack.c.l.b16 %v2897
        %v3036 = vunpack.c.l.b16 %v2898
        %v3037 = vunpack.c.l.b16 %v2899
        %v3038 = vunpack.c.l.b16 %v2900
        %v3039 = vunpack.c.l.b16 %v2901
        %v3040 = vunpack.c.l.b16 %v2902
        %v3041 = vunpack.c.l.b16 %v2903
        %v3042 = vpack.c.b16 %v3035, %v3034
        %v3043 = vpack.c.b16 %v3037, %v3036
        %v3044 = vpack.c.b16 %v3039, %v3038
        %v3045 = vpack.c.b16 %v3041, %v3040
        %v3051 = vsel %vm2249, %v2892, 0
        %v3054 = vsel %vm2249, %v2893, 0
        %v3057 = vsel %vm2249, %v2894, 0
        %v3060 = vsel %vm2249, %v2895, 0
        %3062 = vmatprep.subr.bf16.mxu0 0
        %3063 = vmatpush1.bf16.msra.mxu0 %v3042
        %3064 = vmatprep.subr.bf16.mxu0 0
        %3065 = vmatpush1.bf16.msra.mxu0 %v3043
        %3066 = vmatprep.subr.bf16.mxu0 0
        %3067 = vmatpush1.bf16.msra.mxu0 %v3044
        %3068 = vmatprep.subr.bf16.mxu0 0
        %3069 = vmatpush1.bf16.msra.mxu0 %v3045
        %3070 = vmatprep.subr.bf16.mxu0 0
        %3071 = vmatpush1.bf16.msra.mxu0 0
        %3072 = vmatprep.subr.bf16.mxu0 0
        %3073 = vmatpush1.bf16.msra.mxu0 0
        %3074 = vmatprep.subr.bf16.mxu0 0
        %3075 = vmatpush1.bf16.msra.mxu0 0
        %3076 = vmatprep.subr.bf16.mxu0 0
        %3077 = vmatpush1.bf16.msra.mxu0 0
        %3078 = vmatprep.subr.bf16.mxu0 0
        %3079 = vmatpush1.bf16.msra.mxu0 0
        %3080 = vmatprep.subr.bf16.mxu0 0
        %3081 = vmatpush1.bf16.msra.mxu0 0
        %3082 = vmatprep.subr.bf16.mxu0 0
        %3083 = vmatpush1.bf16.msra.mxu0 0
        %3084 = vmatprep.subr.bf16.mxu0 0
        %3085 = vmatpush1.bf16.msra.mxu0 0
        %3086 = vmatprep.subr.bf16.mxu0 0
        %3087 = vmatpush1.bf16.msra.mxu0 0
        %3088 = vmatprep.subr.bf16.mxu0 0
        %3089 = vmatpush1.bf16.msra.mxu0 0
        %3090 = vmatprep.subr.bf16.mxu0 0
        %3091 = vmatpush1.bf16.msra.mxu0 0
        %3092 = vmatprep.subr.bf16.mxu0 0
        %3093 = vmatpush1.bf16.msra.mxu0 0
        %3094 = vmatprep.mubr.bf16.mxu0 0
        %3095 = vmatmul.mubr.bf16.gmra.mrb[0].mxu0 %v3051
        %v3096 = vpop.f32.mrb[0].mxu0
        %v3097 = vadd.f32 %v2996, %v3096
        %v3098 = vpop.f32.mrb[0].mxu0
        %v3099 = vpop.f32.mrb[0].mxu0
        %v3100 = vadd.f32 %v2999, %v3099
        %v3101 = vpop.f32.mrb[0].mxu0
        %3102 = vmatprep.mubr.bf16.mxu0 0
        %3103 = vmatmul.mubr.bf16.gmra.mrb[0].mxu0 %v3054
        %v3104 = vpop.f32.mrb[0].mxu0
        %v3105 = vadd.f32 %v3004, %v3104
        %v3106 = vpop.f32.mrb[0].mxu0
        %v3107 = vpop.f32.mrb[0].mxu0
        %v3108 = vadd.f32 %v3007, %v3107
        %v3109 = vpop.f32.mrb[0].mxu0
        %3110 = vmatprep.mubr.bf16.mxu0 0
        %3111 = vmatmul.mubr.bf16.gmra.mrb[0].mxu0 %v3057
        %v3112 = vpop.f32.mrb[0].mxu0
        %v3113 = vadd.f32 %v3012, %v3112
        %v3114 = vpop.f32.mrb[0].mxu0
        %v3115 = vpop.f32.mrb[0].mxu0
        %v3116 = vadd.f32 %v3015, %v3115
        %v3117 = vpop.f32.mrb[0].mxu0
        %3118 = vmatprep.mubr.bf16.mxu0 0
        %3119 = vmatmul.mubr.bf16.gmra.mrb[0].mxu0 %v3060
        %v3120 = vpop.f32.mrb[0].mxu0
        %v3121 = vadd.f32 %v3020, %v3120
        %v3122 = vpop.f32.mrb[0].mxu0
        %v3123 = vpop.f32.mrb[0].mxu0
        %v3124 = vadd.f32 %v3023, %v3123
        %v3125 = vpop.f32.mrb[0].mxu0
        %3126 = vdwg.mxu0
        %v3127 = vld [vmem:[#allocation2 + $0x8] sm:$0xff]
        %v3128 = vld [vmem:[#allocation2 + $0x20] sm:$0xff]
        %v3129 = vld [vmem:[#allocation2 + $0x38] sm:$0xff]
        %v3130 = vld [vmem:[#allocation2 + $0x50] sm:$0xff]
        %v3131 = vld [vmem:[#allocation2 + $0x68] sm:$0xff]
        %v3132 = vld [vmem:[#allocation2 + $0x80] sm:$0xff]
        %v3133 = vld [vmem:[#allocation2 + $0x98] sm:$0xff]
        %v3134 = vld [vmem:[#allocation2 + $0xb0] sm:$0xff]
        %v3135 = vpack.c.bf16 %v3128, %v3127
        %v3136 = vpack.c.bf16 %v3130, %v3129
        %v3137 = vpack.c.bf16 %v3132, %v3131
        %v3138 = vpack.c.bf16 %v3134, %v3133
        %s3139 = scalar_lea.vmem %s4, 64
        %v3140 = vld [vmem:[%s3139] sm:$0xf]
        %v3141 = vld [vmem:[%s3139 + $0x4] sm:$0xf]
        %v3142 = vld [vmem:[%s3139 + $0x8] sm:$0xf]
        %v3143 = vld [vmem:[%s3139 + $0xc] sm:$0xf]
        %v3144 = vld [vmem:[%s3139 + $0x10] sm:$0xf]
        %v3145 = vld [vmem:[%s3139 + $0x14] sm:$0xf]
        %v3146 = vld [vmem:[%s3139 + $0x18] sm:$0xf]
        %v3147 = vld [vmem:[%s3139 + $0x1c] sm:$0xf]
        %v3156 = vunpack.c.l.b16 %v3140
        %v3157 = vunpack.c.l.b16 %v3141
        %v3158 = vunpack.c.l.b16 %v3142
        %v3159 = vunpack.c.l.b16 %v3143
        %v3160 = vunpack.c.l.b16 %v3144
        %v3161 = vunpack.c.l.b16 %v3145
        %v3162 = vunpack.c.l.b16 %v3146
        %v3163 = vunpack.c.l.b16 %v3147
        %v3164 = vpack.c.b16 %v3157, %v3156
        %v3165 = vpack.c.b16 %v3159, %v3158
        %v3166 = vpack.c.b16 %v3161, %v3160
        %v3167 = vpack.c.b16 %v3163, %v3162
        %v3173 = vsel %vm2249, %v3135, 0
        %v3176 = vsel %vm2249, %v3136, 0
        %v3179 = vsel %vm2249, %v3137, 0
        %v3182 = vsel %vm2249, %v3138, 0
        %3184 = vmatprep.subr.bf16.mxu0 0
        %3185 = vmatpush1.bf16.msra.mxu0 %v3164
        %3186 = vmatprep.subr.bf16.mxu0 0
        %3187 = vmatpush1.bf16.msra.mxu0 %v3165
        %3188 = vmatprep.subr.bf16.mxu0 0
        %3189 = vmatpush1.bf16.msra.mxu0 %v3166
        %3190 = vmatprep.subr.bf16.mxu0 0
        %3191 = vmatpush1.bf16.msra.mxu0 %v3167
        %3192 = vmatprep.subr.bf16.mxu0 0
        %3193 = vmatpush1.bf16.msra.mxu0 0
        %3194 = vmatprep.subr.bf16.mxu0 0
        %3195 = vmatpush1.bf16.msra.mxu0 0
        %3196 = vmatprep.subr.bf16.mxu0 0
        %3197 = vmatpush1.bf16.msra.mxu0 0
        %3198 = vmatprep.subr.bf16.mxu0 0
        %3199 = vmatpush1.bf16.msra.mxu0 0
        %3200 = vmatprep.subr.bf16.mxu0 0
        %3201 = vmatpush1.bf16.msra.mxu0 0
        %3202 = vmatprep.subr.bf16.mxu0 0
        %3203 = vmatpush1.bf16.msra.mxu0 0
        %3204 = vmatprep.subr.bf16.mxu0 0
        %3205 = vmatpush1.bf16.msra.mxu0 0
        %3206 = vmatprep.subr.bf16.mxu0 0
        %3207 = vmatpush1.bf16.msra.mxu0 0
        %3208 = vmatprep.subr.bf16.mxu0 0
        %3209 = vmatpush1.bf16.msra.mxu0 0
        %3210 = vmatprep.subr.bf16.mxu0 0
        %3211 = vmatpush1.bf16.msra.mxu0 0
        %3212 = vmatprep.subr.bf16.mxu0 0
        %3213 = vmatpush1.bf16.msra.mxu0 0
        %3214 = vmatprep.subr.bf16.mxu0 0
        %3215 = vmatpush1.bf16.msra.mxu0 0
        %3216 = vmatprep.mubr.bf16.mxu0 0
        %3217 = vmatmul.mubr.bf16.gmra.mrb[0].mxu0 %v3173
        %v3218 = vpop.f32.mrb[0].mxu0
        %v3219 = vadd.f32 0.0, %v3218
        %v3220 = vpop.f32.mrb[0].mxu0
        %v3221 = vpop.f32.mrb[0].mxu0
        %v3222 = vadd.f32 0.0, %v3221
        %v3223 = vpop.f32.mrb[0].mxu0
        %3224 = vmatprep.mubr.bf16.mxu0 0
        %3225 = vmatmul.mubr.bf16.gmra.mrb[0].mxu0 %v3176
        %v3226 = vpop.f32.mrb[0].mxu0
        %v3227 = vadd.f32 0.0, %v3226
        %v3228 = vpop.f32.mrb[0].mxu0
        %v3229 = vpop.f32.mrb[0].mxu0
        %v3230 = vadd.f32 0.0, %v3229
        %v3231 = vpop.f32.mrb[0].mxu0
        %3232 = vmatprep.mubr.bf16.mxu0 0
        %3233 = vmatmul.mubr.bf16.gmra.mrb[0].mxu0 %v3179
        %v3234 = vpop.f32.mrb[0].mxu0
        %v3235 = vadd.f32 0.0, %v3234
        %v3236 = vpop.f32.mrb[0].mxu0
        %v3237 = vpop.f32.mrb[0].mxu0
        %v3238 = vadd.f32 0.0, %v3237
        %v3239 = vpop.f32.mrb[0].mxu0
        %3240 = vmatprep.mubr.bf16.mxu0 0
        %3241 = vmatmul.mubr.bf16.gmra.mrb[0].mxu0 %v3182
        %v3242 = vpop.f32.mrb[0].mxu0
        %v3243 = vadd.f32 0.0, %v3242
        %v3244 = vpop.f32.mrb[0].mxu0
        %v3245 = vpop.f32.mrb[0].mxu0
        %v3246 = vadd.f32 0.0, %v3245
        %v3247 = vpop.f32.mrb[0].mxu0
        %3248 = vdwg.mxu0
        %v3249 = vadd.f32 %v3097, %v3219
        %v3250 = vadd.f32 %v3100, %v3222
        %v3251 = vadd.f32 %v3105, %v3227
        %v3252 = vadd.f32 %v3108, %v3230
        %v3253 = vadd.f32 %v3113, %v3235
        %v3254 = vadd.f32 %v3116, %v3238
        %v3255 = vadd.f32 %v3121, %v3243
        %v3256 = vadd.f32 %v3124, %v3246
        %v3257 = vld [vmem:[#allocation2 + $0x9] sm:$0xff]
        %v3258 = vld [vmem:[#allocation2 + $0x21] sm:$0xff]
        %v3259 = vld [vmem:[#allocation2 + $0x39] sm:$0xff]
        %v3260 = vld [vmem:[#allocation2 + $0x51] sm:$0xff]
        %v3261 = vld [vmem:[#allocation2 + $0x69] sm:$0xff]
        %v3262 = vld [vmem:[#allocation2 + $0x81] sm:$0xff]
        %v3263 = vld [vmem:[#allocation2 + $0x99] sm:$0xff]
        %v3264 = vld [vmem:[#allocation2 + $0xb1] sm:$0xff]
        %v3265 = vpack.c.bf16 %v3258, %v3257
        %v3266 = vpack.c.bf16 %v3260, %v3259
        %v3267 = vpack.c.bf16 %v3262, %v3261
        %v3268 = vpack.c.bf16 %v3264, %v3263
        %s3269 = scalar_lea.vmem %s4, 96
        %v3270 = vld [vmem:[%s3269] sm:$0xf]
        %v3271 = vld [vmem:[%s3269 + $0x4] sm:$0xf]
        %v3272 = vld [vmem:[%s3269 + $0x8] sm:$0xf]
        %v3273 = vld [vmem:[%s3269 + $0xc] sm:$0xf]
        %v3274 = vld [vmem:[%s3269 + $0x10] sm:$0xf]
        %v3275 = vld [vmem:[%s3269 + $0x14] sm:$0xf]
        %v3276 = vld [vmem:[%s3269 + $0x18] sm:$0xf]
        %v3277 = vld [vmem:[%s3269 + $0x1c] sm:$0xf]
        %v3286 = vunpack.c.l.b16 %v3270
        %v3287 = vunpack.c.l.b16 %v3271
        %v3288 = vunpack.c.l.b16 %v3272
        %v3289 = vunpack.c.l.b16 %v3273
        %v3290 = vunpack.c.l.b16 %v3274
        %v3291 = vunpack.c.l.b16 %v3275
        %v3292 = vunpack.c.l.b16 %v3276
        %v3293 = vunpack.c.l.b16 %v3277
        %v3294 = vpack.c.b16 %v3287, %v3286
        %v3295 = vpack.c.b16 %v3289, %v3288
        %v3296 = vpack.c.b16 %v3291, %v3290
        %v3297 = vpack.c.b16 %v3293, %v3292
        %v3303 = vsel %vm2249, %v3265, 0
        %v3306 = vsel %vm2249, %v3266, 0
        %v3309 = vsel %vm2249, %v3267, 0
        %v3312 = vsel %vm2249, %v3268, 0
        %3314 = vmatprep.subr.bf16.mxu0 0
        %3315 = vmatpush1.bf16.msra.mxu0 %v3294
        %3316 = vmatprep.subr.bf16.mxu0 0
        %3317 = vmatpush1.bf16.msra.mxu0 %v3295
        %3318 = vmatprep.subr.bf16.mxu0 0
        %3319 = vmatpush1.bf16.msra.mxu0 %v3296
        %3320 = vmatprep.subr.bf16.mxu0 0
        %3321 = vmatpush1.bf16.msra.mxu0 %v3297
        %3322 = vmatprep.subr.bf16.mxu0 0
        %3323 = vmatpush1.bf16.msra.mxu0 0
        %3324 = vmatprep.subr.bf16.mxu0 0
        %3325 = vmatpush1.bf16.msra.mxu0 0
        %3326 = vmatprep.subr.bf16.mxu0 0
        %3327 = vmatpush1.bf16.msra.mxu0 0
        %3328 = vmatprep.subr.bf16.mxu0 0
        %3329 = vmatpush1.bf16.msra.mxu0 0
        %3330 = vmatprep.subr.bf16.mxu0 0
        %3331 = vmatpush1.bf16.msra.mxu0 0
        %3332 = vmatprep.subr.bf16.mxu0 0
        %3333 = vmatpush1.bf16.msra.mxu0 0
        %3334 = vmatprep.subr.bf16.mxu0 0
        %3335 = vmatpush1.bf16.msra.mxu0 0
        %3336 = vmatprep.subr.bf16.mxu0 0
        %3337 = vmatpush1.bf16.msra.mxu0 0
        %3338 = vmatprep.subr.bf16.mxu0 0
        %3339 = vmatpush1.bf16.msra.mxu0 0
        %3340 = vmatprep.subr.bf16.mxu0 0
        %3341 = vmatpush1.bf16.msra.mxu0 0
        %3342 = vmatprep.subr.bf16.mxu0 0
        %3343 = vmatpush1.bf16.msra.mxu0 0
        %3344 = vmatprep.subr.bf16.mxu0 0
        %3345 = vmatpush1.bf16.msra.mxu0 0
        %3346 = vmatprep.mubr.bf16.mxu0 0
        %3347 = vmatmul.mubr.bf16.gmra.mrb[0].mxu0 %v3303
        %v3348 = vpop.f32.mrb[0].mxu0
        %v3349 = vadd.f32 0.0, %v3348
        %v3350 = vpop.f32.mrb[0].mxu0
        %v3351 = vpop.f32.mrb[0].mxu0
        %v3352 = vadd.f32 0.0, %v3351
        %v3353 = vpop.f32.mrb[0].mxu0
        %3354 = vmatprep.mubr.bf16.mxu0 0
        %3355 = vmatmul.mubr.bf16.gmra.mrb[0].mxu0 %v3306
        %v3356 = vpop.f32.mrb[0].mxu0
        %v3357 = vadd.f32 0.0, %v3356
        %v3358 = vpop.f32.mrb[0].mxu0
        %v3359 = vpop.f32.mrb[0].mxu0
        %v3360 = vadd.f32 0.0, %v3359
        %v3361 = vpop.f32.mrb[0].mxu0
        %3362 = vmatprep.mubr.bf16.mxu0 0
        %3363 = vmatmul.mubr.bf16.gmra.mrb[0].mxu0 %v3309
        %v3364 = vpop.f32.mrb[0].mxu0
        %v3365 = vadd.f32 0.0, %v3364
        %v3366 = vpop.f32.mrb[0].mxu0
        %v3367 = vpop.f32.mrb[0].mxu0
        %v3368 = vadd.f32 0.0, %v3367
        %v3369 = vpop.f32.mrb[0].mxu0
        %3370 = vmatprep.mubr.bf16.mxu0 0
        %3371 = vmatmul.mubr.bf16.gmra.mrb[0].mxu0 %v3312
        %v3372 = vpop.f32.mrb[0].mxu0
        %v3373 = vadd.f32 0.0, %v3372
        %v3374 = vpop.f32.mrb[0].mxu0
        %v3375 = vpop.f32.mrb[0].mxu0
        %v3376 = vadd.f32 0.0, %v3375
        %v3377 = vpop.f32.mrb[0].mxu0
        %3378 = vdwg.mxu0
        %v3379 = vadd.f32 %v3249, %v3349
        %v3380 = vadd.f32 %v3250, %v3352
        %v3381 = vadd.f32 %v3251, %v3357
        %v3382 = vadd.f32 %v3252, %v3360
        %v3383 = vadd.f32 %v3253, %v3365
        %v3384 = vadd.f32 %v3254, %v3368
        %v3385 = vadd.f32 %v3255, %v3373
        %v3386 = vadd.f32 %v3256, %v3376
        %v3387 = vld [vmem:[#allocation2 + $0xa] sm:$0xff]
        %v3388 = vld [vmem:[#allocation2 + $0x22] sm:$0xff]
        %v3389 = vld [vmem:[#allocation2 + $0x3a] sm:$0xff]
        %v3390 = vld [vmem:[#allocation2 + $0x52] sm:$0xff]
        %v3391 = vld [vmem:[#allocation2 + $0x6a] sm:$0xff]
        %v3392 = vld [vmem:[#allocation2 + $0x82] sm:$0xff]
        %v3393 = vld [vmem:[#allocation2 + $0x9a] sm:$0xff]
        %v3394 = vld [vmem:[#allocation2 + $0xb2] sm:$0xff]
        %v3395 = vpack.c.bf16 %v3388, %v3387
        %v3396 = vpack.c.bf16 %v3390, %v3389
        %v3397 = vpack.c.bf16 %v3392, %v3391
        %v3398 = vpack.c.bf16 %v3394, %v3393
        %s3399 = scalar_lea.vmem %s4, 128
        %v3400 = vld [vmem:[%s3399] sm:$0xf]
        %v3401 = vld [vmem:[%s3399 + $0x4] sm:$0xf]
        %v3402 = vld [vmem:[%s3399 + $0x8] sm:$0xf]
        %v3403 = vld [vmem:[%s3399 + $0xc] sm:$0xf]
        %v3404 = vld [vmem:[%s3399 + $0x10] sm:$0xf]
        %v3405 = vld [vmem:[%s3399 + $0x14] sm:$0xf]
        %v3406 = vld [vmem:[%s3399 + $0x18] sm:$0xf]
        %v3407 = vld [vmem:[%s3399 + $0x1c] sm:$0xf]
        %v3416 = vunpack.c.l.b16 %v3400
        %v3417 = vunpack.c.l.b16 %v3401
        %v3418 = vunpack.c.l.b16 %v3402
        %v3419 = vunpack.c.l.b16 %v3403
        %v3420 = vunpack.c.l.b16 %v3404
        %v3421 = vunpack.c.l.b16 %v3405
        %v3422 = vunpack.c.l.b16 %v3406
        %v3423 = vunpack.c.l.b16 %v3407
        %v3424 = vpack.c.b16 %v3417, %v3416
        %v3425 = vpack.c.b16 %v3419, %v3418
        %v3426 = vpack.c.b16 %v3421, %v3420
        %v3427 = vpack.c.b16 %v3423, %v3422
        %v3433 = vsel %vm2249, %v3395, 0
        %v3436 = vsel %vm2249, %v3396, 0
        %v3439 = vsel %vm2249, %v3397, 0
        %v3442 = vsel %vm2249, %v3398, 0
        %3444 = vmatprep.subr.bf16.mxu0 0
        %3445 = vmatpush1.bf16.msra.mxu0 %v3424
        %3446 = vmatprep.subr.bf16.mxu0 0
        %3447 = vmatpush1.bf16.msra.mxu0 %v3425
        %3448 = vmatprep.subr.bf16.mxu0 0
        %3449 = vmatpush1.bf16.msra.mxu0 %v3426
        %3450 = vmatprep.subr.bf16.mxu0 0
        %3451 = vmatpush1.bf16.msra.mxu0 %v3427
        %3452 = vmatprep.subr.bf16.mxu0 0
        %3453 = vmatpush1.bf16.msra.mxu0 0
        %3454 = vmatprep.subr.bf16.mxu0 0
        %3455 = vmatpush1.bf16.msra.mxu0 0
        %3456 = vmatprep.subr.bf16.mxu0 0
        %3457 = vmatpush1.bf16.msra.mxu0 0
        %3458 = vmatprep.subr.bf16.mxu0 0
        %3459 = vmatpush1.bf16.msra.mxu0 0
        %3460 = vmatprep.subr.bf16.mxu0 0
        %3461 = vmatpush1.bf16.msra.mxu0 0
        %3462 = vmatprep.subr.bf16.mxu0 0
        %3463 = vmatpush1.bf16.msra.mxu0 0
        %3464 = vmatprep.subr.bf16.mxu0 0
        %3465 = vmatpush1.bf16.msra.mxu0 0
        %3466 = vmatprep.subr.bf16.mxu0 0
        %3467 = vmatpush1.bf16.msra.mxu0 0
        %3468 = vmatprep.subr.bf16.mxu0 0
        %3469 = vmatpush1.bf16.msra.mxu0 0
        %3470 = vmatprep.subr.bf16.mxu0 0
        %3471 = vmatpush1.bf16.msra.mxu0 0
        %3472 = vmatprep.subr.bf16.mxu0 0
        %3473 = vmatpush1.bf16.msra.mxu0 0
        %3474 = vmatprep.subr.bf16.mxu0 0
        %3475 = vmatpush1.bf16.msra.mxu0 0
        %3476 = vmatprep.mubr.bf16.mxu0 0
        %3477 = vmatmul.mubr.bf16.gmra.mrb[0].mxu0 %v3433
        %v3478 = vpop.f32.mrb[0].mxu0
        %v3479 = vadd.f32 0.0, %v3478
        %v3480 = vpop.f32.mrb[0].mxu0
        %v3481 = vpop.f32.mrb[0].mxu0
        %v3482 = vadd.f32 0.0, %v3481
        %v3483 = vpop.f32.mrb[0].mxu0
        %3484 = vmatprep.mubr.bf16.mxu0 0
        %3485 = vmatmul.mubr.bf16.gmra.mrb[0].mxu0 %v3436
        %v3486 = vpop.f32.mrb[0].mxu0
        %v3487 = vadd.f32 0.0, %v3486
        %v3488 = vpop.f32.mrb[0].mxu0
        %v3489 = vpop.f32.mrb[0].mxu0
        %v3490 = vadd.f32 0.0, %v3489
        %v3491 = vpop.f32.mrb[0].mxu0
        %3492 = vmatprep.mubr.bf16.mxu0 0
        %3493 = vmatmul.mubr.bf16.gmra.mrb[0].mxu0 %v3439
        %v3494 = vpop.f32.mrb[0].mxu0
        %v3495 = vadd.f32 0.0, %v3494
        %v3496 = vpop.f32.mrb[0].mxu0
        %v3497 = vpop.f32.mrb[0].mxu0
        %v3498 = vadd.f32 0.0, %v3497
        %v3499 = vpop.f32.mrb[0].mxu0
        %3500 = vmatprep.mubr.bf16.mxu0 0
        %3501 = vmatmul.mubr.bf16.gmra.mrb[0].mxu0 %v3442
        %v3502 = vpop.f32.mrb[0].mxu0
        %v3503 = vadd.f32 0.0, %v3502
        %v3504 = vpop.f32.mrb[0].mxu0
        %v3505 = vpop.f32.mrb[0].mxu0
        %v3506 = vadd.f32 0.0, %v3505
        %v3507 = vpop.f32.mrb[0].mxu0
        %3508 = vdwg.mxu0
        %v3509 = vadd.f32 %v3379, %v3479
        %v3510 = vadd.f32 %v3380, %v3482
        %v3511 = vadd.f32 %v3381, %v3487
        %v3512 = vadd.f32 %v3382, %v3490
        %v3513 = vadd.f32 %v3383, %v3495
        %v3514 = vadd.f32 %v3384, %v3498
        %v3515 = vadd.f32 %v3385, %v3503
        %v3516 = vadd.f32 %v3386, %v3506
        %s3517 = scalar_lea.vmem [#allocation2], 24
        %v3518 = vld [vmem:[%s3517 + $0x6] sm:$0xff]
        %v3519 = vld [vmem:[%s3517 + $0x1e] sm:$0xff]
        %v3520 = vld [vmem:[%s3517 + $0x36] sm:$0xff]
        %v3521 = vld [vmem:[%s3517 + $0x4e] sm:$0xff]
        %v3522 = vld [vmem:[%s3517 + $0x66] sm:$0xff]
        %v3523 = vld [vmem:[%s3517 + $0x7e] sm:$0xff]
        %v3524 = vld [vmem:[%s3517 + $0x96] sm:$0xff]
        %v3525 = vld [vmem:[%s3517 + $0xae] sm:$0xff]
        %v3526 = vpack.c.bf16 %v3519, %v3518
        %v3527 = vpack.c.bf16 %v3521, %v3520
        %v3528 = vpack.c.bf16 %v3523, %v3522
        %v3529 = vpack.c.bf16 %v3525, %v3524
        %s3530 = scalar_lea.vmem %s4, 160
        %v3531 = vld [vmem:[%s3530] sm:$0xf]
        %v3532 = vld [vmem:[%s3530 + $0x4] sm:$0xf]
        %v3533 = vld [vmem:[%s3530 + $0x8] sm:$0xf]
        %v3534 = vld [vmem:[%s3530 + $0xc] sm:$0xf]
        %v3535 = vld [vmem:[%s3530 + $0x10] sm:$0xf]
        %v3536 = vld [vmem:[%s3530 + $0x14] sm:$0xf]
        %v3537 = vld [vmem:[%s3530 + $0x18] sm:$0xf]
        %v3538 = vld [vmem:[%s3530 + $0x1c] sm:$0xf]
        %v3547 = vunpack.c.l.b16 %v3531
        %v3548 = vunpack.c.l.b16 %v3532
        %v3549 = vunpack.c.l.b16 %v3533
        %v3550 = vunpack.c.l.b16 %v3534
        %v3551 = vunpack.c.l.b16 %v3535
        %v3552 = vunpack.c.l.b16 %v3536
        %v3553 = vunpack.c.l.b16 %v3537
        %v3554 = vunpack.c.l.b16 %v3538
        %v3555 = vpack.c.b16 %v3548, %v3547
        %v3556 = vpack.c.b16 %v3550, %v3549
        %v3557 = vpack.c.b16 %v3552, %v3551
        %v3558 = vpack.c.b16 %v3554, %v3553
        %v3564 = vsel %vm2249, %v3526, 0
        %v3567 = vsel %vm2249, %v3527, 0
        %v3570 = vsel %vm2249, %v3528, 0
        %v3573 = vsel %vm2249, %v3529, 0
        %3575 = vmatprep.subr.bf16.mxu0 0
        %3576 = vmatpush1.bf16.msra.mxu0 %v3555
        %3577 = vmatprep.subr.bf16.mxu0 0
        %3578 = vmatpush1.bf16.msra.mxu0 %v3556
        %3579 = vmatprep.subr.bf16.mxu0 0
        %3580 = vmatpush1.bf16.msra.mxu0 %v3557
        %3581 = vmatprep.subr.bf16.mxu0 0
        %3582 = vmatpush1.bf16.msra.mxu0 %v3558
        %3583 = vmatprep.subr.bf16.mxu0 0
        %3584 = vmatpush1.bf16.msra.mxu0 0
        %3585 = vmatprep.subr.bf16.mxu0 0
        %3586 = vmatpush1.bf16.msra.mxu0 0
        %3587 = vmatprep.subr.bf16.mxu0 0
        %3588 = vmatpush1.bf16.msra.mxu0 0
        %3589 = vmatprep.subr.bf16.mxu0 0
        %3590 = vmatpush1.bf16.msra.mxu0 0
        %3591 = vmatprep.subr.bf16.mxu0 0
        %3592 = vmatpush1.bf16.msra.mxu0 0
        %3593 = vmatprep.subr.bf16.mxu0 0
        %3594 = vmatpush1.bf16.msra.mxu0 0
        %3595 = vmatprep.subr.bf16.mxu0 0
        %3596 = vmatpush1.bf16.msra.mxu0 0
        %3597 = vmatprep.subr.bf16.mxu0 0
        %3598 = vmatpush1.bf16.msra.mxu0 0
        %3599 = vmatprep.subr.bf16.mxu0 0
        %3600 = vmatpush1.bf16.msra.mxu0 0
        %3601 = vmatprep.subr.bf16.mxu0 0
        %3602 = vmatpush1.bf16.msra.mxu0 0
        %3603 = vmatprep.subr.bf16.mxu0 0
        %3604 = vmatpush1.bf16.msra.mxu0 0
        %3605 = vmatprep.subr.bf16.mxu0 0
        %3606 = vmatpush1.bf16.msra.mxu0 0
        %3607 = vmatprep.mubr.bf16.mxu0 0
        %3608 = vmatmul.mubr.bf16.gmra.mrb[0].mxu0 %v3564
        %v3609 = vpop.f32.mrb[0].mxu0
        %v3610 = vadd.f32 0.0, %v3609
        %v3611 = vpop.f32.mrb[0].mxu0
        %v3612 = vpop.f32.mrb[0].mxu0
        %v3613 = vadd.f32 0.0, %v3612
        %v3614 = vpop.f32.mrb[0].mxu0
        %3615 = vmatprep.mubr.bf16.mxu0 0
        %3616 = vmatmul.mubr.bf16.gmra.mrb[0].mxu0 %v3567
        %v3617 = vpop.f32.mrb[0].mxu0
        %v3618 = vadd.f32 0.0, %v3617
        %v3619 = vpop.f32.mrb[0].mxu0
        %v3620 = vpop.f32.mrb[0].mxu0
        %v3621 = vadd.f32 0.0, %v3620
        %v3622 = vpop.f32.mrb[0].mxu0
        %3623 = vmatprep.mubr.bf16.mxu0 0
        %3624 = vmatmul.mubr.bf16.gmra.mrb[0].mxu0 %v3570
        %v3625 = vpop.f32.mrb[0].mxu0
        %v3626 = vadd.f32 0.0, %v3625
        %v3627 = vpop.f32.mrb[0].mxu0
        %v3628 = vpop.f32.mrb[0].mxu0
        %v3629 = vadd.f32 0.0, %v3628
        %v3630 = vpop.f32.mrb[0].mxu0
        %3631 = vmatprep.mubr.bf16.mxu0 0
        %3632 = vmatmul.mubr.bf16.gmra.mrb[0].mxu0 %v3573
        %v3633 = vpop.f32.mrb[0].mxu0
        %v3634 = vadd.f32 0.0, %v3633
        %v3635 = vpop.f32.mrb[0].mxu0
        %v3636 = vpop.f32.mrb[0].mxu0
        %v3637 = vadd.f32 0.0, %v3636
        %v3638 = vpop.f32.mrb[0].mxu0
        %3639 = vdwg.mxu0
        %v3640 = vadd.f32 %v3509, %v3610
        %v3641 = vadd.f32 %v3510, %v3613
        %v3642 = vadd.f32 %v3511, %v3618
        %v3643 = vadd.f32 %v3512, %v3621
        %v3644 = vadd.f32 %v3513, %v3626
        %v3645 = vadd.f32 %v3514, %v3629
        %v3646 = vadd.f32 %v3515, %v3634
        %v3647 = vadd.f32 %v3516, %v3637
        %v3648 = vld [vmem:[%s3517 + $0x7] sm:$0xff]
        %v3649 = vld [vmem:[%s3517 + $0x1f] sm:$0xff]
        %v3650 = vld [vmem:[%s3517 + $0x37] sm:$0xff]
        %v3651 = vld [vmem:[%s3517 + $0x4f] sm:$0xff]
        %v3652 = vld [vmem:[%s3517 + $0x67] sm:$0xff]
        %v3653 = vld [vmem:[%s3517 + $0x7f] sm:$0xff]
        %v3654 = vld [vmem:[%s3517 + $0x97] sm:$0xff]
        %v3655 = vld [vmem:[%s3517 + $0xaf] sm:$0xff]
        %v3656 = vpack.c.bf16 %v3649, %v3648
        %v3657 = vpack.c.bf16 %v3651, %v3650
        %v3658 = vpack.c.bf16 %v3653, %v3652
        %v3659 = vpack.c.bf16 %v3655, %v3654
        %s3660 = scalar_lea.vmem %s4, 192
        %v3661 = vld [vmem:[%s3660] sm:$0xf]
        %v3662 = vld [vmem:[%s3660 + $0x4] sm:$0xf]
        %v3663 = vld [vmem:[%s3660 + $0x8] sm:$0xf]
        %v3664 = vld [vmem:[%s3660 + $0xc] sm:$0xf]
        %v3665 = vld [vmem:[%s3660 + $0x10] sm:$0xf]
        %v3666 = vld [vmem:[%s3660 + $0x14] sm:$0xf]
        %v3667 = vld [vmem:[%s3660 + $0x18] sm:$0xf]
        %v3668 = vld [vmem:[%s3660 + $0x1c] sm:$0xf]
        %v3677 = vunpack.c.l.b16 %v3661
        %v3678 = vunpack.c.l.b16 %v3662
        %v3679 = vunpack.c.l.b16 %v3663
        %v3680 = vunpack.c.l.b16 %v3664
        %v3681 = vunpack.c.l.b16 %v3665
        %v3682 = vunpack.c.l.b16 %v3666
        %v3683 = vunpack.c.l.b16 %v3667
        %v3684 = vunpack.c.l.b16 %v3668
        %v3685 = vpack.c.b16 %v3678, %v3677
        %v3686 = vpack.c.b16 %v3680, %v3679
        %v3687 = vpack.c.b16 %v3682, %v3681
        %v3688 = vpack.c.b16 %v3684, %v3683
        %v3694 = vsel %vm2249, %v3656, 0
        %v3697 = vsel %vm2249, %v3657, 0
        %v3700 = vsel %vm2249, %v3658, 0
        %v3703 = vsel %vm2249, %v3659, 0
        %3705 = vmatprep.subr.bf16.mxu0 0
        %3706 = vmatpush1.bf16.msra.mxu0 %v3685
        %3707 = vmatprep.subr.bf16.mxu0 0
        %3708 = vmatpush1.bf16.msra.mxu0 %v3686
        %3709 = vmatprep.subr.bf16.mxu0 0
        %3710 = vmatpush1.bf16.msra.mxu0 %v3687
        %3711 = vmatprep.subr.bf16.mxu0 0
        %3712 = vmatpush1.bf16.msra.mxu0 %v3688
        %3713 = vmatprep.subr.bf16.mxu0 0
        %3714 = vmatpush1.bf16.msra.mxu0 0
        %3715 = vmatprep.subr.bf16.mxu0 0
        %3716 = vmatpush1.bf16.msra.mxu0 0
        %3717 = vmatprep.subr.bf16.mxu0 0
        %3718 = vmatpush1.bf16.msra.mxu0 0
        %3719 = vmatprep.subr.bf16.mxu0 0
        %3720 = vmatpush1.bf16.msra.mxu0 0
        %3721 = vmatprep.subr.bf16.mxu0 0
        %3722 = vmatpush1.bf16.msra.mxu0 0
        %3723 = vmatprep.subr.bf16.mxu0 0
        %3724 = vmatpush1.bf16.msra.mxu0 0
        %3725 = vmatprep.subr.bf16.mxu0 0
        %3726 = vmatpush1.bf16.msra.mxu0 0
        %3727 = vmatprep.subr.bf16.mxu0 0
        %3728 = vmatpush1.bf16.msra.mxu0 0
        %3729 = vmatprep.subr.bf16.mxu0 0
        %3730 = vmatpush1.bf16.msra.mxu0 0
        %3731 = vmatprep.subr.bf16.mxu0 0
        %3732 = vmatpush1.bf16.msra.mxu0 0
        %3733 = vmatprep.subr.bf16.mxu0 0
        %3734 = vmatpush1.bf16.msra.mxu0 0
        %3735 = vmatprep.subr.bf16.mxu0 0
        %3736 = vmatpush1.bf16.msra.mxu0 0
        %3737 = vmatprep.mubr.bf16.mxu0 0
        %3738 = vmatmul.mubr.bf16.gmra.mrb[0].mxu0 %v3694
        %v3739 = vpop.f32.mrb[0].mxu0
        %v3740 = vadd.f32 0.0, %v3739
        %v3741 = vpop.f32.mrb[0].mxu0
        %v3742 = vpop.f32.mrb[0].mxu0
        %v3743 = vadd.f32 0.0, %v3742
        %v3744 = vpop.f32.mrb[0].mxu0
        %3745 = vmatprep.mubr.bf16.mxu0 0
        %3746 = vmatmul.mubr.bf16.gmra.mrb[0].mxu0 %v3697
        %v3747 = vpop.f32.mrb[0].mxu0
        %v3748 = vadd.f32 0.0, %v3747
        %v3749 = vpop.f32.mrb[0].mxu0
        %v3750 = vpop.f32.mrb[0].mxu0
        %v3751 = vadd.f32 0.0, %v3750
        %v3752 = vpop.f32.mrb[0].mxu0
        %3753 = vmatprep.mubr.bf16.mxu0 0
        %3754 = vmatmul.mubr.bf16.gmra.mrb[0].mxu0 %v3700
        %v3755 = vpop.f32.mrb[0].mxu0
        %v3756 = vadd.f32 0.0, %v3755
        %v3757 = vpop.f32.mrb[0].mxu0
        %v3758 = vpop.f32.mrb[0].mxu0
        %v3759 = vadd.f32 0.0, %v3758
        %v3760 = vpop.f32.mrb[0].mxu0
        %3761 = vmatprep.mubr.bf16.mxu0 0
        %3762 = vmatmul.mubr.bf16.gmra.mrb[0].mxu0 %v3703
        %v3763 = vpop.f32.mrb[0].mxu0
        %v3764 = vadd.f32 0.0, %v3763
        %v3765 = vpop.f32.mrb[0].mxu0
        %v3766 = vpop.f32.mrb[0].mxu0
        %v3767 = vadd.f32 0.0, %v3766
        %v3768 = vpop.f32.mrb[0].mxu0
        %3769 = vdwg.mxu0
        %v3770 = vadd.f32 %v3640, %v3740
        %v3771 = vadd.f32 %v3641, %v3743
        %v3772 = vadd.f32 %v3642, %v3748
        %v3773 = vadd.f32 %v3643, %v3751
        %v3774 = vadd.f32 %v3644, %v3756
        %v3775 = vadd.f32 %v3645, %v3759
        %v3776 = vadd.f32 %v3646, %v3764
        %v3777 = vadd.f32 %v3647, %v3767
        %v3778 = vld [vmem:[%s3517 + $0x8] sm:$0xff]
        %v3779 = vld [vmem:[%s3517 + $0x20] sm:$0xff]
        %v3780 = vld [vmem:[%s3517 + $0x38] sm:$0xff]
        %v3781 = vld [vmem:[%s3517 + $0x50] sm:$0xff]
        %v3782 = vld [vmem:[%s3517 + $0x68] sm:$0xff]
        %v3783 = vld [vmem:[%s3517 + $0x80] sm:$0xff]
        %v3784 = vld [vmem:[%s3517 + $0x98] sm:$0xff]
        %v3785 = vld [vmem:[%s3517 + $0xb0] sm:$0xff]
        %v3786 = vpack.c.bf16 %v3779, %v3778
        %v3787 = vpack.c.bf16 %v3781, %v3780
        %v3788 = vpack.c.bf16 %v3783, %v3782
        %v3789 = vpack.c.bf16 %v3785, %v3784
        %s3790 = scalar_lea.vmem %s4, 224
        %v3791 = vld [vmem:[%s3790] sm:$0xf]
        %v3792 = vld [vmem:[%s3790 + $0x4] sm:$0xf]
        %v3793 = vld [vmem:[%s3790 + $0x8] sm:$0xf]
        %v3794 = vld [vmem:[%s3790 + $0xc] sm:$0xf]
        %v3795 = vld [vmem:[%s3790 + $0x10] sm:$0xf]
        %v3796 = vld [vmem:[%s3790 + $0x14] sm:$0xf]
        %v3797 = vld [vmem:[%s3790 + $0x18] sm:$0xf]
        %v3798 = vld [vmem:[%s3790 + $0x1c] sm:$0xf]
        %v3807 = vunpack.c.l.b16 %v3791
        %v3808 = vunpack.c.l.b16 %v3792
        %v3809 = vunpack.c.l.b16 %v3793
        %v3810 = vunpack.c.l.b16 %v3794
        %v3811 = vunpack.c.l.b16 %v3795
        %v3812 = vunpack.c.l.b16 %v3796
        %v3813 = vunpack.c.l.b16 %v3797
        %v3814 = vunpack.c.l.b16 %v3798
        %v3815 = vpack.c.b16 %v3808, %v3807
        %v3816 = vpack.c.b16 %v3810, %v3809
        %v3817 = vpack.c.b16 %v3812, %v3811
        %v3818 = vpack.c.b16 %v3814, %v3813
        %v3824 = vsel %vm2249, %v3786, 0
        %v3827 = vsel %vm2249, %v3787, 0
        %v3830 = vsel %vm2249, %v3788, 0
        %v3833 = vsel %vm2249, %v3789, 0
        %3835 = vmatprep.subr.bf16.mxu0 0
        %3836 = vmatpush1.bf16.msra.mxu0 %v3815
        %3837 = vmatprep.subr.bf16.mxu0 0
        %3838 = vmatpush1.bf16.msra.mxu0 %v3816
        %3839 = vmatprep.subr.bf16.mxu0 0
        %3840 = vmatpush1.bf16.msra.mxu0 %v3817
        %3841 = vmatprep.subr.bf16.mxu0 0
        %3842 = vmatpush1.bf16.msra.mxu0 %v3818
        %3843 = vmatprep.subr.bf16.mxu0 0
        %3844 = vmatpush1.bf16.msra.mxu0 0
        %3845 = vmatprep.subr.bf16.mxu0 0
        %3846 = vmatpush1.bf16.msra.mxu0 0
        %3847 = vmatprep.subr.bf16.mxu0 0
        %3848 = vmatpush1.bf16.msra.mxu0 0
        %3849 = vmatprep.subr.bf16.mxu0 0
        %3850 = vmatpush1.bf16.msra.mxu0 0
        %3851 = vmatprep.subr.bf16.mxu0 0
        %3852 = vmatpush1.bf16.msra.mxu0 0
        %3853 = vmatprep.subr.bf16.mxu0 0
        %3854 = vmatpush1.bf16.msra.mxu0 0
        %3855 = vmatprep.subr.bf16.mxu0 0
        %3856 = vmatpush1.bf16.msra.mxu0 0
        %3857 = vmatprep.subr.bf16.mxu0 0
        %3858 = vmatpush1.bf16.msra.mxu0 0
        %3859 = vmatprep.subr.bf16.mxu0 0
        %3860 = vmatpush1.bf16.msra.mxu0 0
        %3861 = vmatprep.subr.bf16.mxu0 0
        %3862 = vmatpush1.bf16.msra.mxu0 0
        %3863 = vmatprep.subr.bf16.mxu0 0
        %3864 = vmatpush1.bf16.msra.mxu0 0
        %3865 = vmatprep.subr.bf16.mxu0 0
        %3866 = vmatpush1.bf16.msra.mxu0 0
        %3867 = vmatprep.mubr.bf16.mxu0 0
        %3868 = vmatmul.mubr.bf16.gmra.mrb[0].mxu0 %v3824
        %v3869 = vpop.f32.mrb[0].mxu0
        %v3870 = vadd.f32 0.0, %v3869
        %v3871 = vpop.f32.mrb[0].mxu0
        %v3872 = vpop.f32.mrb[0].mxu0
        %v3873 = vadd.f32 0.0, %v3872
        %v3874 = vpop.f32.mrb[0].mxu0
        %3875 = vmatprep.mubr.bf16.mxu0 0
        %3876 = vmatmul.mubr.bf16.gmra.mrb[0].mxu0 %v3827
        %v3877 = vpop.f32.mrb[0].mxu0
        %v3878 = vadd.f32 0.0, %v3877
        %v3879 = vpop.f32.mrb[0].mxu0
        %v3880 = vpop.f32.mrb[0].mxu0
        %v3881 = vadd.f32 0.0, %v3880
        %v3882 = vpop.f32.mrb[0].mxu0
        %3883 = vmatprep.mubr.bf16.mxu0 0
        %3884 = vmatmul.mubr.bf16.gmra.mrb[0].mxu0 %v3830
        %v3885 = vpop.f32.mrb[0].mxu0
        %v3886 = vadd.f32 0.0, %v3885
        %v3887 = vpop.f32.mrb[0].mxu0
        %v3888 = vpop.f32.mrb[0].mxu0
        %v3889 = vadd.f32 0.0, %v3888
        %v3890 = vpop.f32.mrb[0].mxu0
        %3891 = vmatprep.mubr.bf16.mxu0 0
        %3892 = vmatmul.mubr.bf16.gmra.mrb[0].mxu0 %v3833
        %v3893 = vpop.f32.mrb[0].mxu0
        %v3894 = vadd.f32 0.0, %v3893
        %v3895 = vpop.f32.mrb[0].mxu0
        %v3896 = vpop.f32.mrb[0].mxu0
        %v3897 = vadd.f32 0.0, %v3896
        %v3898 = vpop.f32.mrb[0].mxu0
        %3899 = vdwg.mxu0
        %v3900 = vadd.f32 %v3770, %v3870
        %v3901 = vadd.f32 %v3771, %v3873
        %v3902 = vadd.f32 %v3772, %v3878
        %v3903 = vadd.f32 %v3773, %v3881
        %v3904 = vadd.f32 %v3774, %v3886
        %v3905 = vadd.f32 %v3775, %v3889
        %v3906 = vadd.f32 %v3776, %v3894
        %v3907 = vadd.f32 %v3777, %v3897
        %v3908 = vld [vmem:[%s3517 + $0x9] sm:$0xff]
        %v3909 = vld [vmem:[%s3517 + $0x21] sm:$0xff]
        %v3910 = vld [vmem:[%s3517 + $0x39] sm:$0xff]
        %v3911 = vld [vmem:[%s3517 + $0x51] sm:$0xff]
        %v3912 = vld [vmem:[%s3517 + $0x69] sm:$0xff]
        %v3913 = vld [vmem:[%s3517 + $0x81] sm:$0xff]
        %v3914 = vld [vmem:[%s3517 + $0x99] sm:$0xff]
        %v3915 = vld [vmem:[%s3517 + $0xb1] sm:$0xff]
        %v3916 = vpack.c.bf16 %v3909, %v3908
        %v3917 = vpack.c.bf16 %v3911, %v3910
        %v3918 = vpack.c.bf16 %v3913, %v3912
        %v3919 = vpack.c.bf16 %v3915, %v3914
        %s3920 = scalar_lea.vmem %s4, 256
        %v3921 = vld [vmem:[%s3920] sm:$0xf]
        %v3922 = vld [vmem:[%s3920 + $0x4] sm:$0xf]
        %v3923 = vld [vmem:[%s3920 + $0x8] sm:$0xf]
        %v3924 = vld [vmem:[%s3920 + $0xc] sm:$0xf]
        %v3925 = vld [vmem:[%s3920 + $0x10] sm:$0xf]
        %v3926 = vld [vmem:[%s3920 + $0x14] sm:$0xf]
        %v3927 = vld [vmem:[%s3920 + $0x18] sm:$0xf]
        %v3928 = vld [vmem:[%s3920 + $0x1c] sm:$0xf]
        %v3937 = vunpack.c.l.b16 %v3921
        %v3938 = vunpack.c.l.b16 %v3922
        %v3939 = vunpack.c.l.b16 %v3923
        %v3940 = vunpack.c.l.b16 %v3924
        %v3941 = vunpack.c.l.b16 %v3925
        %v3942 = vunpack.c.l.b16 %v3926
        %v3943 = vunpack.c.l.b16 %v3927
        %v3944 = vunpack.c.l.b16 %v3928
        %v3945 = vpack.c.b16 %v3938, %v3937
        %v3946 = vpack.c.b16 %v3940, %v3939
        %v3947 = vpack.c.b16 %v3942, %v3941
        %v3948 = vpack.c.b16 %v3944, %v3943
        %v3954 = vsel %vm2249, %v3916, 0
        %v3957 = vsel %vm2249, %v3917, 0
        %v3960 = vsel %vm2249, %v3918, 0
        %v3963 = vsel %vm2249, %v3919, 0
        %3965 = vmatprep.subr.bf16.mxu0 0
        %3966 = vmatpush1.bf16.msra.mxu0 %v3945
        %3967 = vmatprep.subr.bf16.mxu0 0
        %3968 = vmatpush1.bf16.msra.mxu0 %v3946
        %3969 = vmatprep.subr.bf16.mxu0 0
        %3970 = vmatpush1.bf16.msra.mxu0 %v3947
        %3971 = vmatprep.subr.bf16.mxu0 0
        %3972 = vmatpush1.bf16.msra.mxu0 %v3948
        %3973 = vmatprep.subr.bf16.mxu0 0
        %3974 = vmatpush1.bf16.msra.mxu0 0
        %3975 = vmatprep.subr.bf16.mxu0 0
        %3976 = vmatpush1.bf16.msra.mxu0 0
        %3977 = vmatprep.subr.bf16.mxu0 0
        %3978 = vmatpush1.bf16.msra.mxu0 0
        %3979 = vmatprep.subr.bf16.mxu0 0
        %3980 = vmatpush1.bf16.msra.mxu0 0
        %3981 = vmatprep.subr.bf16.mxu0 0
        %3982 = vmatpush1.bf16.msra.mxu0 0
        %3983 = vmatprep.subr.bf16.mxu0 0
        %3984 = vmatpush1.bf16.msra.mxu0 0
        %3985 = vmatprep.subr.bf16.mxu0 0
        %3986 = vmatpush1.bf16.msra.mxu0 0
        %3987 = vmatprep.subr.bf16.mxu0 0
        %3988 = vmatpush1.bf16.msra.mxu0 0
        %3989 = vmatprep.subr.bf16.mxu0 0
        %3990 = vmatpush1.bf16.msra.mxu0 0
        %3991 = vmatprep.subr.bf16.mxu0 0
        %3992 = vmatpush1.bf16.msra.mxu0 0
        %3993 = vmatprep.subr.bf16.mxu0 0
        %3994 = vmatpush1.bf16.msra.mxu0 0
        %3995 = vmatprep.subr.bf16.mxu0 0
        %3996 = vmatpush1.bf16.msra.mxu0 0
        %3997 = vmatprep.mubr.bf16.mxu0 0
        %3998 = vmatmul.mubr.bf16.gmra.mrb[0].mxu0 %v3954
        %v3999 = vpop.f32.mrb[0].mxu0
        %v4000 = vadd.f32 0.0, %v3999
        %v4001 = vpop.f32.mrb[0].mxu0
        %v4002 = vpop.f32.mrb[0].mxu0
        %v4003 = vadd.f32 0.0, %v4002
        %v4004 = vpop.f32.mrb[0].mxu0
        %4005 = vmatprep.mubr.bf16.mxu0 0
        %4006 = vmatmul.mubr.bf16.gmra.mrb[0].mxu0 %v3957
        %v4007 = vpop.f32.mrb[0].mxu0
        %v4008 = vadd.f32 0.0, %v4007
        %v4009 = vpop.f32.mrb[0].mxu0
        %v4010 = vpop.f32.mrb[0].mxu0
        %v4011 = vadd.f32 0.0, %v4010
        %v4012 = vpop.f32.mrb[0].mxu0
        %4013 = vmatprep.mubr.bf16.mxu0 0
        %4014 = vmatmul.mubr.bf16.gmra.mrb[0].mxu0 %v3960
        %v4015 = vpop.f32.mrb[0].mxu0
        %v4016 = vadd.f32 0.0, %v4015
        %v4017 = vpop.f32.mrb[0].mxu0
        %v4018 = vpop.f32.mrb[0].mxu0
        %v4019 = vadd.f32 0.0, %v4018
        %v4020 = vpop.f32.mrb[0].mxu0
        %4021 = vmatprep.mubr.bf16.mxu0 0
        %4022 = vmatmul.mubr.bf16.gmra.mrb[0].mxu0 %v3963
        %v4023 = vpop.f32.mrb[0].mxu0
        %v4024 = vadd.f32 0.0, %v4023
        %v4025 = vpop.f32.mrb[0].mxu0
        %v4026 = vpop.f32.mrb[0].mxu0
        %v4027 = vadd.f32 0.0, %v4026
        %v4028 = vpop.f32.mrb[0].mxu0
        %4029 = vdwg.mxu0
        %v4030 = vadd.f32 %v3900, %v4000
        %v4031 = vadd.f32 %v3901, %v4003
        %v4032 = vadd.f32 %v3902, %v4008
        %v4033 = vadd.f32 %v3903, %v4011
        %v4034 = vadd.f32 %v3904, %v4016
        %v4035 = vadd.f32 %v3905, %v4019
        %v4036 = vadd.f32 %v3906, %v4024
        %v4037 = vadd.f32 %v3907, %v4027
        %v4038 = vld [vmem:[%s3517 + $0xa] sm:$0xff]
        %v4039 = vld [vmem:[%s3517 + $0x22] sm:$0xff]
        %v4040 = vld [vmem:[%s3517 + $0x3a] sm:$0xff]
        %v4041 = vld [vmem:[%s3517 + $0x52] sm:$0xff]
        %v4042 = vld [vmem:[%s3517 + $0x6a] sm:$0xff]
        %v4043 = vld [vmem:[%s3517 + $0x82] sm:$0xff]
        %v4044 = vld [vmem:[%s3517 + $0x9a] sm:$0xff]
        %v4045 = vld [vmem:[%s3517 + $0xb2] sm:$0xff]
        %v4046 = vpack.c.bf16 %v4039, %v4038
        %v4047 = vpack.c.bf16 %v4041, %v4040
        %v4048 = vpack.c.bf16 %v4043, %v4042
        %v4049 = vpack.c.bf16 %v4045, %v4044
        %s4050 = scalar_lea.vmem %s4, 288
        %v4051 = vld [vmem:[%s4050] sm:$0xf]
        %v4052 = vld [vmem:[%s4050 + $0x4] sm:$0xf]
        %v4053 = vld [vmem:[%s4050 + $0x8] sm:$0xf]
        %v4054 = vld [vmem:[%s4050 + $0xc] sm:$0xf]
        %v4055 = vld [vmem:[%s4050 + $0x10] sm:$0xf]
        %v4056 = vld [vmem:[%s4050 + $0x14] sm:$0xf]
        %v4057 = vld [vmem:[%s4050 + $0x18] sm:$0xf]
        %v4058 = vld [vmem:[%s4050 + $0x1c] sm:$0xf]
        %v4067 = vunpack.c.l.b16 %v4051
        %v4068 = vunpack.c.l.b16 %v4052
        %v4069 = vunpack.c.l.b16 %v4053
        %v4070 = vunpack.c.l.b16 %v4054
        %v4071 = vunpack.c.l.b16 %v4055
        %v4072 = vunpack.c.l.b16 %v4056
        %v4073 = vunpack.c.l.b16 %v4057
        %v4074 = vunpack.c.l.b16 %v4058
        %v4075 = vpack.c.b16 %v4068, %v4067
        %v4076 = vpack.c.b16 %v4070, %v4069
        %v4077 = vpack.c.b16 %v4072, %v4071
        %v4078 = vpack.c.b16 %v4074, %v4073
        %v4084 = vsel %vm2249, %v4046, 0
        %v4087 = vsel %vm2249, %v4047, 0
        %v4090 = vsel %vm2249, %v4048, 0
        %v4093 = vsel %vm2249, %v4049, 0
        %4095 = vmatprep.subr.bf16.mxu0 0
        %4096 = vmatpush1.bf16.msra.mxu0 %v4075
        %4097 = vmatprep.subr.bf16.mxu0 0
        %4098 = vmatpush1.bf16.msra.mxu0 %v4076
        %4099 = vmatprep.subr.bf16.mxu0 0
        %4100 = vmatpush1.bf16.msra.mxu0 %v4077
        %4101 = vmatprep.subr.bf16.mxu0 0
        %4102 = vmatpush1.bf16.msra.mxu0 %v4078
        %4103 = vmatprep.subr.bf16.mxu0 0
        %4104 = vmatpush1.bf16.msra.mxu0 0
        %4105 = vmatprep.subr.bf16.mxu0 0
        %4106 = vmatpush1.bf16.msra.mxu0 0
        %4107 = vmatprep.subr.bf16.mxu0 0
        %4108 = vmatpush1.bf16.msra.mxu0 0
        %4109 = vmatprep.subr.bf16.mxu0 0
        %4110 = vmatpush1.bf16.msra.mxu0 0
        %4111 = vmatprep.subr.bf16.mxu0 0
        %4112 = vmatpush1.bf16.msra.mxu0 0
        %4113 = vmatprep.subr.bf16.mxu0 0
        %4114 = vmatpush1.bf16.msra.mxu0 0
        %4115 = vmatprep.subr.bf16.mxu0 0
        %4116 = vmatpush1.bf16.msra.mxu0 0
        %4117 = vmatprep.subr.bf16.mxu0 0
        %4118 = vmatpush1.bf16.msra.mxu0 0
        %4119 = vmatprep.subr.bf16.mxu0 0
        %4120 = vmatpush1.bf16.msra.mxu0 0
        %4121 = vmatprep.subr.bf16.mxu0 0
        %4122 = vmatpush1.bf16.msra.mxu0 0
        %4123 = vmatprep.subr.bf16.mxu0 0
        %4124 = vmatpush1.bf16.msra.mxu0 0
        %4125 = vmatprep.subr.bf16.mxu0 0
        %4126 = vmatpush1.bf16.msra.mxu0 0
        %4127 = vmatprep.mubr.bf16.mxu0 0
        %4128 = vmatmul.mubr.bf16.gmra.mrb[0].mxu0 %v4084
        %v4129 = vpop.f32.mrb[0].mxu0
        %v4130 = vadd.f32 0.0, %v4129
        %v4131 = vpop.f32.mrb[0].mxu0
        %v4132 = vpop.f32.mrb[0].mxu0
        %v4133 = vadd.f32 0.0, %v4132
        %v4134 = vpop.f32.mrb[0].mxu0
        %4135 = vmatprep.mubr.bf16.mxu0 0
        %4136 = vmatmul.mubr.bf16.gmra.mrb[0].mxu0 %v4087
        %v4137 = vpop.f32.mrb[0].mxu0
        %v4138 = vadd.f32 0.0, %v4137
        %v4139 = vpop.f32.mrb[0].mxu0
        %v4140 = vpop.f32.mrb[0].mxu0
        %v4141 = vadd.f32 0.0, %v4140
        %v4142 = vpop.f32.mrb[0].mxu0
        %4143 = vmatprep.mubr.bf16.mxu0 0
        %4144 = vmatmul.mubr.bf16.gmra.mrb[0].mxu0 %v4090
        %v4145 = vpop.f32.mrb[0].mxu0
        %v4146 = vadd.f32 0.0, %v4145
        %v4147 = vpop.f32.mrb[0].mxu0
        %v4148 = vpop.f32.mrb[0].mxu0
        %v4149 = vadd.f32 0.0, %v4148
        %v4150 = vpop.f32.mrb[0].mxu0
        %4151 = vmatprep.mubr.bf16.mxu0 0
        %4152 = vmatmul.mubr.bf16.gmra.mrb[0].mxu0 %v4093
        %v4153 = vpop.f32.mrb[0].mxu0
        %v4154 = vadd.f32 0.0, %v4153
        %v4155 = vpop.f32.mrb[0].mxu0
        %v4156 = vpop.f32.mrb[0].mxu0
        %v4157 = vadd.f32 0.0, %v4156
        %v4158 = vpop.f32.mrb[0].mxu0
        %4159 = vdwg.mxu0
        %v4160 = vadd.f32 %v4030, %v4130
        %v4161 = vadd.f32 %v4031, %v4133
        %v4162 = vadd.f32 %v4032, %v4138
        %v4163 = vadd.f32 %v4033, %v4141
        %v4164 = vadd.f32 %v4034, %v4146
        %v4165 = vadd.f32 %v4035, %v4149
        %v4166 = vadd.f32 %v4036, %v4154
        %v4167 = vadd.f32 %v4037, %v4157
        %v4168 = vld [vmem:[%s2875 + $0x6] sm:$0xff]
        %v4169 = vld [vmem:[%s2875 + $0x1e] sm:$0xff]
        %v4170 = vld [vmem:[%s2875 + $0x36] sm:$0xff]
        %v4171 = vld [vmem:[%s2875 + $0x4e] sm:$0xff]
        %v4172 = vld [vmem:[%s2875 + $0x66] sm:$0xff]
        %v4173 = vld [vmem:[%s2875 + $0x7e] sm:$0xff]
        %v4174 = vld [vmem:[%s2875 + $0x96] sm:$0xff]
        %v4175 = vld [vmem:[%s2875 + $0xae] sm:$0xff]
        %v4176 = vpack.c.bf16 %v4169, %v4168
        %v4177 = vpack.c.bf16 %v4171, %v4170
        %v4178 = vpack.c.bf16 %v4173, %v4172
        %v4179 = vpack.c.bf16 %v4175, %v4174
        %s4180 = scalar_lea.vmem %s4, 320
        %v4181 = vld [vmem:[%s4180] sm:$0xf]
        %v4182 = vld [vmem:[%s4180 + $0x4] sm:$0xf]
        %v4183 = vld [vmem:[%s4180 + $0x8] sm:$0xf]
        %v4184 = vld [vmem:[%s4180 + $0xc] sm:$0xf]
        %v4185 = vld [vmem:[%s4180 + $0x10] sm:$0xf]
        %v4186 = vld [vmem:[%s4180 + $0x14] sm:$0xf]
        %v4187 = vld [vmem:[%s4180 + $0x18] sm:$0xf]
        %v4188 = vld [vmem:[%s4180 + $0x1c] sm:$0xf]
        %v4197 = vunpack.c.l.b16 %v4181
        %v4198 = vunpack.c.l.b16 %v4182
        %v4199 = vunpack.c.l.b16 %v4183
        %v4200 = vunpack.c.l.b16 %v4184
        %v4201 = vunpack.c.l.b16 %v4185
        %v4202 = vunpack.c.l.b16 %v4186
        %v4203 = vunpack.c.l.b16 %v4187
        %v4204 = vunpack.c.l.b16 %v4188
        %v4205 = vpack.c.b16 %v4198, %v4197
        %v4206 = vpack.c.b16 %v4200, %v4199
        %v4207 = vpack.c.b16 %v4202, %v4201
        %v4208 = vpack.c.b16 %v4204, %v4203
        %v4214 = vsel %vm2249, %v4176, 0
        %v4217 = vsel %vm2249, %v4177, 0
        %v4220 = vsel %vm2249, %v4178, 0
        %v4223 = vsel %vm2249, %v4179, 0
        %4225 = vmatprep.subr.bf16.mxu0 0
        %4226 = vmatpush1.bf16.msra.mxu0 %v4205
        %4227 = vmatprep.subr.bf16.mxu0 0
        %4228 = vmatpush1.bf16.msra.mxu0 %v4206
        %4229 = vmatprep.subr.bf16.mxu0 0
        %4230 = vmatpush1.bf16.msra.mxu0 %v4207
        %4231 = vmatprep.subr.bf16.mxu0 0
        %4232 = vmatpush1.bf16.msra.mxu0 %v4208
        %4233 = vmatprep.subr.bf16.mxu0 0
        %4234 = vmatpush1.bf16.msra.mxu0 0
        %4235 = vmatprep.subr.bf16.mxu0 0
        %4236 = vmatpush1.bf16.msra.mxu0 0
        %4237 = vmatprep.subr.bf16.mxu0 0
        %4238 = vmatpush1.bf16.msra.mxu0 0
        %4239 = vmatprep.subr.bf16.mxu0 0
        %4240 = vmatpush1.bf16.msra.mxu0 0
        %4241 = vmatprep.subr.bf16.mxu0 0
        %4242 = vmatpush1.bf16.msra.mxu0 0
        %4243 = vmatprep.subr.bf16.mxu0 0
        %4244 = vmatpush1.bf16.msra.mxu0 0
        %4245 = vmatprep.subr.bf16.mxu0 0
        %4246 = vmatpush1.bf16.msra.mxu0 0
        %4247 = vmatprep.subr.bf16.mxu0 0
        %4248 = vmatpush1.bf16.msra.mxu0 0
        %4249 = vmatprep.subr.bf16.mxu0 0
        %4250 = vmatpush1.bf16.msra.mxu0 0
        %4251 = vmatprep.subr.bf16.mxu0 0
        %4252 = vmatpush1.bf16.msra.mxu0 0
        %4253 = vmatprep.subr.bf16.mxu0 0
        %4254 = vmatpush1.bf16.msra.mxu0 0
        %4255 = vmatprep.subr.bf16.mxu0 0
        %4256 = vmatpush1.bf16.msra.mxu0 0
        %4257 = vmatprep.mubr.bf16.mxu0 0
        %4258 = vmatmul.mubr.bf16.gmra.mrb[0].mxu0 %v4214
        %v4259 = vpop.f32.mrb[0].mxu0
        %v4260 = vadd.f32 0.0, %v4259
        %v4261 = vpop.f32.mrb[0].mxu0
        %v4262 = vpop.f32.mrb[0].mxu0
        %v4263 = vadd.f32 0.0, %v4262
        %v4264 = vpop.f32.mrb[0].mxu0
        %4265 = vmatprep.mubr.bf16.mxu0 0
        %4266 = vmatmul.mubr.bf16.gmra.mrb[0].mxu0 %v4217
        %v4267 = vpop.f32.mrb[0].mxu0
        %v4268 = vadd.f32 0.0, %v4267
        %v4269 = vpop.f32.mrb[0].mxu0
        %v4270 = vpop.f32.mrb[0].mxu0
        %v4271 = vadd.f32 0.0, %v4270
        %v4272 = vpop.f32.mrb[0].mxu0
        %4273 = vmatprep.mubr.bf16.mxu0 0
        %4274 = vmatmul.mubr.bf16.gmra.mrb[0].mxu0 %v4220
        %v4275 = vpop.f32.mrb[0].mxu0
        %v4276 = vadd.f32 0.0, %v4275
        %v4277 = vpop.f32.mrb[0].mxu0
        %v4278 = vpop.f32.mrb[0].mxu0
        %v4279 = vadd.f32 0.0, %v4278
        %v4280 = vpop.f32.mrb[0].mxu0
        %4281 = vmatprep.mubr.bf16.mxu0 0
        %4282 = vmatmul.mubr.bf16.gmra.mrb[0].mxu0 %v4223
        %v4283 = vpop.f32.mrb[0].mxu0
        %v4284 = vadd.f32 0.0, %v4283
        %v4285 = vpop.f32.mrb[0].mxu0
        %v4286 = vpop.f32.mrb[0].mxu0
        %v4287 = vadd.f32 0.0, %v4286
        %v4288 = vpop.f32.mrb[0].mxu0
        %4289 = vdwg.mxu0
        %v4290 = vadd.f32 %v4160, %v4260
        %v4291 = vadd.f32 %v4161, %v4263
        %v4292 = vadd.f32 %v4162, %v4268
        %v4293 = vadd.f32 %v4163, %v4271
        %v4294 = vadd.f32 %v4164, %v4276
        %v4295 = vadd.f32 %v4165, %v4279
        %v4296 = vadd.f32 %v4166, %v4284
        %v4297 = vadd.f32 %v4167, %v4287
        %v4298 = vld [vmem:[%s2875 + $0x7] sm:$0xff]
        %v4299 = vld [vmem:[%s2875 + $0x1f] sm:$0xff]
        %v4300 = vld [vmem:[%s2875 + $0x37] sm:$0xff]
        %v4301 = vld [vmem:[%s2875 + $0x4f] sm:$0xff]
        %v4302 = vld [vmem:[%s2875 + $0x67] sm:$0xff]
        %v4303 = vld [vmem:[%s2875 + $0x7f] sm:$0xff]
        %v4304 = vld [vmem:[%s2875 + $0x97] sm:$0xff]
        %v4305 = vld [vmem:[%s2875 + $0xaf] sm:$0xff]
        %v4306 = vpack.c.bf16 %v4299, %v4298
        %v4307 = vpack.c.bf16 %v4301, %v4300
        %v4308 = vpack.c.bf16 %v4303, %v4302
        %v4309 = vpack.c.bf16 %v4305, %v4304
        %s4310 = scalar_lea.vmem %s4, 352
        %v4311 = vld [vmem:[%s4310] sm:$0xf]
        %v4312 = vld [vmem:[%s4310 + $0x4] sm:$0xf]
        %v4313 = vld [vmem:[%s4310 + $0x8] sm:$0xf]
        %v4314 = vld [vmem:[%s4310 + $0xc] sm:$0xf]
        %v4315 = vld [vmem:[%s4310 + $0x10] sm:$0xf]
        %v4316 = vld [vmem:[%s4310 + $0x14] sm:$0xf]
        %v4317 = vld [vmem:[%s4310 + $0x18] sm:$0xf]
        %v4318 = vld [vmem:[%s4310 + $0x1c] sm:$0xf]
        %v4327 = vunpack.c.l.b16 %v4311
        %v4328 = vunpack.c.l.b16 %v4312
        %v4329 = vunpack.c.l.b16 %v4313
        %v4330 = vunpack.c.l.b16 %v4314
        %v4331 = vunpack.c.l.b16 %v4315
        %v4332 = vunpack.c.l.b16 %v4316
        %v4333 = vunpack.c.l.b16 %v4317
        %v4334 = vunpack.c.l.b16 %v4318
        %v4335 = vpack.c.b16 %v4328, %v4327
        %v4336 = vpack.c.b16 %v4330, %v4329
        %v4337 = vpack.c.b16 %v4332, %v4331
        %v4338 = vpack.c.b16 %v4334, %v4333
        %v4344 = vsel %vm2249, %v4306, 0
        %v4347 = vsel %vm2249, %v4307, 0
        %v4350 = vsel %vm2249, %v4308, 0
        %v4353 = vsel %vm2249, %v4309, 0
        %4355 = vmatprep.subr.bf16.mxu0 0
        %4356 = vmatpush1.bf16.msra.mxu0 %v4335
        %4357 = vmatprep.subr.bf16.mxu0 0
        %4358 = vmatpush1.bf16.msra.mxu0 %v4336
        %4359 = vmatprep.subr.bf16.mxu0 0
        %4360 = vmatpush1.bf16.msra.mxu0 %v4337
        %4361 = vmatprep.subr.bf16.mxu0 0
        %4362 = vmatpush1.bf16.msra.mxu0 %v4338
        %4363 = vmatprep.subr.bf16.mxu0 0
        %4364 = vmatpush1.bf16.msra.mxu0 0
        %4365 = vmatprep.subr.bf16.mxu0 0
        %4366 = vmatpush1.bf16.msra.mxu0 0
        %4367 = vmatprep.subr.bf16.mxu0 0
        %4368 = vmatpush1.bf16.msra.mxu0 0
        %4369 = vmatprep.subr.bf16.mxu0 0
        %4370 = vmatpush1.bf16.msra.mxu0 0
        %4371 = vmatprep.subr.bf16.mxu0 0
        %4372 = vmatpush1.bf16.msra.mxu0 0
        %4373 = vmatprep.subr.bf16.mxu0 0
        %4374 = vmatpush1.bf16.msra.mxu0 0
        %4375 = vmatprep.subr.bf16.mxu0 0
        %4376 = vmatpush1.bf16.msra.mxu0 0
        %4377 = vmatprep.subr.bf16.mxu0 0
        %4378 = vmatpush1.bf16.msra.mxu0 0
        %4379 = vmatprep.subr.bf16.mxu0 0
        %4380 = vmatpush1.bf16.msra.mxu0 0
        %4381 = vmatprep.subr.bf16.mxu0 0
        %4382 = vmatpush1.bf16.msra.mxu0 0
        %4383 = vmatprep.subr.bf16.mxu0 0
        %4384 = vmatpush1.bf16.msra.mxu0 0
        %4385 = vmatprep.subr.bf16.mxu0 0
        %4386 = vmatpush1.bf16.msra.mxu0 0
        %4387 = vmatprep.mubr.bf16.mxu0 0
        %4388 = vmatmul.mubr.bf16.gmra.mrb[0].mxu0 %v4344
        %v4389 = vpop.f32.mrb[0].mxu0
        %v4390 = vadd.f32 0.0, %v4389
        %v4391 = vpop.f32.mrb[0].mxu0
        %v4392 = vpop.f32.mrb[0].mxu0
        %v4393 = vadd.f32 0.0, %v4392
        %v4394 = vpop.f32.mrb[0].mxu0
        %4395 = vmatprep.mubr.bf16.mxu0 0
        %4396 = vmatmul.mubr.bf16.gmra.mrb[0].mxu0 %v4347
        %v4397 = vpop.f32.mrb[0].mxu0
        %v4398 = vadd.f32 0.0, %v4397
        %v4399 = vpop.f32.mrb[0].mxu0
        %v4400 = vpop.f32.mrb[0].mxu0
        %v4401 = vadd.f32 0.0, %v4400
        %v4402 = vpop.f32.mrb[0].mxu0
        %4403 = vmatprep.mubr.bf16.mxu0 0
        %4404 = vmatmul.mubr.bf16.gmra.mrb[0].mxu0 %v4350
        %v4405 = vpop.f32.mrb[0].mxu0
        %v4406 = vadd.f32 0.0, %v4405
        %v4407 = vpop.f32.mrb[0].mxu0
        %v4408 = vpop.f32.mrb[0].mxu0
        %v4409 = vadd.f32 0.0, %v4408
        %v4410 = vpop.f32.mrb[0].mxu0
        %4411 = vmatprep.mubr.bf16.mxu0 0
        %4412 = vmatmul.mubr.bf16.gmra.mrb[0].mxu0 %v4353
        %v4413 = vpop.f32.mrb[0].mxu0
        %v4414 = vadd.f32 0.0, %v4413
        %v4415 = vpop.f32.mrb[0].mxu0
        %v4416 = vpop.f32.mrb[0].mxu0
        %v4417 = vadd.f32 0.0, %v4416
        %v4418 = vpop.f32.mrb[0].mxu0
        %4419 = vdwg.mxu0
        %v4420 = vadd.f32 %v4290, %v4390
        %v4421 = vadd.f32 %v4291, %v4393
        %v4422 = vadd.f32 %v4292, %v4398
        %v4423 = vadd.f32 %v4293, %v4401
        %v4424 = vadd.f32 %v4294, %v4406
        %v4425 = vadd.f32 %v4295, %v4409
        %v4426 = vadd.f32 %v4296, %v4414
        %v4427 = vadd.f32 %v4297, %v4417
        %v4428 = vld [vmem:[%s2875 + $0x8] sm:$0xff]
        %v4429 = vld [vmem:[%s2875 + $0x20] sm:$0xff]
        %v4430 = vld [vmem:[%s2875 + $0x38] sm:$0xff]
        %v4431 = vld [vmem:[%s2875 + $0x50] sm:$0xff]
        %v4432 = vld [vmem:[%s2875 + $0x68] sm:$0xff]
        %v4433 = vld [vmem:[%s2875 + $0x80] sm:$0xff]
        %v4434 = vld [vmem:[%s2875 + $0x98] sm:$0xff]
        %v4435 = vld [vmem:[%s2875 + $0xb0] sm:$0xff]
        %v4436 = vpack.c.bf16 %v4429, %v4428
        %v4437 = vpack.c.bf16 %v4431, %v4430
        %v4438 = vpack.c.bf16 %v4433, %v4432
        %v4439 = vpack.c.bf16 %v4435, %v4434
        %s4440 = scalar_lea.vmem %s4, 384
        %v4441 = vld [vmem:[%s4440] sm:$0xf]
        %v4442 = vld [vmem:[%s4440 + $0x4] sm:$0xf]
        %v4443 = vld [vmem:[%s4440 + $0x8] sm:$0xf]
        %v4444 = vld [vmem:[%s4440 + $0xc] sm:$0xf]
        %v4445 = vld [vmem:[%s4440 + $0x10] sm:$0xf]
        %v4446 = vld [vmem:[%s4440 + $0x14] sm:$0xf]
        %v4447 = vld [vmem:[%s4440 + $0x18] sm:$0xf]
        %v4448 = vld [vmem:[%s4440 + $0x1c] sm:$0xf]
        %v4457 = vunpack.c.l.b16 %v4441
        %v4458 = vunpack.c.l.b16 %v4442
        %v4459 = vunpack.c.l.b16 %v4443
        %v4460 = vunpack.c.l.b16 %v4444
        %v4461 = vunpack.c.l.b16 %v4445
        %v4462 = vunpack.c.l.b16 %v4446
        %v4463 = vunpack.c.l.b16 %v4447
        %v4464 = vunpack.c.l.b16 %v4448
        %v4465 = vpack.c.b16 %v4458, %v4457
        %v4466 = vpack.c.b16 %v4460, %v4459
        %v4467 = vpack.c.b16 %v4462, %v4461
        %v4468 = vpack.c.b16 %v4464, %v4463
        %v4474 = vsel %vm2249, %v4436, 0
        %v4477 = vsel %vm2249, %v4437, 0
        %v4480 = vsel %vm2249, %v4438, 0
        %v4483 = vsel %vm2249, %v4439, 0
        %4485 = vmatprep.subr.bf16.mxu0 0
        %4486 = vmatpush1.bf16.msra.mxu0 %v4465
        %4487 = vmatprep.subr.bf16.mxu0 0
        %4488 = vmatpush1.bf16.msra.mxu0 %v4466
        %4489 = vmatprep.subr.bf16.mxu0 0
        %4490 = vmatpush1.bf16.msra.mxu0 %v4467
        %4491 = vmatprep.subr.bf16.mxu0 0
        %4492 = vmatpush1.bf16.msra.mxu0 %v4468
        %4493 = vmatprep.subr.bf16.mxu0 0
        %4494 = vmatpush1.bf16.msra.mxu0 0
        %4495 = vmatprep.subr.bf16.mxu0 0
        %4496 = vmatpush1.bf16.msra.mxu0 0
        %4497 = vmatprep.subr.bf16.mxu0 0
        %4498 = vmatpush1.bf16.msra.mxu0 0
        %4499 = vmatprep.subr.bf16.mxu0 0
        %4500 = vmatpush1.bf16.msra.mxu0 0
        %4501 = vmatprep.subr.bf16.mxu0 0
        %4502 = vmatpush1.bf16.msra.mxu0 0
        %4503 = vmatprep.subr.bf16.mxu0 0
        %4504 = vmatpush1.bf16.msra.mxu0 0
        %4505 = vmatprep.subr.bf16.mxu0 0
        %4506 = vmatpush1.bf16.msra.mxu0 0
        %4507 = vmatprep.subr.bf16.mxu0 0
        %4508 = vmatpush1.bf16.msra.mxu0 0
        %4509 = vmatprep.subr.bf16.mxu0 0
        %4510 = vmatpush1.bf16.msra.mxu0 0
        %4511 = vmatprep.subr.bf16.mxu0 0
        %4512 = vmatpush1.bf16.msra.mxu0 0
        %4513 = vmatprep.subr.bf16.mxu0 0
        %4514 = vmatpush1.bf16.msra.mxu0 0
        %4515 = vmatprep.subr.bf16.mxu0 0
        %4516 = vmatpush1.bf16.msra.mxu0 0
        %4517 = vmatprep.mubr.bf16.mxu0 0
        %4518 = vmatmul.mubr.bf16.gmra.mrb[0].mxu0 %v4474
        %v4519 = vpop.f32.mrb[0].mxu0
        %v4520 = vadd.f32 0.0, %v4519
        %v4521 = vpop.f32.mrb[0].mxu0
        %v4522 = vpop.f32.mrb[0].mxu0
        %v4523 = vadd.f32 0.0, %v4522
        %v4524 = vpop.f32.mrb[0].mxu0
        %4525 = vmatprep.mubr.bf16.mxu0 0
        %4526 = vmatmul.mubr.bf16.gmra.mrb[0].mxu0 %v4477
        %v4527 = vpop.f32.mrb[0].mxu0
        %v4528 = vadd.f32 0.0, %v4527
        %v4529 = vpop.f32.mrb[0].mxu0
        %v4530 = vpop.f32.mrb[0].mxu0
        %v4531 = vadd.f32 0.0, %v4530
        %v4532 = vpop.f32.mrb[0].mxu0
        %4533 = vmatprep.mubr.bf16.mxu0 0
        %4534 = vmatmul.mubr.bf16.gmra.mrb[0].mxu0 %v4480
        %v4535 = vpop.f32.mrb[0].mxu0
        %v4536 = vadd.f32 0.0, %v4535
        %v4537 = vpop.f32.mrb[0].mxu0
        %v4538 = vpop.f32.mrb[0].mxu0
        %v4539 = vadd.f32 0.0, %v4538
        %v4540 = vpop.f32.mrb[0].mxu0
        %4541 = vmatprep.mubr.bf16.mxu0 0
        %4542 = vmatmul.mubr.bf16.gmra.mrb[0].mxu0 %v4483
        %v4543 = vpop.f32.mrb[0].mxu0
        %v4544 = vadd.f32 0.0, %v4543
        %v4545 = vpop.f32.mrb[0].mxu0
        %v4546 = vpop.f32.mrb[0].mxu0
        %v4547 = vadd.f32 0.0, %v4546
        %v4548 = vpop.f32.mrb[0].mxu0
        %4549 = vdwg.mxu0
        %v4550 = vadd.f32 %v4420, %v4520
        %v4551 = vadd.f32 %v4421, %v4523
        %v4552 = vadd.f32 %v4422, %v4528
        %v4553 = vadd.f32 %v4423, %v4531
        %v4554 = vadd.f32 %v4424, %v4536
        %v4555 = vadd.f32 %v4425, %v4539
        %v4556 = vadd.f32 %v4426, %v4544
        %v4557 = vadd.f32 %v4427, %v4547
        %v4558 = vld [vmem:[%s2875 + $0x9] sm:$0xff]
        %v4559 = vld [vmem:[%s2875 + $0x21] sm:$0xff]
        %v4560 = vld [vmem:[%s2875 + $0x39] sm:$0xff]
        %v4561 = vld [vmem:[%s2875 + $0x51] sm:$0xff]
        %v4562 = vld [vmem:[%s2875 + $0x69] sm:$0xff]
        %v4563 = vld [vmem:[%s2875 + $0x81] sm:$0xff]
        %v4564 = vld [vmem:[%s2875 + $0x99] sm:$0xff]
        %v4565 = vld [vmem:[%s2875 + $0xb1] sm:$0xff]
        %v4566 = vpack.c.bf16 %v4559, %v4558
        %v4567 = vpack.c.bf16 %v4561, %v4560
        %v4568 = vpack.c.bf16 %v4563, %v4562
        %v4569 = vpack.c.bf16 %v4565, %v4564
        %s4570 = scalar_lea.vmem %s4, 416
        %v4571 = vld [vmem:[%s4570] sm:$0xf]
        %v4572 = vld [vmem:[%s4570 + $0x4] sm:$0xf]
        %v4573 = vld [vmem:[%s4570 + $0x8] sm:$0xf]
        %v4574 = vld [vmem:[%s4570 + $0xc] sm:$0xf]
        %v4575 = vld [vmem:[%s4570 + $0x10] sm:$0xf]
        %v4576 = vld [vmem:[%s4570 + $0x14] sm:$0xf]
        %v4577 = vld [vmem:[%s4570 + $0x18] sm:$0xf]
        %v4578 = vld [vmem:[%s4570 + $0x1c] sm:$0xf]
        %v4587 = vunpack.c.l.b16 %v4571
        %v4588 = vunpack.c.l.b16 %v4572
        %v4589 = vunpack.c.l.b16 %v4573
        %v4590 = vunpack.c.l.b16 %v4574
        %v4591 = vunpack.c.l.b16 %v4575
        %v4592 = vunpack.c.l.b16 %v4576
        %v4593 = vunpack.c.l.b16 %v4577
        %v4594 = vunpack.c.l.b16 %v4578
        %v4595 = vpack.c.b16 %v4588, %v4587
        %v4596 = vpack.c.b16 %v4590, %v4589
        %v4597 = vpack.c.b16 %v4592, %v4591
        %v4598 = vpack.c.b16 %v4594, %v4593
        %v4604 = vsel %vm2249, %v4566, 0
        %v4607 = vsel %vm2249, %v4567, 0
        %v4610 = vsel %vm2249, %v4568, 0
        %v4613 = vsel %vm2249, %v4569, 0
        %4615 = vmatprep.subr.bf16.mxu0 0
        %4616 = vmatpush1.bf16.msra.mxu0 %v4595
        %4617 = vmatprep.subr.bf16.mxu0 0
        %4618 = vmatpush1.bf16.msra.mxu0 %v4596
        %4619 = vmatprep.subr.bf16.mxu0 0
        %4620 = vmatpush1.bf16.msra.mxu0 %v4597
        %4621 = vmatprep.subr.bf16.mxu0 0
        %4622 = vmatpush1.bf16.msra.mxu0 %v4598
        %4623 = vmatprep.subr.bf16.mxu0 0
        %4624 = vmatpush1.bf16.msra.mxu0 0
        %4625 = vmatprep.subr.bf16.mxu0 0
        %4626 = vmatpush1.bf16.msra.mxu0 0
        %4627 = vmatprep.subr.bf16.mxu0 0
        %4628 = vmatpush1.bf16.msra.mxu0 0
        %4629 = vmatprep.subr.bf16.mxu0 0
        %4630 = vmatpush1.bf16.msra.mxu0 0
        %4631 = vmatprep.subr.bf16.mxu0 0
        %4632 = vmatpush1.bf16.msra.mxu0 0
        %4633 = vmatprep.subr.bf16.mxu0 0
        %4634 = vmatpush1.bf16.msra.mxu0 0
        %4635 = vmatprep.subr.bf16.mxu0 0
        %4636 = vmatpush1.bf16.msra.mxu0 0
        %4637 = vmatprep.subr.bf16.mxu0 0
        %4638 = vmatpush1.bf16.msra.mxu0 0
        %4639 = vmatprep.subr.bf16.mxu0 0
        %4640 = vmatpush1.bf16.msra.mxu0 0
        %4641 = vmatprep.subr.bf16.mxu0 0
        %4642 = vmatpush1.bf16.msra.mxu0 0
        %4643 = vmatprep.subr.bf16.mxu0 0
        %4644 = vmatpush1.bf16.msra.mxu0 0
        %4645 = vmatprep.subr.bf16.mxu0 0
        %4646 = vmatpush1.bf16.msra.mxu0 0
        %4647 = vmatprep.mubr.bf16.mxu0 0
        %4648 = vmatmul.mubr.bf16.gmra.mrb[0].mxu0 %v4604
        %v4649 = vpop.f32.mrb[0].mxu0
        %v4650 = vadd.f32 0.0, %v4649
        %v4651 = vpop.f32.mrb[0].mxu0
        %v4652 = vpop.f32.mrb[0].mxu0
        %v4653 = vadd.f32 0.0, %v4652
        %v4654 = vpop.f32.mrb[0].mxu0
        %4655 = vmatprep.mubr.bf16.mxu0 0
        %4656 = vmatmul.mubr.bf16.gmra.mrb[0].mxu0 %v4607
        %v4657 = vpop.f32.mrb[0].mxu0
        %v4658 = vadd.f32 0.0, %v4657
        %v4659 = vpop.f32.mrb[0].mxu0
        %v4660 = vpop.f32.mrb[0].mxu0
        %v4661 = vadd.f32 0.0, %v4660
        %v4662 = vpop.f32.mrb[0].mxu0
        %4663 = vmatprep.mubr.bf16.mxu0 0
        %4664 = vmatmul.mubr.bf16.gmra.mrb[0].mxu0 %v4610
        %v4665 = vpop.f32.mrb[0].mxu0
        %v4666 = vadd.f32 0.0, %v4665
        %v4667 = vpop.f32.mrb[0].mxu0
        %v4668 = vpop.f32.mrb[0].mxu0
        %v4669 = vadd.f32 0.0, %v4668
        %v4670 = vpop.f32.mrb[0].mxu0
        %4671 = vmatprep.mubr.bf16.mxu0 0
        %4672 = vmatmul.mubr.bf16.gmra.mrb[0].mxu0 %v4613
        %v4673 = vpop.f32.mrb[0].mxu0
        %v4674 = vadd.f32 0.0, %v4673
        %v4675 = vpop.f32.mrb[0].mxu0
        %v4676 = vpop.f32.mrb[0].mxu0
        %v4677 = vadd.f32 0.0, %v4676
        %v4678 = vpop.f32.mrb[0].mxu0
        %4679 = vdwg.mxu0
        %v4680 = vadd.f32 %v4550, %v4650
        %v4681 = vadd.f32 %v4551, %v4653
        %v4682 = vadd.f32 %v4552, %v4658
        %v4683 = vadd.f32 %v4553, %v4661
        %v4684 = vadd.f32 %v4554, %v4666
        %v4685 = vadd.f32 %v4555, %v4669
        %v4686 = vadd.f32 %v4556, %v4674
        %v4687 = vadd.f32 %v4557, %v4677
        %v4688 = vld [vmem:[%s2875 + $0xa] sm:$0xff]
        %v4689 = vld [vmem:[%s2875 + $0x22] sm:$0xff]
        %v4690 = vld [vmem:[%s2875 + $0x3a] sm:$0xff]
        %v4691 = vld [vmem:[%s2875 + $0x52] sm:$0xff]
        %v4692 = vld [vmem:[%s2875 + $0x6a] sm:$0xff]
        %v4693 = vld [vmem:[%s2875 + $0x82] sm:$0xff]
        %v4694 = vld [vmem:[%s2875 + $0x9a] sm:$0xff]
        %v4695 = vld [vmem:[%s2875 + $0xb2] sm:$0xff]
        %v4696 = vpack.c.bf16 %v4689, %v4688
        %v4697 = vpack.c.bf16 %v4691, %v4690
        %v4698 = vpack.c.bf16 %v4693, %v4692
        %v4699 = vpack.c.bf16 %v4695, %v4694
        %s4700 = scalar_lea.vmem %s4, 448
        %v4701 = vld [vmem:[%s4700] sm:$0xf]
        %v4702 = vld [vmem:[%s4700 + $0x4] sm:$0xf]
        %v4703 = vld [vmem:[%s4700 + $0x8] sm:$0xf]
        %v4704 = vld [vmem:[%s4700 + $0xc] sm:$0xf]
        %v4705 = vld [vmem:[%s4700 + $0x10] sm:$0xf]
        %v4706 = vld [vmem:[%s4700 + $0x14] sm:$0xf]
        %v4707 = vld [vmem:[%s4700 + $0x18] sm:$0xf]
        %v4708 = vld [vmem:[%s4700 + $0x1c] sm:$0xf]
        %v4717 = vunpack.c.l.b16 %v4701
        %v4718 = vunpack.c.l.b16 %v4702
        %v4719 = vunpack.c.l.b16 %v4703
        %v4720 = vunpack.c.l.b16 %v4704
        %v4721 = vunpack.c.l.b16 %v4705
        %v4722 = vunpack.c.l.b16 %v4706
        %v4723 = vunpack.c.l.b16 %v4707
        %v4724 = vunpack.c.l.b16 %v4708
        %v4725 = vpack.c.b16 %v4718, %v4717
        %v4726 = vpack.c.b16 %v4720, %v4719
        %v4727 = vpack.c.b16 %v4722, %v4721
        %v4728 = vpack.c.b16 %v4724, %v4723
        %v4734 = vsel %vm2249, %v4696, 0
        %v4737 = vsel %vm2249, %v4697, 0
        %v4740 = vsel %vm2249, %v4698, 0
        %v4743 = vsel %vm2249, %v4699, 0
        %4745 = vmatprep.subr.bf16.mxu0 0
        %4746 = vmatpush1.bf16.msra.mxu0 %v4725
        %4747 = vmatprep.subr.bf16.mxu0 0
        %4748 = vmatpush1.bf16.msra.mxu0 %v4726
        %4749 = vmatprep.subr.bf16.mxu0 0
        %4750 = vmatpush1.bf16.msra.mxu0 %v4727
        %4751 = vmatprep.subr.bf16.mxu0 0
        %4752 = vmatpush1.bf16.msra.mxu0 %v4728
        %4753 = vmatprep.subr.bf16.mxu0 0
        %4754 = vmatpush1.bf16.msra.mxu0 0
        %4755 = vmatprep.subr.bf16.mxu0 0
        %4756 = vmatpush1.bf16.msra.mxu0 0
        %4757 = vmatprep.subr.bf16.mxu0 0
        %4758 = vmatpush1.bf16.msra.mxu0 0
        %4759 = vmatprep.subr.bf16.mxu0 0
        %4760 = vmatpush1.bf16.msra.mxu0 0
        %4761 = vmatprep.subr.bf16.mxu0 0
        %4762 = vmatpush1.bf16.msra.mxu0 0
        %4763 = vmatprep.subr.bf16.mxu0 0
        %4764 = vmatpush1.bf16.msra.mxu0 0
        %4765 = vmatprep.subr.bf16.mxu0 0
        %4766 = vmatpush1.bf16.msra.mxu0 0
        %4767 = vmatprep.subr.bf16.mxu0 0
        %4768 = vmatpush1.bf16.msra.mxu0 0
        %4769 = vmatprep.subr.bf16.mxu0 0
        %4770 = vmatpush1.bf16.msra.mxu0 0
        %4771 = vmatprep.subr.bf16.mxu0 0
        %4772 = vmatpush1.bf16.msra.mxu0 0
        %4773 = vmatprep.subr.bf16.mxu0 0
        %4774 = vmatpush1.bf16.msra.mxu0 0
        %4775 = vmatprep.subr.bf16.mxu0 0
        %4776 = vmatpush1.bf16.msra.mxu0 0
        %4777 = vmatprep.mubr.bf16.mxu0 0
        %4778 = vmatmul.mubr.bf16.gmra.mrb[0].mxu0 %v4734
        %v4779 = vpop.f32.mrb[0].mxu0
        %v4780 = vadd.f32 0.0, %v4779
        %v4781 = vpop.f32.mrb[0].mxu0
        %v4782 = vpop.f32.mrb[0].mxu0
        %v4783 = vadd.f32 0.0, %v4782
        %v4784 = vpop.f32.mrb[0].mxu0
        %4785 = vmatprep.mubr.bf16.mxu0 0
        %4786 = vmatmul.mubr.bf16.gmra.mrb[0].mxu0 %v4737
        %v4787 = vpop.f32.mrb[0].mxu0
        %v4788 = vadd.f32 0.0, %v4787
        %v4789 = vpop.f32.mrb[0].mxu0
        %v4790 = vpop.f32.mrb[0].mxu0
        %v4791 = vadd.f32 0.0, %v4790
        %v4792 = vpop.f32.mrb[0].mxu0
        %4793 = vmatprep.mubr.bf16.mxu0 0
        %4794 = vmatmul.mubr.bf16.gmra.mrb[0].mxu0 %v4740
        %v4795 = vpop.f32.mrb[0].mxu0
        %v4796 = vadd.f32 0.0, %v4795
        %v4797 = vpop.f32.mrb[0].mxu0
        %v4798 = vpop.f32.mrb[0].mxu0
        %v4799 = vadd.f32 0.0, %v4798
        %v4800 = vpop.f32.mrb[0].mxu0
        %4801 = vmatprep.mubr.bf16.mxu0 0
        %4802 = vmatmul.mubr.bf16.gmra.mrb[0].mxu0 %v4743
        %v4803 = vpop.f32.mrb[0].mxu0
        %v4804 = vadd.f32 0.0, %v4803
        %v4805 = vpop.f32.mrb[0].mxu0
        %v4806 = vpop.f32.mrb[0].mxu0
        %v4807 = vadd.f32 0.0, %v4806
        %v4808 = vpop.f32.mrb[0].mxu0
        %4809 = vdwg.mxu0
        %v4810 = vadd.f32 %v4680, %v4780
        %v4811 = vadd.f32 %v4681, %v4783
        %v4812 = vadd.f32 %v4682, %v4788
        %v4813 = vadd.f32 %v4683, %v4791
        %v4814 = vadd.f32 %v4684, %v4796
        %v4815 = vadd.f32 %v4685, %v4799
        %v4816 = vadd.f32 %v4686, %v4804
        %v4817 = vadd.f32 %v4687, %v4807
        %s4818 = scalar_lea.vmem [#allocation2], 72
        %v4819 = vld [vmem:[%s4818 + $0x6] sm:$0xff]
        %v4820 = vld [vmem:[%s4818 + $0x1e] sm:$0xff]
        %v4821 = vld [vmem:[%s4818 + $0x36] sm:$0xff]
        %v4822 = vld [vmem:[%s4818 + $0x4e] sm:$0xff]
        %v4823 = vld [vmem:[%s4818 + $0x66] sm:$0xff]
        %v4824 = vld [vmem:[%s4818 + $0x7e] sm:$0xff]
        %v4825 = vld [vmem:[%s4818 + $0x96] sm:$0xff]
        %v4826 = vld [vmem:[%s4818 + $0xae] sm:$0xff]
        %v4827 = vpack.c.bf16 %v4820, %v4819
        %v4828 = vpack.c.bf16 %v4822, %v4821
        %v4829 = vpack.c.bf16 %v4824, %v4823
        %v4830 = vpack.c.bf16 %v4826, %v4825
        %s4831 = scalar_lea.vmem %s4, 480
        %v4832 = vld [vmem:[%s4831] sm:$0xf]
        %v4833 = vld [vmem:[%s4831 + $0x4] sm:$0xf]
        %v4834 = vld [vmem:[%s4831 + $0x8] sm:$0xf]
        %v4835 = vld [vmem:[%s4831 + $0xc] sm:$0xf]
        %v4836 = vld [vmem:[%s4831 + $0x10] sm:$0xf]
        %v4837 = vld [vmem:[%s4831 + $0x14] sm:$0xf]
        %v4838 = vld [vmem:[%s4831 + $0x18] sm:$0xf]
        %v4839 = vld [vmem:[%s4831 + $0x1c] sm:$0xf]
        %v4848 = vunpack.c.l.b16 %v4832
        %v4849 = vunpack.c.l.b16 %v4833
        %v4850 = vunpack.c.l.b16 %v4834
        %v4851 = vunpack.c.l.b16 %v4835
        %v4852 = vunpack.c.l.b16 %v4836
        %v4853 = vunpack.c.l.b16 %v4837
        %v4854 = vunpack.c.l.b16 %v4838
        %v4855 = vunpack.c.l.b16 %v4839
        %v4856 = vpack.c.b16 %v4849, %v4848
        %v4857 = vpack.c.b16 %v4851, %v4850
        %v4858 = vpack.c.b16 %v4853, %v4852
        %v4859 = vpack.c.b16 %v4855, %v4854
        %v4865 = vsel %vm2249, %v4827, 0
        %v4868 = vsel %vm2249, %v4828, 0
        %v4871 = vsel %vm2249, %v4829, 0
        %v4874 = vsel %vm2249, %v4830, 0
        %4876 = vmatprep.subr.bf16.mxu0 0
        %4877 = vmatpush1.bf16.msra.mxu0 %v4856
        %4878 = vmatprep.subr.bf16.mxu0 0
        %4879 = vmatpush1.bf16.msra.mxu0 %v4857
        %4880 = vmatprep.subr.bf16.mxu0 0
        %4881 = vmatpush1.bf16.msra.mxu0 %v4858
        %4882 = vmatprep.subr.bf16.mxu0 0
        %4883 = vmatpush1.bf16.msra.mxu0 %v4859
        %4884 = vmatprep.subr.bf16.mxu0 0
        %4885 = vmatpush1.bf16.msra.mxu0 0
        %4886 = vmatprep.subr.bf16.mxu0 0
        %4887 = vmatpush1.bf16.msra.mxu0 0
        %4888 = vmatprep.subr.bf16.mxu0 0
        %4889 = vmatpush1.bf16.msra.mxu0 0
        %4890 = vmatprep.subr.bf16.mxu0 0
        %4891 = vmatpush1.bf16.msra.mxu0 0
        %4892 = vmatprep.subr.bf16.mxu0 0
        %4893 = vmatpush1.bf16.msra.mxu0 0
        %4894 = vmatprep.subr.bf16.mxu0 0
        %4895 = vmatpush1.bf16.msra.mxu0 0
        %4896 = vmatprep.subr.bf16.mxu0 0
        %4897 = vmatpush1.bf16.msra.mxu0 0
        %4898 = vmatprep.subr.bf16.mxu0 0
        %4899 = vmatpush1.bf16.msra.mxu0 0
        %4900 = vmatprep.subr.bf16.mxu0 0
        %4901 = vmatpush1.bf16.msra.mxu0 0
        %4902 = vmatprep.subr.bf16.mxu0 0
        %4903 = vmatpush1.bf16.msra.mxu0 0
        %4904 = vmatprep.subr.bf16.mxu0 0
        %4905 = vmatpush1.bf16.msra.mxu0 0
        %4906 = vmatprep.subr.bf16.mxu0 0
        %4907 = vmatpush1.bf16.msra.mxu0 0
        %4908 = vmatprep.mubr.bf16.mxu0 0
        %4909 = vmatmul.mubr.bf16.gmra.mrb[0].mxu0 %v4865
        %v4910 = vpop.f32.mrb[0].mxu0
        %v4911 = vadd.f32 0.0, %v4910
        %v4912 = vpop.f32.mrb[0].mxu0
        %v4913 = vpop.f32.mrb[0].mxu0
        %v4914 = vadd.f32 0.0, %v4913
        %v4915 = vpop.f32.mrb[0].mxu0
        %4916 = vmatprep.mubr.bf16.mxu0 0
        %4917 = vmatmul.mubr.bf16.gmra.mrb[0].mxu0 %v4868
        %v4918 = vpop.f32.mrb[0].mxu0
        %v4919 = vadd.f32 0.0, %v4918
        %v4920 = vpop.f32.mrb[0].mxu0
        %v4921 = vpop.f32.mrb[0].mxu0
        %v4922 = vadd.f32 0.0, %v4921
        %v4923 = vpop.f32.mrb[0].mxu0
        %4924 = vmatprep.mubr.bf16.mxu0 0
        %4925 = vmatmul.mubr.bf16.gmra.mrb[0].mxu0 %v4871
        %v4926 = vpop.f32.mrb[0].mxu0
        %v4927 = vadd.f32 0.0, %v4926
        %v4928 = vpop.f32.mrb[0].mxu0
        %v4929 = vpop.f32.mrb[0].mxu0
        %v4930 = vadd.f32 0.0, %v4929
        %v4931 = vpop.f32.mrb[0].mxu0
        %4932 = vmatprep.mubr.bf16.mxu0 0
        %4933 = vmatmul.mubr.bf16.gmra.mrb[0].mxu0 %v4874
        %v4934 = vpop.f32.mrb[0].mxu0
        %v4935 = vadd.f32 0.0, %v4934
        %v4936 = vpop.f32.mrb[0].mxu0
        %v4937 = vpop.f32.mrb[0].mxu0
        %v4938 = vadd.f32 0.0, %v4937
        %v4939 = vpop.f32.mrb[0].mxu0
        %4940 = vdwg.mxu0
        %v4941 = vadd.f32 %v4810, %v4911
        %v4942 = vadd.f32 %v4811, %v4914
        %v4943 = vadd.f32 %v4812, %v4919
        %v4944 = vadd.f32 %v4813, %v4922
        %v4945 = vadd.f32 %v4814, %v4927
        %v4946 = vadd.f32 %v4815, %v4930
        %v4947 = vadd.f32 %v4816, %v4935
        %v4948 = vadd.f32 %v4817, %v4938
        %v4949 = vld [vmem:[%s4818 + $0x7] sm:$0xff]
        %v4950 = vld [vmem:[%s4818 + $0x1f] sm:$0xff]
        %v4951 = vld [vmem:[%s4818 + $0x37] sm:$0xff]
        %v4952 = vld [vmem:[%s4818 + $0x4f] sm:$0xff]
        %v4953 = vld [vmem:[%s4818 + $0x67] sm:$0xff]
        %v4954 = vld [vmem:[%s4818 + $0x7f] sm:$0xff]
        %v4955 = vld [vmem:[%s4818 + $0x97] sm:$0xff]
        %v4956 = vld [vmem:[%s4818 + $0xaf] sm:$0xff]
        %v4957 = vpack.c.bf16 %v4950, %v4949
        %v4958 = vpack.c.bf16 %v4952, %v4951
        %v4959 = vpack.c.bf16 %v4954, %v4953
        %v4960 = vpack.c.bf16 %v4956, %v4955
        %s4961 = scalar_lea.vmem %s4, 512
        %v4962 = vld [vmem:[%s4961] sm:$0xf]
        %v4963 = vld [vmem:[%s4961 + $0x4] sm:$0xf]
        %v4964 = vld [vmem:[%s4961 + $0x8] sm:$0xf]
        %v4965 = vld [vmem:[%s4961 + $0xc] sm:$0xf]
        %v4966 = vld [vmem:[%s4961 + $0x10] sm:$0xf]
        %v4967 = vld [vmem:[%s4961 + $0x14] sm:$0xf]
        %v4968 = vld [vmem:[%s4961 + $0x18] sm:$0xf]
        %v4969 = vld [vmem:[%s4961 + $0x1c] sm:$0xf]
        %v4978 = vunpack.c.l.b16 %v4962
        %v4979 = vunpack.c.l.b16 %v4963
        %v4980 = vunpack.c.l.b16 %v4964
        %v4981 = vunpack.c.l.b16 %v4965
        %v4982 = vunpack.c.l.b16 %v4966
        %v4983 = vunpack.c.l.b16 %v4967
        %v4984 = vunpack.c.l.b16 %v4968
        %v4985 = vunpack.c.l.b16 %v4969
        %v4986 = vpack.c.b16 %v4979, %v4978
        %v4987 = vpack.c.b16 %v4981, %v4980
        %v4988 = vpack.c.b16 %v4983, %v4982
        %v4989 = vpack.c.b16 %v4985, %v4984
        %v4995 = vsel %vm2249, %v4957, 0
        %v4998 = vsel %vm2249, %v4958, 0
        %v5001 = vsel %vm2249, %v4959, 0
        %v5004 = vsel %vm2249, %v4960, 0
        %5006 = vmatprep.subr.bf16.mxu0 0
        %5007 = vmatpush1.bf16.msra.mxu0 %v4986
        %5008 = vmatprep.subr.bf16.mxu0 0
        %5009 = vmatpush1.bf16.msra.mxu0 %v4987
        %5010 = vmatprep.subr.bf16.mxu0 0
        %5011 = vmatpush1.bf16.msra.mxu0 %v4988
        %5012 = vmatprep.subr.bf16.mxu0 0
        %5013 = vmatpush1.bf16.msra.mxu0 %v4989
        %5014 = vmatprep.subr.bf16.mxu0 0
        %5015 = vmatpush1.bf16.msra.mxu0 0
        %5016 = vmatprep.subr.bf16.mxu0 0
        %5017 = vmatpush1.bf16.msra.mxu0 0
        %5018 = vmatprep.subr.bf16.mxu0 0
        %5019 = vmatpush1.bf16.msra.mxu0 0
        %5020 = vmatprep.subr.bf16.mxu0 0
        %5021 = vmatpush1.bf16.msra.mxu0 0
        %5022 = vmatprep.subr.bf16.mxu0 0
        %5023 = vmatpush1.bf16.msra.mxu0 0
        %5024 = vmatprep.subr.bf16.mxu0 0
        %5025 = vmatpush1.bf16.msra.mxu0 0
        %5026 = vmatprep.subr.bf16.mxu0 0
        %5027 = vmatpush1.bf16.msra.mxu0 0
        %5028 = vmatprep.subr.bf16.mxu0 0
        %5029 = vmatpush1.bf16.msra.mxu0 0
        %5030 = vmatprep.subr.bf16.mxu0 0
        %5031 = vmatpush1.bf16.msra.mxu0 0
        %5032 = vmatprep.subr.bf16.mxu0 0
        %5033 = vmatpush1.bf16.msra.mxu0 0
        %5034 = vmatprep.subr.bf16.mxu0 0
        %5035 = vmatpush1.bf16.msra.mxu0 0
        %5036 = vmatprep.subr.bf16.mxu0 0
        %5037 = vmatpush1.bf16.msra.mxu0 0
        %5038 = vmatprep.mubr.bf16.mxu0 0
        %5039 = vmatmul.mubr.bf16.gmra.mrb[0].mxu0 %v4995
        %v5040 = vpop.f32.mrb[0].mxu0
        %v5041 = vadd.f32 0.0, %v5040
        %v5042 = vpop.f32.mrb[0].mxu0
        %v5043 = vpop.f32.mrb[0].mxu0
        %v5044 = vadd.f32 0.0, %v5043
        %v5045 = vpop.f32.mrb[0].mxu0
        %5046 = vmatprep.mubr.bf16.mxu0 0
        %5047 = vmatmul.mubr.bf16.gmra.mrb[0].mxu0 %v4998
        %v5048 = vpop.f32.mrb[0].mxu0
        %v5049 = vadd.f32 0.0, %v5048
        %v5050 = vpop.f32.mrb[0].mxu0
        %v5051 = vpop.f32.mrb[0].mxu0
        %v5052 = vadd.f32 0.0, %v5051
        %v5053 = vpop.f32.mrb[0].mxu0
        %5054 = vmatprep.mubr.bf16.mxu0 0
        %5055 = vmatmul.mubr.bf16.gmra.mrb[0].mxu0 %v5001
        %v5056 = vpop.f32.mrb[0].mxu0
        %v5057 = vadd.f32 0.0, %v5056
        %v5058 = vpop.f32.mrb[0].mxu0
        %v5059 = vpop.f32.mrb[0].mxu0
        %v5060 = vadd.f32 0.0, %v5059
        %v5061 = vpop.f32.mrb[0].mxu0
        %5062 = vmatprep.mubr.bf16.mxu0 0
        %5063 = vmatmul.mubr.bf16.gmra.mrb[0].mxu0 %v5004
        %v5064 = vpop.f32.mrb[0].mxu0
        %v5065 = vadd.f32 0.0, %v5064
        %v5066 = vpop.f32.mrb[0].mxu0
        %v5067 = vpop.f32.mrb[0].mxu0
        %v5068 = vadd.f32 0.0, %v5067
        %v5069 = vpop.f32.mrb[0].mxu0
        %5070 = vdwg.mxu0
        %v5071 = vadd.f32 %v4941, %v5041
        %v5072 = vadd.f32 %v4942, %v5044
        %v5073 = vadd.f32 %v4943, %v5049
        %v5074 = vadd.f32 %v4944, %v5052
        %v5075 = vadd.f32 %v4945, %v5057
        %v5076 = vadd.f32 %v4946, %v5060
        %v5077 = vadd.f32 %v4947, %v5065
        %v5078 = vadd.f32 %v4948, %v5068
        %v5079 = vld [vmem:[%s4818 + $0x8] sm:$0xff]
        %v5080 = vld [vmem:[%s4818 + $0x20] sm:$0xff]
        %v5081 = vld [vmem:[%s4818 + $0x38] sm:$0xff]
        %v5082 = vld [vmem:[%s4818 + $0x50] sm:$0xff]
        %v5083 = vld [vmem:[%s4818 + $0x68] sm:$0xff]
        %v5084 = vld [vmem:[%s4818 + $0x80] sm:$0xff]
        %v5085 = vld [vmem:[%s4818 + $0x98] sm:$0xff]
        %v5086 = vld [vmem:[%s4818 + $0xb0] sm:$0xff]
        %v5087 = vpack.c.bf16 %v5080, %v5079
        %v5088 = vpack.c.bf16 %v5082, %v5081
        %v5089 = vpack.c.bf16 %v5084, %v5083
        %v5090 = vpack.c.bf16 %v5086, %v5085
        %s5091 = scalar_lea.vmem %s4, 544
        %v5092 = vld [vmem:[%s5091] sm:$0xf]
        %v5093 = vld [vmem:[%s5091 + $0x4] sm:$0xf]
        %v5094 = vld [vmem:[%s5091 + $0x8] sm:$0xf]
        %v5095 = vld [vmem:[%s5091 + $0xc] sm:$0xf]
        %v5096 = vld [vmem:[%s5091 + $0x10] sm:$0xf]
        %v5097 = vld [vmem:[%s5091 + $0x14] sm:$0xf]
        %v5098 = vld [vmem:[%s5091 + $0x18] sm:$0xf]
        %v5099 = vld [vmem:[%s5091 + $0x1c] sm:$0xf]
        %v5108 = vunpack.c.l.b16 %v5092
        %v5109 = vunpack.c.l.b16 %v5093
        %v5110 = vunpack.c.l.b16 %v5094
        %v5111 = vunpack.c.l.b16 %v5095
        %v5112 = vunpack.c.l.b16 %v5096
        %v5113 = vunpack.c.l.b16 %v5097
        %v5114 = vunpack.c.l.b16 %v5098
        %v5115 = vunpack.c.l.b16 %v5099
        %v5116 = vpack.c.b16 %v5109, %v5108
        %v5117 = vpack.c.b16 %v5111, %v5110
        %v5118 = vpack.c.b16 %v5113, %v5112
        %v5119 = vpack.c.b16 %v5115, %v5114
        %v5125 = vsel %vm2249, %v5087, 0
        %v5128 = vsel %vm2249, %v5088, 0
        %v5131 = vsel %vm2249, %v5089, 0
        %v5134 = vsel %vm2249, %v5090, 0
        %5136 = vmatprep.subr.bf16.mxu0 0
        %5137 = vmatpush1.bf16.msra.mxu0 %v5116
        %5138 = vmatprep.subr.bf16.mxu0 0
        %5139 = vmatpush1.bf16.msra.mxu0 %v5117
        %5140 = vmatprep.subr.bf16.mxu0 0
        %5141 = vmatpush1.bf16.msra.mxu0 %v5118
        %5142 = vmatprep.subr.bf16.mxu0 0
        %5143 = vmatpush1.bf16.msra.mxu0 %v5119
        %5144 = vmatprep.subr.bf16.mxu0 0
        %5145 = vmatpush1.bf16.msra.mxu0 0
        %5146 = vmatprep.subr.bf16.mxu0 0
        %5147 = vmatpush1.bf16.msra.mxu0 0
        %5148 = vmatprep.subr.bf16.mxu0 0
        %5149 = vmatpush1.bf16.msra.mxu0 0
        %5150 = vmatprep.subr.bf16.mxu0 0
        %5151 = vmatpush1.bf16.msra.mxu0 0
        %5152 = vmatprep.subr.bf16.mxu0 0
        %5153 = vmatpush1.bf16.msra.mxu0 0
        %5154 = vmatprep.subr.bf16.mxu0 0
        %5155 = vmatpush1.bf16.msra.mxu0 0
        %5156 = vmatprep.subr.bf16.mxu0 0
        %5157 = vmatpush1.bf16.msra.mxu0 0
        %5158 = vmatprep.subr.bf16.mxu0 0
        %5159 = vmatpush1.bf16.msra.mxu0 0
        %5160 = vmatprep.subr.bf16.mxu0 0
        %5161 = vmatpush1.bf16.msra.mxu0 0
        %5162 = vmatprep.subr.bf16.mxu0 0
        %5163 = vmatpush1.bf16.msra.mxu0 0
        %5164 = vmatprep.subr.bf16.mxu0 0
        %5165 = vmatpush1.bf16.msra.mxu0 0
        %5166 = vmatprep.subr.bf16.mxu0 0
        %5167 = vmatpush1.bf16.msra.mxu0 0
        %5168 = vmatprep.mubr.bf16.mxu0 0
        %5169 = vmatmul.mubr.bf16.gmra.mrb[0].mxu0 %v5125
        %v5170 = vpop.f32.mrb[0].mxu0
        %v5171 = vadd.f32 0.0, %v5170
        %v5172 = vpop.f32.mrb[0].mxu0
        %v5173 = vpop.f32.mrb[0].mxu0
        %v5174 = vadd.f32 0.0, %v5173
        %v5175 = vpop.f32.mrb[0].mxu0
        %5176 = vmatprep.mubr.bf16.mxu0 0
        %5177 = vmatmul.mubr.bf16.gmra.mrb[0].mxu0 %v5128
        %v5178 = vpop.f32.mrb[0].mxu0
        %v5179 = vadd.f32 0.0, %v5178
        %v5180 = vpop.f32.mrb[0].mxu0
        %v5181 = vpop.f32.mrb[0].mxu0
        %v5182 = vadd.f32 0.0, %v5181
        %v5183 = vpop.f32.mrb[0].mxu0
        %5184 = vmatprep.mubr.bf16.mxu0 0
        %5185 = vmatmul.mubr.bf16.gmra.mrb[0].mxu0 %v5131
        %v5186 = vpop.f32.mrb[0].mxu0
        %v5187 = vadd.f32 0.0, %v5186
        %v5188 = vpop.f32.mrb[0].mxu0
        %v5189 = vpop.f32.mrb[0].mxu0
        %v5190 = vadd.f32 0.0, %v5189
        %v5191 = vpop.f32.mrb[0].mxu0
        %5192 = vmatprep.mubr.bf16.mxu0 0
        %5193 = vmatmul.mubr.bf16.gmra.mrb[0].mxu0 %v5134
        %v5194 = vpop.f32.mrb[0].mxu0
        %v5195 = vadd.f32 0.0, %v5194
        %v5196 = vpop.f32.mrb[0].mxu0
        %v5197 = vpop.f32.mrb[0].mxu0
        %v5198 = vadd.f32 0.0, %v5197
        %v5199 = vpop.f32.mrb[0].mxu0
        %5200 = vdwg.mxu0
        %v5201 = vadd.f32 %v5071, %v5171
        %v5202 = vadd.f32 %v5072, %v5174
        %v5203 = vadd.f32 %v5073, %v5179
        %v5204 = vadd.f32 %v5074, %v5182
        %v5205 = vadd.f32 %v5075, %v5187
        %v5206 = vadd.f32 %v5076, %v5190
        %v5207 = vadd.f32 %v5077, %v5195
        %v5208 = vadd.f32 %v5078, %v5198
        %v5209 = vld [vmem:[%s4818 + $0x9] sm:$0xff]
        %v5210 = vld [vmem:[%s4818 + $0x21] sm:$0xff]
        %v5211 = vld [vmem:[%s4818 + $0x39] sm:$0xff]
        %v5212 = vld [vmem:[%s4818 + $0x51] sm:$0xff]
        %v5213 = vld [vmem:[%s4818 + $0x69] sm:$0xff]
        %v5214 = vld [vmem:[%s4818 + $0x81] sm:$0xff]
        %v5215 = vld [vmem:[%s4818 + $0x99] sm:$0xff]
        %v5216 = vld [vmem:[%s4818 + $0xb1] sm:$0xff]
        %v5217 = vpack.c.bf16 %v5210, %v5209
        %v5218 = vpack.c.bf16 %v5212, %v5211
        %v5219 = vpack.c.bf16 %v5214, %v5213
        %v5220 = vpack.c.bf16 %v5216, %v5215
        %s5221 = scalar_lea.vmem %s4, 576
        %v5222 = vld [vmem:[%s5221] sm:$0xf]
        %v5223 = vld [vmem:[%s5221 + $0x4] sm:$0xf]
        %v5224 = vld [vmem:[%s5221 + $0x8] sm:$0xf]
        %v5225 = vld [vmem:[%s5221 + $0xc] sm:$0xf]
        %v5226 = vld [vmem:[%s5221 + $0x10] sm:$0xf]
        %v5227 = vld [vmem:[%s5221 + $0x14] sm:$0xf]
        %v5228 = vld [vmem:[%s5221 + $0x18] sm:$0xf]
        %v5229 = vld [vmem:[%s5221 + $0x1c] sm:$0xf]
        %v5238 = vunpack.c.l.b16 %v5222
        %v5239 = vunpack.c.l.b16 %v5223
        %v5240 = vunpack.c.l.b16 %v5224
        %v5241 = vunpack.c.l.b16 %v5225
        %v5242 = vunpack.c.l.b16 %v5226
        %v5243 = vunpack.c.l.b16 %v5227
        %v5244 = vunpack.c.l.b16 %v5228
        %v5245 = vunpack.c.l.b16 %v5229
        %v5246 = vpack.c.b16 %v5239, %v5238
        %v5247 = vpack.c.b16 %v5241, %v5240
        %v5248 = vpack.c.b16 %v5243, %v5242
        %v5249 = vpack.c.b16 %v5245, %v5244
        %v5255 = vsel %vm2249, %v5217, 0
        %v5258 = vsel %vm2249, %v5218, 0
        %v5261 = vsel %vm2249, %v5219, 0
        %v5264 = vsel %vm2249, %v5220, 0
        %5266 = vmatprep.subr.bf16.mxu0 0
        %5267 = vmatpush1.bf16.msra.mxu0 %v5246
        %5268 = vmatprep.subr.bf16.mxu0 0
        %5269 = vmatpush1.bf16.msra.mxu0 %v5247
        %5270 = vmatprep.subr.bf16.mxu0 0
        %5271 = vmatpush1.bf16.msra.mxu0 %v5248
        %5272 = vmatprep.subr.bf16.mxu0 0
        %5273 = vmatpush1.bf16.msra.mxu0 %v5249
        %5274 = vmatprep.subr.bf16.mxu0 0
        %5275 = vmatpush1.bf16.msra.mxu0 0
        %5276 = vmatprep.subr.bf16.mxu0 0
        %5277 = vmatpush1.bf16.msra.mxu0 0
        %5278 = vmatprep.subr.bf16.mxu0 0
        %5279 = vmatpush1.bf16.msra.mxu0 0
        %5280 = vmatprep.subr.bf16.mxu0 0
        %5281 = vmatpush1.bf16.msra.mxu0 0
        %5282 = vmatprep.subr.bf16.mxu0 0
        %5283 = vmatpush1.bf16.msra.mxu0 0
        %5284 = vmatprep.subr.bf16.mxu0 0
        %5285 = vmatpush1.bf16.msra.mxu0 0
        %5286 = vmatprep.subr.bf16.mxu0 0
        %5287 = vmatpush1.bf16.msra.mxu0 0
        %5288 = vmatprep.subr.bf16.mxu0 0
        %5289 = vmatpush1.bf16.msra.mxu0 0
        %5290 = vmatprep.subr.bf16.mxu0 0
        %5291 = vmatpush1.bf16.msra.mxu0 0
        %5292 = vmatprep.subr.bf16.mxu0 0
        %5293 = vmatpush1.bf16.msra.mxu0 0
        %5294 = vmatprep.subr.bf16.mxu0 0
        %5295 = vmatpush1.bf16.msra.mxu0 0
        %5296 = vmatprep.subr.bf16.mxu0 0
        %5297 = vmatpush1.bf16.msra.mxu0 0
        %5298 = vmatprep.mubr.bf16.mxu0 0
        %5299 = vmatmul.mubr.bf16.gmra.mrb[0].mxu0 %v5255
        %v5300 = vpop.f32.mrb[0].mxu0
        %v5301 = vadd.f32 0.0, %v5300
        %v5302 = vpop.f32.mrb[0].mxu0
        %v5303 = vpop.f32.mrb[0].mxu0
        %v5304 = vadd.f32 0.0, %v5303
        %v5305 = vpop.f32.mrb[0].mxu0
        %5306 = vmatprep.mubr.bf16.mxu0 0
        %5307 = vmatmul.mubr.bf16.gmra.mrb[0].mxu0 %v5258
        %v5308 = vpop.f32.mrb[0].mxu0
        %v5309 = vadd.f32 0.0, %v5308
        %v5310 = vpop.f32.mrb[0].mxu0
        %v5311 = vpop.f32.mrb[0].mxu0
        %v5312 = vadd.f32 0.0, %v5311
        %v5313 = vpop.f32.mrb[0].mxu0
        %5314 = vmatprep.mubr.bf16.mxu0 0
        %5315 = vmatmul.mubr.bf16.gmra.mrb[0].mxu0 %v5261
        %v5316 = vpop.f32.mrb[0].mxu0
        %v5317 = vadd.f32 0.0, %v5316
        %v5318 = vpop.f32.mrb[0].mxu0
        %v5319 = vpop.f32.mrb[0].mxu0
        %v5320 = vadd.f32 0.0, %v5319
        %v5321 = vpop.f32.mrb[0].mxu0
        %5322 = vmatprep.mubr.bf16.mxu0 0
        %5323 = vmatmul.mubr.bf16.gmra.mrb[0].mxu0 %v5264
        %v5324 = vpop.f32.mrb[0].mxu0
        %v5325 = vadd.f32 0.0, %v5324
        %v5326 = vpop.f32.mrb[0].mxu0
        %v5327 = vpop.f32.mrb[0].mxu0
        %v5328 = vadd.f32 0.0, %v5327
        %v5329 = vpop.f32.mrb[0].mxu0
        %5330 = vdwg.mxu0
        %v5331 = vadd.f32 %v5201, %v5301
        %v5332 = vadd.f32 %v5202, %v5304
        %v5333 = vadd.f32 %v5203, %v5309
        %v5334 = vadd.f32 %v5204, %v5312
        %v5335 = vadd.f32 %v5205, %v5317
        %v5336 = vadd.f32 %v5206, %v5320
        %v5337 = vadd.f32 %v5207, %v5325
        %v5338 = vadd.f32 %v5208, %v5328
        %v5339 = vld [vmem:[%s4818 + $0xa] sm:$0xff]
        %v5340 = vld [vmem:[%s4818 + $0x22] sm:$0xff]
        %v5341 = vld [vmem:[%s4818 + $0x3a] sm:$0xff]
        %v5342 = vld [vmem:[%s4818 + $0x52] sm:$0xff]
        %v5343 = vld [vmem:[%s4818 + $0x6a] sm:$0xff]
        %v5344 = vld [vmem:[%s4818 + $0x82] sm:$0xff]
        %v5345 = vld [vmem:[%s4818 + $0x9a] sm:$0xff]
        %v5346 = vld [vmem:[%s4818 + $0xb2] sm:$0xff]
        %v5347 = vpack.c.bf16 %v5340, %v5339
        %v5348 = vpack.c.bf16 %v5342, %v5341
        %v5349 = vpack.c.bf16 %v5344, %v5343
        %v5350 = vpack.c.bf16 %v5346, %v5345
        %s5351 = scalar_lea.vmem %s4, 608
        %v5352 = vld [vmem:[%s5351] sm:$0xf]
        %v5353 = vld [vmem:[%s5351 + $0x4] sm:$0xf]
        %v5354 = vld [vmem:[%s5351 + $0x8] sm:$0xf]
        %v5355 = vld [vmem:[%s5351 + $0xc] sm:$0xf]
        %v5356 = vld [vmem:[%s5351 + $0x10] sm:$0xf]
        %v5357 = vld [vmem:[%s5351 + $0x14] sm:$0xf]
        %v5358 = vld [vmem:[%s5351 + $0x18] sm:$0xf]
        %v5359 = vld [vmem:[%s5351 + $0x1c] sm:$0xf]
        %v5368 = vunpack.c.l.b16 %v5352
        %v5369 = vunpack.c.l.b16 %v5353
        %v5370 = vunpack.c.l.b16 %v5354
        %v5371 = vunpack.c.l.b16 %v5355
        %v5372 = vunpack.c.l.b16 %v5356
        %v5373 = vunpack.c.l.b16 %v5357
        %v5374 = vunpack.c.l.b16 %v5358
        %v5375 = vunpack.c.l.b16 %v5359
        %v5376 = vpack.c.b16 %v5369, %v5368
        %v5377 = vpack.c.b16 %v5371, %v5370
        %v5378 = vpack.c.b16 %v5373, %v5372
        %v5379 = vpack.c.b16 %v5375, %v5374
        %v5385 = vsel %vm2249, %v5347, 0
        %v5388 = vsel %vm2249, %v5348, 0
        %v5391 = vsel %vm2249, %v5349, 0
        %v5394 = vsel %vm2249, %v5350, 0
        %5396 = vmatprep.subr.bf16.mxu0 0
        %5397 = vmatpush1.bf16.msra.mxu0 %v5376
        %5398 = vmatprep.subr.bf16.mxu0 0
        %5399 = vmatpush1.bf16.msra.mxu0 %v5377
        %5400 = vmatprep.subr.bf16.mxu0 0
        %5401 = vmatpush1.bf16.msra.mxu0 %v5378
        %5402 = vmatprep.subr.bf16.mxu0 0
        %5403 = vmatpush1.bf16.msra.mxu0 %v5379
        %5404 = vmatprep.subr.bf16.mxu0 0
        %5405 = vmatpush1.bf16.msra.mxu0 0
        %5406 = vmatprep.subr.bf16.mxu0 0
        %5407 = vmatpush1.bf16.msra.mxu0 0
        %5408 = vmatprep.subr.bf16.mxu0 0
        %5409 = vmatpush1.bf16.msra.mxu0 0
        %5410 = vmatprep.subr.bf16.mxu0 0
        %5411 = vmatpush1.bf16.msra.mxu0 0
        %5412 = vmatprep.subr.bf16.mxu0 0
        %5413 = vmatpush1.bf16.msra.mxu0 0
        %5414 = vmatprep.subr.bf16.mxu0 0
        %5415 = vmatpush1.bf16.msra.mxu0 0
        %5416 = vmatprep.subr.bf16.mxu0 0
        %5417 = vmatpush1.bf16.msra.mxu0 0
        %5418 = vmatprep.subr.bf16.mxu0 0
        %5419 = vmatpush1.bf16.msra.mxu0 0
        %5420 = vmatprep.subr.bf16.mxu0 0
        %5421 = vmatpush1.bf16.msra.mxu0 0
        %5422 = vmatprep.subr.bf16.mxu0 0
        %5423 = vmatpush1.bf16.msra.mxu0 0
        %5424 = vmatprep.subr.bf16.mxu0 0
        %5425 = vmatpush1.bf16.msra.mxu0 0
        %5426 = vmatprep.subr.bf16.mxu0 0
        %5427 = vmatpush1.bf16.msra.mxu0 0
        %5428 = vmatprep.mubr.bf16.mxu0 0
        %5429 = vmatmul.mubr.bf16.gmra.mrb[0].mxu0 %v5385
        %v5430 = vpop.f32.mrb[0].mxu0
        %v5431 = vadd.f32 0.0, %v5430
        %v5432 = vpop.f32.mrb[0].mxu0
        %v5433 = vpop.f32.mrb[0].mxu0
        %v5434 = vadd.f32 0.0, %v5433
        %v5435 = vpop.f32.mrb[0].mxu0
        %5436 = vmatprep.mubr.bf16.mxu0 0
        %5437 = vmatmul.mubr.bf16.gmra.mrb[0].mxu0 %v5388
        %v5438 = vpop.f32.mrb[0].mxu0
        %v5439 = vadd.f32 0.0, %v5438
        %v5440 = vpop.f32.mrb[0].mxu0
        %v5441 = vpop.f32.mrb[0].mxu0
        %v5442 = vadd.f32 0.0, %v5441
        %v5443 = vpop.f32.mrb[0].mxu0
        %5444 = vmatprep.mubr.bf16.mxu0 0
        %5445 = vmatmul.mubr.bf16.gmra.mrb[0].mxu0 %v5391
        %v5446 = vpop.f32.mrb[0].mxu0
        %v5447 = vadd.f32 0.0, %v5446
        %v5448 = vpop.f32.mrb[0].mxu0
        %v5449 = vpop.f32.mrb[0].mxu0
        %v5450 = vadd.f32 0.0, %v5449
        %v5451 = vpop.f32.mrb[0].mxu0
        %5452 = vmatprep.mubr.bf16.mxu0 0
        %5453 = vmatmul.mubr.bf16.gmra.mrb[0].mxu0 %v5394
        %v5454 = vpop.f32.mrb[0].mxu0
        %v5455 = vadd.f32 0.0, %v5454
        %v5456 = vpop.f32.mrb[0].mxu0
        %v5457 = vpop.f32.mrb[0].mxu0
        %v5458 = vadd.f32 0.0, %v5457
        %v5459 = vpop.f32.mrb[0].mxu0
        %5460 = vdwg.mxu0
        %v5461 = vadd.f32 %v5331, %v5431
        %v5462 = vadd.f32 %v5332, %v5434
        %v5463 = vadd.f32 %v5333, %v5439
        %v5464 = vadd.f32 %v5334, %v5442
        %v5465 = vadd.f32 %v5335, %v5447
        %v5466 = vadd.f32 %v5336, %v5450
        %v5467 = vadd.f32 %v5337, %v5455
        %v5468 = vadd.f32 %v5338, %v5458
        %s5469 = scalar_lea.vmem [#allocation2], 96
        %v5470 = vld [vmem:[%s5469 + $0x6] sm:$0xff]
        %v5471 = vld [vmem:[%s5469 + $0x1e] sm:$0xff]
        %v5472 = vld [vmem:[%s5469 + $0x36] sm:$0xff]
        %v5473 = vld [vmem:[%s5469 + $0x4e] sm:$0xff]
        %v5474 = vld [vmem:[%s5469 + $0x66] sm:$0xff]
        %v5475 = vld [vmem:[%s5469 + $0x7e] sm:$0xff]
        %v5476 = vld [vmem:[%s5469 + $0x96] sm:$0xff]
        %v5477 = vld [vmem:[%s5469 + $0xae] sm:$0xff]
        %v5478 = vpack.c.bf16 %v5471, %v5470
        %v5479 = vpack.c.bf16 %v5473, %v5472
        %v5480 = vpack.c.bf16 %v5475, %v5474
        %v5481 = vpack.c.bf16 %v5477, %v5476
        %s5482 = scalar_lea.vmem %s4, 640
        %v5483 = vld [vmem:[%s5482] sm:$0xf]
        %v5484 = vld [vmem:[%s5482 + $0x4] sm:$0xf]
        %v5485 = vld [vmem:[%s5482 + $0x8] sm:$0xf]
        %v5486 = vld [vmem:[%s5482 + $0xc] sm:$0xf]
        %v5487 = vld [vmem:[%s5482 + $0x10] sm:$0xf]
        %v5488 = vld [vmem:[%s5482 + $0x14] sm:$0xf]
        %v5489 = vld [vmem:[%s5482 + $0x18] sm:$0xf]
        %v5490 = vld [vmem:[%s5482 + $0x1c] sm:$0xf]
        %v5499 = vunpack.c.l.b16 %v5483
        %v5500 = vunpack.c.l.b16 %v5484
        %v5501 = vunpack.c.l.b16 %v5485
        %v5502 = vunpack.c.l.b16 %v5486
        %v5503 = vunpack.c.l.b16 %v5487
        %v5504 = vunpack.c.l.b16 %v5488
        %v5505 = vunpack.c.l.b16 %v5489
        %v5506 = vunpack.c.l.b16 %v5490
        %v5507 = vpack.c.b16 %v5500, %v5499
        %v5508 = vpack.c.b16 %v5502, %v5501
        %v5509 = vpack.c.b16 %v5504, %v5503
        %v5510 = vpack.c.b16 %v5506, %v5505
        %v5516 = vsel %vm2249, %v5478, 0
        %v5519 = vsel %vm2249, %v5479, 0
        %v5522 = vsel %vm2249, %v5480, 0
        %v5525 = vsel %vm2249, %v5481, 0
        %5527 = vmatprep.subr.bf16.mxu0 0
        %5528 = vmatpush1.bf16.msra.mxu0 %v5507
        %5529 = vmatprep.subr.bf16.mxu0 0
        %5530 = vmatpush1.bf16.msra.mxu0 %v5508
        %5531 = vmatprep.subr.bf16.mxu0 0
        %5532 = vmatpush1.bf16.msra.mxu0 %v5509
        %5533 = vmatprep.subr.bf16.mxu0 0
        %5534 = vmatpush1.bf16.msra.mxu0 %v5510
        %5535 = vmatprep.subr.bf16.mxu0 0
        %5536 = vmatpush1.bf16.msra.mxu0 0
        %5537 = vmatprep.subr.bf16.mxu0 0
        %5538 = vmatpush1.bf16.msra.mxu0 0
        %5539 = vmatprep.subr.bf16.mxu0 0
        %5540 = vmatpush1.bf16.msra.mxu0 0
        %5541 = vmatprep.subr.bf16.mxu0 0
        %5542 = vmatpush1.bf16.msra.mxu0 0
        %5543 = vmatprep.subr.bf16.mxu0 0
        %5544 = vmatpush1.bf16.msra.mxu0 0
        %5545 = vmatprep.subr.bf16.mxu0 0
        %5546 = vmatpush1.bf16.msra.mxu0 0
        %5547 = vmatprep.subr.bf16.mxu0 0
        %5548 = vmatpush1.bf16.msra.mxu0 0
        %5549 = vmatprep.subr.bf16.mxu0 0
        %5550 = vmatpush1.bf16.msra.mxu0 0
        %5551 = vmatprep.subr.bf16.mxu0 0
        %5552 = vmatpush1.bf16.msra.mxu0 0
        %5553 = vmatprep.subr.bf16.mxu0 0
        %5554 = vmatpush1.bf16.msra.mxu0 0
        %5555 = vmatprep.subr.bf16.mxu0 0
        %5556 = vmatpush1.bf16.msra.mxu0 0
        %5557 = vmatprep.subr.bf16.mxu0 0
        %5558 = vmatpush1.bf16.msra.mxu0 0
        %5559 = vmatprep.mubr.bf16.mxu0 0
        %5560 = vmatmul.mubr.bf16.gmra.mrb[0].mxu0 %v5516
        %v5561 = vpop.f32.mrb[0].mxu0
        %v5562 = vadd.f32 0.0, %v5561
        %v5563 = vpop.f32.mrb[0].mxu0
        %v5564 = vpop.f32.mrb[0].mxu0
        %v5565 = vadd.f32 0.0, %v5564
        %v5566 = vpop.f32.mrb[0].mxu0
        %5567 = vmatprep.mubr.bf16.mxu0 0
        %5568 = vmatmul.mubr.bf16.gmra.mrb[0].mxu0 %v5519
        %v5569 = vpop.f32.mrb[0].mxu0
        %v5570 = vadd.f32 0.0, %v5569
        %v5571 = vpop.f32.mrb[0].mxu0
        %v5572 = vpop.f32.mrb[0].mxu0
        %v5573 = vadd.f32 0.0, %v5572
        %v5574 = vpop.f32.mrb[0].mxu0
        %5575 = vmatprep.mubr.bf16.mxu0 0
        %5576 = vmatmul.mubr.bf16.gmra.mrb[0].mxu0 %v5522
        %v5577 = vpop.f32.mrb[0].mxu0
        %v5578 = vadd.f32 0.0, %v5577
        %v5579 = vpop.f32.mrb[0].mxu0
        %v5580 = vpop.f32.mrb[0].mxu0
        %v5581 = vadd.f32 0.0, %v5580
        %v5582 = vpop.f32.mrb[0].mxu0
        %5583 = vmatprep.mubr.bf16.mxu0 0
        %5584 = vmatmul.mubr.bf16.gmra.mrb[0].mxu0 %v5525
        %v5585 = vpop.f32.mrb[0].mxu0
        %v5586 = vadd.f32 0.0, %v5585
        %v5587 = vpop.f32.mrb[0].mxu0
        %v5588 = vpop.f32.mrb[0].mxu0
        %v5589 = vadd.f32 0.0, %v5588
        %v5590 = vpop.f32.mrb[0].mxu0
        %5591 = vdwg.mxu0
        %v5592 = vadd.f32 %v5461, %v5562
        %v5593 = vadd.f32 %v5462, %v5565
        %v5594 = vadd.f32 %v5463, %v5570
        %v5595 = vadd.f32 %v5464, %v5573
        %v5596 = vadd.f32 %v5465, %v5578
        %v5597 = vadd.f32 %v5466, %v5581
        %v5598 = vadd.f32 %v5467, %v5586
        %v5599 = vadd.f32 %v5468, %v5589
        %v5600 = vld [vmem:[%s5469 + $0x7] sm:$0xff]
        %v5601 = vld [vmem:[%s5469 + $0x1f] sm:$0xff]
        %v5602 = vld [vmem:[%s5469 + $0x37] sm:$0xff]
        %v5603 = vld [vmem:[%s5469 + $0x4f] sm:$0xff]
        %v5604 = vld [vmem:[%s5469 + $0x67] sm:$0xff]
        %v5605 = vld [vmem:[%s5469 + $0x7f] sm:$0xff]
        %v5606 = vld [vmem:[%s5469 + $0x97] sm:$0xff]
        %v5607 = vld [vmem:[%s5469 + $0xaf] sm:$0xff]
        %v5608 = vpack.c.bf16 %v5601, %v5600
        %v5609 = vpack.c.bf16 %v5603, %v5602
        %v5610 = vpack.c.bf16 %v5605, %v5604
        %v5611 = vpack.c.bf16 %v5607, %v5606
        %s5612 = scalar_lea.vmem %s4, 672
        %v5613 = vld [vmem:[%s5612] sm:$0xf]
        %v5614 = vld [vmem:[%s5612 + $0x4] sm:$0xf]
        %v5615 = vld [vmem:[%s5612 + $0x8] sm:$0xf]
        %v5616 = vld [vmem:[%s5612 + $0xc] sm:$0xf]
        %v5617 = vld [vmem:[%s5612 + $0x10] sm:$0xf]
        %v5618 = vld [vmem:[%s5612 + $0x14] sm:$0xf]
        %v5619 = vld [vmem:[%s5612 + $0x18] sm:$0xf]
        %v5620 = vld [vmem:[%s5612 + $0x1c] sm:$0xf]
        %v5629 = vunpack.c.l.b16 %v5613
        %v5630 = vunpack.c.l.b16 %v5614
        %v5631 = vunpack.c.l.b16 %v5615
        %v5632 = vunpack.c.l.b16 %v5616
        %v5633 = vunpack.c.l.b16 %v5617
        %v5634 = vunpack.c.l.b16 %v5618
        %v5635 = vunpack.c.l.b16 %v5619
        %v5636 = vunpack.c.l.b16 %v5620
        %v5637 = vpack.c.b16 %v5630, %v5629
        %v5638 = vpack.c.b16 %v5632, %v5631
        %v5639 = vpack.c.b16 %v5634, %v5633
        %v5640 = vpack.c.b16 %v5636, %v5635
        %v5646 = vsel %vm2249, %v5608, 0
        %v5649 = vsel %vm2249, %v5609, 0
        %v5652 = vsel %vm2249, %v5610, 0
        %v5655 = vsel %vm2249, %v5611, 0
        %5657 = vmatprep.subr.bf16.mxu0 0
        %5658 = vmatpush1.bf16.msra.mxu0 %v5637
        %5659 = vmatprep.subr.bf16.mxu0 0
        %5660 = vmatpush1.bf16.msra.mxu0 %v5638
        %5661 = vmatprep.subr.bf16.mxu0 0
        %5662 = vmatpush1.bf16.msra.mxu0 %v5639
        %5663 = vmatprep.subr.bf16.mxu0 0
        %5664 = vmatpush1.bf16.msra.mxu0 %v5640
        %5665 = vmatprep.subr.bf16.mxu0 0
        %5666 = vmatpush1.bf16.msra.mxu0 0
        %5667 = vmatprep.subr.bf16.mxu0 0
        %5668 = vmatpush1.bf16.msra.mxu0 0
        %5669 = vmatprep.subr.bf16.mxu0 0
        %5670 = vmatpush1.bf16.msra.mxu0 0
        %5671 = vmatprep.subr.bf16.mxu0 0
        %5672 = vmatpush1.bf16.msra.mxu0 0
        %5673 = vmatprep.subr.bf16.mxu0 0
        %5674 = vmatpush1.bf16.msra.mxu0 0
        %5675 = vmatprep.subr.bf16.mxu0 0
        %5676 = vmatpush1.bf16.msra.mxu0 0
        %5677 = vmatprep.subr.bf16.mxu0 0
        %5678 = vmatpush1.bf16.msra.mxu0 0
        %5679 = vmatprep.subr.bf16.mxu0 0
        %5680 = vmatpush1.bf16.msra.mxu0 0
        %5681 = vmatprep.subr.bf16.mxu0 0
        %5682 = vmatpush1.bf16.msra.mxu0 0
        %5683 = vmatprep.subr.bf16.mxu0 0
        %5684 = vmatpush1.bf16.msra.mxu0 0
        %5685 = vmatprep.subr.bf16.mxu0 0
        %5686 = vmatpush1.bf16.msra.mxu0 0
        %5687 = vmatprep.subr.bf16.mxu0 0
        %5688 = vmatpush1.bf16.msra.mxu0 0
        %5689 = vmatprep.mubr.bf16.mxu0 0
        %5690 = vmatmul.mubr.bf16.gmra.mrb[0].mxu0 %v5646
        %v5691 = vpop.f32.mrb[0].mxu0
        %v5692 = vadd.f32 0.0, %v5691
        %v5693 = vpop.f32.mrb[0].mxu0
        %v5694 = vpop.f32.mrb[0].mxu0
        %v5695 = vadd.f32 0.0, %v5694
        %v5696 = vpop.f32.mrb[0].mxu0
        %5697 = vmatprep.mubr.bf16.mxu0 0
        %5698 = vmatmul.mubr.bf16.gmra.mrb[0].mxu0 %v5649
        %v5699 = vpop.f32.mrb[0].mxu0
        %v5700 = vadd.f32 0.0, %v5699
        %v5701 = vpop.f32.mrb[0].mxu0
        %v5702 = vpop.f32.mrb[0].mxu0
        %v5703 = vadd.f32 0.0, %v5702
        %v5704 = vpop.f32.mrb[0].mxu0
        %5705 = vmatprep.mubr.bf16.mxu0 0
        %5706 = vmatmul.mubr.bf16.gmra.mrb[0].mxu0 %v5652
        %v5707 = vpop.f32.mrb[0].mxu0
        %v5708 = vadd.f32 0.0, %v5707
        %v5709 = vpop.f32.mrb[0].mxu0
        %v5710 = vpop.f32.mrb[0].mxu0
        %v5711 = vadd.f32 0.0, %v5710
        %v5712 = vpop.f32.mrb[0].mxu0
        %5713 = vmatprep.mubr.bf16.mxu0 0
        %5714 = vmatmul.mubr.bf16.gmra.mrb[0].mxu0 %v5655
        %v5715 = vpop.f32.mrb[0].mxu0
        %v5716 = vadd.f32 0.0, %v5715
        %v5717 = vpop.f32.mrb[0].mxu0
        %v5718 = vpop.f32.mrb[0].mxu0
        %v5719 = vadd.f32 0.0, %v5718
        %v5720 = vpop.f32.mrb[0].mxu0
        %5721 = vdwg.mxu0
        %v5722 = vadd.f32 %v5592, %v5692
        %v5723 = vadd.f32 %v5593, %v5695
        %v5724 = vadd.f32 %v5594, %v5700
        %v5725 = vadd.f32 %v5595, %v5703
        %v5726 = vadd.f32 %v5596, %v5708
        %v5727 = vadd.f32 %v5597, %v5711
        %v5728 = vadd.f32 %v5598, %v5716
        %v5729 = vadd.f32 %v5599, %v5719
        %v5730 = vld [vmem:[%s5469 + $0x8] sm:$0xff]
        %v5731 = vld [vmem:[%s5469 + $0x20] sm:$0xff]
        %v5732 = vld [vmem:[%s5469 + $0x38] sm:$0xff]
        %v5733 = vld [vmem:[%s5469 + $0x50] sm:$0xff]
        %v5734 = vld [vmem:[%s5469 + $0x68] sm:$0xff]
        %v5735 = vld [vmem:[%s5469 + $0x80] sm:$0xff]
        %v5736 = vld [vmem:[%s5469 + $0x98] sm:$0xff]
        %v5737 = vld [vmem:[%s5469 + $0xb0] sm:$0xff]
        %v5738 = vpack.c.bf16 %v5731, %v5730
        %v5739 = vpack.c.bf16 %v5733, %v5732
        %v5740 = vpack.c.bf16 %v5735, %v5734
        %v5741 = vpack.c.bf16 %v5737, %v5736
        %s5742 = scalar_lea.vmem %s4, 704
        %v5743 = vld [vmem:[%s5742] sm:$0xf]
        %v5744 = vld [vmem:[%s5742 + $0x4] sm:$0xf]
        %v5745 = vld [vmem:[%s5742 + $0x8] sm:$0xf]
        %v5746 = vld [vmem:[%s5742 + $0xc] sm:$0xf]
        %v5747 = vld [vmem:[%s5742 + $0x10] sm:$0xf]
        %v5748 = vld [vmem:[%s5742 + $0x14] sm:$0xf]
        %v5749 = vld [vmem:[%s5742 + $0x18] sm:$0xf]
        %v5750 = vld [vmem:[%s5742 + $0x1c] sm:$0xf]
        %v5759 = vunpack.c.l.b16 %v5743
        %v5760 = vunpack.c.l.b16 %v5744
        %v5761 = vunpack.c.l.b16 %v5745
        %v5762 = vunpack.c.l.b16 %v5746
        %v5763 = vunpack.c.l.b16 %v5747
        %v5764 = vunpack.c.l.b16 %v5748
        %v5765 = vunpack.c.l.b16 %v5749
        %v5766 = vunpack.c.l.b16 %v5750
        %v5767 = vpack.c.b16 %v5760, %v5759
        %v5768 = vpack.c.b16 %v5762, %v5761
        %v5769 = vpack.c.b16 %v5764, %v5763
        %v5770 = vpack.c.b16 %v5766, %v5765
        %v5776 = vsel %vm2249, %v5738, 0
        %v5779 = vsel %vm2249, %v5739, 0
        %v5782 = vsel %vm2249, %v5740, 0
        %v5785 = vsel %vm2249, %v5741, 0
        %5787 = vmatprep.subr.bf16.mxu0 0
        %5788 = vmatpush1.bf16.msra.mxu0 %v5767
        %5789 = vmatprep.subr.bf16.mxu0 0
        %5790 = vmatpush1.bf16.msra.mxu0 %v5768
        %5791 = vmatprep.subr.bf16.mxu0 0
        %5792 = vmatpush1.bf16.msra.mxu0 %v5769
        %5793 = vmatprep.subr.bf16.mxu0 0
        %5794 = vmatpush1.bf16.msra.mxu0 %v5770
        %5795 = vmatprep.subr.bf16.mxu0 0
        %5796 = vmatpush1.bf16.msra.mxu0 0
        %5797 = vmatprep.subr.bf16.mxu0 0
        %5798 = vmatpush1.bf16.msra.mxu0 0
        %5799 = vmatprep.subr.bf16.mxu0 0
        %5800 = vmatpush1.bf16.msra.mxu0 0
        %5801 = vmatprep.subr.bf16.mxu0 0
        %5802 = vmatpush1.bf16.msra.mxu0 0
        %5803 = vmatprep.subr.bf16.mxu0 0
        %5804 = vmatpush1.bf16.msra.mxu0 0
        %5805 = vmatprep.subr.bf16.mxu0 0
        %5806 = vmatpush1.bf16.msra.mxu0 0
        %5807 = vmatprep.subr.bf16.mxu0 0
        %5808 = vmatpush1.bf16.msra.mxu0 0
        %5809 = vmatprep.subr.bf16.mxu0 0
        %5810 = vmatpush1.bf16.msra.mxu0 0
        %5811 = vmatprep.subr.bf16.mxu0 0
        %5812 = vmatpush1.bf16.msra.mxu0 0
        %5813 = vmatprep.subr.bf16.mxu0 0
        %5814 = vmatpush1.bf16.msra.mxu0 0
        %5815 = vmatprep.subr.bf16.mxu0 0
        %5816 = vmatpush1.bf16.msra.mxu0 0
        %5817 = vmatprep.subr.bf16.mxu0 0
        %5818 = vmatpush1.bf16.msra.mxu0 0
        %5819 = vmatprep.mubr.bf16.mxu0 0
        %5820 = vmatmul.mubr.bf16.gmra.mrb[0].mxu0 %v5776
        %v5821 = vpop.f32.mrb[0].mxu0
        %v5822 = vadd.f32 0.0, %v5821
        %v5823 = vpop.f32.mrb[0].mxu0
        %v5824 = vpop.f32.mrb[0].mxu0
        %v5825 = vadd.f32 0.0, %v5824
        %v5826 = vpop.f32.mrb[0].mxu0
        %5827 = vmatprep.mubr.bf16.mxu0 0
        %5828 = vmatmul.mubr.bf16.gmra.mrb[0].mxu0 %v5779
        %v5829 = vpop.f32.mrb[0].mxu0
        %v5830 = vadd.f32 0.0, %v5829
        %v5831 = vpop.f32.mrb[0].mxu0
        %v5832 = vpop.f32.mrb[0].mxu0
        %v5833 = vadd.f32 0.0, %v5832
        %v5834 = vpop.f32.mrb[0].mxu0
        %5835 = vmatprep.mubr.bf16.mxu0 0
        %5836 = vmatmul.mubr.bf16.gmra.mrb[0].mxu0 %v5782
        %v5837 = vpop.f32.mrb[0].mxu0
        %v5838 = vadd.f32 0.0, %v5837
        %v5839 = vpop.f32.mrb[0].mxu0
        %v5840 = vpop.f32.mrb[0].mxu0
        %v5841 = vadd.f32 0.0, %v5840
        %v5842 = vpop.f32.mrb[0].mxu0
        %5843 = vmatprep.mubr.bf16.mxu0 0
        %5844 = vmatmul.mubr.bf16.gmra.mrb[0].mxu0 %v5785
        %v5845 = vpop.f32.mrb[0].mxu0
        %v5846 = vadd.f32 0.0, %v5845
        %v5847 = vpop.f32.mrb[0].mxu0
        %v5848 = vpop.f32.mrb[0].mxu0
        %v5849 = vadd.f32 0.0, %v5848
        %v5850 = vpop.f32.mrb[0].mxu0
        %5851 = vdwg.mxu0
        %v5852 = vadd.f32 %v5722, %v5822
        %v5853 = vadd.f32 %v5723, %v5825
        %v5854 = vadd.f32 %v5724, %v5830
        %v5855 = vadd.f32 %v5725, %v5833
        %v5856 = vadd.f32 %v5726, %v5838
        %v5857 = vadd.f32 %v5727, %v5841
        %v5858 = vadd.f32 %v5728, %v5846
        %v5859 = vadd.f32 %v5729, %v5849
        %v5860 = vld [vmem:[%s5469 + $0x9] sm:$0xff]
        %v5861 = vld [vmem:[%s5469 + $0x21] sm:$0xff]
        %v5862 = vld [vmem:[%s5469 + $0x39] sm:$0xff]
        %v5863 = vld [vmem:[%s5469 + $0x51] sm:$0xff]
        %v5864 = vld [vmem:[%s5469 + $0x69] sm:$0xff]
        %v5865 = vld [vmem:[%s5469 + $0x81] sm:$0xff]
        %v5866 = vld [vmem:[%s5469 + $0x99] sm:$0xff]
        %v5867 = vld [vmem:[%s5469 + $0xb1] sm:$0xff]
        %v5868 = vpack.c.bf16 %v5861, %v5860
        %v5869 = vpack.c.bf16 %v5863, %v5862
        %v5870 = vpack.c.bf16 %v5865, %v5864
        %v5871 = vpack.c.bf16 %v5867, %v5866
        %s5872 = scalar_lea.vmem %s4, 736
        %v5873 = vld [vmem:[%s5872] sm:$0xf]
        %v5874 = vld [vmem:[%s5872 + $0x4] sm:$0xf]
        %v5875 = vld [vmem:[%s5872 + $0x8] sm:$0xf]
        %v5876 = vld [vmem:[%s5872 + $0xc] sm:$0xf]
        %v5877 = vld [vmem:[%s5872 + $0x10] sm:$0xf]
        %v5878 = vld [vmem:[%s5872 + $0x14] sm:$0xf]
        %v5879 = vld [vmem:[%s5872 + $0x18] sm:$0xf]
        %v5880 = vld [vmem:[%s5872 + $0x1c] sm:$0xf]
        %v5889 = vunpack.c.l.b16 %v5873
        %v5890 = vunpack.c.l.b16 %v5874
        %v5891 = vunpack.c.l.b16 %v5875
        %v5892 = vunpack.c.l.b16 %v5876
        %v5893 = vunpack.c.l.b16 %v5877
        %v5894 = vunpack.c.l.b16 %v5878
        %v5895 = vunpack.c.l.b16 %v5879
        %v5896 = vunpack.c.l.b16 %v5880
        %v5897 = vpack.c.b16 %v5890, %v5889
        %v5898 = vpack.c.b16 %v5892, %v5891
        %v5899 = vpack.c.b16 %v5894, %v5893
        %v5900 = vpack.c.b16 %v5896, %v5895
        %v5906 = vsel %vm2249, %v5868, 0
        %v5909 = vsel %vm2249, %v5869, 0
        %v5912 = vsel %vm2249, %v5870, 0
        %v5915 = vsel %vm2249, %v5871, 0
        %5917 = vmatprep.subr.bf16.mxu0 0
        %5918 = vmatpush1.bf16.msra.mxu0 %v5897
        %5919 = vmatprep.subr.bf16.mxu0 0
        %5920 = vmatpush1.bf16.msra.mxu0 %v5898
        %5921 = vmatprep.subr.bf16.mxu0 0
        %5922 = vmatpush1.bf16.msra.mxu0 %v5899
        %5923 = vmatprep.subr.bf16.mxu0 0
        %5924 = vmatpush1.bf16.msra.mxu0 %v5900
        %5925 = vmatprep.subr.bf16.mxu0 0
        %5926 = vmatpush1.bf16.msra.mxu0 0
        %5927 = vmatprep.subr.bf16.mxu0 0
        %5928 = vmatpush1.bf16.msra.mxu0 0
        %5929 = vmatprep.subr.bf16.mxu0 0
        %5930 = vmatpush1.bf16.msra.mxu0 0
        %5931 = vmatprep.subr.bf16.mxu0 0
        %5932 = vmatpush1.bf16.msra.mxu0 0
        %5933 = vmatprep.subr.bf16.mxu0 0
        %5934 = vmatpush1.bf16.msra.mxu0 0
        %5935 = vmatprep.subr.bf16.mxu0 0
        %5936 = vmatpush1.bf16.msra.mxu0 0
        %5937 = vmatprep.subr.bf16.mxu0 0
        %5938 = vmatpush1.bf16.msra.mxu0 0
        %5939 = vmatprep.subr.bf16.mxu0 0
        %5940 = vmatpush1.bf16.msra.mxu0 0
        %5941 = vmatprep.subr.bf16.mxu0 0
        %5942 = vmatpush1.bf16.msra.mxu0 0
        %5943 = vmatprep.subr.bf16.mxu0 0
        %5944 = vmatpush1.bf16.msra.mxu0 0
        %5945 = vmatprep.subr.bf16.mxu0 0
        %5946 = vmatpush1.bf16.msra.mxu0 0
        %5947 = vmatprep.subr.bf16.mxu0 0
        %5948 = vmatpush1.bf16.msra.mxu0 0
        %5949 = vmatprep.mubr.bf16.mxu0 0
        %5950 = vmatmul.mubr.bf16.gmra.mrb[0].mxu0 %v5906
        %v5951 = vpop.f32.mrb[0].mxu0
        %v5952 = vadd.f32 0.0, %v5951
        %v5953 = vpop.f32.mrb[0].mxu0
        %v5954 = vpop.f32.mrb[0].mxu0
        %v5955 = vadd.f32 0.0, %v5954
        %v5956 = vpop.f32.mrb[0].mxu0
        %5957 = vmatprep.mubr.bf16.mxu0 0
        %5958 = vmatmul.mubr.bf16.gmra.mrb[0].mxu0 %v5909
        %v5959 = vpop.f32.mrb[0].mxu0
        %v5960 = vadd.f32 0.0, %v5959
        %v5961 = vpop.f32.mrb[0].mxu0
        %v5962 = vpop.f32.mrb[0].mxu0
        %v5963 = vadd.f32 0.0, %v5962
        %v5964 = vpop.f32.mrb[0].mxu0
        %5965 = vmatprep.mubr.bf16.mxu0 0
        %5966 = vmatmul.mubr.bf16.gmra.mrb[0].mxu0 %v5912
        %v5967 = vpop.f32.mrb[0].mxu0
        %v5968 = vadd.f32 0.0, %v5967
        %v5969 = vpop.f32.mrb[0].mxu0
        %v5970 = vpop.f32.mrb[0].mxu0
        %v5971 = vadd.f32 0.0, %v5970
        %v5972 = vpop.f32.mrb[0].mxu0
        %5973 = vmatprep.mubr.bf16.mxu0 0
        %5974 = vmatmul.mubr.bf16.gmra.mrb[0].mxu0 %v5915
        %v5975 = vpop.f32.mrb[0].mxu0
        %v5976 = vadd.f32 0.0, %v5975
        %v5977 = vpop.f32.mrb[0].mxu0
        %v5978 = vpop.f32.mrb[0].mxu0
        %v5979 = vadd.f32 0.0, %v5978
        %v5980 = vpop.f32.mrb[0].mxu0
        %5981 = vdwg.mxu0
        %v5982 = vadd.f32 %v5852, %v5952
        %v5983 = vadd.f32 %v5853, %v5955
        %v5984 = vadd.f32 %v5854, %v5960
        %v5985 = vadd.f32 %v5855, %v5963
        %v5986 = vadd.f32 %v5856, %v5968
        %v5987 = vadd.f32 %v5857, %v5971
        %v5988 = vadd.f32 %v5858, %v5976
        %v5989 = vadd.f32 %v5859, %v5979
        %v5990 = vld [vmem:[%s5469 + $0xa] sm:$0xff]
        %v5991 = vld [vmem:[%s5469 + $0x22] sm:$0xff]
        %v5992 = vld [vmem:[%s5469 + $0x3a] sm:$0xff]
        %v5993 = vld [vmem:[%s5469 + $0x52] sm:$0xff]
        %v5994 = vld [vmem:[%s5469 + $0x6a] sm:$0xff]
        %v5995 = vld [vmem:[%s5469 + $0x82] sm:$0xff]
        %v5996 = vld [vmem:[%s5469 + $0x9a] sm:$0xff]
        %v5997 = vld [vmem:[%s5469 + $0xb2] sm:$0xff]
        %v5998 = vpack.c.bf16 %v5991, %v5990
        %v5999 = vpack.c.bf16 %v5993, %v5992
        %v6000 = vpack.c.bf16 %v5995, %v5994
        %v6001 = vpack.c.bf16 %v5997, %v5996
        %s6002 = scalar_lea.vmem %s4, 768
        %v6003 = vld [vmem:[%s6002] sm:$0xf]
        %v6004 = vld [vmem:[%s6002 + $0x4] sm:$0xf]
        %v6005 = vld [vmem:[%s6002 + $0x8] sm:$0xf]
        %v6006 = vld [vmem:[%s6002 + $0xc] sm:$0xf]
        %v6007 = vld [vmem:[%s6002 + $0x10] sm:$0xf]
        %v6008 = vld [vmem:[%s6002 + $0x14] sm:$0xf]
        %v6009 = vld [vmem:[%s6002 + $0x18] sm:$0xf]
        %v6010 = vld [vmem:[%s6002 + $0x1c] sm:$0xf]
        %v6019 = vunpack.c.l.b16 %v6003
        %v6020 = vunpack.c.l.b16 %v6004
        %v6021 = vunpack.c.l.b16 %v6005
        %v6022 = vunpack.c.l.b16 %v6006
        %v6023 = vunpack.c.l.b16 %v6007
        %v6024 = vunpack.c.l.b16 %v6008
        %v6025 = vunpack.c.l.b16 %v6009
        %v6026 = vunpack.c.l.b16 %v6010
        %v6027 = vpack.c.b16 %v6020, %v6019
        %v6028 = vpack.c.b16 %v6022, %v6021
        %v6029 = vpack.c.b16 %v6024, %v6023
        %v6030 = vpack.c.b16 %v6026, %v6025
        %v6036 = vsel %vm2249, %v5998, 0
        %v6039 = vsel %vm2249, %v5999, 0
        %v6042 = vsel %vm2249, %v6000, 0
        %v6045 = vsel %vm2249, %v6001, 0
        %6047 = vmatprep.subr.bf16.mxu0 0
        %6048 = vmatpush1.bf16.msra.mxu0 %v6027
        %6049 = vmatprep.subr.bf16.mxu0 0
        %6050 = vmatpush1.bf16.msra.mxu0 %v6028
        %6051 = vmatprep.subr.bf16.mxu0 0
        %6052 = vmatpush1.bf16.msra.mxu0 %v6029
        %6053 = vmatprep.subr.bf16.mxu0 0
        %6054 = vmatpush1.bf16.msra.mxu0 %v6030
        %6055 = vmatprep.subr.bf16.mxu0 0
        %6056 = vmatpush1.bf16.msra.mxu0 0
        %6057 = vmatprep.subr.bf16.mxu0 0
        %6058 = vmatpush1.bf16.msra.mxu0 0
        %6059 = vmatprep.subr.bf16.mxu0 0
        %6060 = vmatpush1.bf16.msra.mxu0 0
        %6061 = vmatprep.subr.bf16.mxu0 0
        %6062 = vmatpush1.bf16.msra.mxu0 0
        %6063 = vmatprep.subr.bf16.mxu0 0
        %6064 = vmatpush1.bf16.msra.mxu0 0
        %6065 = vmatprep.subr.bf16.mxu0 0
        %6066 = vmatpush1.bf16.msra.mxu0 0
        %6067 = vmatprep.subr.bf16.mxu0 0
        %6068 = vmatpush1.bf16.msra.mxu0 0
        %6069 = vmatprep.subr.bf16.mxu0 0
        %6070 = vmatpush1.bf16.msra.mxu0 0
        %6071 = vmatprep.subr.bf16.mxu0 0
        %6072 = vmatpush1.bf16.msra.mxu0 0
        %6073 = vmatprep.subr.bf16.mxu0 0
        %6074 = vmatpush1.bf16.msra.mxu0 0
        %6075 = vmatprep.subr.bf16.mxu0 0
        %6076 = vmatpush1.bf16.msra.mxu0 0
        %6077 = vmatprep.subr.bf16.mxu0 0
        %6078 = vmatpush1.bf16.msra.mxu0 0
        %6079 = vmatprep.mubr.bf16.mxu0 0
        %6080 = vmatmul.mubr.bf16.gmra.mrb[0].mxu0 %v6036
        %v6081 = vpop.f32.mrb[0].mxu0
        %v6082 = vadd.f32 0.0, %v6081
        %v6083 = vpop.f32.mrb[0].mxu0
        %v6084 = vpop.f32.mrb[0].mxu0
        %v6085 = vadd.f32 0.0, %v6084
        %v6086 = vpop.f32.mrb[0].mxu0
        %6087 = vmatprep.mubr.bf16.mxu0 0
        %6088 = vmatmul.mubr.bf16.gmra.mrb[0].mxu0 %v6039
        %v6089 = vpop.f32.mrb[0].mxu0
        %v6090 = vadd.f32 0.0, %v6089
        %v6091 = vpop.f32.mrb[0].mxu0
        %v6092 = vpop.f32.mrb[0].mxu0
        %v6093 = vadd.f32 0.0, %v6092
        %v6094 = vpop.f32.mrb[0].mxu0
        %6095 = vmatprep.mubr.bf16.mxu0 0
        %6096 = vmatmul.mubr.bf16.gmra.mrb[0].mxu0 %v6042
        %v6097 = vpop.f32.mrb[0].mxu0
        %v6098 = vadd.f32 0.0, %v6097
        %v6099 = vpop.f32.mrb[0].mxu0
        %v6100 = vpop.f32.mrb[0].mxu0
        %v6101 = vadd.f32 0.0, %v6100
        %v6102 = vpop.f32.mrb[0].mxu0
        %6103 = vmatprep.mubr.bf16.mxu0 0
        %6104 = vmatmul.mubr.bf16.gmra.mrb[0].mxu0 %v6045
        %v6105 = vpop.f32.mrb[0].mxu0
        %v6106 = vadd.f32 0.0, %v6105
        %v6107 = vpop.f32.mrb[0].mxu0
        %v6108 = vpop.f32.mrb[0].mxu0
        %v6109 = vadd.f32 0.0, %v6108
        %v6110 = vpop.f32.mrb[0].mxu0
        %6111 = vdwg.mxu0
        %v6112 = vadd.f32 %v5982, %v6082
        %v6113 = vadd.f32 %v5983, %v6085
        %v6114 = vadd.f32 %v5984, %v6090
        %v6115 = vadd.f32 %v5985, %v6093
        %v6116 = vadd.f32 %v5986, %v6098
        %v6117 = vadd.f32 %v5987, %v6101
        %v6118 = vadd.f32 %v5988, %v6106
        %v6119 = vadd.f32 %v5989, %v6109
        %v6128 = vcombine.high %v6112, %v6112
        %v6130 = vunpack.c.l.s4 1983009808
        %v6131 = vunpack.c.0.s8 %v6130
        %v6132 = vlaneseq
        %v6133 = vshrl.u32 %v6132, 7
        %v6134 = vsub.s32 %v6131, %v6133
        %v6135 = vrot.slane %v6112, %v6134
        %v6137 = vunpack.c.l.s4 1983009808
        %v6138 = vunpack.c.0.s8 %v6137
        %v6139 = vlaneseq
        %v6140 = vshrl.u32 %v6139, 7
        %v6141 = vsub.s32 %v6138, %v6140
        %v6142 = vrot.slane %v6128, %v6141
        %v6143 = vcombine.high %v6135, %v6135
        %v6144 = vcombine.high %v6142, %v6142
        %v6145 = vcombine.high %v6113, %v6113
        %v6147 = vunpack.c.l.s4 1983009808
        %v6148 = vunpack.c.0.s8 %v6147
        %v6149 = vlaneseq
        %v6150 = vshrl.u32 %v6149, 7
        %v6151 = vsub.s32 %v6148, %v6150
        %v6152 = vrot.slane %v6113, %v6151
        %v6154 = vunpack.c.l.s4 1983009808
        %v6155 = vunpack.c.0.s8 %v6154
        %v6156 = vlaneseq
        %v6157 = vshrl.u32 %v6156, 7
        %v6158 = vsub.s32 %v6155, %v6157
        %v6159 = vrot.slane %v6145, %v6158
        %v6160 = vcombine.high %v6152, %v6152
        %v6161 = vcombine.high %v6159, %v6159
        %v6162 = vcombine.high %v6114, %v6114
        %v6164 = vunpack.c.l.s4 1983009808
        %v6165 = vunpack.c.0.s8 %v6164
        %v6166 = vlaneseq
        %v6167 = vshrl.u32 %v6166, 7
        %v6168 = vsub.s32 %v6165, %v6167
        %v6169 = vrot.slane %v6114, %v6168
        %v6171 = vunpack.c.l.s4 1983009808
        %v6172 = vunpack.c.0.s8 %v6171
        %v6173 = vlaneseq
        %v6174 = vshrl.u32 %v6173, 7
        %v6175 = vsub.s32 %v6172, %v6174
        %v6176 = vrot.slane %v6162, %v6175
        %v6177 = vcombine.high %v6169, %v6169
        %v6178 = vcombine.high %v6176, %v6176
        %v6179 = vcombine.high %v6115, %v6115
        %v6181 = vunpack.c.l.s4 1983009808
        %v6182 = vunpack.c.0.s8 %v6181
        %v6183 = vlaneseq
        %v6184 = vshrl.u32 %v6183, 7
        %v6185 = vsub.s32 %v6182, %v6184
        %v6186 = vrot.slane %v6115, %v6185
        %v6188 = vunpack.c.l.s4 1983009808
        %v6189 = vunpack.c.0.s8 %v6188
        %v6190 = vlaneseq
        %v6191 = vshrl.u32 %v6190, 7
        %v6192 = vsub.s32 %v6189, %v6191
        %v6193 = vrot.slane %v6179, %v6192
        %v6194 = vcombine.high %v6186, %v6186
        %v6195 = vcombine.high %v6193, %v6193
        %v6196 = vcombine.high %v6116, %v6116
        %v6198 = vunpack.c.l.s4 1983009808
        %v6199 = vunpack.c.0.s8 %v6198
        %v6200 = vlaneseq
        %v6201 = vshrl.u32 %v6200, 7
        %v6202 = vsub.s32 %v6199, %v6201
        %v6203 = vrot.slane %v6116, %v6202
        %v6205 = vunpack.c.l.s4 1983009808
        %v6206 = vunpack.c.0.s8 %v6205
        %v6207 = vlaneseq
        %v6208 = vshrl.u32 %v6207, 7
        %v6209 = vsub.s32 %v6206, %v6208
        %v6210 = vrot.slane %v6196, %v6209
        %v6211 = vcombine.high %v6203, %v6203
        %v6212 = vcombine.high %v6210, %v6210
        %v6213 = vcombine.high %v6117, %v6117
        %v6215 = vunpack.c.l.s4 1983009808
        %v6216 = vunpack.c.0.s8 %v6215
        %v6217 = vlaneseq
        %v6218 = vshrl.u32 %v6217, 7
        %v6219 = vsub.s32 %v6216, %v6218
        %v6220 = vrot.slane %v6117, %v6219
        %v6222 = vunpack.c.l.s4 1983009808
        %v6223 = vunpack.c.0.s8 %v6222
        %v6224 = vlaneseq
        %v6225 = vshrl.u32 %v6224, 7
        %v6226 = vsub.s32 %v6223, %v6225
        %v6227 = vrot.slane %v6213, %v6226
        %v6228 = vcombine.high %v6220, %v6220
        %v6229 = vcombine.high %v6227, %v6227
        %v6230 = vcombine.high %v6118, %v6118
        %v6232 = vunpack.c.l.s4 1983009808
        %v6233 = vunpack.c.0.s8 %v6232
        %v6234 = vlaneseq
        %v6235 = vshrl.u32 %v6234, 7
        %v6236 = vsub.s32 %v6233, %v6235
        %v6237 = vrot.slane %v6118, %v6236
        %v6239 = vunpack.c.l.s4 1983009808
        %v6240 = vunpack.c.0.s8 %v6239
        %v6241 = vlaneseq
        %v6242 = vshrl.u32 %v6241, 7
        %v6243 = vsub.s32 %v6240, %v6242
        %v6244 = vrot.slane %v6230, %v6243
        %v6245 = vcombine.high %v6237, %v6237
        %v6246 = vcombine.high %v6244, %v6244
        %v6247 = vcombine.high %v6119, %v6119
        %v6249 = vunpack.c.l.s4 1983009808
        %v6250 = vunpack.c.0.s8 %v6249
        %v6251 = vlaneseq
        %v6252 = vshrl.u32 %v6251, 7
        %v6253 = vsub.s32 %v6250, %v6252
        %v6254 = vrot.slane %v6119, %v6253
        %v6256 = vunpack.c.l.s4 1983009808
        %v6257 = vunpack.c.0.s8 %v6256
        %v6258 = vlaneseq
        %v6259 = vshrl.u32 %v6258, 7
        %v6260 = vsub.s32 %v6257, %v6259
        %v6261 = vrot.slane %v6247, %v6260
        %v6262 = vcombine.high %v6254, %v6254
        %v6263 = vcombine.high %v6261, %v6261
        %vm6296 = vcmask 1041408
        %v6297 = vsel %vm6296, %v6135, -inf
        %v6298 = vrot.slane %v6297, 4
        %v6299 = vmax.f32 %v6297, %v6298
        %v6300 = vrot.slane %v6299, 2
        %v6301 = vmax.f32 %v6299, %v6300
        %v6302 = vrot.slane %v6301, 1
        %v6303 = vmax.f32 %v6301, %v6302
        %v6304 = vsel %vm6296, %v6143, -inf
        %v6305 = vrot.slane %v6304, 4
        %v6306 = vmax.f32 %v6304, %v6305
        %v6307 = vrot.slane %v6306, 2
        %v6308 = vmax.f32 %v6306, %v6307
        %v6309 = vrot.slane %v6308, 1
        %v6310 = vmax.f32 %v6308, %v6309
        %v6311 = vsel %vm6296, %v6142, -inf
        %v6312 = vrot.slane %v6311, 4
        %v6313 = vmax.f32 %v6311, %v6312
        %v6314 = vrot.slane %v6313, 2
        %v6315 = vmax.f32 %v6313, %v6314
        %v6316 = vrot.slane %v6315, 1
        %v6317 = vmax.f32 %v6315, %v6316
        %v6318 = vsel %vm6296, %v6144, -inf
        %v6319 = vrot.slane %v6318, 4
        %v6320 = vmax.f32 %v6318, %v6319
        %v6321 = vrot.slane %v6320, 2
        %v6322 = vmax.f32 %v6320, %v6321
        %v6323 = vrot.slane %v6322, 1
        %v6324 = vmax.f32 %v6322, %v6323
        %v6325 = vsel %vm6296, %v6152, -inf
        %v6326 = vrot.slane %v6325, 4
        %v6327 = vmax.f32 %v6325, %v6326
        %v6328 = vrot.slane %v6327, 2
        %v6329 = vmax.f32 %v6327, %v6328
        %v6330 = vrot.slane %v6329, 1
        %v6331 = vmax.f32 %v6329, %v6330
        %v6332 = vsel %vm6296, %v6160, -inf
        %v6333 = vrot.slane %v6332, 4
        %v6334 = vmax.f32 %v6332, %v6333
        %v6335 = vrot.slane %v6334, 2
        %v6336 = vmax.f32 %v6334, %v6335
        %v6337 = vrot.slane %v6336, 1
        %v6338 = vmax.f32 %v6336, %v6337
        %v6339 = vsel %vm6296, %v6159, -inf
        %v6340 = vrot.slane %v6339, 4
        %v6341 = vmax.f32 %v6339, %v6340
        %v6342 = vrot.slane %v6341, 2
        %v6343 = vmax.f32 %v6341, %v6342
        %v6344 = vrot.slane %v6343, 1
        %v6345 = vmax.f32 %v6343, %v6344
        %v6346 = vsel %vm6296, %v6161, -inf
        %v6347 = vrot.slane %v6346, 4
        %v6348 = vmax.f32 %v6346, %v6347
        %v6349 = vrot.slane %v6348, 2
        %v6350 = vmax.f32 %v6348, %v6349
        %v6351 = vrot.slane %v6350, 1
        %v6352 = vmax.f32 %v6350, %v6351
        %v6353 = vsel %vm6296, %v6169, -inf
        %v6354 = vrot.slane %v6353, 4
        %v6355 = vmax.f32 %v6353, %v6354
        %v6356 = vrot.slane %v6355, 2
        %v6357 = vmax.f32 %v6355, %v6356
        %v6358 = vrot.slane %v6357, 1
        %v6359 = vmax.f32 %v6357, %v6358
        %v6360 = vsel %vm6296, %v6177, -inf
        %v6361 = vrot.slane %v6360, 4
        %v6362 = vmax.f32 %v6360, %v6361
        %v6363 = vrot.slane %v6362, 2
        %v6364 = vmax.f32 %v6362, %v6363
        %v6365 = vrot.slane %v6364, 1
        %v6366 = vmax.f32 %v6364, %v6365
        %v6367 = vsel %vm6296, %v6176, -inf
        %v6368 = vrot.slane %v6367, 4
        %v6369 = vmax.f32 %v6367, %v6368
        %v6370 = vrot.slane %v6369, 2
        %v6371 = vmax.f32 %v6369, %v6370
        %v6372 = vrot.slane %v6371, 1
        %v6373 = vmax.f32 %v6371, %v6372
        %v6374 = vsel %vm6296, %v6178, -inf
        %v6375 = vrot.slane %v6374, 4
        %v6376 = vmax.f32 %v6374, %v6375
        %v6377 = vrot.slane %v6376, 2
        %v6378 = vmax.f32 %v6376, %v6377
        %v6379 = vrot.slane %v6378, 1
        %v6380 = vmax.f32 %v6378, %v6379
        %v6381 = vsel %vm6296, %v6186, -inf
        %v6382 = vrot.slane %v6381, 4
        %v6383 = vmax.f32 %v6381, %v6382
        %v6384 = vrot.slane %v6383, 2
        %v6385 = vmax.f32 %v6383, %v6384
        %v6386 = vrot.slane %v6385, 1
        %v6387 = vmax.f32 %v6385, %v6386
        %v6388 = vsel %vm6296, %v6194, -inf
        %v6389 = vrot.slane %v6388, 4
        %v6390 = vmax.f32 %v6388, %v6389
        %v6391 = vrot.slane %v6390, 2
        %v6392 = vmax.f32 %v6390, %v6391
        %v6393 = vrot.slane %v6392, 1
        %v6394 = vmax.f32 %v6392, %v6393
        %v6395 = vsel %vm6296, %v6193, -inf
        %v6396 = vrot.slane %v6395, 4
        %v6397 = vmax.f32 %v6395, %v6396
        %v6398 = vrot.slane %v6397, 2
        %v6399 = vmax.f32 %v6397, %v6398
        %v6400 = vrot.slane %v6399, 1
        %v6401 = vmax.f32 %v6399, %v6400
        %v6402 = vsel %vm6296, %v6195, -inf
        %v6403 = vrot.slane %v6402, 4
        %v6404 = vmax.f32 %v6402, %v6403
        %v6405 = vrot.slane %v6404, 2
        %v6406 = vmax.f32 %v6404, %v6405
        %v6407 = vrot.slane %v6406, 1
        %v6408 = vmax.f32 %v6406, %v6407
        %v6409 = vsel %vm6296, %v6203, -inf
        %v6410 = vrot.slane %v6409, 4
        %v6411 = vmax.f32 %v6409, %v6410
        %v6412 = vrot.slane %v6411, 2
        %v6413 = vmax.f32 %v6411, %v6412
        %v6414 = vrot.slane %v6413, 1
        %v6415 = vmax.f32 %v6413, %v6414
        %v6416 = vsel %vm6296, %v6211, -inf
        %v6417 = vrot.slane %v6416, 4
        %v6418 = vmax.f32 %v6416, %v6417
        %v6419 = vrot.slane %v6418, 2
        %v6420 = vmax.f32 %v6418, %v6419
        %v6421 = vrot.slane %v6420, 1
        %v6422 = vmax.f32 %v6420, %v6421
        %v6423 = vsel %vm6296, %v6210, -inf
        %v6424 = vrot.slane %v6423, 4
        %v6425 = vmax.f32 %v6423, %v6424
        %v6426 = vrot.slane %v6425, 2
        %v6427 = vmax.f32 %v6425, %v6426
        %v6428 = vrot.slane %v6427, 1
        %v6429 = vmax.f32 %v6427, %v6428
        %v6430 = vsel %vm6296, %v6212, -inf
        %v6431 = vrot.slane %v6430, 4
        %v6432 = vmax.f32 %v6430, %v6431
        %v6433 = vrot.slane %v6432, 2
        %v6434 = vmax.f32 %v6432, %v6433
        %v6435 = vrot.slane %v6434, 1
        %v6436 = vmax.f32 %v6434, %v6435
        %v6437 = vsel %vm6296, %v6220, -inf
        %v6438 = vrot.slane %v6437, 4
        %v6439 = vmax.f32 %v6437, %v6438
        %v6440 = vrot.slane %v6439, 2
        %v6441 = vmax.f32 %v6439, %v6440
        %v6442 = vrot.slane %v6441, 1
        %v6443 = vmax.f32 %v6441, %v6442
        %v6444 = vsel %vm6296, %v6228, -inf
        %v6445 = vrot.slane %v6444, 4
        %v6446 = vmax.f32 %v6444, %v6445
        %v6447 = vrot.slane %v6446, 2
        %v6448 = vmax.f32 %v6446, %v6447
        %v6449 = vrot.slane %v6448, 1
        %v6450 = vmax.f32 %v6448, %v6449
        %v6451 = vsel %vm6296, %v6227, -inf
        %v6452 = vrot.slane %v6451, 4
        %v6453 = vmax.f32 %v6451, %v6452
        %v6454 = vrot.slane %v6453, 2
        %v6455 = vmax.f32 %v6453, %v6454
        %v6456 = vrot.slane %v6455, 1
        %v6457 = vmax.f32 %v6455, %v6456
        %v6458 = vsel %vm6296, %v6229, -inf
        %v6459 = vrot.slane %v6458, 4
        %v6460 = vmax.f32 %v6458, %v6459
        %v6461 = vrot.slane %v6460, 2
        %v6462 = vmax.f32 %v6460, %v6461
        %v6463 = vrot.slane %v6462, 1
        %v6464 = vmax.f32 %v6462, %v6463
        %v6465 = vsel %vm6296, %v6237, -inf
        %v6466 = vrot.slane %v6465, 4
        %v6467 = vmax.f32 %v6465, %v6466
        %v6468 = vrot.slane %v6467, 2
        %v6469 = vmax.f32 %v6467, %v6468
        %v6470 = vrot.slane %v6469, 1
        %v6471 = vmax.f32 %v6469, %v6470
        %v6472 = vsel %vm6296, %v6245, -inf
        %v6473 = vrot.slane %v6472, 4
        %v6474 = vmax.f32 %v6472, %v6473
        %v6475 = vrot.slane %v6474, 2
        %v6476 = vmax.f32 %v6474, %v6475
        %v6477 = vrot.slane %v6476, 1
        %v6478 = vmax.f32 %v6476, %v6477
        %v6479 = vsel %vm6296, %v6244, -inf
        %v6480 = vrot.slane %v6479, 4
        %v6481 = vmax.f32 %v6479, %v6480
        %v6482 = vrot.slane %v6481, 2
        %v6483 = vmax.f32 %v6481, %v6482
        %v6484 = vrot.slane %v6483, 1
        %v6485 = vmax.f32 %v6483, %v6484
        %v6486 = vsel %vm6296, %v6246, -inf
        %v6487 = vrot.slane %v6486, 4
        %v6488 = vmax.f32 %v6486, %v6487
        %v6489 = vrot.slane %v6488, 2
        %v6490 = vmax.f32 %v6488, %v6489
        %v6491 = vrot.slane %v6490, 1
        %v6492 = vmax.f32 %v6490, %v6491
        %v6493 = vsel %vm6296, %v6254, -inf
        %v6494 = vrot.slane %v6493, 4
        %v6495 = vmax.f32 %v6493, %v6494
        %v6496 = vrot.slane %v6495, 2
        %v6497 = vmax.f32 %v6495, %v6496
        %v6498 = vrot.slane %v6497, 1
        %v6499 = vmax.f32 %v6497, %v6498
        %v6500 = vsel %vm6296, %v6262, -inf
        %v6501 = vrot.slane %v6500, 4
        %v6502 = vmax.f32 %v6500, %v6501
        %v6503 = vrot.slane %v6502, 2
        %v6504 = vmax.f32 %v6502, %v6503
        %v6505 = vrot.slane %v6504, 1
        %v6506 = vmax.f32 %v6504, %v6505
        %v6507 = vsel %vm6296, %v6261, -inf
        %v6508 = vrot.slane %v6507, 4
        %v6509 = vmax.f32 %v6507, %v6508
        %v6510 = vrot.slane %v6509, 2
        %v6511 = vmax.f32 %v6509, %v6510
        %v6512 = vrot.slane %v6511, 1
        %v6513 = vmax.f32 %v6511, %v6512
        %v6514 = vsel %vm6296, %v6263, -inf
        %v6515 = vrot.slane %v6514, 4
        %v6516 = vmax.f32 %v6514, %v6515
        %v6517 = vrot.slane %v6516, 2
        %v6518 = vmax.f32 %v6516, %v6517
        %v6519 = vrot.slane %v6518, 1
        %v6520 = vmax.f32 %v6518, %v6519
        %v6521 = vmax.f32 %v6303, %v6331
        %v6522 = vmax.f32 %v6310, %v6338
        %v6523 = vmax.f32 %v6317, %v6345
        %v6524 = vmax.f32 %v6324, %v6352
        %v6525 = vmax.f32 %v6359, %v6387
        %v6526 = vmax.f32 %v6366, %v6394
        %v6527 = vmax.f32 %v6373, %v6401
        %v6528 = vmax.f32 %v6380, %v6408
        %v6529 = vmax.f32 %v6415, %v6443
        %v6530 = vmax.f32 %v6422, %v6450
        %v6531 = vmax.f32 %v6429, %v6457
        %v6532 = vmax.f32 %v6436, %v6464
        %v6533 = vmax.f32 %v6471, %v6499
        %v6534 = vmax.f32 %v6478, %v6506
        %v6535 = vmax.f32 %v6485, %v6513
        %v6536 = vmax.f32 %v6492, %v6520
        %v6537 = vld [vmem:[%s5] sm:$0x1]
        %v6539 = vlaneseq
        %v6540 = vshrl.u32 %v6539, 7
        %v6541 = vsub.s32 0, %v6540
        %v6542 = vrot.slane %v6537, %v6541
        %v6544 = vmul.f32 %v6521, %v6542
        %v6545 = vmul.f32 %v6522, %v6542
        %v6546 = vmul.f32 %v6523, %v6542
        %v6547 = vmul.f32 %v6524, %v6542
        %v6548 = vmul.f32 %v6525, %v6542
        %v6549 = vmul.f32 %v6526, %v6542
        %v6550 = vmul.f32 %v6527, %v6542
        %v6551 = vmul.f32 %v6528, %v6542
        %v6552 = vmul.f32 %v6529, %v6542
        %v6553 = vmul.f32 %v6530, %v6542
        %v6554 = vmul.f32 %v6531, %v6542
        %v6555 = vmul.f32 %v6532, %v6542
        %v6556 = vmul.f32 %v6533, %v6542
        %v6557 = vmul.f32 %v6534, %v6542
        %v6558 = vmul.f32 %v6535, %v6542
        %v6559 = vmul.f32 %v6536, %v6542
        %v6560 = vld [vmem:[%s6] sm:$0x1]
        %v6562 = vlaneseq
        %v6563 = vshrl.u32 %v6562, 7
        %v6564 = vsub.s32 0, %v6563
        %v6565 = vrot.slane %v6560, %v6564
        %v6567 = vadd.f32 %v6544, %v6565
        %v6568 = vadd.f32 %v6545, %v6565
        %v6569 = vadd.f32 %v6546, %v6565
        %v6570 = vadd.f32 %v6547, %v6565
        %v6571 = vadd.f32 %v6548, %v6565
        %v6572 = vadd.f32 %v6549, %v6565
        %v6573 = vadd.f32 %v6550, %v6565
        %v6574 = vadd.f32 %v6551, %v6565
        %v6575 = vadd.f32 %v6552, %v6565
        %v6576 = vadd.f32 %v6553, %v6565
        %v6577 = vadd.f32 %v6554, %v6565
        %v6578 = vadd.f32 %v6555, %v6565
        %v6579 = vadd.f32 %v6556, %v6565
        %v6580 = vadd.f32 %v6557, %v6565
        %v6581 = vadd.f32 %v6558, %v6565
        %v6582 = vadd.f32 %v6559, %v6565
        %v6583 = vmax.f32 %v6567, 0.0
        %v6584 = vmax.f32 %v6568, 0.0
        %v6585 = vmax.f32 %v6569, 0.0
        %v6586 = vmax.f32 %v6570, 0.0
        %v6587 = vmax.f32 %v6571, 0.0
        %v6588 = vmax.f32 %v6572, 0.0
        %v6589 = vmax.f32 %v6573, 0.0
        %v6590 = vmax.f32 %v6574, 0.0
        %v6591 = vmax.f32 %v6575, 0.0
        %v6592 = vmax.f32 %v6576, 0.0
        %v6593 = vmax.f32 %v6577, 0.0
        %v6594 = vmax.f32 %v6578, 0.0
        %v6595 = vmax.f32 %v6579, 0.0
        %v6596 = vmax.f32 %v6580, 0.0
        %v6597 = vmax.f32 %v6581, 0.0
        %v6598 = vmax.f32 %v6582, 0.0
        %v6615 = vrot.slane %v6584, 7
        %v6616 = vsel %vm2749, %v6615, %v6583
        %v6617 = vrot.slane %v6585, 6
        %v6618 = vsel %vm2752, %v6617, %v6616
        %v6619 = vrot.slane %v6586, 5
        %v6620 = vsel %vm2755, %v6619, %v6618
        %v6621 = vrot.slane %v6588, 7
        %v6622 = vsel %vm2749, %v6621, %v6587
        %v6623 = vrot.slane %v6589, 6
        %v6624 = vsel %vm2752, %v6623, %v6622
        %v6625 = vrot.slane %v6590, 5
        %v6626 = vsel %vm2755, %v6625, %v6624
        %v6627 = vrot.slane %v6592, 7
        %v6628 = vsel %vm2749, %v6627, %v6591
        %v6629 = vrot.slane %v6593, 6
        %v6630 = vsel %vm2752, %v6629, %v6628
        %v6631 = vrot.slane %v6594, 5
        %v6632 = vsel %vm2755, %v6631, %v6630
        %v6633 = vrot.slane %v6596, 7
        %v6634 = vsel %vm2749, %v6633, %v6595
        %v6635 = vrot.slane %v6597, 6
        %v6636 = vsel %vm2752, %v6635, %v6634
        %v6637 = vrot.slane %v6598, 5
        %v6638 = vsel %vm2755, %v6637, %v6636
        %6643 = vst [vmem:[%s272] sm:$0xf] %v6620
        %6644 = vst [vmem:[%s272 + $0x4] sm:$0xf] %v6626
        %6645 = vst [vmem:[%s272 + $0x8] sm:$0xf] %v6632
        %6646 = vst [vmem:[%s272 + $0xc] sm:$0xf] %v6638
        %s6647 = sand.u32 %s181, 1
        %s6648 = scalar_lea.sflag [#allocation4], %s6647
        %s6649 = sand.u32 %s181, 1
        %s6650 = smul.addr %s6649, 16
        %s6651 = scalar_lea.vmem [#allocation3], %s6650
        // Predicated region
        $region49: #{feature_forward.1} parent=47 // pred_check
          %p6652 = pneg %p191
        $region50: #{feature_forward.1} parent=47 // pred_check_branch
          %6654 = sbr.rel (%p6652) target = $region52
        $region51: #{feature_forward.1} parent=47 // pred_region
          %s6656 = ssub.s32 256, 256
          %6657 = vsyncadd %s6648, %s6656
          %s6658 = smul.addr %s21, 4
          %s6659 = smul.addr %s6658, 64
          %s6660 = scalar_lea.hbm %s7, %s6659
          %s6661 = sshll.u32 %s6651, 4
          %s6662 = int_to_ptr.vmem [resolvable:$true] %s6661
          %6667 = dma.vmem_to_hbm [thread:$0]  %s6662, 256, %s6660, %s6648, 64, 64, 4
        $region52: #{feature_forward.1} parent=47 // pred_fallthru
          _
      $region48: #{feature_forward.1} parent=5 // pred_fallthru
        _
      %p6668 = scmp.le.s32.totalorder 2, %s16
      // Predicated region
      $region53: #{feature_forward.1} parent=5 // pred_check
        %p6669 = pneg %p6668
      $region54: #{feature_forward.1} parent=5 // pred_check_branch
        %6671 = sbr.rel (%p6669) target = $region56
      $region55: #{feature_forward.1} parent=5 // pred_region
        %s6672 = ssub.s32 %s16, 2
        // Predicated region
        $region57: #{feature_forward.1} parent=55 // pred_check
          %p6673 = pneg %p197
        $region58: #{feature_forward.1} parent=55 // pred_check_branch
          %6675 = sbr.rel (%p6673) target = $region60
        $region59: #{feature_forward.1} parent=55 // pred_region
          %s6676 = sand.u32 %s182, 1
          %s6677 = scalar_lea.sflag [#allocation4], %s6676
          %s6678 = sand.u32 %s182, 1
          %s6679 = smul.addr %s6678, 16
          %s6680 = scalar_lea.vmem [#allocation3], %s6679
          %6681 = dma.done %s6677, 256
        $region60: #{feature_forward.1} parent=55 // pred_fallthru
          _
      $region56: #{feature_forward.1} parent=5 // pred_fallthru
        _
    $region6: #{feature_forward.1} parent=1 // loop_footer
      %s20 = sadd.s32 1, %s16
    $region7: #{feature_forward.1} parent=1 // loop_footer_branch
      %15 = sbr.rel target = $region3
    $region8: #{feature_forward.1} parent=1 // loop_exit
      _
    %6682 = vsyncpa [#allocation4], 1
    %s6683 = scalar_lea.sflag [#allocation4], 1
    %6684 = vsyncpa %s6683, 1

</llo_original>
